<compile_context>
chip_gen: v5e
topology: v5e:2x2
jax: 0.10.0
libtpu: 0.0.40
codegen_flags: <defaults>
</compile_context>

<pallas_src>
import functools

import jax
import jax.numpy as jnp
from jax.experimental import pallas as pl
from jax.experimental.pallas import tpu as pltpu

B = 8              # batch (multiple of 8 for sublane alignment)
D_IN = 4096
D_H1 = 1024
D_H2 = 512
D_OUT = 40
D_OUT_PAD = 128    # lane-dense padded fc3 output width
TK = 2048          # K-tile for the fc1 reduction (grid = D_IN // TK = 2)
BN_EPS = 1e-5


def olivetti_kernel(x_ref, w1_ref, t1_ref, w2_ref, t2_ref, w3_ref, b3_ref,
                    o_ref, acc_ref):
    k = pl.program_id(0)

    @pl.when(k == 0)
    def _():
        acc_ref[...] = jnp.zeros_like(acc_ref)

    # fc1 partial product for this K-tile (BN scale already folded into w1).
    acc_ref[...] += jnp.dot(x_ref[...], w1_ref[...],
                            preferred_element_type=jnp.float32)

    @pl.when(k == pl.num_programs(0) - 1)
    def _():
        # bn1 shift + relu   [dropout == identity in eval]
        h1 = jnp.maximum(acc_ref[...] + t1_ref[...], 0.0)
        # fc2 + bn2 (folded scale) + shift + relu
        h2 = jnp.dot(h1.astype(jnp.bfloat16), w2_ref[...],
                     preferred_element_type=jnp.float32)
        h2 = jnp.maximum(h2 + t2_ref[...], 0.0)
        # fc3 (padded to 128 lanes -> unmasked vst)
        o_ref[...] = (jnp.dot(h2.astype(jnp.bfloat16), w3_ref[...],
                              preferred_element_type=jnp.float32)
                      + b3_ref[...])


def olivetti_forward(x, params):
    (w1, t1, w2, t2, w3, b3) = params
    xb = x.astype(jnp.bfloat16)
    n_k = D_IN // TK

    flops = 2 * B * (D_IN * D_H1 + D_H1 * D_H2 + D_H2 * D_OUT_PAD)
    bytes_accessed = (
        (D_IN * D_H1 + D_H1 * D_H2 + D_H2 * D_OUT_PAD) * 2   # bf16 weights
        + B * D_IN * 2                                        # x (bf16)
        + (D_H1 + D_H2 + D_OUT_PAD) * 4                       # f32 shifts/bias
        + B * D_OUT_PAD * 4)                                  # f32 output

    out = pl.pallas_call(
        olivetti_kernel,
        out_shape=jax.ShapeDtypeStruct((B, D_OUT_PAD), jnp.float32),
        grid=(n_k,),
        in_specs=[
            pl.BlockSpec((B, TK), lambda k: (0, k)),            # x (streamed over K)
            pl.BlockSpec((TK, D_H1), lambda k: (k, 0)),         # w1 (streamed over K)
            pl.BlockSpec((1, D_H1), lambda k: (0, 0)),          # t1 (resident)
            pl.BlockSpec((D_H1, D_H2), lambda k: (0, 0)),       # w2 (resident)
            pl.BlockSpec((1, D_H2), lambda k: (0, 0)),          # t2 (resident)
            pl.BlockSpec((D_H2, D_OUT_PAD), lambda k: (0, 0)),  # w3 (resident, padded)
            pl.BlockSpec((1, D_OUT_PAD), lambda k: (0, 0)),     # b3 (resident, padded)
        ],
        out_specs=pl.BlockSpec((B, D_OUT_PAD), lambda k: (0, 0)),
        scratch_shapes=[pltpu.VMEM((B, D_H1), jnp.float32)],
        compiler_params=pltpu.CompilerParams(
            dimension_semantics=("arbitrary",),      # K is a reduction axis
            vmem_limit_bytes=20 * 1024 * 1024,
        ),
        cost_estimate=pl.CostEstimate(
            flops=flops, transcendentals=0, bytes_accessed=bytes_accessed),
    )(xb, w1, t1, w2, t2, w3, b3)
    return out[:, :D_OUT]


def init_params(key):
    """Deterministic init mimicking PyTorch defaults (uniform +/- 1/sqrt(fan_in))."""
    def linear(key, fan_in, fan_out):
        kw, kb = jax.random.split(key)
        bound = 1.0 / jnp.sqrt(fan_in)
        w = jax.random.uniform(kw, (fan_in, fan_out), jnp.float32, -bound, bound)
        b = jax.random.uniform(kb, (fan_out,), jnp.float32, -bound, bound)
        return w, b

    k1, k2, k3, k4, k5 = jax.random.split(key, 5)
    w1, b1 = linear(k1, D_IN, D_H1)
    w2, b2 = linear(k2, D_H1, D_H2)
    w3, b3 = linear(k3, D_H2, D_OUT)

    # BatchNorm1d parameters (running stats at init values)
    g1 = 1.0 + 0.1 * jax.random.normal(k4, (D_H1,), jnp.float32)
    be1 = 0.1 * jax.random.normal(jax.random.fold_in(k4, 1), (D_H1,), jnp.float32)
    rm1 = jnp.zeros((D_H1,), jnp.float32)
    rv1 = jnp.ones((D_H1,), jnp.float32)

    g2 = 1.0 + 0.1 * jax.random.normal(k5, (D_H2,), jnp.float32)
    be2 = 0.1 * jax.random.normal(jax.random.fold_in(k5, 1), (D_H2,), jnp.float32)
    rm2 = jnp.zeros((D_H2,), jnp.float32)
    rv2 = jnp.ones((D_H2,), jnp.float32)

    # Eval-mode BN fold:  bn(xW + b) = (xW) * s + ((b - rm) * s + beta)
    s1 = g1 / jnp.sqrt(rv1 + BN_EPS)
    t1 = (b1 - rm1) * s1 + be1
    s2 = g2 / jnp.sqrt(rv2 + BN_EPS)
    t2 = (b2 - rm2) * s2 + be2

    # Fold the multiplicative scale into the weight columns, then cast weights
    # to bf16 (f32 accumulation happens in the kernel / MXU).  Note: this
    # quantizes s1/s2 together with the weights; if running variance ever gets
    # tiny, keep the scale as a separate f32 (1, N) multiply in the epilogue.
    w1f = (w1 * s1[None, :]).astype(jnp.bfloat16)
    w2f = (w2 * s2[None, :]).astype(jnp.bfloat16)

    # Zero-pad fc3 to a lane-dense 128-wide output; wrapper slices back to 40.
    w3p = jnp.zeros((D_H2, D_OUT_PAD), jnp.float32).at[:, :D_OUT].set(w3)
    w3p = w3p.astype(jnp.bfloat16)
    b3p = jnp.zeros((1, D_OUT_PAD), jnp.float32).at[0, :D_OUT].set(b3)

    return (w1f, t1.reshape(1, D_H1),
            w2f, t2.reshape(1, D_H2),
            w3p, b3p)


if __name__ == "__main__":
    key = jax.random.PRNGKey(0)
    kx, kp = jax.random.split(key)
    x = jax.random.normal(kx, (B, D_IN), jnp.float32)
    params = init_params(kp)

    out = jax.jit(functools.partial(olivetti_forward))(x, params)
    out = jax.block_until_ready(out)

    # sanity: plain-JAX reference using the same bf16 weights / f32 accumulation
    (w1, t1, w2, t2, w3, b3) = params
    xb = x.astype(jnp.bfloat16)
    h1 = jnp.maximum(jnp.dot(xb, w1, preferred_element_type=jnp.float32) + t1, 0.0)
    h2 = jnp.maximum(
        jnp.dot(h1.astype(jnp.bfloat16), w2, preferred_element_type=jnp.float32) + t2,
        0.0)
    ref = (jnp.dot(h2.astype(jnp.bfloat16), w3, preferred_element_type=jnp.float32)
           + b3)[:, :D_OUT]

    assert out.shape == (B, D_OUT)
    assert jnp.allclose(out, ref, atol=2e-2, rtol=2e-2), \
        float(jnp.max(jnp.abs(out - ref)))

    print("KERNEL_OK")
</pallas_src>

<mosaic_0001>
module attributes {stable_mosaic.version = 11 : i64} {
  func.func @olivetti_kernel(%arg0: i32, %arg1: memref<8x2048xbf16, #tpu.memory_space<vmem>>, %arg2: memref<2048x1024xbf16, #tpu.memory_space<vmem>>, %arg3: memref<1x1024xf32, #tpu.memory_space<vmem>>, %arg4: memref<1024x512xbf16, #tpu.memory_space<vmem>>, %arg5: memref<1x512xf32, #tpu.memory_space<vmem>>, %arg6: memref<512x128xbf16, #tpu.memory_space<vmem>>, %arg7: memref<1x128xf32, #tpu.memory_space<vmem>>, %arg8: memref<8x128xf32, #tpu.memory_space<vmem>>, %arg9: memref<8x1024xf32, #tpu.memory_space<vmem>>) attributes {dimension_semantics = [#tpu.dimension_semantics<arbitrary>], iteration_bounds = array<i64: 2>, scalar_prefetch = 0 : i64, scratch_operands = 1 : i64, tpu.core_type = #tpu.core_type<tc>, window_params = [{transform_indices = @transform_0, window_bounds = array<i64: 8, 2048>}, {transform_indices = @transform_1, window_bounds = array<i64: 2048, 1024>}, {pipeline_mode = #tpu.pipeline_mode<synchronous>, transform_indices = @transform_2, window_bounds = array<i64: 1, 1024>}, {pipeline_mode = #tpu.pipeline_mode<synchronous>, transform_indices = @transform_3, window_bounds = array<i64: 1024, 512>}, {pipeline_mode = #tpu.pipeline_mode<synchronous>, transform_indices = @transform_4, window_bounds = array<i64: 1, 512>}, {pipeline_mode = #tpu.pipeline_mode<synchronous>, transform_indices = @transform_5, window_bounds = array<i64: 512, 128>}, {pipeline_mode = #tpu.pipeline_mode<synchronous>, transform_indices = @transform_6, window_bounds = array<i64: 1, 128>}, {pipeline_mode = #tpu.pipeline_mode<synchronous>, transform_indices = @transform_7, window_bounds = array<i64: 8, 128>}]} {
    %c0_i32 = arith.constant 0 : i32
    %0 = arith.cmpi eq, %arg0, %c0_i32 : i32
    %1 = arith.extui %0 : i1 to i32
    %c0_i32_0 = arith.constant 0 : i32
    %2 = arith.cmpi ne, %1, %c0_i32_0 : i32
    scf.if %2 {
      %cst_9 = arith.constant 0.000000e+00 : f32
      %12 = vector.broadcast %cst_9 : f32 to vector<8x1024xf32>
      %c0_10 = arith.constant 0 : index
      %c0_11 = arith.constant 0 : index
      %13 = vector.load %arg9[%c0_10, %c0_11] : memref<8x1024xf32, #tpu.memory_space<vmem>>, vector<8x1024xf32>
      tpu.vector_store %arg9[%c0_10, %c0_11], %12 {strides = array<i32>} : memref<8x1024xf32, #tpu.memory_space<vmem>>, vector<8x1024xf32>,
    } else {
    }
    %c0 = arith.constant 0 : index
    %c0_1 = arith.constant 0 : index
    %3 = vector.load %arg9[%c0, %c0_1] : memref<8x1024xf32, #tpu.memory_space<vmem>>, vector<8x1024xf32>
    %c0_2 = arith.constant 0 : index
    %c0_3 = arith.constant 0 : index
    %4 = vector.load %arg1[%c0_2, %c0_3] : memref<8x2048xbf16, #tpu.memory_space<vmem>>, vector<8x2048xbf16>
    %c0_4 = arith.constant 0 : index
    %c0_5 = arith.constant 0 : index
    %5 = vector.load %arg2[%c0_4, %c0_5] : memref<2048x1024xbf16, #tpu.memory_space<vmem>>, vector<2048x1024xbf16>
    %cst = arith.constant dense<0.000000e+00> : vector<8x1024xf32>
    %6 = tpu.matmul %4, %5, %cst {dimension_numbers = #tpu.dot_dimension_numbers<[1], [0], [0], [1], [0, 0, 1, 1], [], []>} : vector<8x2048xbf16>, vector<2048x1024xbf16>, vector<8x1024xf32> -> vector<8x1024xf32>
    %7 = arith.addf %3, %6 : vector<8x1024xf32>
    %c0_6 = arith.constant 0 : index
    %c0_7 = arith.constant 0 : index
    %8 = vector.load %arg9[%c0_6, %c0_7] : memref<8x1024xf32, #tpu.memory_space<vmem>>, vector<8x1024xf32>
    tpu.vector_store %arg9[%c0_6, %c0_7], %7 {strides = array<i32>} : memref<8x1024xf32, #tpu.memory_space<vmem>>, vector<8x1024xf32>,
    %c1_i32 = arith.constant 1 : i32
    %9 = arith.cmpi eq, %arg0, %c1_i32 : i32
    %10 = arith.extui %9 : i1 to i32
    %c0_i32_8 = arith.constant 0 : i32
    %11 = arith.cmpi ne, %10, %c0_i32_8 : i32
    scf.if %11 {
      %c0_9 = arith.constant 0 : index
      %c0_10 = arith.constant 0 : index
      %12 = vector.load %arg9[%c0_9, %c0_10] : memref<8x1024xf32, #tpu.memory_space<vmem>>, vector<8x1024xf32>
      %c0_11 = arith.constant 0 : index
      %c0_12 = arith.constant 0 : index
      %13 = vector.load %arg3[%c0_11, %c0_12] : memref<1x1024xf32, #tpu.memory_space<vmem>>, vector<1x1024xf32>
      %14 = vector.broadcast %13 : vector<1x1024xf32> to vector<8x1024xf32>
      %15 = arith.addf %12, %14 : vector<8x1024xf32>
      %cst_13 = arith.constant 0.000000e+00 : f32
      %16 = vector.broadcast %cst_13 : f32 to vector<8x1024xf32>
      %17 = arith.maximumf %15, %16 : vector<8x1024xf32>
      %18 = arith.truncf %17 : vector<8x1024xf32> to vector<8x1024xbf16>
      %c0_14 = arith.constant 0 : index
      %c0_15 = arith.constant 0 : index
      %19 = vector.load %arg4[%c0_14, %c0_15] : memref<1024x512xbf16, #tpu.memory_space<vmem>>, vector<1024x512xbf16>
      %cst_16 = arith.constant dense<0.000000e+00> : vector<8x512xf32>
      %20 = tpu.matmul %18, %19, %cst_16 {dimension_numbers = #tpu.dot_dimension_numbers<[1], [0], [0], [1], [0, 0, 1, 1], [], []>} : vector<8x1024xbf16>, vector<1024x512xbf16>, vector<8x512xf32> -> vector<8x512xf32>
      %c0_17 = arith.constant 0 : index
      %c0_18 = arith.constant 0 : index
      %21 = vector.load %arg5[%c0_17, %c0_18] : memref<1x512xf32, #tpu.memory_space<vmem>>, vector<1x512xf32>
      %22 = vector.broadcast %21 : vector<1x512xf32> to vector<8x512xf32>
      %23 = arith.addf %20, %22 : vector<8x512xf32>
      %cst_19 = arith.constant 0.000000e+00 : f32
      %24 = vector.broadcast %cst_19 : f32 to vector<8x512xf32>
      %25 = arith.maximumf %23, %24 : vector<8x512xf32>
      %26 = arith.truncf %25 : vector<8x512xf32> to vector<8x512xbf16>
      %c0_20 = arith.constant 0 : index
      %c0_21 = arith.constant 0 : index
      %27 = vector.load %arg6[%c0_20, %c0_21] : memref<512x128xbf16, #tpu.memory_space<vmem>>, vector<512x128xbf16>
      %cst_22 = arith.constant dense<0.000000e+00> : vector<8x128xf32>
      %28 = tpu.matmul %26, %27, %cst_22 {dimension_numbers = #tpu.dot_dimension_numbers<[1], [0], [0], [1], [0, 0, 1, 1], [], []>} : vector<8x512xbf16>, vector<512x128xbf16>, vector<8x128xf32> -> vector<8x128xf32>
      %c0_23 = arith.constant 0 : index
      %c0_24 = arith.constant 0 : index
      %29 = vector.load %arg7[%c0_23, %c0_24] : memref<1x128xf32, #tpu.memory_space<vmem>>, vector<1x128xf32>
      %30 = vector.broadcast %29 : vector<1x128xf32> to vector<8x128xf32>
      %31 = arith.addf %28, %30 : vector<8x128xf32>
      %c0_25 = arith.constant 0 : index
      %c0_26 = arith.constant 0 : index
      %32 = vector.load %arg8[%c0_25, %c0_26] : memref<8x128xf32, #tpu.memory_space<vmem>>, vector<8x128xf32>
      tpu.vector_store %arg8[%c0_25, %c0_26], %31 {strides = array<i32>} : memref<8x128xf32, #tpu.memory_space<vmem>>, vector<8x128xf32>,
    } else {
    }
    return
  }
  func.func @transform_0(%arg0: i32) -> (i32, i32) {
    %c0_i32 = arith.constant 0 : i32
    %c0_i32_0 = arith.constant 0 : i32
    return %c0_i32, %arg0 : i32, i32
  }
  func.func @transform_1(%arg0: i32) -> (i32, i32) {
    %c0_i32 = arith.constant 0 : i32
    %c0_i32_0 = arith.constant 0 : i32
    return %arg0, %c0_i32 : i32, i32
  }
  func.func @transform_2(%arg0: i32) -> (i32, i32) {
    %c0_i32 = arith.constant 0 : i32
    %c0_i32_0 = arith.constant 0 : i32
    %c0_i32_1 = arith.constant 0 : i32
    return %c0_i32, %c0_i32_0 : i32, i32
  }
  func.func @transform_3(%arg0: i32) -> (i32, i32) {
    %c0_i32 = arith.constant 0 : i32
    %c0_i32_0 = arith.constant 0 : i32
    %c0_i32_1 = arith.constant 0 : i32
    return %c0_i32, %c0_i32_0 : i32, i32
  }
  func.func @transform_4(%arg0: i32) -> (i32, i32) {
    %c0_i32 = arith.constant 0 : i32
    %c0_i32_0 = arith.constant 0 : i32
    %c0_i32_1 = arith.constant 0 : i32
    return %c0_i32, %c0_i32_0 : i32, i32
  }
  func.func @transform_5(%arg0: i32) -> (i32, i32) {
    %c0_i32 = arith.constant 0 : i32
    %c0_i32_0 = arith.constant 0 : i32
    %c0_i32_1 = arith.constant 0 : i32
    return %c0_i32, %c0_i32_0 : i32, i32
  }
  func.func @transform_6(%arg0: i32) -> (i32, i32) {
    %c0_i32 = arith.constant 0 : i32
    %c0_i32_0 = arith.constant 0 : i32
    %c0_i32_1 = arith.constant 0 : i32
    return %c0_i32, %c0_i32_0 : i32, i32
  }
  func.func @transform_7(%arg0: i32) -> (i32, i32) {
    %c0_i32 = arith.constant 0 : i32
    %c0_i32_0 = arith.constant 0 : i32
    %c0_i32_1 = arith.constant 0 : i32
    return %c0_i32, %c0_i32_0 : i32, i32
  }
}

</mosaic_0001>

<llo_original>
// kernel: olivetti_forward.1
$region0: #{olivetti_forward.1}
  #allocation0 [shape = 'u32[]', space=smem, size = 0x4, offset = 0x4, fixed_abs, tag = 'smem constant byte address 0x4 - core index']
  #allocation1 [shape = 'u32[72,128]{1,0:T(1,128)}', space=vmem, size = 0x9000, scoped, tag = 'internal scratch']
  #allocation2 [shape = 'f32[8,1024]{1,0:T(8,128)}', space=vmem, size = 0x8000, scoped, tag = 'scratch operand']
  %s0 = inlined_call_operand.vmem [shape: bf16[8,4096], index: 0, kind: input, shape index: {}]
  %s1 = inlined_call_operand.hbm [shape: bf16[4096,1024], index: 1, kind: input, shape index: {}]
  %s2 = inlined_call_operand.hbm [shape: f32[1,1024], index: 2, kind: input, shape index: {}]
  %s3 = inlined_call_operand.hbm [shape: bf16[1024,512], index: 3, kind: input, shape index: {}]
  %s4 = inlined_call_operand.hbm [shape: f32[1,512], index: 4, kind: input, shape index: {}]
  %s5 = inlined_call_operand.hbm [shape: bf16[512,128], index: 5, kind: input, shape index: {}]
  %s6 = inlined_call_operand.hbm [shape: f32[1,128], index: 6, kind: input, shape index: {}]
  %s7 = inlined_call_operand.hbm [shape: f32[8,128], index: 7, kind: output, shape index: {}]
  %s8 = sld [smem:[#allocation0]]
  $region93: #{olivetti_forward.1} parent=0
    _
  %s10 = ssub.s32 1, %s8
  %s11 = scalar_select 0, %s10, %s8
  $region1: #{olivetti_forward.1} parent=0
    #allocation3 [shape = 'u8[8388608]{0}', space=vmem, size = 0x800000, scoped, tag = 'input window, operand 1']
    #allocation4 [shape = 's32[2]{0}', space=sflag, size = 0x8, scoped, tag = 'scoped memory for olivetti_forward.1']
    #allocation5 [shape = 's32[2]{0}', space=sflag, size = 0x8, scoped, tag = 'scoped memory for olivetti_forward.1']
    #allocation6 [shape = 'u8[4096]{0}', space=vmem, size = 0x1000, scoped, tag = 'input window, operand 2, single buffered']
    #allocation7 [shape = 's32[1]{0}', space=sflag, size = 0x4, scoped, tag = 'scoped memory for olivetti_forward.1']
    #allocation8 [shape = 'u8[1048576]{0}', space=vmem, size = 0x100000, scoped, tag = 'input window, operand 3, single buffered']
    #allocation9 [shape = 'u8[2048]{0}', space=vmem, size = 0x800, scoped, tag = 'input window, operand 4, single buffered']
    #allocation10 [shape = 's32[1]{0}', space=sflag, size = 0x4, scoped, tag = 'scoped memory for olivetti_forward.1']
    #allocation11 [shape = 'u8[131072]{0}', space=vmem, size = 0x20000, scoped, tag = 'input window, operand 5, single buffered']
    #allocation12 [shape = 'u8[512]{0}', space=vmem, size = 0x400, scoped, tag = 'input window, operand 6, single buffered']
    #allocation13 [shape = 's32[1]{0}', space=sflag, size = 0x4, scoped, tag = 'scoped memory for olivetti_forward.1']
    #allocation14 [shape = 'u8[4096]{0}', space=vmem, size = 0x1000, scoped, tag = 'output window, operand 0, single buffered']
    %12 = vsyncpa [#allocation4], 0
    %s13 = scalar_lea.sflag [#allocation4], 1
    %14 = vsyncpa %s13, 0
    %15 = vsyncpa [#allocation7], 0
    %16 = vsyncpa [#allocation10], 0
    %17 = vsyncpa [#allocation13], 0
    %18 = vsyncpa [#allocation5], 0
    loop: start=0, step=1, limit=4
    $region2: #{olivetti_forward.1} parent=1 // loop_pre_header
      _
    $region3: #{olivetti_forward.1} parent=1 // loop_header
      %s20 = sphi 0, %s24
      %p21 = scmp.ge.s32.totalorder %s20, 4
      %s30 = sphi 0, %s32
      %s33 = sphi 0, %s30
      %s34 = sphi 0, %s33
      %s50 = sphi 0, %s34
      %s56 = sphi 0, %s58
      %s59 = sphi 0, %s56
      %s60 = sphi 0, %s59
      %s76 = sphi 0, %s60
      %s80 = sphi 0, %s80
      %s82 = sphi 0, %s80
      %s83 = sphi 0, %s82
      %s97 = sphi 0, %s83
      %s101 = sphi 0, %s101
      %s103 = sphi 0, %s101
      %s104 = sphi 0, %s103
      %s118 = sphi 0, %s104
      %s122 = sphi 0, %s122
      %s124 = sphi 0, %s122
      %s125 = sphi 0, %s124
      %s139 = sphi 0, %s125
      %s143 = sphi 0, %s143
      %s145 = sphi 0, %s143
      %s146 = sphi 0, %s145
      %s160 = sphi 0, %s146
      %s164 = sphi 0, %s164
      %s166 = sphi 0, %s164
      %s167 = sphi 0, %s166
      %s181 = sphi 0, %s167
      %s185 = sphi 0, %s185
      %s187 = sphi 0, %s185
      %s188 = sphi 0, %s187
      %s202 = sphi 0, %s188
    $region4: #{olivetti_forward.1} parent=1 // loop_header_branch
      %23 = sbr.rel (%p21) target = $region8
    $region5: #{olivetti_forward.1} parent=1 // loop_body
      %s25 = ssub.s32 %s20, 1
      %s26 = ssub.s32 %s20, 2
      %s27 = sadd.s32 %s20, 1
      %s28 = ssub.s32 %s20, %s27
      %p29 = scmp.eq.s32.totalorder %s28, 0
      %s31 = sadd.s32 %s30, 1
      %s32 = scalar_select %p29, %s30, %s31
      %p35 = pneg %p29
      %p36 = scmp.eq.s32.totalorder %s20, 1
      %p37 = por %p35, %p36
      %p38 = scmp.ne.s32.totalorder %s30, %s33
      %p39 = scmp.eq.s32.totalorder %s20, 0
      %p40 = por %p38, %p39
      %p41 = scmp.ne.s32.totalorder %s30, %s33
      %p42 = scmp.eq.s32.totalorder %s25, 1
      %p43 = por %p41, %p42
      %p44 = scmp.ne.s32.totalorder %s33, %s34
      %p45 = scmp.eq.s32.totalorder %s25, 0
      %p46 = por %p44, %p45
      %p47 = scmp.ne.s32.totalorder %s33, %s34
      %p48 = scmp.eq.s32.totalorder %s26, 1
      %p49 = por %p47, %p48
      %p51 = scmp.ne.s32.totalorder %s34, %s50
      %p52 = scmp.eq.s32.totalorder %s26, 0
      %p53 = por %p51, %p52
      %s54 = ssub.s32 %s20, %s27
      %p55 = scmp.eq.s32.totalorder %s54, 0
      %s57 = sadd.s32 %s56, 1
      %s58 = scalar_select %p55, %s56, %s57
      %p61 = pneg %p55
      %p62 = scmp.eq.s32.totalorder %s20, 1
      %p63 = por %p61, %p62
      %p64 = scmp.ne.s32.totalorder %s56, %s59
      %p65 = scmp.eq.s32.totalorder %s20, 0
      %p66 = por %p64, %p65
      %p67 = scmp.ne.s32.totalorder %s56, %s59
      %p68 = scmp.eq.s32.totalorder %s25, 1
      %p69 = por %p67, %p68
      %p70 = scmp.ne.s32.totalorder %s59, %s60
      %p71 = scmp.eq.s32.totalorder %s25, 0
      %p72 = por %p70, %p71
      %p73 = scmp.ne.s32.totalorder %s59, %s60
      %p74 = scmp.eq.s32.totalorder %s26, 1
      %p75 = por %p73, %p74
      %p77 = scmp.ne.s32.totalorder %s60, %s76
      %p78 = scmp.eq.s32.totalorder %s26, 0
      %p79 = por %p77, %p78
      %s81 = sadd.s32 %s80, 1
      %p84 = scmp.eq.s32.totalorder %s20, 1
      %p85 = scmp.ne.s32.totalorder %s80, %s82
      %p86 = scmp.eq.s32.totalorder %s20, 0
      %p87 = por %p85, %p86
      %p88 = scmp.ne.s32.totalorder %s80, %s82
      %p89 = scmp.eq.s32.totalorder %s25, 1
      %p90 = por %p88, %p89
      %p91 = scmp.ne.s32.totalorder %s82, %s83
      %p92 = scmp.eq.s32.totalorder %s25, 0
      %p93 = por %p91, %p92
      %p94 = scmp.ne.s32.totalorder %s82, %s83
      %p95 = scmp.eq.s32.totalorder %s26, 1
      %p96 = por %p94, %p95
      %p98 = scmp.ne.s32.totalorder %s83, %s97
      %p99 = scmp.eq.s32.totalorder %s26, 0
      %p100 = por %p98, %p99
      %s102 = sadd.s32 %s101, 1
      %p105 = scmp.eq.s32.totalorder %s20, 1
      %p106 = scmp.ne.s32.totalorder %s101, %s103
      %p107 = scmp.eq.s32.totalorder %s20, 0
      %p108 = por %p106, %p107
      %p109 = scmp.ne.s32.totalorder %s101, %s103
      %p110 = scmp.eq.s32.totalorder %s25, 1
      %p111 = por %p109, %p110
      %p112 = scmp.ne.s32.totalorder %s103, %s104
      %p113 = scmp.eq.s32.totalorder %s25, 0
      %p114 = por %p112, %p113
      %p115 = scmp.ne.s32.totalorder %s103, %s104
      %p116 = scmp.eq.s32.totalorder %s26, 1
      %p117 = por %p115, %p116
      %p119 = scmp.ne.s32.totalorder %s104, %s118
      %p120 = scmp.eq.s32.totalorder %s26, 0
      %p121 = por %p119, %p120
      %s123 = sadd.s32 %s122, 1
      %p126 = scmp.eq.s32.totalorder %s20, 1
      %p127 = scmp.ne.s32.totalorder %s122, %s124
      %p128 = scmp.eq.s32.totalorder %s20, 0
      %p129 = por %p127, %p128
      %p130 = scmp.ne.s32.totalorder %s122, %s124
      %p131 = scmp.eq.s32.totalorder %s25, 1
      %p132 = por %p130, %p131
      %p133 = scmp.ne.s32.totalorder %s124, %s125
      %p134 = scmp.eq.s32.totalorder %s25, 0
      %p135 = por %p133, %p134
      %p136 = scmp.ne.s32.totalorder %s124, %s125
      %p137 = scmp.eq.s32.totalorder %s26, 1
      %p138 = por %p136, %p137
      %p140 = scmp.ne.s32.totalorder %s125, %s139
      %p141 = scmp.eq.s32.totalorder %s26, 0
      %p142 = por %p140, %p141
      %s144 = sadd.s32 %s143, 1
      %p147 = scmp.eq.s32.totalorder %s20, 1
      %p148 = scmp.ne.s32.totalorder %s143, %s145
      %p149 = scmp.eq.s32.totalorder %s20, 0
      %p150 = por %p148, %p149
      %p151 = scmp.ne.s32.totalorder %s143, %s145
      %p152 = scmp.eq.s32.totalorder %s25, 1
      %p153 = por %p151, %p152
      %p154 = scmp.ne.s32.totalorder %s145, %s146
      %p155 = scmp.eq.s32.totalorder %s25, 0
      %p156 = por %p154, %p155
      %p157 = scmp.ne.s32.totalorder %s145, %s146
      %p158 = scmp.eq.s32.totalorder %s26, 1
      %p159 = por %p157, %p158
      %p161 = scmp.ne.s32.totalorder %s146, %s160
      %p162 = scmp.eq.s32.totalorder %s26, 0
      %p163 = por %p161, %p162
      %s165 = sadd.s32 %s164, 1
      %p168 = scmp.eq.s32.totalorder %s20, 1
      %p169 = scmp.ne.s32.totalorder %s164, %s166
      %p170 = scmp.eq.s32.totalorder %s20, 0
      %p171 = por %p169, %p170
      %p172 = scmp.ne.s32.totalorder %s164, %s166
      %p173 = scmp.eq.s32.totalorder %s25, 1
      %p174 = por %p172, %p173
      %p175 = scmp.ne.s32.totalorder %s166, %s167
      %p176 = scmp.eq.s32.totalorder %s25, 0
      %p177 = por %p175, %p176
      %p178 = scmp.ne.s32.totalorder %s166, %s167
      %p179 = scmp.eq.s32.totalorder %s26, 1
      %p180 = por %p178, %p179
      %p182 = scmp.ne.s32.totalorder %s167, %s181
      %p183 = scmp.eq.s32.totalorder %s26, 0
      %p184 = por %p182, %p183
      %s186 = sadd.s32 %s185, 1
      %p189 = scmp.eq.s32.totalorder %s20, 1
      %p190 = scmp.ne.s32.totalorder %s185, %s187
      %p191 = scmp.eq.s32.totalorder %s20, 0
      %p192 = por %p190, %p191
      %p193 = scmp.ne.s32.totalorder %s185, %s187
      %p194 = scmp.eq.s32.totalorder %s25, 1
      %p195 = por %p193, %p194
      %p196 = scmp.ne.s32.totalorder %s187, %s188
      %p197 = scmp.eq.s32.totalorder %s25, 0
      %p198 = por %p196, %p197
      %p199 = scmp.ne.s32.totalorder %s187, %s188
      %p200 = scmp.eq.s32.totalorder %s26, 1
      %p201 = por %p199, %p200
      %p203 = scmp.ne.s32.totalorder %s188, %s202
      %p204 = scmp.eq.s32.totalorder %s26, 0
      %p205 = por %p203, %p204
      %p206 = scmp.le.s32.totalorder 1, %s20
      %p207 = scmp.lt.s32.totalorder %s20, 3
      %p208 = pnand %p206, %p207
      %p209 = pneg %p208
      // Predicated region
      $region9: #{olivetti_forward.1} parent=5 // pred_check
        _
      $region10: #{olivetti_forward.1} parent=5 // pred_check_branch
        %211 = sbr.rel (%p208) target = $region12
      $region11: #{olivetti_forward.1} parent=5 // pred_region
        %s212 = ssub.s32 %s20, 1
        // Predicated region
        $region13: #{olivetti_forward.1} parent=11 // pred_check
          %p213 = pneg %p93
        $region14: #{olivetti_forward.1} parent=11 // pred_check_branch
          %215 = sbr.rel (%p213) target = $region16
        $region15: #{olivetti_forward.1} parent=11 // pred_region
          %217 = vsyncadd [#allocation7], 0
          %s219 = sshll.u32 %s2, 4
          %s220 = int_to_ptr.hbm [resolvable:$true] %s219
          %s221 = sshll.u32 [#allocation6], 4
          %s222 = int_to_ptr.vmem [resolvable:$true] %s221
          %224 = dma.hbm_to_vmem [thread:$0]  %s220, 128, %s222, [#allocation7]
        $region16: #{olivetti_forward.1} parent=11 // pred_fallthru
          _
        // Predicated region
        $region17: #{olivetti_forward.1} parent=11 // pred_check
          %p225 = pneg %p114
        $region18: #{olivetti_forward.1} parent=11 // pred_check_branch
          %227 = sbr.rel (%p225) target = $region20
        $region19: #{olivetti_forward.1} parent=11 // pred_region
          %229 = vsyncadd [#allocation7], 0
          %s230 = sshll.u32 %s3, 4
          %s231 = int_to_ptr.hbm [resolvable:$true] %s230
          %s232 = sshll.u32 [#allocation8], 4
          %s233 = int_to_ptr.vmem [resolvable:$true] %s232
          %238 = dma.hbm_to_vmem [thread:$0]  %s231, 32768, %s233, [#allocation7], 256, 256, 16
        $region20: #{olivetti_forward.1} parent=11 // pred_fallthru
          _
        // Predicated region
        $region21: #{olivetti_forward.1} parent=11 // pred_check
          %p239 = pneg %p135
        $region22: #{olivetti_forward.1} parent=11 // pred_check_branch
          %241 = sbr.rel (%p239) target = $region24
        $region23: #{olivetti_forward.1} parent=11 // pred_region
          %243 = vsyncadd [#allocation10], 0
          %s245 = sshll.u32 %s4, 4
          %s246 = int_to_ptr.hbm [resolvable:$true] %s245
          %s247 = sshll.u32 [#allocation9], 4
          %s248 = int_to_ptr.vmem [resolvable:$true] %s247
          %250 = dma.hbm_to_vmem [thread:$0]  %s246, 64, %s248, [#allocation10]
        $region24: #{olivetti_forward.1} parent=11 // pred_fallthru
          _
        // Predicated region
        $region25: #{olivetti_forward.1} parent=11 // pred_check
          %p251 = pneg %p156
        $region26: #{olivetti_forward.1} parent=11 // pred_check_branch
          %253 = sbr.rel (%p251) target = $region28
        $region27: #{olivetti_forward.1} parent=11 // pred_region
          %255 = vsyncadd [#allocation10], 0
          %s256 = sshll.u32 %s5, 4
          %s257 = int_to_ptr.hbm [resolvable:$true] %s256
          %s258 = sshll.u32 [#allocation11], 4
          %s259 = int_to_ptr.vmem [resolvable:$true] %s258
          %264 = dma.hbm_to_vmem [thread:$0]  %s257, 4096, %s259, [#allocation10], 64, 64, 4
        $region28: #{olivetti_forward.1} parent=11 // pred_fallthru
          _
        // Predicated region
        $region29: #{olivetti_forward.1} parent=11 // pred_check
          %p265 = pneg %p177
        $region30: #{olivetti_forward.1} parent=11 // pred_check_branch
          %267 = sbr.rel (%p265) target = $region32
        $region31: #{olivetti_forward.1} parent=11 // pred_region
          %269 = vsyncadd [#allocation13], 0
          %s271 = sshll.u32 %s6, 4
          %s272 = int_to_ptr.hbm [resolvable:$true] %s271
          %s273 = sshll.u32 [#allocation12], 4
          %s274 = int_to_ptr.vmem [resolvable:$true] %s273
          %276 = dma.hbm_to_vmem [thread:$0]  %s272, 16, %s274, [#allocation13]
        $region32: #{olivetti_forward.1} parent=11 // pred_fallthru
          _
      $region12: #{olivetti_forward.1} parent=5 // pred_fallthru
        _
      %p277 = scmp.lt.s32.totalorder %s20, 2
      // Predicated region
      $region33: #{olivetti_forward.1} parent=5 // pred_check
        %p278 = pneg %p277
      $region34: #{olivetti_forward.1} parent=5 // pred_check_branch
        %280 = sbr.rel (%p278) target = $region36
      $region35: #{olivetti_forward.1} parent=5 // pred_region
        // Predicated region
        $region37: #{olivetti_forward.1} parent=35 // pred_check
          %p281 = pneg %p40
        $region38: #{olivetti_forward.1} parent=35 // pred_check_branch
          %283 = sbr.rel (%p281) target = $region40
        $region39: #{olivetti_forward.1} parent=35 // pred_region
          %s284 = smul.u32 16, %s20
          %p285 = scmp.lt.s32.totalorder %s284, 31
          %s286 = scalar_select %p285, %s284, 31
          %s287 = smul.addr %s286, 4
          %s288 = scalar_lea.vmem %s0, %s287
          %s289 = smul.u32 16, %s20
        $region40: #{olivetti_forward.1} parent=35 // pred_fallthru
          _
        // Predicated region
        $region41: #{olivetti_forward.1} parent=35 // pred_check
          %p290 = pneg %p66
        $region42: #{olivetti_forward.1} parent=35 // pred_check_branch
          %292 = sbr.rel (%p290) target = $region44
        $region43: #{olivetti_forward.1} parent=35 // pred_region
          %s293 = sand.u32 %s56, 1
          %s294 = scalar_lea.sflag [#allocation4], %s293
          %s295 = sand.u32 %s56, 1
          %s296 = smul.addr %s295, 8192
          %s297 = scalar_lea.vmem [#allocation3], %s296
          %s298 = smul.u32 256, %s20
          %300 = vsyncadd %s294, 0
          %s301 = smul.addr %s298, 8
          %s302 = smul.addr %s301, 4
          %s303 = scalar_lea.hbm %s1, %s302
          %s304 = sshll.u32 %s303, 4
          %s305 = int_to_ptr.hbm [resolvable:$true] %s304
          %s306 = sshll.u32 %s297, 4
          %s307 = int_to_ptr.vmem [resolvable:$true] %s306
          %312 = dma.hbm_to_vmem [thread:$0]  %s305, 131072, %s307, %s294, 512, 512, 32
        $region44: #{olivetti_forward.1} parent=35 // pred_fallthru
          _
      $region36: #{olivetti_forward.1} parent=5 // pred_fallthru
        _
      %p313 = scmp.le.s32.totalorder 1, %s20
      %p314 = scmp.lt.s32.totalorder %s20, 3
      %p315 = pnand %p313, %p314
      %p316 = pneg %p315
      // Predicated region
      $region45: #{olivetti_forward.1} parent=5 // pred_check
        _
      $region46: #{olivetti_forward.1} parent=5 // pred_check_branch
        %318 = sbr.rel (%p315) target = $region48
      $region47: #{olivetti_forward.1} parent=5 // pred_region
        %s319 = ssub.s32 %s20, 1
        %s320 = sand.u32 %s59, 1
        %s321 = scalar_lea.sflag [#allocation4], %s320
        %s322 = sand.u32 %s59, 1
        %s323 = smul.addr %s322, 8192
        %s324 = scalar_lea.vmem [#allocation3], %s323
        // Predicated region
        $region49: #{olivetti_forward.1} parent=47 // pred_check
          %p325 = pneg %p72
        $region50: #{olivetti_forward.1} parent=47 // pred_check_branch
          %327 = sbr.rel (%p325) target = $region52
        $region51: #{olivetti_forward.1} parent=47 // pred_region
          %329 = dma.done %s321, 131072
        $region52: #{olivetti_forward.1} parent=47 // pred_fallthru
          _
        // Predicated region
        $region53: #{olivetti_forward.1} parent=47 // pred_check
          %p330 = pneg %p93
        $region54: #{olivetti_forward.1} parent=47 // pred_check_branch
          %332 = sbr.rel (%p330) target = $region56
        $region55: #{olivetti_forward.1} parent=47 // pred_region
          %334 = dma.done [#allocation7], 128
        $region56: #{olivetti_forward.1} parent=47 // pred_fallthru
          _
        // Predicated region
        $region57: #{olivetti_forward.1} parent=47 // pred_check
          %p335 = pneg %p114
        $region58: #{olivetti_forward.1} parent=47 // pred_check_branch
          %337 = sbr.rel (%p335) target = $region60
        $region59: #{olivetti_forward.1} parent=47 // pred_region
          %339 = dma.done [#allocation7], 32768
        $region60: #{olivetti_forward.1} parent=47 // pred_fallthru
          _
        // Predicated region
        $region61: #{olivetti_forward.1} parent=47 // pred_check
          %p340 = pneg %p135
        $region62: #{olivetti_forward.1} parent=47 // pred_check_branch
          %342 = sbr.rel (%p340) target = $region64
        $region63: #{olivetti_forward.1} parent=47 // pred_region
          %344 = dma.done [#allocation10], 64
        $region64: #{olivetti_forward.1} parent=47 // pred_fallthru
          _
        // Predicated region
        $region65: #{olivetti_forward.1} parent=47 // pred_check
          %p345 = pneg %p156
        $region66: #{olivetti_forward.1} parent=47 // pred_check_branch
          %347 = sbr.rel (%p345) target = $region68
        $region67: #{olivetti_forward.1} parent=47 // pred_region
          %349 = dma.done [#allocation10], 4096
        $region68: #{olivetti_forward.1} parent=47 // pred_fallthru
          _
        // Predicated region
        $region69: #{olivetti_forward.1} parent=47 // pred_check
          %p350 = pneg %p177
        $region70: #{olivetti_forward.1} parent=47 // pred_check_branch
          %352 = sbr.rel (%p350) target = $region72
        $region71: #{olivetti_forward.1} parent=47 // pred_region
          %354 = dma.done [#allocation13], 16
        $region72: #{olivetti_forward.1} parent=47 // pred_fallthru
          _
        %s355 = smul.u32 16, %s25
        %p356 = scmp.lt.s32.totalorder %s355, 31
        %s357 = scalar_select %p356, %s355, 31
        %s358 = smul.addr %s357, 4
        %s359 = scalar_lea.vmem %s0, %s358
        %p360 = pneg %p46
        %p361 = pneg %p43
        %s362 = sand.u32 %s59, 1
        %s363 = scalar_lea.sflag [#allocation4], %s362
        %s364 = sand.u32 %s59, 1
        %s365 = smul.addr %s364, 8192
        %s366 = scalar_lea.vmem [#allocation3], %s365
        %p367 = pneg %p72
        %p368 = pneg %p69
        %p369 = pneg %p93
        %p370 = pneg %p90
        %p371 = pneg %p114
        %p372 = pneg %p111
        %p373 = pneg %p135
        %p374 = pneg %p132
        %p375 = pneg %p156
        %p376 = pneg %p153
        %p377 = pneg %p177
        %p378 = pneg %p174
        %p379 = pneg %p198
        %p380 = pneg %p195
        %s381 = smul.u32 16, %s25
        %p382 = scmp.lt.s32.totalorder %s381, 31
        %s383 = scalar_select %p382, %s381, 31
        %s384 = smul.addr %s383, 4
        %s385 = scalar_lea.vmem %s0, %s384
        %s386 = smul.u32 16, %s25
        %s387 = smul.u32 256, %s25
        %p388 = scmp.eq.s32.totalorder %s25, 0
        // Predicated region
        $region73: #{olivetti_forward.1} parent=47 // pred_check
          %p389 = pneg %p388
        $region74: #{olivetti_forward.1} parent=47 // pred_check_branch
          %391 = sbr.rel (%p389) target = $region76
        $region75: #{olivetti_forward.1} parent=47 // pred_region
          %392 = vst [vmem:[#allocation2] sm:$0xff] 0.0
          %393 = vst [vmem:[#allocation2 + $0x8] sm:$0xff] 0.0
          %394 = vst [vmem:[#allocation2 + $0x10] sm:$0xff] 0.0
          %395 = vst [vmem:[#allocation2 + $0x18] sm:$0xff] 0.0
          %396 = vst [vmem:[#allocation2 + $0x20] sm:$0xff] 0.0
          %397 = vst [vmem:[#allocation2 + $0x28] sm:$0xff] 0.0
          %398 = vst [vmem:[#allocation2 + $0x30] sm:$0xff] 0.0
          %399 = vst [vmem:[#allocation2 + $0x38] sm:$0xff] 0.0
        $region76: #{olivetti_forward.1} parent=47 // pred_fallthru
          _
        %v400 = vld [vmem:[#allocation2] sm:$0xff]
        %v401 = vld [vmem:[#allocation2 + $0x8] sm:$0xff]
        %v402 = vld [vmem:[#allocation2 + $0x10] sm:$0xff]
        %v403 = vld [vmem:[#allocation2 + $0x18] sm:$0xff]
        %v404 = vld [vmem:[#allocation2 + $0x20] sm:$0xff]
        %v405 = vld [vmem:[#allocation2 + $0x28] sm:$0xff]
        %v406 = vld [vmem:[#allocation2 + $0x30] sm:$0xff]
        %v407 = vld [vmem:[#allocation2 + $0x38] sm:$0xff]
        %v408 = vld [vmem:[%s385] sm:$0xff]
        %v409 = vld [vmem:[%s385 + $0x8] sm:$0xff]
        %v410 = vld [vmem:[%s385 + $0x10] sm:$0xff]
        %v411 = vld [vmem:[%s385 + $0x18] sm:$0xff]
        %v412 = vld [vmem:[%s385 + $0x20] sm:$0xff]
        %v413 = vld [vmem:[%s385 + $0x28] sm:$0xff]
        %v414 = vld [vmem:[%s385 + $0x30] sm:$0xff]
        %v415 = vld [vmem:[%s385 + $0x38] sm:$0xff]
        %v416 = vld [vmem:[%s324] sm:$0xff]
        %v417 = vld [vmem:[%s324 + $0x8] sm:$0xff]
        %v418 = vld [vmem:[%s324 + $0x10] sm:$0xff]
        %v419 = vld [vmem:[%s324 + $0x18] sm:$0xff]
        %v420 = vld [vmem:[%s324 + $0x20] sm:$0xff]
        %v421 = vld [vmem:[%s324 + $0x28] sm:$0xff]
        %v422 = vld [vmem:[%s324 + $0x30] sm:$0xff]
        %v423 = vld [vmem:[%s324 + $0x38] sm:$0xff]
        %v424 = vld [vmem:[%s324 + $0x40] sm:$0xff]
        %v425 = vld [vmem:[%s324 + $0x48] sm:$0xff]
        %v426 = vld [vmem:[%s324 + $0x50] sm:$0xff]
        %v427 = vld [vmem:[%s324 + $0x58] sm:$0xff]
        %v428 = vld [vmem:[%s324 + $0x60] sm:$0xff]
        %v429 = vld [vmem:[%s324 + $0x68] sm:$0xff]
        %v430 = vld [vmem:[%s324 + $0x70] sm:$0xff]
        %v431 = vld [vmem:[%s324 + $0x78] sm:$0xff]
        %v432 = vld [vmem:[%s324 + $0x80] sm:$0xff]
        %v433 = vld [vmem:[%s324 + $0x88] sm:$0xff]
        %v434 = vld [vmem:[%s324 + $0x90] sm:$0xff]
        %v435 = vld [vmem:[%s324 + $0x98] sm:$0xff]
        %v436 = vld [vmem:[%s324 + $0xa0] sm:$0xff]
        %v437 = vld [vmem:[%s324 + $0xa8] sm:$0xff]
        %v438 = vld [vmem:[%s324 + $0xb0] sm:$0xff]
        %v439 = vld [vmem:[%s324 + $0xb8] sm:$0xff]
        %v440 = vld [vmem:[%s324 + $0xc0] sm:$0xff]
        %v441 = vld [vmem:[%s324 + $0xc8] sm:$0xff]
        %v442 = vld [vmem:[%s324 + $0xd0] sm:$0xff]
        %v443 = vld [vmem:[%s324 + $0xd8] sm:$0xff]
        %v444 = vld [vmem:[%s324 + $0xe0] sm:$0xff]
        %v445 = vld [vmem:[%s324 + $0xe8] sm:$0xff]
        %v446 = vld [vmem:[%s324 + $0xf0] sm:$0xff]
        %v447 = vld [vmem:[%s324 + $0xf8] sm:$0xff]
        %v448 = vld [vmem:[%s324 + $0x100] sm:$0xff]
        %v449 = vld [vmem:[%s324 + $0x108] sm:$0xff]
        %v450 = vld [vmem:[%s324 + $0x110] sm:$0xff]
        %v451 = vld [vmem:[%s324 + $0x118] sm:$0xff]
        %v452 = vld [vmem:[%s324 + $0x120] sm:$0xff]
        %v453 = vld [vmem:[%s324 + $0x128] sm:$0xff]
        %v454 = vld [vmem:[%s324 + $0x130] sm:$0xff]
        %v455 = vld [vmem:[%s324 + $0x138] sm:$0xff]
        %v456 = vld [vmem:[%s324 + $0x140] sm:$0xff]
        %v457 = vld [vmem:[%s324 + $0x148] sm:$0xff]
        %v458 = vld [vmem:[%s324 + $0x150] sm:$0xff]
        %v459 = vld [vmem:[%s324 + $0x158] sm:$0xff]
        %v460 = vld [vmem:[%s324 + $0x160] sm:$0xff]
        %v461 = vld [vmem:[%s324 + $0x168] sm:$0xff]
        %v462 = vld [vmem:[%s324 + $0x170] sm:$0xff]
        %v463 = vld [vmem:[%s324 + $0x178] sm:$0xff]
        %v464 = vld [vmem:[%s324 + $0x180] sm:$0xff]
        %v465 = vld [vmem:[%s324 + $0x188] sm:$0xff]
        %v466 = vld [vmem:[%s324 + $0x190] sm:$0xff]
        %v467 = vld [vmem:[%s324 + $0x198] sm:$0xff]
        %v468 = vld [vmem:[%s324 + $0x1a0] sm:$0xff]
        %v469 = vld [vmem:[%s324 + $0x1a8] sm:$0xff]
        %v470 = vld [vmem:[%s324 + $0x1b0] sm:$0xff]
        %v471 = vld [vmem:[%s324 + $0x1b8] sm:$0xff]
        %v472 = vld [vmem:[%s324 + $0x1c0] sm:$0xff]
        %v473 = vld [vmem:[%s324 + $0x1c8] sm:$0xff]
        %v474 = vld [vmem:[%s324 + $0x1d0] sm:$0xff]
        %v475 = vld [vmem:[%s324 + $0x1d8] sm:$0xff]
        %v476 = vld [vmem:[%s324 + $0x1e0] sm:$0xff]
        %v477 = vld [vmem:[%s324 + $0x1e8] sm:$0xff]
        %v478 = vld [vmem:[%s324 + $0x1f0] sm:$0xff]
        %v479 = vld [vmem:[%s324 + $0x1f8] sm:$0xff]
        %v480 = vld [vmem:[%s324 + $0x200] sm:$0xff]
        %v481 = vld [vmem:[%s324 + $0x208] sm:$0xff]
        %v482 = vld [vmem:[%s324 + $0x210] sm:$0xff]
        %v483 = vld [vmem:[%s324 + $0x218] sm:$0xff]
        %v484 = vld [vmem:[%s324 + $0x220] sm:$0xff]
        %v485 = vld [vmem:[%s324 + $0x228] sm:$0xff]
        %v486 = vld [vmem:[%s324 + $0x230] sm:$0xff]
        %v487 = vld [vmem:[%s324 + $0x238] sm:$0xff]
        %v488 = vld [vmem:[%s324 + $0x240] sm:$0xff]
        %v489 = vld [vmem:[%s324 + $0x248] sm:$0xff]
        %v490 = vld [vmem:[%s324 + $0x250] sm:$0xff]
        %v491 = vld [vmem:[%s324 + $0x258] sm:$0xff]
        %v492 = vld [vmem:[%s324 + $0x260] sm:$0xff]
        %v493 = vld [vmem:[%s324 + $0x268] sm:$0xff]
        %v494 = vld [vmem:[%s324 + $0x270] sm:$0xff]
        %v495 = vld [vmem:[%s324 + $0x278] sm:$0xff]
        %v496 = vld [vmem:[%s324 + $0x280] sm:$0xff]
        %v497 = vld [vmem:[%s324 + $0x288] sm:$0xff]
        %v498 = vld [vmem:[%s324 + $0x290] sm:$0xff]
        %v499 = vld [vmem:[%s324 + $0x298] sm:$0xff]
        %v500 = vld [vmem:[%s324 + $0x2a0] sm:$0xff]
        %v501 = vld [vmem:[%s324 + $0x2a8] sm:$0xff]
        %v502 = vld [vmem:[%s324 + $0x2b0] sm:$0xff]
        %v503 = vld [vmem:[%s324 + $0x2b8] sm:$0xff]
        %v504 = vld [vmem:[%s324 + $0x2c0] sm:$0xff]
        %v505 = vld [vmem:[%s324 + $0x2c8] sm:$0xff]
        %v506 = vld [vmem:[%s324 + $0x2d0] sm:$0xff]
        %v507 = vld [vmem:[%s324 + $0x2d8] sm:$0xff]
        %v508 = vld [vmem:[%s324 + $0x2e0] sm:$0xff]
        %v509 = vld [vmem:[%s324 + $0x2e8] sm:$0xff]
        %v510 = vld [vmem:[%s324 + $0x2f0] sm:$0xff]
        %v511 = vld [vmem:[%s324 + $0x2f8] sm:$0xff]
        %v512 = vld [vmem:[%s324 + $0x300] sm:$0xff]
        %v513 = vld [vmem:[%s324 + $0x308] sm:$0xff]
        %v514 = vld [vmem:[%s324 + $0x310] sm:$0xff]
        %v515 = vld [vmem:[%s324 + $0x318] sm:$0xff]
        %v516 = vld [vmem:[%s324 + $0x320] sm:$0xff]
        %v517 = vld [vmem:[%s324 + $0x328] sm:$0xff]
        %v518 = vld [vmem:[%s324 + $0x330] sm:$0xff]
        %v519 = vld [vmem:[%s324 + $0x338] sm:$0xff]
        %v520 = vld [vmem:[%s324 + $0x340] sm:$0xff]
        %v521 = vld [vmem:[%s324 + $0x348] sm:$0xff]
        %v522 = vld [vmem:[%s324 + $0x350] sm:$0xff]
        %v523 = vld [vmem:[%s324 + $0x358] sm:$0xff]
        %v524 = vld [vmem:[%s324 + $0x360] sm:$0xff]
        %v525 = vld [vmem:[%s324 + $0x368] sm:$0xff]
        %v526 = vld [vmem:[%s324 + $0x370] sm:$0xff]
        %v527 = vld [vmem:[%s324 + $0x378] sm:$0xff]
        %v528 = vld [vmem:[%s324 + $0x380] sm:$0xff]
        %v529 = vld [vmem:[%s324 + $0x388] sm:$0xff]
        %v530 = vld [vmem:[%s324 + $0x390] sm:$0xff]
        %v531 = vld [vmem:[%s324 + $0x398] sm:$0xff]
        %v532 = vld [vmem:[%s324 + $0x3a0] sm:$0xff]
        %v533 = vld [vmem:[%s324 + $0x3a8] sm:$0xff]
        %v534 = vld [vmem:[%s324 + $0x3b0] sm:$0xff]
        %v535 = vld [vmem:[%s324 + $0x3b8] sm:$0xff]
        %v536 = vld [vmem:[%s324 + $0x3c0] sm:$0xff]
        %v537 = vld [vmem:[%s324 + $0x3c8] sm:$0xff]
        %v538 = vld [vmem:[%s324 + $0x3d0] sm:$0xff]
        %v539 = vld [vmem:[%s324 + $0x3d8] sm:$0xff]
        %v540 = vld [vmem:[%s324 + $0x3e0] sm:$0xff]
        %v541 = vld [vmem:[%s324 + $0x3e8] sm:$0xff]
        %v542 = vld [vmem:[%s324 + $0x3f0] sm:$0xff]
        %v543 = vld [vmem:[%s324 + $0x3f8] sm:$0xff]
        %v544 = vld [vmem:[%s324 + $0x400] sm:$0xff]
        %v545 = vld [vmem:[%s324 + $0x408] sm:$0xff]
        %v546 = vld [vmem:[%s324 + $0x410] sm:$0xff]
        %v547 = vld [vmem:[%s324 + $0x418] sm:$0xff]
        %v548 = vld [vmem:[%s324 + $0x420] sm:$0xff]
        %v549 = vld [vmem:[%s324 + $0x428] sm:$0xff]
        %v550 = vld [vmem:[%s324 + $0x430] sm:$0xff]
        %v551 = vld [vmem:[%s324 + $0x438] sm:$0xff]
        %v552 = vld [vmem:[%s324 + $0x440] sm:$0xff]
        %v553 = vld [vmem:[%s324 + $0x448] sm:$0xff]
        %v554 = vld [vmem:[%s324 + $0x450] sm:$0xff]
        %v555 = vld [vmem:[%s324 + $0x458] sm:$0xff]
        %v556 = vld [vmem:[%s324 + $0x460] sm:$0xff]
        %v557 = vld [vmem:[%s324 + $0x468] sm:$0xff]
        %v558 = vld [vmem:[%s324 + $0x470] sm:$0xff]
        %v559 = vld [vmem:[%s324 + $0x478] sm:$0xff]
        %v560 = vld [vmem:[%s324 + $0x480] sm:$0xff]
        %v561 = vld [vmem:[%s324 + $0x488] sm:$0xff]
        %v562 = vld [vmem:[%s324 + $0x490] sm:$0xff]
        %v563 = vld [vmem:[%s324 + $0x498] sm:$0xff]
        %v564 = vld [vmem:[%s324 + $0x4a0] sm:$0xff]
        %v565 = vld [vmem:[%s324 + $0x4a8] sm:$0xff]
        %v566 = vld [vmem:[%s324 + $0x4b0] sm:$0xff]
        %v567 = vld [vmem:[%s324 + $0x4b8] sm:$0xff]
        %v568 = vld [vmem:[%s324 + $0x4c0] sm:$0xff]
        %v569 = vld [vmem:[%s324 + $0x4c8] sm:$0xff]
        %v570 = vld [vmem:[%s324 + $0x4d0] sm:$0xff]
        %v571 = vld [vmem:[%s324 + $0x4d8] sm:$0xff]
        %v572 = vld [vmem:[%s324 + $0x4e0] sm:$0xff]
        %v573 = vld [vmem:[%s324 + $0x4e8] sm:$0xff]
        %v574 = vld [vmem:[%s324 + $0x4f0] sm:$0xff]
        %v575 = vld [vmem:[%s324 + $0x4f8] sm:$0xff]
        %v576 = vld [vmem:[%s324 + $0x500] sm:$0xff]
        %v577 = vld [vmem:[%s324 + $0x508] sm:$0xff]
        %v578 = vld [vmem:[%s324 + $0x510] sm:$0xff]
        %v579 = vld [vmem:[%s324 + $0x518] sm:$0xff]
        %v580 = vld [vmem:[%s324 + $0x520] sm:$0xff]
        %v581 = vld [vmem:[%s324 + $0x528] sm:$0xff]
        %v582 = vld [vmem:[%s324 + $0x530] sm:$0xff]
        %v583 = vld [vmem:[%s324 + $0x538] sm:$0xff]
        %v584 = vld [vmem:[%s324 + $0x540] sm:$0xff]
        %v585 = vld [vmem:[%s324 + $0x548] sm:$0xff]
        %v586 = vld [vmem:[%s324 + $0x550] sm:$0xff]
        %v587 = vld [vmem:[%s324 + $0x558] sm:$0xff]
        %v588 = vld [vmem:[%s324 + $0x560] sm:$0xff]
        %v589 = vld [vmem:[%s324 + $0x568] sm:$0xff]
        %v590 = vld [vmem:[%s324 + $0x570] sm:$0xff]
        %v591 = vld [vmem:[%s324 + $0x578] sm:$0xff]
        %v592 = vld [vmem:[%s324 + $0x580] sm:$0xff]
        %v593 = vld [vmem:[%s324 + $0x588] sm:$0xff]
        %v594 = vld [vmem:[%s324 + $0x590] sm:$0xff]
        %v595 = vld [vmem:[%s324 + $0x598] sm:$0xff]
        %v596 = vld [vmem:[%s324 + $0x5a0] sm:$0xff]
        %v597 = vld [vmem:[%s324 + $0x5a8] sm:$0xff]
        %v598 = vld [vmem:[%s324 + $0x5b0] sm:$0xff]
        %v599 = vld [vmem:[%s324 + $0x5b8] sm:$0xff]
        %v600 = vld [vmem:[%s324 + $0x5c0] sm:$0xff]
        %v601 = vld [vmem:[%s324 + $0x5c8] sm:$0xff]
        %v602 = vld [vmem:[%s324 + $0x5d0] sm:$0xff]
        %v603 = vld [vmem:[%s324 + $0x5d8] sm:$0xff]
        %v604 = vld [vmem:[%s324 + $0x5e0] sm:$0xff]
        %v605 = vld [vmem:[%s324 + $0x5e8] sm:$0xff]
        %v606 = vld [vmem:[%s324 + $0x5f0] sm:$0xff]
        %v607 = vld [vmem:[%s324 + $0x5f8] sm:$0xff]
        %v608 = vld [vmem:[%s324 + $0x600] sm:$0xff]
        %v609 = vld [vmem:[%s324 + $0x608] sm:$0xff]
        %v610 = vld [vmem:[%s324 + $0x610] sm:$0xff]
        %v611 = vld [vmem:[%s324 + $0x618] sm:$0xff]
        %v612 = vld [vmem:[%s324 + $0x620] sm:$0xff]
        %v613 = vld [vmem:[%s324 + $0x628] sm:$0xff]
        %v614 = vld [vmem:[%s324 + $0x630] sm:$0xff]
        %v615 = vld [vmem:[%s324 + $0x638] sm:$0xff]
        %v616 = vld [vmem:[%s324 + $0x640] sm:$0xff]
        %v617 = vld [vmem:[%s324 + $0x648] sm:$0xff]
        %v618 = vld [vmem:[%s324 + $0x650] sm:$0xff]
        %v619 = vld [vmem:[%s324 + $0x658] sm:$0xff]
        %v620 = vld [vmem:[%s324 + $0x660] sm:$0xff]
        %v621 = vld [vmem:[%s324 + $0x668] sm:$0xff]
        %v622 = vld [vmem:[%s324 + $0x670] sm:$0xff]
        %v623 = vld [vmem:[%s324 + $0x678] sm:$0xff]
        %v624 = vld [vmem:[%s324 + $0x680] sm:$0xff]
        %v625 = vld [vmem:[%s324 + $0x688] sm:$0xff]
        %v626 = vld [vmem:[%s324 + $0x690] sm:$0xff]
        %v627 = vld [vmem:[%s324 + $0x698] sm:$0xff]
        %v628 = vld [vmem:[%s324 + $0x6a0] sm:$0xff]
        %v629 = vld [vmem:[%s324 + $0x6a8] sm:$0xff]
        %v630 = vld [vmem:[%s324 + $0x6b0] sm:$0xff]
        %v631 = vld [vmem:[%s324 + $0x6b8] sm:$0xff]
        %v632 = vld [vmem:[%s324 + $0x6c0] sm:$0xff]
        %v633 = vld [vmem:[%s324 + $0x6c8] sm:$0xff]
        %v634 = vld [vmem:[%s324 + $0x6d0] sm:$0xff]
        %v635 = vld [vmem:[%s324 + $0x6d8] sm:$0xff]
        %v636 = vld [vmem:[%s324 + $0x6e0] sm:$0xff]
        %v637 = vld [vmem:[%s324 + $0x6e8] sm:$0xff]
        %v638 = vld [vmem:[%s324 + $0x6f0] sm:$0xff]
        %v639 = vld [vmem:[%s324 + $0x6f8] sm:$0xff]
        %v640 = vld [vmem:[%s324 + $0x700] sm:$0xff]
        %v641 = vld [vmem:[%s324 + $0x708] sm:$0xff]
        %v642 = vld [vmem:[%s324 + $0x710] sm:$0xff]
        %v643 = vld [vmem:[%s324 + $0x718] sm:$0xff]
        %v644 = vld [vmem:[%s324 + $0x720] sm:$0xff]
        %v645 = vld [vmem:[%s324 + $0x728] sm:$0xff]
        %v646 = vld [vmem:[%s324 + $0x730] sm:$0xff]
        %v647 = vld [vmem:[%s324 + $0x738] sm:$0xff]
        %v648 = vld [vmem:[%s324 + $0x740] sm:$0xff]
        %v649 = vld [vmem:[%s324 + $0x748] sm:$0xff]
        %v650 = vld [vmem:[%s324 + $0x750] sm:$0xff]
        %v651 = vld [vmem:[%s324 + $0x758] sm:$0xff]
        %v652 = vld [vmem:[%s324 + $0x760] sm:$0xff]
        %v653 = vld [vmem:[%s324 + $0x768] sm:$0xff]
        %v654 = vld [vmem:[%s324 + $0x770] sm:$0xff]
        %v655 = vld [vmem:[%s324 + $0x778] sm:$0xff]
        %v656 = vld [vmem:[%s324 + $0x780] sm:$0xff]
        %v657 = vld [vmem:[%s324 + $0x788] sm:$0xff]
        %v658 = vld [vmem:[%s324 + $0x790] sm:$0xff]
        %v659 = vld [vmem:[%s324 + $0x798] sm:$0xff]
        %v660 = vld [vmem:[%s324 + $0x7a0] sm:$0xff]
        %v661 = vld [vmem:[%s324 + $0x7a8] sm:$0xff]
        %v662 = vld [vmem:[%s324 + $0x7b0] sm:$0xff]
        %v663 = vld [vmem:[%s324 + $0x7b8] sm:$0xff]
        %v664 = vld [vmem:[%s324 + $0x7c0] sm:$0xff]
        %v665 = vld [vmem:[%s324 + $0x7c8] sm:$0xff]
        %v666 = vld [vmem:[%s324 + $0x7d0] sm:$0xff]
        %v667 = vld [vmem:[%s324 + $0x7d8] sm:$0xff]
        %v668 = vld [vmem:[%s324 + $0x7e0] sm:$0xff]
        %v669 = vld [vmem:[%s324 + $0x7e8] sm:$0xff]
        %v670 = vld [vmem:[%s324 + $0x7f0] sm:$0xff]
        %v671 = vld [vmem:[%s324 + $0x7f8] sm:$0xff]
        %v672 = vld [vmem:[%s324 + $0x800] sm:$0xff]
        %v673 = vld [vmem:[%s324 + $0x808] sm:$0xff]
        %v674 = vld [vmem:[%s324 + $0x810] sm:$0xff]
        %v675 = vld [vmem:[%s324 + $0x818] sm:$0xff]
        %v676 = vld [vmem:[%s324 + $0x820] sm:$0xff]
        %v677 = vld [vmem:[%s324 + $0x828] sm:$0xff]
        %v678 = vld [vmem:[%s324 + $0x830] sm:$0xff]
        %v679 = vld [vmem:[%s324 + $0x838] sm:$0xff]
        %v680 = vld [vmem:[%s324 + $0x840] sm:$0xff]
        %v681 = vld [vmem:[%s324 + $0x848] sm:$0xff]
        %v682 = vld [vmem:[%s324 + $0x850] sm:$0xff]
        %v683 = vld [vmem:[%s324 + $0x858] sm:$0xff]
        %v684 = vld [vmem:[%s324 + $0x860] sm:$0xff]
        %v685 = vld [vmem:[%s324 + $0x868] sm:$0xff]
        %v686 = vld [vmem:[%s324 + $0x870] sm:$0xff]
        %v687 = vld [vmem:[%s324 + $0x878] sm:$0xff]
        %v688 = vld [vmem:[%s324 + $0x880] sm:$0xff]
        %v689 = vld [vmem:[%s324 + $0x888] sm:$0xff]
        %v690 = vld [vmem:[%s324 + $0x890] sm:$0xff]
        %v691 = vld [vmem:[%s324 + $0x898] sm:$0xff]
        %v692 = vld [vmem:[%s324 + $0x8a0] sm:$0xff]
        %v693 = vld [vmem:[%s324 + $0x8a8] sm:$0xff]
        %v694 = vld [vmem:[%s324 + $0x8b0] sm:$0xff]
        %v695 = vld [vmem:[%s324 + $0x8b8] sm:$0xff]
        %v696 = vld [vmem:[%s324 + $0x8c0] sm:$0xff]
        %v697 = vld [vmem:[%s324 + $0x8c8] sm:$0xff]
        %v698 = vld [vmem:[%s324 + $0x8d0] sm:$0xff]
        %v699 = vld [vmem:[%s324 + $0x8d8] sm:$0xff]
        %v700 = vld [vmem:[%s324 + $0x8e0] sm:$0xff]
        %v701 = vld [vmem:[%s324 + $0x8e8] sm:$0xff]
        %v702 = vld [vmem:[%s324 + $0x8f0] sm:$0xff]
        %v703 = vld [vmem:[%s324 + $0x8f8] sm:$0xff]
        %v704 = vld [vmem:[%s324 + $0x900] sm:$0xff]
        %v705 = vld [vmem:[%s324 + $0x908] sm:$0xff]
        %v706 = vld [vmem:[%s324 + $0x910] sm:$0xff]
        %v707 = vld [vmem:[%s324 + $0x918] sm:$0xff]
        %v708 = vld [vmem:[%s324 + $0x920] sm:$0xff]
        %v709 = vld [vmem:[%s324 + $0x928] sm:$0xff]
        %v710 = vld [vmem:[%s324 + $0x930] sm:$0xff]
        %v711 = vld [vmem:[%s324 + $0x938] sm:$0xff]
        %v712 = vld [vmem:[%s324 + $0x940] sm:$0xff]
        %v713 = vld [vmem:[%s324 + $0x948] sm:$0xff]
        %v714 = vld [vmem:[%s324 + $0x950] sm:$0xff]
        %v715 = vld [vmem:[%s324 + $0x958] sm:$0xff]
        %v716 = vld [vmem:[%s324 + $0x960] sm:$0xff]
        %v717 = vld [vmem:[%s324 + $0x968] sm:$0xff]
        %v718 = vld [vmem:[%s324 + $0x970] sm:$0xff]
        %v719 = vld [vmem:[%s324 + $0x978] sm:$0xff]
        %v720 = vld [vmem:[%s324 + $0x980] sm:$0xff]
        %v721 = vld [vmem:[%s324 + $0x988] sm:$0xff]
        %v722 = vld [vmem:[%s324 + $0x990] sm:$0xff]
        %v723 = vld [vmem:[%s324 + $0x998] sm:$0xff]
        %v724 = vld [vmem:[%s324 + $0x9a0] sm:$0xff]
        %v725 = vld [vmem:[%s324 + $0x9a8] sm:$0xff]
        %v726 = vld [vmem:[%s324 + $0x9b0] sm:$0xff]
        %v727 = vld [vmem:[%s324 + $0x9b8] sm:$0xff]
        %v728 = vld [vmem:[%s324 + $0x9c0] sm:$0xff]
        %v729 = vld [vmem:[%s324 + $0x9c8] sm:$0xff]
        %v730 = vld [vmem:[%s324 + $0x9d0] sm:$0xff]
        %v731 = vld [vmem:[%s324 + $0x9d8] sm:$0xff]
        %v732 = vld [vmem:[%s324 + $0x9e0] sm:$0xff]
        %v733 = vld [vmem:[%s324 + $0x9e8] sm:$0xff]
        %v734 = vld [vmem:[%s324 + $0x9f0] sm:$0xff]
        %v735 = vld [vmem:[%s324 + $0x9f8] sm:$0xff]
        %v736 = vld [vmem:[%s324 + $0xa00] sm:$0xff]
        %v737 = vld [vmem:[%s324 + $0xa08] sm:$0xff]
        %v738 = vld [vmem:[%s324 + $0xa10] sm:$0xff]
        %v739 = vld [vmem:[%s324 + $0xa18] sm:$0xff]
        %v740 = vld [vmem:[%s324 + $0xa20] sm:$0xff]
        %v741 = vld [vmem:[%s324 + $0xa28] sm:$0xff]
        %v742 = vld [vmem:[%s324 + $0xa30] sm:$0xff]
        %v743 = vld [vmem:[%s324 + $0xa38] sm:$0xff]
        %v744 = vld [vmem:[%s324 + $0xa40] sm:$0xff]
        %v745 = vld [vmem:[%s324 + $0xa48] sm:$0xff]
        %v746 = vld [vmem:[%s324 + $0xa50] sm:$0xff]
        %v747 = vld [vmem:[%s324 + $0xa58] sm:$0xff]
        %v748 = vld [vmem:[%s324 + $0xa60] sm:$0xff]
        %v749 = vld [vmem:[%s324 + $0xa68] sm:$0xff]
        %v750 = vld [vmem:[%s324 + $0xa70] sm:$0xff]
        %v751 = vld [vmem:[%s324 + $0xa78] sm:$0xff]
        %v752 = vld [vmem:[%s324 + $0xa80] sm:$0xff]
        %v753 = vld [vmem:[%s324 + $0xa88] sm:$0xff]
        %v754 = vld [vmem:[%s324 + $0xa90] sm:$0xff]
        %v755 = vld [vmem:[%s324 + $0xa98] sm:$0xff]
        %v756 = vld [vmem:[%s324 + $0xaa0] sm:$0xff]
        %v757 = vld [vmem:[%s324 + $0xaa8] sm:$0xff]
        %v758 = vld [vmem:[%s324 + $0xab0] sm:$0xff]
        %v759 = vld [vmem:[%s324 + $0xab8] sm:$0xff]
        %v760 = vld [vmem:[%s324 + $0xac0] sm:$0xff]
        %v761 = vld [vmem:[%s324 + $0xac8] sm:$0xff]
        %v762 = vld [vmem:[%s324 + $0xad0] sm:$0xff]
        %v763 = vld [vmem:[%s324 + $0xad8] sm:$0xff]
        %v764 = vld [vmem:[%s324 + $0xae0] sm:$0xff]
        %v765 = vld [vmem:[%s324 + $0xae8] sm:$0xff]
        %v766 = vld [vmem:[%s324 + $0xaf0] sm:$0xff]
        %v767 = vld [vmem:[%s324 + $0xaf8] sm:$0xff]
        %v768 = vld [vmem:[%s324 + $0xb00] sm:$0xff]
        %v769 = vld [vmem:[%s324 + $0xb08] sm:$0xff]
        %v770 = vld [vmem:[%s324 + $0xb10] sm:$0xff]
        %v771 = vld [vmem:[%s324 + $0xb18] sm:$0xff]
        %v772 = vld [vmem:[%s324 + $0xb20] sm:$0xff]
        %v773 = vld [vmem:[%s324 + $0xb28] sm:$0xff]
        %v774 = vld [vmem:[%s324 + $0xb30] sm:$0xff]
        %v775 = vld [vmem:[%s324 + $0xb38] sm:$0xff]
        %v776 = vld [vmem:[%s324 + $0xb40] sm:$0xff]
        %v777 = vld [vmem:[%s324 + $0xb48] sm:$0xff]
        %v778 = vld [vmem:[%s324 + $0xb50] sm:$0xff]
        %v779 = vld [vmem:[%s324 + $0xb58] sm:$0xff]
        %v780 = vld [vmem:[%s324 + $0xb60] sm:$0xff]
        %v781 = vld [vmem:[%s324 + $0xb68] sm:$0xff]
        %v782 = vld [vmem:[%s324 + $0xb70] sm:$0xff]
        %v783 = vld [vmem:[%s324 + $0xb78] sm:$0xff]
        %v784 = vld [vmem:[%s324 + $0xb80] sm:$0xff]
        %v785 = vld [vmem:[%s324 + $0xb88] sm:$0xff]
        %v786 = vld [vmem:[%s324 + $0xb90] sm:$0xff]
        %v787 = vld [vmem:[%s324 + $0xb98] sm:$0xff]
        %v788 = vld [vmem:[%s324 + $0xba0] sm:$0xff]
        %v789 = vld [vmem:[%s324 + $0xba8] sm:$0xff]
        %v790 = vld [vmem:[%s324 + $0xbb0] sm:$0xff]
        %v791 = vld [vmem:[%s324 + $0xbb8] sm:$0xff]
        %v792 = vld [vmem:[%s324 + $0xbc0] sm:$0xff]
        %v793 = vld [vmem:[%s324 + $0xbc8] sm:$0xff]
        %v794 = vld [vmem:[%s324 + $0xbd0] sm:$0xff]
        %v795 = vld [vmem:[%s324 + $0xbd8] sm:$0xff]
        %v796 = vld [vmem:[%s324 + $0xbe0] sm:$0xff]
        %v797 = vld [vmem:[%s324 + $0xbe8] sm:$0xff]
        %v798 = vld [vmem:[%s324 + $0xbf0] sm:$0xff]
        %v799 = vld [vmem:[%s324 + $0xbf8] sm:$0xff]
        %v800 = vld [vmem:[%s324 + $0xc00] sm:$0xff]
        %v801 = vld [vmem:[%s324 + $0xc08] sm:$0xff]
        %v802 = vld [vmem:[%s324 + $0xc10] sm:$0xff]
        %v803 = vld [vmem:[%s324 + $0xc18] sm:$0xff]
        %v804 = vld [vmem:[%s324 + $0xc20] sm:$0xff]
        %v805 = vld [vmem:[%s324 + $0xc28] sm:$0xff]
        %v806 = vld [vmem:[%s324 + $0xc30] sm:$0xff]
        %v807 = vld [vmem:[%s324 + $0xc38] sm:$0xff]
        %v808 = vld [vmem:[%s324 + $0xc40] sm:$0xff]
        %v809 = vld [vmem:[%s324 + $0xc48] sm:$0xff]
        %v810 = vld [vmem:[%s324 + $0xc50] sm:$0xff]
        %v811 = vld [vmem:[%s324 + $0xc58] sm:$0xff]
        %v812 = vld [vmem:[%s324 + $0xc60] sm:$0xff]
        %v813 = vld [vmem:[%s324 + $0xc68] sm:$0xff]
        %v814 = vld [vmem:[%s324 + $0xc70] sm:$0xff]
        %v815 = vld [vmem:[%s324 + $0xc78] sm:$0xff]
        %v816 = vld [vmem:[%s324 + $0xc80] sm:$0xff]
        %v817 = vld [vmem:[%s324 + $0xc88] sm:$0xff]
        %v818 = vld [vmem:[%s324 + $0xc90] sm:$0xff]
        %v819 = vld [vmem:[%s324 + $0xc98] sm:$0xff]
        %v820 = vld [vmem:[%s324 + $0xca0] sm:$0xff]
        %v821 = vld [vmem:[%s324 + $0xca8] sm:$0xff]
        %v822 = vld [vmem:[%s324 + $0xcb0] sm:$0xff]
        %v823 = vld [vmem:[%s324 + $0xcb8] sm:$0xff]
        %v824 = vld [vmem:[%s324 + $0xcc0] sm:$0xff]
        %v825 = vld [vmem:[%s324 + $0xcc8] sm:$0xff]
        %v826 = vld [vmem:[%s324 + $0xcd0] sm:$0xff]
        %v827 = vld [vmem:[%s324 + $0xcd8] sm:$0xff]
        %v828 = vld [vmem:[%s324 + $0xce0] sm:$0xff]
        %v829 = vld [vmem:[%s324 + $0xce8] sm:$0xff]
        %v830 = vld [vmem:[%s324 + $0xcf0] sm:$0xff]
        %v831 = vld [vmem:[%s324 + $0xcf8] sm:$0xff]
        %v832 = vld [vmem:[%s324 + $0xd00] sm:$0xff]
        %v833 = vld [vmem:[%s324 + $0xd08] sm:$0xff]
        %v834 = vld [vmem:[%s324 + $0xd10] sm:$0xff]
        %v835 = vld [vmem:[%s324 + $0xd18] sm:$0xff]
        %v836 = vld [vmem:[%s324 + $0xd20] sm:$0xff]
        %v837 = vld [vmem:[%s324 + $0xd28] sm:$0xff]
        %v838 = vld [vmem:[%s324 + $0xd30] sm:$0xff]
        %v839 = vld [vmem:[%s324 + $0xd38] sm:$0xff]
        %v840 = vld [vmem:[%s324 + $0xd40] sm:$0xff]
        %v841 = vld [vmem:[%s324 + $0xd48] sm:$0xff]
        %v842 = vld [vmem:[%s324 + $0xd50] sm:$0xff]
        %v843 = vld [vmem:[%s324 + $0xd58] sm:$0xff]
        %v844 = vld [vmem:[%s324 + $0xd60] sm:$0xff]
        %v845 = vld [vmem:[%s324 + $0xd68] sm:$0xff]
        %v846 = vld [vmem:[%s324 + $0xd70] sm:$0xff]
        %v847 = vld [vmem:[%s324 + $0xd78] sm:$0xff]
        %v848 = vld [vmem:[%s324 + $0xd80] sm:$0xff]
        %v849 = vld [vmem:[%s324 + $0xd88] sm:$0xff]
        %v850 = vld [vmem:[%s324 + $0xd90] sm:$0xff]
        %v851 = vld [vmem:[%s324 + $0xd98] sm:$0xff]
        %v852 = vld [vmem:[%s324 + $0xda0] sm:$0xff]
        %v853 = vld [vmem:[%s324 + $0xda8] sm:$0xff]
        %v854 = vld [vmem:[%s324 + $0xdb0] sm:$0xff]
        %v855 = vld [vmem:[%s324 + $0xdb8] sm:$0xff]
        %v856 = vld [vmem:[%s324 + $0xdc0] sm:$0xff]
        %v857 = vld [vmem:[%s324 + $0xdc8] sm:$0xff]
        %v858 = vld [vmem:[%s324 + $0xdd0] sm:$0xff]
        %v859 = vld [vmem:[%s324 + $0xdd8] sm:$0xff]
        %v860 = vld [vmem:[%s324 + $0xde0] sm:$0xff]
        %v861 = vld [vmem:[%s324 + $0xde8] sm:$0xff]
        %v862 = vld [vmem:[%s324 + $0xdf0] sm:$0xff]
        %v863 = vld [vmem:[%s324 + $0xdf8] sm:$0xff]
        %v864 = vld [vmem:[%s324 + $0xe00] sm:$0xff]
        %v865 = vld [vmem:[%s324 + $0xe08] sm:$0xff]
        %v866 = vld [vmem:[%s324 + $0xe10] sm:$0xff]
        %v867 = vld [vmem:[%s324 + $0xe18] sm:$0xff]
        %v868 = vld [vmem:[%s324 + $0xe20] sm:$0xff]
        %v869 = vld [vmem:[%s324 + $0xe28] sm:$0xff]
        %v870 = vld [vmem:[%s324 + $0xe30] sm:$0xff]
        %v871 = vld [vmem:[%s324 + $0xe38] sm:$0xff]
        %v872 = vld [vmem:[%s324 + $0xe40] sm:$0xff]
        %v873 = vld [vmem:[%s324 + $0xe48] sm:$0xff]
        %v874 = vld [vmem:[%s324 + $0xe50] sm:$0xff]
        %v875 = vld [vmem:[%s324 + $0xe58] sm:$0xff]
        %v876 = vld [vmem:[%s324 + $0xe60] sm:$0xff]
        %v877 = vld [vmem:[%s324 + $0xe68] sm:$0xff]
        %v878 = vld [vmem:[%s324 + $0xe70] sm:$0xff]
        %v879 = vld [vmem:[%s324 + $0xe78] sm:$0xff]
        %v880 = vld [vmem:[%s324 + $0xe80] sm:$0xff]
        %v881 = vld [vmem:[%s324 + $0xe88] sm:$0xff]
        %v882 = vld [vmem:[%s324 + $0xe90] sm:$0xff]
        %v883 = vld [vmem:[%s324 + $0xe98] sm:$0xff]
        %v884 = vld [vmem:[%s324 + $0xea0] sm:$0xff]
        %v885 = vld [vmem:[%s324 + $0xea8] sm:$0xff]
        %v886 = vld [vmem:[%s324 + $0xeb0] sm:$0xff]
        %v887 = vld [vmem:[%s324 + $0xeb8] sm:$0xff]
        %v888 = vld [vmem:[%s324 + $0xec0] sm:$0xff]
        %v889 = vld [vmem:[%s324 + $0xec8] sm:$0xff]
        %v890 = vld [vmem:[%s324 + $0xed0] sm:$0xff]
        %v891 = vld [vmem:[%s324 + $0xed8] sm:$0xff]
        %v892 = vld [vmem:[%s324 + $0xee0] sm:$0xff]
        %v893 = vld [vmem:[%s324 + $0xee8] sm:$0xff]
        %v894 = vld [vmem:[%s324 + $0xef0] sm:$0xff]
        %v895 = vld [vmem:[%s324 + $0xef8] sm:$0xff]
        %v896 = vld [vmem:[%s324 + $0xf00] sm:$0xff]
        %v897 = vld [vmem:[%s324 + $0xf08] sm:$0xff]
        %v898 = vld [vmem:[%s324 + $0xf10] sm:$0xff]
        %v899 = vld [vmem:[%s324 + $0xf18] sm:$0xff]
        %v900 = vld [vmem:[%s324 + $0xf20] sm:$0xff]
        %v901 = vld [vmem:[%s324 + $0xf28] sm:$0xff]
        %v902 = vld [vmem:[%s324 + $0xf30] sm:$0xff]
        %v903 = vld [vmem:[%s324 + $0xf38] sm:$0xff]
        %v904 = vld [vmem:[%s324 + $0xf40] sm:$0xff]
        %v905 = vld [vmem:[%s324 + $0xf48] sm:$0xff]
        %v906 = vld [vmem:[%s324 + $0xf50] sm:$0xff]
        %v907 = vld [vmem:[%s324 + $0xf58] sm:$0xff]
        %v908 = vld [vmem:[%s324 + $0xf60] sm:$0xff]
        %v909 = vld [vmem:[%s324 + $0xf68] sm:$0xff]
        %v910 = vld [vmem:[%s324 + $0xf70] sm:$0xff]
        %v911 = vld [vmem:[%s324 + $0xf78] sm:$0xff]
        %v912 = vld [vmem:[%s324 + $0xf80] sm:$0xff]
        %v913 = vld [vmem:[%s324 + $0xf88] sm:$0xff]
        %v914 = vld [vmem:[%s324 + $0xf90] sm:$0xff]
        %v915 = vld [vmem:[%s324 + $0xf98] sm:$0xff]
        %v916 = vld [vmem:[%s324 + $0xfa0] sm:$0xff]
        %v917 = vld [vmem:[%s324 + $0xfa8] sm:$0xff]
        %v918 = vld [vmem:[%s324 + $0xfb0] sm:$0xff]
        %v919 = vld [vmem:[%s324 + $0xfb8] sm:$0xff]
        %v920 = vld [vmem:[%s324 + $0xfc0] sm:$0xff]
        %v921 = vld [vmem:[%s324 + $0xfc8] sm:$0xff]
        %v922 = vld [vmem:[%s324 + $0xfd0] sm:$0xff]
        %v923 = vld [vmem:[%s324 + $0xfd8] sm:$0xff]
        %v924 = vld [vmem:[%s324 + $0xfe0] sm:$0xff]
        %v925 = vld [vmem:[%s324 + $0xfe8] sm:$0xff]
        %v926 = vld [vmem:[%s324 + $0xff0] sm:$0xff]
        %v927 = vld [vmem:[%s324 + $0xff8] sm:$0xff]
        %v928 = vld [vmem:[%s324 + $0x1000] sm:$0xff]
        %v929 = vld [vmem:[%s324 + $0x1008] sm:$0xff]
        %v930 = vld [vmem:[%s324 + $0x1010] sm:$0xff]
        %v931 = vld [vmem:[%s324 + $0x1018] sm:$0xff]
        %v932 = vld [vmem:[%s324 + $0x1020] sm:$0xff]
        %v933 = vld [vmem:[%s324 + $0x1028] sm:$0xff]
        %v934 = vld [vmem:[%s324 + $0x1030] sm:$0xff]
        %v935 = vld [vmem:[%s324 + $0x1038] sm:$0xff]
        %v936 = vld [vmem:[%s324 + $0x1040] sm:$0xff]
        %v937 = vld [vmem:[%s324 + $0x1048] sm:$0xff]
        %v938 = vld [vmem:[%s324 + $0x1050] sm:$0xff]
        %v939 = vld [vmem:[%s324 + $0x1058] sm:$0xff]
        %v940 = vld [vmem:[%s324 + $0x1060] sm:$0xff]
        %v941 = vld [vmem:[%s324 + $0x1068] sm:$0xff]
        %v942 = vld [vmem:[%s324 + $0x1070] sm:$0xff]
        %v943 = vld [vmem:[%s324 + $0x1078] sm:$0xff]
        %v944 = vld [vmem:[%s324 + $0x1080] sm:$0xff]
        %v945 = vld [vmem:[%s324 + $0x1088] sm:$0xff]
        %v946 = vld [vmem:[%s324 + $0x1090] sm:$0xff]
        %v947 = vld [vmem:[%s324 + $0x1098] sm:$0xff]
        %v948 = vld [vmem:[%s324 + $0x10a0] sm:$0xff]
        %v949 = vld [vmem:[%s324 + $0x10a8] sm:$0xff]
        %v950 = vld [vmem:[%s324 + $0x10b0] sm:$0xff]
        %v951 = vld [vmem:[%s324 + $0x10b8] sm:$0xff]
        %v952 = vld [vmem:[%s324 + $0x10c0] sm:$0xff]
        %v953 = vld [vmem:[%s324 + $0x10c8] sm:$0xff]
        %v954 = vld [vmem:[%s324 + $0x10d0] sm:$0xff]
        %v955 = vld [vmem:[%s324 + $0x10d8] sm:$0xff]
        %v956 = vld [vmem:[%s324 + $0x10e0] sm:$0xff]
        %v957 = vld [vmem:[%s324 + $0x10e8] sm:$0xff]
        %v958 = vld [vmem:[%s324 + $0x10f0] sm:$0xff]
        %v959 = vld [vmem:[%s324 + $0x10f8] sm:$0xff]
        %v960 = vld [vmem:[%s324 + $0x1100] sm:$0xff]
        %v961 = vld [vmem:[%s324 + $0x1108] sm:$0xff]
        %v962 = vld [vmem:[%s324 + $0x1110] sm:$0xff]
        %v963 = vld [vmem:[%s324 + $0x1118] sm:$0xff]
        %v964 = vld [vmem:[%s324 + $0x1120] sm:$0xff]
        %v965 = vld [vmem:[%s324 + $0x1128] sm:$0xff]
        %v966 = vld [vmem:[%s324 + $0x1130] sm:$0xff]
        %v967 = vld [vmem:[%s324 + $0x1138] sm:$0xff]
        %v968 = vld [vmem:[%s324 + $0x1140] sm:$0xff]
        %v969 = vld [vmem:[%s324 + $0x1148] sm:$0xff]
        %v970 = vld [vmem:[%s324 + $0x1150] sm:$0xff]
        %v971 = vld [vmem:[%s324 + $0x1158] sm:$0xff]
        %v972 = vld [vmem:[%s324 + $0x1160] sm:$0xff]
        %v973 = vld [vmem:[%s324 + $0x1168] sm:$0xff]
        %v974 = vld [vmem:[%s324 + $0x1170] sm:$0xff]
        %v975 = vld [vmem:[%s324 + $0x1178] sm:$0xff]
        %v976 = vld [vmem:[%s324 + $0x1180] sm:$0xff]
        %v977 = vld [vmem:[%s324 + $0x1188] sm:$0xff]
        %v978 = vld [vmem:[%s324 + $0x1190] sm:$0xff]
        %v979 = vld [vmem:[%s324 + $0x1198] sm:$0xff]
        %v980 = vld [vmem:[%s324 + $0x11a0] sm:$0xff]
        %v981 = vld [vmem:[%s324 + $0x11a8] sm:$0xff]
        %v982 = vld [vmem:[%s324 + $0x11b0] sm:$0xff]
        %v983 = vld [vmem:[%s324 + $0x11b8] sm:$0xff]
        %v984 = vld [vmem:[%s324 + $0x11c0] sm:$0xff]
        %v985 = vld [vmem:[%s324 + $0x11c8] sm:$0xff]
        %v986 = vld [vmem:[%s324 + $0x11d0] sm:$0xff]
        %v987 = vld [vmem:[%s324 + $0x11d8] sm:$0xff]
        %v988 = vld [vmem:[%s324 + $0x11e0] sm:$0xff]
        %v989 = vld [vmem:[%s324 + $0x11e8] sm:$0xff]
        %v990 = vld [vmem:[%s324 + $0x11f0] sm:$0xff]
        %v991 = vld [vmem:[%s324 + $0x11f8] sm:$0xff]
        %v992 = vld [vmem:[%s324 + $0x1200] sm:$0xff]
        %v993 = vld [vmem:[%s324 + $0x1208] sm:$0xff]
        %v994 = vld [vmem:[%s324 + $0x1210] sm:$0xff]
        %v995 = vld [vmem:[%s324 + $0x1218] sm:$0xff]
        %v996 = vld [vmem:[%s324 + $0x1220] sm:$0xff]
        %v997 = vld [vmem:[%s324 + $0x1228] sm:$0xff]
        %v998 = vld [vmem:[%s324 + $0x1230] sm:$0xff]
        %v999 = vld [vmem:[%s324 + $0x1238] sm:$0xff]
        %v1000 = vld [vmem:[%s324 + $0x1240] sm:$0xff]
        %v1001 = vld [vmem:[%s324 + $0x1248] sm:$0xff]
        %v1002 = vld [vmem:[%s324 + $0x1250] sm:$0xff]
        %v1003 = vld [vmem:[%s324 + $0x1258] sm:$0xff]
        %v1004 = vld [vmem:[%s324 + $0x1260] sm:$0xff]
        %v1005 = vld [vmem:[%s324 + $0x1268] sm:$0xff]
        %v1006 = vld [vmem:[%s324 + $0x1270] sm:$0xff]
        %v1007 = vld [vmem:[%s324 + $0x1278] sm:$0xff]
        %v1008 = vld [vmem:[%s324 + $0x1280] sm:$0xff]
        %v1009 = vld [vmem:[%s324 + $0x1288] sm:$0xff]
        %v1010 = vld [vmem:[%s324 + $0x1290] sm:$0xff]
        %v1011 = vld [vmem:[%s324 + $0x1298] sm:$0xff]
        %v1012 = vld [vmem:[%s324 + $0x12a0] sm:$0xff]
        %v1013 = vld [vmem:[%s324 + $0x12a8] sm:$0xff]
        %v1014 = vld [vmem:[%s324 + $0x12b0] sm:$0xff]
        %v1015 = vld [vmem:[%s324 + $0x12b8] sm:$0xff]
        %v1016 = vld [vmem:[%s324 + $0x12c0] sm:$0xff]
        %v1017 = vld [vmem:[%s324 + $0x12c8] sm:$0xff]
        %v1018 = vld [vmem:[%s324 + $0x12d0] sm:$0xff]
        %v1019 = vld [vmem:[%s324 + $0x12d8] sm:$0xff]
        %v1020 = vld [vmem:[%s324 + $0x12e0] sm:$0xff]
        %v1021 = vld [vmem:[%s324 + $0x12e8] sm:$0xff]
        %v1022 = vld [vmem:[%s324 + $0x12f0] sm:$0xff]
        %v1023 = vld [vmem:[%s324 + $0x12f8] sm:$0xff]
        %v1024 = vld [vmem:[%s324 + $0x1300] sm:$0xff]
        %v1025 = vld [vmem:[%s324 + $0x1308] sm:$0xff]
        %v1026 = vld [vmem:[%s324 + $0x1310] sm:$0xff]
        %v1027 = vld [vmem:[%s324 + $0x1318] sm:$0xff]
        %v1028 = vld [vmem:[%s324 + $0x1320] sm:$0xff]
        %v1029 = vld [vmem:[%s324 + $0x1328] sm:$0xff]
        %v1030 = vld [vmem:[%s324 + $0x1330] sm:$0xff]
        %v1031 = vld [vmem:[%s324 + $0x1338] sm:$0xff]
        %v1032 = vld [vmem:[%s324 + $0x1340] sm:$0xff]
        %v1033 = vld [vmem:[%s324 + $0x1348] sm:$0xff]
        %v1034 = vld [vmem:[%s324 + $0x1350] sm:$0xff]
        %v1035 = vld [vmem:[%s324 + $0x1358] sm:$0xff]
        %v1036 = vld [vmem:[%s324 + $0x1360] sm:$0xff]
        %v1037 = vld [vmem:[%s324 + $0x1368] sm:$0xff]
        %v1038 = vld [vmem:[%s324 + $0x1370] sm:$0xff]
        %v1039 = vld [vmem:[%s324 + $0x1378] sm:$0xff]
        %v1040 = vld [vmem:[%s324 + $0x1380] sm:$0xff]
        %v1041 = vld [vmem:[%s324 + $0x1388] sm:$0xff]
        %v1042 = vld [vmem:[%s324 + $0x1390] sm:$0xff]
        %v1043 = vld [vmem:[%s324 + $0x1398] sm:$0xff]
        %v1044 = vld [vmem:[%s324 + $0x13a0] sm:$0xff]
        %v1045 = vld [vmem:[%s324 + $0x13a8] sm:$0xff]
        %v1046 = vld [vmem:[%s324 + $0x13b0] sm:$0xff]
        %v1047 = vld [vmem:[%s324 + $0x13b8] sm:$0xff]
        %v1048 = vld [vmem:[%s324 + $0x13c0] sm:$0xff]
        %v1049 = vld [vmem:[%s324 + $0x13c8] sm:$0xff]
        %v1050 = vld [vmem:[%s324 + $0x13d0] sm:$0xff]
        %v1051 = vld [vmem:[%s324 + $0x13d8] sm:$0xff]
        %v1052 = vld [vmem:[%s324 + $0x13e0] sm:$0xff]
        %v1053 = vld [vmem:[%s324 + $0x13e8] sm:$0xff]
        %v1054 = vld [vmem:[%s324 + $0x13f0] sm:$0xff]
        %v1055 = vld [vmem:[%s324 + $0x13f8] sm:$0xff]
        %v1056 = vld [vmem:[%s324 + $0x1400] sm:$0xff]
        %v1057 = vld [vmem:[%s324 + $0x1408] sm:$0xff]
        %v1058 = vld [vmem:[%s324 + $0x1410] sm:$0xff]
        %v1059 = vld [vmem:[%s324 + $0x1418] sm:$0xff]
        %v1060 = vld [vmem:[%s324 + $0x1420] sm:$0xff]
        %v1061 = vld [vmem:[%s324 + $0x1428] sm:$0xff]
        %v1062 = vld [vmem:[%s324 + $0x1430] sm:$0xff]
        %v1063 = vld [vmem:[%s324 + $0x1438] sm:$0xff]
        %v1064 = vld [vmem:[%s324 + $0x1440] sm:$0xff]
        %v1065 = vld [vmem:[%s324 + $0x1448] sm:$0xff]
        %v1066 = vld [vmem:[%s324 + $0x1450] sm:$0xff]
        %v1067 = vld [vmem:[%s324 + $0x1458] sm:$0xff]
        %v1068 = vld [vmem:[%s324 + $0x1460] sm:$0xff]
        %v1069 = vld [vmem:[%s324 + $0x1468] sm:$0xff]
        %v1070 = vld [vmem:[%s324 + $0x1470] sm:$0xff]
        %v1071 = vld [vmem:[%s324 + $0x1478] sm:$0xff]
        %v1072 = vld [vmem:[%s324 + $0x1480] sm:$0xff]
        %v1073 = vld [vmem:[%s324 + $0x1488] sm:$0xff]
        %v1074 = vld [vmem:[%s324 + $0x1490] sm:$0xff]
        %v1075 = vld [vmem:[%s324 + $0x1498] sm:$0xff]
        %v1076 = vld [vmem:[%s324 + $0x14a0] sm:$0xff]
        %v1077 = vld [vmem:[%s324 + $0x14a8] sm:$0xff]
        %v1078 = vld [vmem:[%s324 + $0x14b0] sm:$0xff]
        %v1079 = vld [vmem:[%s324 + $0x14b8] sm:$0xff]
        %v1080 = vld [vmem:[%s324 + $0x14c0] sm:$0xff]
        %v1081 = vld [vmem:[%s324 + $0x14c8] sm:$0xff]
        %v1082 = vld [vmem:[%s324 + $0x14d0] sm:$0xff]
        %v1083 = vld [vmem:[%s324 + $0x14d8] sm:$0xff]
        %v1084 = vld [vmem:[%s324 + $0x14e0] sm:$0xff]
        %v1085 = vld [vmem:[%s324 + $0x14e8] sm:$0xff]
        %v1086 = vld [vmem:[%s324 + $0x14f0] sm:$0xff]
        %v1087 = vld [vmem:[%s324 + $0x14f8] sm:$0xff]
        %v1088 = vld [vmem:[%s324 + $0x1500] sm:$0xff]
        %v1089 = vld [vmem:[%s324 + $0x1508] sm:$0xff]
        %v1090 = vld [vmem:[%s324 + $0x1510] sm:$0xff]
        %v1091 = vld [vmem:[%s324 + $0x1518] sm:$0xff]
        %v1092 = vld [vmem:[%s324 + $0x1520] sm:$0xff]
        %v1093 = vld [vmem:[%s324 + $0x1528] sm:$0xff]
        %v1094 = vld [vmem:[%s324 + $0x1530] sm:$0xff]
        %v1095 = vld [vmem:[%s324 + $0x1538] sm:$0xff]
        %v1096 = vld [vmem:[%s324 + $0x1540] sm:$0xff]
        %v1097 = vld [vmem:[%s324 + $0x1548] sm:$0xff]
        %v1098 = vld [vmem:[%s324 + $0x1550] sm:$0xff]
        %v1099 = vld [vmem:[%s324 + $0x1558] sm:$0xff]
        %v1100 = vld [vmem:[%s324 + $0x1560] sm:$0xff]
        %v1101 = vld [vmem:[%s324 + $0x1568] sm:$0xff]
        %v1102 = vld [vmem:[%s324 + $0x1570] sm:$0xff]
        %v1103 = vld [vmem:[%s324 + $0x1578] sm:$0xff]
        %v1104 = vld [vmem:[%s324 + $0x1580] sm:$0xff]
        %v1105 = vld [vmem:[%s324 + $0x1588] sm:$0xff]
        %v1106 = vld [vmem:[%s324 + $0x1590] sm:$0xff]
        %v1107 = vld [vmem:[%s324 + $0x1598] sm:$0xff]
        %v1108 = vld [vmem:[%s324 + $0x15a0] sm:$0xff]
        %v1109 = vld [vmem:[%s324 + $0x15a8] sm:$0xff]
        %v1110 = vld [vmem:[%s324 + $0x15b0] sm:$0xff]
        %v1111 = vld [vmem:[%s324 + $0x15b8] sm:$0xff]
        %v1112 = vld [vmem:[%s324 + $0x15c0] sm:$0xff]
        %v1113 = vld [vmem:[%s324 + $0x15c8] sm:$0xff]
        %v1114 = vld [vmem:[%s324 + $0x15d0] sm:$0xff]
        %v1115 = vld [vmem:[%s324 + $0x15d8] sm:$0xff]
        %v1116 = vld [vmem:[%s324 + $0x15e0] sm:$0xff]
        %v1117 = vld [vmem:[%s324 + $0x15e8] sm:$0xff]
        %v1118 = vld [vmem:[%s324 + $0x15f0] sm:$0xff]
        %v1119 = vld [vmem:[%s324 + $0x15f8] sm:$0xff]
        %v1120 = vld [vmem:[%s324 + $0x1600] sm:$0xff]
        %v1121 = vld [vmem:[%s324 + $0x1608] sm:$0xff]
        %v1122 = vld [vmem:[%s324 + $0x1610] sm:$0xff]
        %v1123 = vld [vmem:[%s324 + $0x1618] sm:$0xff]
        %v1124 = vld [vmem:[%s324 + $0x1620] sm:$0xff]
        %v1125 = vld [vmem:[%s324 + $0x1628] sm:$0xff]
        %v1126 = vld [vmem:[%s324 + $0x1630] sm:$0xff]
        %v1127 = vld [vmem:[%s324 + $0x1638] sm:$0xff]
        %v1128 = vld [vmem:[%s324 + $0x1640] sm:$0xff]
        %v1129 = vld [vmem:[%s324 + $0x1648] sm:$0xff]
        %v1130 = vld [vmem:[%s324 + $0x1650] sm:$0xff]
        %v1131 = vld [vmem:[%s324 + $0x1658] sm:$0xff]
        %v1132 = vld [vmem:[%s324 + $0x1660] sm:$0xff]
        %v1133 = vld [vmem:[%s324 + $0x1668] sm:$0xff]
        %v1134 = vld [vmem:[%s324 + $0x1670] sm:$0xff]
        %v1135 = vld [vmem:[%s324 + $0x1678] sm:$0xff]
        %v1136 = vld [vmem:[%s324 + $0x1680] sm:$0xff]
        %v1137 = vld [vmem:[%s324 + $0x1688] sm:$0xff]
        %v1138 = vld [vmem:[%s324 + $0x1690] sm:$0xff]
        %v1139 = vld [vmem:[%s324 + $0x1698] sm:$0xff]
        %v1140 = vld [vmem:[%s324 + $0x16a0] sm:$0xff]
        %v1141 = vld [vmem:[%s324 + $0x16a8] sm:$0xff]
        %v1142 = vld [vmem:[%s324 + $0x16b0] sm:$0xff]
        %v1143 = vld [vmem:[%s324 + $0x16b8] sm:$0xff]
        %v1144 = vld [vmem:[%s324 + $0x16c0] sm:$0xff]
        %v1145 = vld [vmem:[%s324 + $0x16c8] sm:$0xff]
        %v1146 = vld [vmem:[%s324 + $0x16d0] sm:$0xff]
        %v1147 = vld [vmem:[%s324 + $0x16d8] sm:$0xff]
        %v1148 = vld [vmem:[%s324 + $0x16e0] sm:$0xff]
        %v1149 = vld [vmem:[%s324 + $0x16e8] sm:$0xff]
        %v1150 = vld [vmem:[%s324 + $0x16f0] sm:$0xff]
        %v1151 = vld [vmem:[%s324 + $0x16f8] sm:$0xff]
        %v1152 = vld [vmem:[%s324 + $0x1700] sm:$0xff]
        %v1153 = vld [vmem:[%s324 + $0x1708] sm:$0xff]
        %v1154 = vld [vmem:[%s324 + $0x1710] sm:$0xff]
        %v1155 = vld [vmem:[%s324 + $0x1718] sm:$0xff]
        %v1156 = vld [vmem:[%s324 + $0x1720] sm:$0xff]
        %v1157 = vld [vmem:[%s324 + $0x1728] sm:$0xff]
        %v1158 = vld [vmem:[%s324 + $0x1730] sm:$0xff]
        %v1159 = vld [vmem:[%s324 + $0x1738] sm:$0xff]
        %v1160 = vld [vmem:[%s324 + $0x1740] sm:$0xff]
        %v1161 = vld [vmem:[%s324 + $0x1748] sm:$0xff]
        %v1162 = vld [vmem:[%s324 + $0x1750] sm:$0xff]
        %v1163 = vld [vmem:[%s324 + $0x1758] sm:$0xff]
        %v1164 = vld [vmem:[%s324 + $0x1760] sm:$0xff]
        %v1165 = vld [vmem:[%s324 + $0x1768] sm:$0xff]
        %v1166 = vld [vmem:[%s324 + $0x1770] sm:$0xff]
        %v1167 = vld [vmem:[%s324 + $0x1778] sm:$0xff]
        %v1168 = vld [vmem:[%s324 + $0x1780] sm:$0xff]
        %v1169 = vld [vmem:[%s324 + $0x1788] sm:$0xff]
        %v1170 = vld [vmem:[%s324 + $0x1790] sm:$0xff]
        %v1171 = vld [vmem:[%s324 + $0x1798] sm:$0xff]
        %v1172 = vld [vmem:[%s324 + $0x17a0] sm:$0xff]
        %v1173 = vld [vmem:[%s324 + $0x17a8] sm:$0xff]
        %v1174 = vld [vmem:[%s324 + $0x17b0] sm:$0xff]
        %v1175 = vld [vmem:[%s324 + $0x17b8] sm:$0xff]
        %v1176 = vld [vmem:[%s324 + $0x17c0] sm:$0xff]
        %v1177 = vld [vmem:[%s324 + $0x17c8] sm:$0xff]
        %v1178 = vld [vmem:[%s324 + $0x17d0] sm:$0xff]
        %v1179 = vld [vmem:[%s324 + $0x17d8] sm:$0xff]
        %v1180 = vld [vmem:[%s324 + $0x17e0] sm:$0xff]
        %v1181 = vld [vmem:[%s324 + $0x17e8] sm:$0xff]
        %v1182 = vld [vmem:[%s324 + $0x17f0] sm:$0xff]
        %v1183 = vld [vmem:[%s324 + $0x17f8] sm:$0xff]
        %v1184 = vld [vmem:[%s324 + $0x1800] sm:$0xff]
        %v1185 = vld [vmem:[%s324 + $0x1808] sm:$0xff]
        %v1186 = vld [vmem:[%s324 + $0x1810] sm:$0xff]
        %v1187 = vld [vmem:[%s324 + $0x1818] sm:$0xff]
        %v1188 = vld [vmem:[%s324 + $0x1820] sm:$0xff]
        %v1189 = vld [vmem:[%s324 + $0x1828] sm:$0xff]
        %v1190 = vld [vmem:[%s324 + $0x1830] sm:$0xff]
        %v1191 = vld [vmem:[%s324 + $0x1838] sm:$0xff]
        %v1192 = vld [vmem:[%s324 + $0x1840] sm:$0xff]
        %v1193 = vld [vmem:[%s324 + $0x1848] sm:$0xff]
        %v1194 = vld [vmem:[%s324 + $0x1850] sm:$0xff]
        %v1195 = vld [vmem:[%s324 + $0x1858] sm:$0xff]
        %v1196 = vld [vmem:[%s324 + $0x1860] sm:$0xff]
        %v1197 = vld [vmem:[%s324 + $0x1868] sm:$0xff]
        %v1198 = vld [vmem:[%s324 + $0x1870] sm:$0xff]
        %v1199 = vld [vmem:[%s324 + $0x1878] sm:$0xff]
        %v1200 = vld [vmem:[%s324 + $0x1880] sm:$0xff]
        %v1201 = vld [vmem:[%s324 + $0x1888] sm:$0xff]
        %v1202 = vld [vmem:[%s324 + $0x1890] sm:$0xff]
        %v1203 = vld [vmem:[%s324 + $0x1898] sm:$0xff]
        %v1204 = vld [vmem:[%s324 + $0x18a0] sm:$0xff]
        %v1205 = vld [vmem:[%s324 + $0x18a8] sm:$0xff]
        %v1206 = vld [vmem:[%s324 + $0x18b0] sm:$0xff]
        %v1207 = vld [vmem:[%s324 + $0x18b8] sm:$0xff]
        %v1208 = vld [vmem:[%s324 + $0x18c0] sm:$0xff]
        %v1209 = vld [vmem:[%s324 + $0x18c8] sm:$0xff]
        %v1210 = vld [vmem:[%s324 + $0x18d0] sm:$0xff]
        %v1211 = vld [vmem:[%s324 + $0x18d8] sm:$0xff]
        %v1212 = vld [vmem:[%s324 + $0x18e0] sm:$0xff]
        %v1213 = vld [vmem:[%s324 + $0x18e8] sm:$0xff]
        %v1214 = vld [vmem:[%s324 + $0x18f0] sm:$0xff]
        %v1215 = vld [vmem:[%s324 + $0x18f8] sm:$0xff]
        %v1216 = vld [vmem:[%s324 + $0x1900] sm:$0xff]
        %v1217 = vld [vmem:[%s324 + $0x1908] sm:$0xff]
        %v1218 = vld [vmem:[%s324 + $0x1910] sm:$0xff]
        %v1219 = vld [vmem:[%s324 + $0x1918] sm:$0xff]
        %v1220 = vld [vmem:[%s324 + $0x1920] sm:$0xff]
        %v1221 = vld [vmem:[%s324 + $0x1928] sm:$0xff]
        %v1222 = vld [vmem:[%s324 + $0x1930] sm:$0xff]
        %v1223 = vld [vmem:[%s324 + $0x1938] sm:$0xff]
        %v1224 = vld [vmem:[%s324 + $0x1940] sm:$0xff]
        %v1225 = vld [vmem:[%s324 + $0x1948] sm:$0xff]
        %v1226 = vld [vmem:[%s324 + $0x1950] sm:$0xff]
        %v1227 = vld [vmem:[%s324 + $0x1958] sm:$0xff]
        %v1228 = vld [vmem:[%s324 + $0x1960] sm:$0xff]
        %v1229 = vld [vmem:[%s324 + $0x1968] sm:$0xff]
        %v1230 = vld [vmem:[%s324 + $0x1970] sm:$0xff]
        %v1231 = vld [vmem:[%s324 + $0x1978] sm:$0xff]
        %v1232 = vld [vmem:[%s324 + $0x1980] sm:$0xff]
        %v1233 = vld [vmem:[%s324 + $0x1988] sm:$0xff]
        %v1234 = vld [vmem:[%s324 + $0x1990] sm:$0xff]
        %v1235 = vld [vmem:[%s324 + $0x1998] sm:$0xff]
        %v1236 = vld [vmem:[%s324 + $0x19a0] sm:$0xff]
        %v1237 = vld [vmem:[%s324 + $0x19a8] sm:$0xff]
        %v1238 = vld [vmem:[%s324 + $0x19b0] sm:$0xff]
        %v1239 = vld [vmem:[%s324 + $0x19b8] sm:$0xff]
        %v1240 = vld [vmem:[%s324 + $0x19c0] sm:$0xff]
        %v1241 = vld [vmem:[%s324 + $0x19c8] sm:$0xff]
        %v1242 = vld [vmem:[%s324 + $0x19d0] sm:$0xff]
        %v1243 = vld [vmem:[%s324 + $0x19d8] sm:$0xff]
        %v1244 = vld [vmem:[%s324 + $0x19e0] sm:$0xff]
        %v1245 = vld [vmem:[%s324 + $0x19e8] sm:$0xff]
        %v1246 = vld [vmem:[%s324 + $0x19f0] sm:$0xff]
        %v1247 = vld [vmem:[%s324 + $0x19f8] sm:$0xff]
        %v1248 = vld [vmem:[%s324 + $0x1a00] sm:$0xff]
        %v1249 = vld [vmem:[%s324 + $0x1a08] sm:$0xff]
        %v1250 = vld [vmem:[%s324 + $0x1a10] sm:$0xff]
        %v1251 = vld [vmem:[%s324 + $0x1a18] sm:$0xff]
        %v1252 = vld [vmem:[%s324 + $0x1a20] sm:$0xff]
        %v1253 = vld [vmem:[%s324 + $0x1a28] sm:$0xff]
        %v1254 = vld [vmem:[%s324 + $0x1a30] sm:$0xff]
        %v1255 = vld [vmem:[%s324 + $0x1a38] sm:$0xff]
        %v1256 = vld [vmem:[%s324 + $0x1a40] sm:$0xff]
        %v1257 = vld [vmem:[%s324 + $0x1a48] sm:$0xff]
        %v1258 = vld [vmem:[%s324 + $0x1a50] sm:$0xff]
        %v1259 = vld [vmem:[%s324 + $0x1a58] sm:$0xff]
        %v1260 = vld [vmem:[%s324 + $0x1a60] sm:$0xff]
        %v1261 = vld [vmem:[%s324 + $0x1a68] sm:$0xff]
        %v1262 = vld [vmem:[%s324 + $0x1a70] sm:$0xff]
        %v1263 = vld [vmem:[%s324 + $0x1a78] sm:$0xff]
        %v1264 = vld [vmem:[%s324 + $0x1a80] sm:$0xff]
        %v1265 = vld [vmem:[%s324 + $0x1a88] sm:$0xff]
        %v1266 = vld [vmem:[%s324 + $0x1a90] sm:$0xff]
        %v1267 = vld [vmem:[%s324 + $0x1a98] sm:$0xff]
        %v1268 = vld [vmem:[%s324 + $0x1aa0] sm:$0xff]
        %v1269 = vld [vmem:[%s324 + $0x1aa8] sm:$0xff]
        %v1270 = vld [vmem:[%s324 + $0x1ab0] sm:$0xff]
        %v1271 = vld [vmem:[%s324 + $0x1ab8] sm:$0xff]
        %v1272 = vld [vmem:[%s324 + $0x1ac0] sm:$0xff]
        %v1273 = vld [vmem:[%s324 + $0x1ac8] sm:$0xff]
        %v1274 = vld [vmem:[%s324 + $0x1ad0] sm:$0xff]
        %v1275 = vld [vmem:[%s324 + $0x1ad8] sm:$0xff]
        %v1276 = vld [vmem:[%s324 + $0x1ae0] sm:$0xff]
        %v1277 = vld [vmem:[%s324 + $0x1ae8] sm:$0xff]
        %v1278 = vld [vmem:[%s324 + $0x1af0] sm:$0xff]
        %v1279 = vld [vmem:[%s324 + $0x1af8] sm:$0xff]
        %v1280 = vld [vmem:[%s324 + $0x1b00] sm:$0xff]
        %v1281 = vld [vmem:[%s324 + $0x1b08] sm:$0xff]
        %v1282 = vld [vmem:[%s324 + $0x1b10] sm:$0xff]
        %v1283 = vld [vmem:[%s324 + $0x1b18] sm:$0xff]
        %v1284 = vld [vmem:[%s324 + $0x1b20] sm:$0xff]
        %v1285 = vld [vmem:[%s324 + $0x1b28] sm:$0xff]
        %v1286 = vld [vmem:[%s324 + $0x1b30] sm:$0xff]
        %v1287 = vld [vmem:[%s324 + $0x1b38] sm:$0xff]
        %v1288 = vld [vmem:[%s324 + $0x1b40] sm:$0xff]
        %v1289 = vld [vmem:[%s324 + $0x1b48] sm:$0xff]
        %v1290 = vld [vmem:[%s324 + $0x1b50] sm:$0xff]
        %v1291 = vld [vmem:[%s324 + $0x1b58] sm:$0xff]
        %v1292 = vld [vmem:[%s324 + $0x1b60] sm:$0xff]
        %v1293 = vld [vmem:[%s324 + $0x1b68] sm:$0xff]
        %v1294 = vld [vmem:[%s324 + $0x1b70] sm:$0xff]
        %v1295 = vld [vmem:[%s324 + $0x1b78] sm:$0xff]
        %v1296 = vld [vmem:[%s324 + $0x1b80] sm:$0xff]
        %v1297 = vld [vmem:[%s324 + $0x1b88] sm:$0xff]
        %v1298 = vld [vmem:[%s324 + $0x1b90] sm:$0xff]
        %v1299 = vld [vmem:[%s324 + $0x1b98] sm:$0xff]
        %v1300 = vld [vmem:[%s324 + $0x1ba0] sm:$0xff]
        %v1301 = vld [vmem:[%s324 + $0x1ba8] sm:$0xff]
        %v1302 = vld [vmem:[%s324 + $0x1bb0] sm:$0xff]
        %v1303 = vld [vmem:[%s324 + $0x1bb8] sm:$0xff]
        %v1304 = vld [vmem:[%s324 + $0x1bc0] sm:$0xff]
        %v1305 = vld [vmem:[%s324 + $0x1bc8] sm:$0xff]
        %v1306 = vld [vmem:[%s324 + $0x1bd0] sm:$0xff]
        %v1307 = vld [vmem:[%s324 + $0x1bd8] sm:$0xff]
        %v1308 = vld [vmem:[%s324 + $0x1be0] sm:$0xff]
        %v1309 = vld [vmem:[%s324 + $0x1be8] sm:$0xff]
        %v1310 = vld [vmem:[%s324 + $0x1bf0] sm:$0xff]
        %v1311 = vld [vmem:[%s324 + $0x1bf8] sm:$0xff]
        %v1312 = vld [vmem:[%s324 + $0x1c00] sm:$0xff]
        %v1313 = vld [vmem:[%s324 + $0x1c08] sm:$0xff]
        %v1314 = vld [vmem:[%s324 + $0x1c10] sm:$0xff]
        %v1315 = vld [vmem:[%s324 + $0x1c18] sm:$0xff]
        %v1316 = vld [vmem:[%s324 + $0x1c20] sm:$0xff]
        %v1317 = vld [vmem:[%s324 + $0x1c28] sm:$0xff]
        %v1318 = vld [vmem:[%s324 + $0x1c30] sm:$0xff]
        %v1319 = vld [vmem:[%s324 + $0x1c38] sm:$0xff]
        %v1320 = vld [vmem:[%s324 + $0x1c40] sm:$0xff]
        %v1321 = vld [vmem:[%s324 + $0x1c48] sm:$0xff]
        %v1322 = vld [vmem:[%s324 + $0x1c50] sm:$0xff]
        %v1323 = vld [vmem:[%s324 + $0x1c58] sm:$0xff]
        %v1324 = vld [vmem:[%s324 + $0x1c60] sm:$0xff]
        %v1325 = vld [vmem:[%s324 + $0x1c68] sm:$0xff]
        %v1326 = vld [vmem:[%s324 + $0x1c70] sm:$0xff]
        %v1327 = vld [vmem:[%s324 + $0x1c78] sm:$0xff]
        %v1328 = vld [vmem:[%s324 + $0x1c80] sm:$0xff]
        %v1329 = vld [vmem:[%s324 + $0x1c88] sm:$0xff]
        %v1330 = vld [vmem:[%s324 + $0x1c90] sm:$0xff]
        %v1331 = vld [vmem:[%s324 + $0x1c98] sm:$0xff]
        %v1332 = vld [vmem:[%s324 + $0x1ca0] sm:$0xff]
        %v1333 = vld [vmem:[%s324 + $0x1ca8] sm:$0xff]
        %v1334 = vld [vmem:[%s324 + $0x1cb0] sm:$0xff]
        %v1335 = vld [vmem:[%s324 + $0x1cb8] sm:$0xff]
        %v1336 = vld [vmem:[%s324 + $0x1cc0] sm:$0xff]
        %v1337 = vld [vmem:[%s324 + $0x1cc8] sm:$0xff]
        %v1338 = vld [vmem:[%s324 + $0x1cd0] sm:$0xff]
        %v1339 = vld [vmem:[%s324 + $0x1cd8] sm:$0xff]
        %v1340 = vld [vmem:[%s324 + $0x1ce0] sm:$0xff]
        %v1341 = vld [vmem:[%s324 + $0x1ce8] sm:$0xff]
        %v1342 = vld [vmem:[%s324 + $0x1cf0] sm:$0xff]
        %v1343 = vld [vmem:[%s324 + $0x1cf8] sm:$0xff]
        %v1344 = vld [vmem:[%s324 + $0x1d00] sm:$0xff]
        %v1345 = vld [vmem:[%s324 + $0x1d08] sm:$0xff]
        %v1346 = vld [vmem:[%s324 + $0x1d10] sm:$0xff]
        %v1347 = vld [vmem:[%s324 + $0x1d18] sm:$0xff]
        %v1348 = vld [vmem:[%s324 + $0x1d20] sm:$0xff]
        %v1349 = vld [vmem:[%s324 + $0x1d28] sm:$0xff]
        %v1350 = vld [vmem:[%s324 + $0x1d30] sm:$0xff]
        %v1351 = vld [vmem:[%s324 + $0x1d38] sm:$0xff]
        %v1352 = vld [vmem:[%s324 + $0x1d40] sm:$0xff]
        %v1353 = vld [vmem:[%s324 + $0x1d48] sm:$0xff]
        %v1354 = vld [vmem:[%s324 + $0x1d50] sm:$0xff]
        %v1355 = vld [vmem:[%s324 + $0x1d58] sm:$0xff]
        %v1356 = vld [vmem:[%s324 + $0x1d60] sm:$0xff]
        %v1357 = vld [vmem:[%s324 + $0x1d68] sm:$0xff]
        %v1358 = vld [vmem:[%s324 + $0x1d70] sm:$0xff]
        %v1359 = vld [vmem:[%s324 + $0x1d78] sm:$0xff]
        %v1360 = vld [vmem:[%s324 + $0x1d80] sm:$0xff]
        %v1361 = vld [vmem:[%s324 + $0x1d88] sm:$0xff]
        %v1362 = vld [vmem:[%s324 + $0x1d90] sm:$0xff]
        %v1363 = vld [vmem:[%s324 + $0x1d98] sm:$0xff]
        %v1364 = vld [vmem:[%s324 + $0x1da0] sm:$0xff]
        %v1365 = vld [vmem:[%s324 + $0x1da8] sm:$0xff]
        %v1366 = vld [vmem:[%s324 + $0x1db0] sm:$0xff]
        %v1367 = vld [vmem:[%s324 + $0x1db8] sm:$0xff]
        %v1368 = vld [vmem:[%s324 + $0x1dc0] sm:$0xff]
        %v1369 = vld [vmem:[%s324 + $0x1dc8] sm:$0xff]
        %v1370 = vld [vmem:[%s324 + $0x1dd0] sm:$0xff]
        %v1371 = vld [vmem:[%s324 + $0x1dd8] sm:$0xff]
        %v1372 = vld [vmem:[%s324 + $0x1de0] sm:$0xff]
        %v1373 = vld [vmem:[%s324 + $0x1de8] sm:$0xff]
        %v1374 = vld [vmem:[%s324 + $0x1df0] sm:$0xff]
        %v1375 = vld [vmem:[%s324 + $0x1df8] sm:$0xff]
        %v1376 = vld [vmem:[%s324 + $0x1e00] sm:$0xff]
        %v1377 = vld [vmem:[%s324 + $0x1e08] sm:$0xff]
        %v1378 = vld [vmem:[%s324 + $0x1e10] sm:$0xff]
        %v1379 = vld [vmem:[%s324 + $0x1e18] sm:$0xff]
        %v1380 = vld [vmem:[%s324 + $0x1e20] sm:$0xff]
        %v1381 = vld [vmem:[%s324 + $0x1e28] sm:$0xff]
        %v1382 = vld [vmem:[%s324 + $0x1e30] sm:$0xff]
        %v1383 = vld [vmem:[%s324 + $0x1e38] sm:$0xff]
        %v1384 = vld [vmem:[%s324 + $0x1e40] sm:$0xff]
        %v1385 = vld [vmem:[%s324 + $0x1e48] sm:$0xff]
        %v1386 = vld [vmem:[%s324 + $0x1e50] sm:$0xff]
        %v1387 = vld [vmem:[%s324 + $0x1e58] sm:$0xff]
        %v1388 = vld [vmem:[%s324 + $0x1e60] sm:$0xff]
        %v1389 = vld [vmem:[%s324 + $0x1e68] sm:$0xff]
        %v1390 = vld [vmem:[%s324 + $0x1e70] sm:$0xff]
        %v1391 = vld [vmem:[%s324 + $0x1e78] sm:$0xff]
        %v1392 = vld [vmem:[%s324 + $0x1e80] sm:$0xff]
        %v1393 = vld [vmem:[%s324 + $0x1e88] sm:$0xff]
        %v1394 = vld [vmem:[%s324 + $0x1e90] sm:$0xff]
        %v1395 = vld [vmem:[%s324 + $0x1e98] sm:$0xff]
        %v1396 = vld [vmem:[%s324 + $0x1ea0] sm:$0xff]
        %v1397 = vld [vmem:[%s324 + $0x1ea8] sm:$0xff]
        %v1398 = vld [vmem:[%s324 + $0x1eb0] sm:$0xff]
        %v1399 = vld [vmem:[%s324 + $0x1eb8] sm:$0xff]
        %v1400 = vld [vmem:[%s324 + $0x1ec0] sm:$0xff]
        %v1401 = vld [vmem:[%s324 + $0x1ec8] sm:$0xff]
        %v1402 = vld [vmem:[%s324 + $0x1ed0] sm:$0xff]
        %v1403 = vld [vmem:[%s324 + $0x1ed8] sm:$0xff]
        %v1404 = vld [vmem:[%s324 + $0x1ee0] sm:$0xff]
        %v1405 = vld [vmem:[%s324 + $0x1ee8] sm:$0xff]
        %v1406 = vld [vmem:[%s324 + $0x1ef0] sm:$0xff]
        %v1407 = vld [vmem:[%s324 + $0x1ef8] sm:$0xff]
        %v1408 = vld [vmem:[%s324 + $0x1f00] sm:$0xff]
        %v1409 = vld [vmem:[%s324 + $0x1f08] sm:$0xff]
        %v1410 = vld [vmem:[%s324 + $0x1f10] sm:$0xff]
        %v1411 = vld [vmem:[%s324 + $0x1f18] sm:$0xff]
        %v1412 = vld [vmem:[%s324 + $0x1f20] sm:$0xff]
        %v1413 = vld [vmem:[%s324 + $0x1f28] sm:$0xff]
        %v1414 = vld [vmem:[%s324 + $0x1f30] sm:$0xff]
        %v1415 = vld [vmem:[%s324 + $0x1f38] sm:$0xff]
        %v1416 = vld [vmem:[%s324 + $0x1f40] sm:$0xff]
        %v1417 = vld [vmem:[%s324 + $0x1f48] sm:$0xff]
        %v1418 = vld [vmem:[%s324 + $0x1f50] sm:$0xff]
        %v1419 = vld [vmem:[%s324 + $0x1f58] sm:$0xff]
        %v1420 = vld [vmem:[%s324 + $0x1f60] sm:$0xff]
        %v1421 = vld [vmem:[%s324 + $0x1f68] sm:$0xff]
        %v1422 = vld [vmem:[%s324 + $0x1f70] sm:$0xff]
        %v1423 = vld [vmem:[%s324 + $0x1f78] sm:$0xff]
        %v1424 = vld [vmem:[%s324 + $0x1f80] sm:$0xff]
        %v1425 = vld [vmem:[%s324 + $0x1f88] sm:$0xff]
        %v1426 = vld [vmem:[%s324 + $0x1f90] sm:$0xff]
        %v1427 = vld [vmem:[%s324 + $0x1f98] sm:$0xff]
        %v1428 = vld [vmem:[%s324 + $0x1fa0] sm:$0xff]
        %v1429 = vld [vmem:[%s324 + $0x1fa8] sm:$0xff]
        %v1430 = vld [vmem:[%s324 + $0x1fb0] sm:$0xff]
        %v1431 = vld [vmem:[%s324 + $0x1fb8] sm:$0xff]
        %v1432 = vld [vmem:[%s324 + $0x1fc0] sm:$0xff]
        %v1433 = vld [vmem:[%s324 + $0x1fc8] sm:$0xff]
        %v1434 = vld [vmem:[%s324 + $0x1fd0] sm:$0xff]
        %v1435 = vld [vmem:[%s324 + $0x1fd8] sm:$0xff]
        %v1436 = vld [vmem:[%s324 + $0x1fe0] sm:$0xff]
        %v1437 = vld [vmem:[%s324 + $0x1fe8] sm:$0xff]
        %v1438 = vld [vmem:[%s324 + $0x1ff0] sm:$0xff]
        %v1439 = vld [vmem:[%s324 + $0x1ff8] sm:$0xff]
        %v1448 = vunpack.c.l.b16 %v408
        %v1449 = vunpack.c.h.b16 %v408
        %v1450 = vunpack.c.l.b16 %v409
        %v1451 = vunpack.c.h.b16 %v409
        %v1452 = vunpack.c.l.b16 %v410
        %v1453 = vunpack.c.h.b16 %v410
        %v1454 = vunpack.c.l.b16 %v411
        %v1455 = vunpack.c.h.b16 %v411
        %v1456 = vunpack.c.l.b16 %v412
        %v1457 = vunpack.c.h.b16 %v412
        %v1458 = vunpack.c.l.b16 %v413
        %v1459 = vunpack.c.h.b16 %v413
        %v1460 = vunpack.c.l.b16 %v414
        %v1461 = vunpack.c.h.b16 %v414
        %v1462 = vunpack.c.l.b16 %v415
        %v1463 = vunpack.c.h.b16 %v415
        %v1464 = vpack.c.b16 %v1448, %v1448
        %v1465 = vpack.c.b16 %v1449, %v1449
        %v1466 = vpack.c.b16 %v1450, %v1450
        %v1467 = vpack.c.b16 %v1451, %v1451
        %v1468 = vpack.c.b16 %v1452, %v1452
        %v1469 = vpack.c.b16 %v1453, %v1453
        %v1470 = vpack.c.b16 %v1454, %v1454
        %v1471 = vpack.c.b16 %v1455, %v1455
        %v1472 = vpack.c.b16 %v1456, %v1456
        %v1473 = vpack.c.b16 %v1457, %v1457
        %v1474 = vpack.c.b16 %v1458, %v1458
        %v1475 = vpack.c.b16 %v1459, %v1459
        %v1476 = vpack.c.b16 %v1460, %v1460
        %v1477 = vpack.c.b16 %v1461, %v1461
        %v1478 = vpack.c.b16 %v1462, %v1462
        %v1479 = vpack.c.b16 %v1463, %v1463
        %v2520 = vunpack.c.l.b16 %v416
        %v2521 = vunpack.c.h.b16 %v416
        %v2522 = vunpack.c.l.b16 %v417
        %v2523 = vunpack.c.h.b16 %v417
        %v2524 = vunpack.c.l.b16 %v418
        %v2525 = vunpack.c.h.b16 %v418
        %v2526 = vunpack.c.l.b16 %v419
        %v2527 = vunpack.c.h.b16 %v419
        %v2528 = vunpack.c.l.b16 %v420
        %v2529 = vunpack.c.h.b16 %v420
        %v2530 = vunpack.c.l.b16 %v421
        %v2531 = vunpack.c.h.b16 %v421
        %v2532 = vunpack.c.l.b16 %v422
        %v2533 = vunpack.c.h.b16 %v422
        %v2534 = vunpack.c.l.b16 %v423
        %v2535 = vunpack.c.h.b16 %v423
        %v2536 = vunpack.c.l.b16 %v424
        %v2537 = vunpack.c.h.b16 %v424
        %v2538 = vunpack.c.l.b16 %v425
        %v2539 = vunpack.c.h.b16 %v425
        %v2540 = vunpack.c.l.b16 %v426
        %v2541 = vunpack.c.h.b16 %v426
        %v2542 = vunpack.c.l.b16 %v427
        %v2543 = vunpack.c.h.b16 %v427
        %v2544 = vunpack.c.l.b16 %v428
        %v2545 = vunpack.c.h.b16 %v428
        %v2546 = vunpack.c.l.b16 %v429
        %v2547 = vunpack.c.h.b16 %v429
        %v2548 = vunpack.c.l.b16 %v430
        %v2549 = vunpack.c.h.b16 %v430
        %v2550 = vunpack.c.l.b16 %v431
        %v2551 = vunpack.c.h.b16 %v431
        %v2552 = vunpack.c.l.b16 %v432
        %v2553 = vunpack.c.h.b16 %v432
        %v2554 = vunpack.c.l.b16 %v433
        %v2555 = vunpack.c.h.b16 %v433
        %v2556 = vunpack.c.l.b16 %v434
        %v2557 = vunpack.c.h.b16 %v434
        %v2558 = vunpack.c.l.b16 %v435
        %v2559 = vunpack.c.h.b16 %v435
        %v2560 = vunpack.c.l.b16 %v436
        %v2561 = vunpack.c.h.b16 %v436
        %v2562 = vunpack.c.l.b16 %v437
        %v2563 = vunpack.c.h.b16 %v437
        %v2564 = vunpack.c.l.b16 %v438
        %v2565 = vunpack.c.h.b16 %v438
        %v2566 = vunpack.c.l.b16 %v439
        %v2567 = vunpack.c.h.b16 %v439
        %v2568 = vunpack.c.l.b16 %v440
        %v2569 = vunpack.c.h.b16 %v440
        %v2570 = vunpack.c.l.b16 %v441
        %v2571 = vunpack.c.h.b16 %v441
        %v2572 = vunpack.c.l.b16 %v442
        %v2573 = vunpack.c.h.b16 %v442
        %v2574 = vunpack.c.l.b16 %v443
        %v2575 = vunpack.c.h.b16 %v443
        %v2576 = vunpack.c.l.b16 %v444
        %v2577 = vunpack.c.h.b16 %v444
        %v2578 = vunpack.c.l.b16 %v445
        %v2579 = vunpack.c.h.b16 %v445
        %v2580 = vunpack.c.l.b16 %v446
        %v2581 = vunpack.c.h.b16 %v446
        %v2582 = vunpack.c.l.b16 %v447
        %v2583 = vunpack.c.h.b16 %v447
        %v2584 = vunpack.c.l.b16 %v448
        %v2585 = vunpack.c.h.b16 %v448
        %v2586 = vunpack.c.l.b16 %v449
        %v2587 = vunpack.c.h.b16 %v449
        %v2588 = vunpack.c.l.b16 %v450
        %v2589 = vunpack.c.h.b16 %v450
        %v2590 = vunpack.c.l.b16 %v451
        %v2591 = vunpack.c.h.b16 %v451
        %v2592 = vunpack.c.l.b16 %v452
        %v2593 = vunpack.c.h.b16 %v452
        %v2594 = vunpack.c.l.b16 %v453
        %v2595 = vunpack.c.h.b16 %v453
        %v2596 = vunpack.c.l.b16 %v454
        %v2597 = vunpack.c.h.b16 %v454
        %v2598 = vunpack.c.l.b16 %v455
        %v2599 = vunpack.c.h.b16 %v455
        %v2600 = vunpack.c.l.b16 %v456
        %v2601 = vunpack.c.h.b16 %v456
        %v2602 = vunpack.c.l.b16 %v457
        %v2603 = vunpack.c.h.b16 %v457
        %v2604 = vunpack.c.l.b16 %v458
        %v2605 = vunpack.c.h.b16 %v458
        %v2606 = vunpack.c.l.b16 %v459
        %v2607 = vunpack.c.h.b16 %v459
        %v2608 = vunpack.c.l.b16 %v460
        %v2609 = vunpack.c.h.b16 %v460
        %v2610 = vunpack.c.l.b16 %v461
        %v2611 = vunpack.c.h.b16 %v461
        %v2612 = vunpack.c.l.b16 %v462
        %v2613 = vunpack.c.h.b16 %v462
        %v2614 = vunpack.c.l.b16 %v463
        %v2615 = vunpack.c.h.b16 %v463
        %v2616 = vunpack.c.l.b16 %v464
        %v2617 = vunpack.c.h.b16 %v464
        %v2618 = vunpack.c.l.b16 %v465
        %v2619 = vunpack.c.h.b16 %v465
        %v2620 = vunpack.c.l.b16 %v466
        %v2621 = vunpack.c.h.b16 %v466
        %v2622 = vunpack.c.l.b16 %v467
        %v2623 = vunpack.c.h.b16 %v467
        %v2624 = vunpack.c.l.b16 %v468
        %v2625 = vunpack.c.h.b16 %v468
        %v2626 = vunpack.c.l.b16 %v469
        %v2627 = vunpack.c.h.b16 %v469
        %v2628 = vunpack.c.l.b16 %v470
        %v2629 = vunpack.c.h.b16 %v470
        %v2630 = vunpack.c.l.b16 %v471
        %v2631 = vunpack.c.h.b16 %v471
        %v2632 = vunpack.c.l.b16 %v472
        %v2633 = vunpack.c.h.b16 %v472
        %v2634 = vunpack.c.l.b16 %v473
        %v2635 = vunpack.c.h.b16 %v473
        %v2636 = vunpack.c.l.b16 %v474
        %v2637 = vunpack.c.h.b16 %v474
        %v2638 = vunpack.c.l.b16 %v475
        %v2639 = vunpack.c.h.b16 %v475
        %v2640 = vunpack.c.l.b16 %v476
        %v2641 = vunpack.c.h.b16 %v476
        %v2642 = vunpack.c.l.b16 %v477
        %v2643 = vunpack.c.h.b16 %v477
        %v2644 = vunpack.c.l.b16 %v478
        %v2645 = vunpack.c.h.b16 %v478
        %v2646 = vunpack.c.l.b16 %v479
        %v2647 = vunpack.c.h.b16 %v479
        %v2648 = vunpack.c.l.b16 %v480
        %v2649 = vunpack.c.h.b16 %v480
        %v2650 = vunpack.c.l.b16 %v481
        %v2651 = vunpack.c.h.b16 %v481
        %v2652 = vunpack.c.l.b16 %v482
        %v2653 = vunpack.c.h.b16 %v482
        %v2654 = vunpack.c.l.b16 %v483
        %v2655 = vunpack.c.h.b16 %v483
        %v2656 = vunpack.c.l.b16 %v484
        %v2657 = vunpack.c.h.b16 %v484
        %v2658 = vunpack.c.l.b16 %v485
        %v2659 = vunpack.c.h.b16 %v485
        %v2660 = vunpack.c.l.b16 %v486
        %v2661 = vunpack.c.h.b16 %v486
        %v2662 = vunpack.c.l.b16 %v487
        %v2663 = vunpack.c.h.b16 %v487
        %v2664 = vunpack.c.l.b16 %v488
        %v2665 = vunpack.c.h.b16 %v488
        %v2666 = vunpack.c.l.b16 %v489
        %v2667 = vunpack.c.h.b16 %v489
        %v2668 = vunpack.c.l.b16 %v490
        %v2669 = vunpack.c.h.b16 %v490
        %v2670 = vunpack.c.l.b16 %v491
        %v2671 = vunpack.c.h.b16 %v491
        %v2672 = vunpack.c.l.b16 %v492
        %v2673 = vunpack.c.h.b16 %v492
        %v2674 = vunpack.c.l.b16 %v493
        %v2675 = vunpack.c.h.b16 %v493
        %v2676 = vunpack.c.l.b16 %v494
        %v2677 = vunpack.c.h.b16 %v494
        %v2678 = vunpack.c.l.b16 %v495
        %v2679 = vunpack.c.h.b16 %v495
        %v2680 = vunpack.c.l.b16 %v496
        %v2681 = vunpack.c.h.b16 %v496
        %v2682 = vunpack.c.l.b16 %v497
        %v2683 = vunpack.c.h.b16 %v497
        %v2684 = vunpack.c.l.b16 %v498
        %v2685 = vunpack.c.h.b16 %v498
        %v2686 = vunpack.c.l.b16 %v499
        %v2687 = vunpack.c.h.b16 %v499
        %v2688 = vunpack.c.l.b16 %v500
        %v2689 = vunpack.c.h.b16 %v500
        %v2690 = vunpack.c.l.b16 %v501
        %v2691 = vunpack.c.h.b16 %v501
        %v2692 = vunpack.c.l.b16 %v502
        %v2693 = vunpack.c.h.b16 %v502
        %v2694 = vunpack.c.l.b16 %v503
        %v2695 = vunpack.c.h.b16 %v503
        %v2696 = vunpack.c.l.b16 %v504
        %v2697 = vunpack.c.h.b16 %v504
        %v2698 = vunpack.c.l.b16 %v505
        %v2699 = vunpack.c.h.b16 %v505
        %v2700 = vunpack.c.l.b16 %v506
        %v2701 = vunpack.c.h.b16 %v506
        %v2702 = vunpack.c.l.b16 %v507
        %v2703 = vunpack.c.h.b16 %v507
        %v2704 = vunpack.c.l.b16 %v508
        %v2705 = vunpack.c.h.b16 %v508
        %v2706 = vunpack.c.l.b16 %v509
        %v2707 = vunpack.c.h.b16 %v509
        %v2708 = vunpack.c.l.b16 %v510
        %v2709 = vunpack.c.h.b16 %v510
        %v2710 = vunpack.c.l.b16 %v511
        %v2711 = vunpack.c.h.b16 %v511
        %v2712 = vunpack.c.l.b16 %v512
        %v2713 = vunpack.c.h.b16 %v512
        %v2714 = vunpack.c.l.b16 %v513
        %v2715 = vunpack.c.h.b16 %v513
        %v2716 = vunpack.c.l.b16 %v514
        %v2717 = vunpack.c.h.b16 %v514
        %v2718 = vunpack.c.l.b16 %v515
        %v2719 = vunpack.c.h.b16 %v515
        %v2720 = vunpack.c.l.b16 %v516
        %v2721 = vunpack.c.h.b16 %v516
        %v2722 = vunpack.c.l.b16 %v517
        %v2723 = vunpack.c.h.b16 %v517
        %v2724 = vunpack.c.l.b16 %v518
        %v2725 = vunpack.c.h.b16 %v518
        %v2726 = vunpack.c.l.b16 %v519
        %v2727 = vunpack.c.h.b16 %v519
        %v2728 = vunpack.c.l.b16 %v520
        %v2729 = vunpack.c.h.b16 %v520
        %v2730 = vunpack.c.l.b16 %v521
        %v2731 = vunpack.c.h.b16 %v521
        %v2732 = vunpack.c.l.b16 %v522
        %v2733 = vunpack.c.h.b16 %v522
        %v2734 = vunpack.c.l.b16 %v523
        %v2735 = vunpack.c.h.b16 %v523
        %v2736 = vunpack.c.l.b16 %v524
        %v2737 = vunpack.c.h.b16 %v524
        %v2738 = vunpack.c.l.b16 %v525
        %v2739 = vunpack.c.h.b16 %v525
        %v2740 = vunpack.c.l.b16 %v526
        %v2741 = vunpack.c.h.b16 %v526
        %v2742 = vunpack.c.l.b16 %v527
        %v2743 = vunpack.c.h.b16 %v527
        %v2744 = vunpack.c.l.b16 %v528
        %v2745 = vunpack.c.h.b16 %v528
        %v2746 = vunpack.c.l.b16 %v529
        %v2747 = vunpack.c.h.b16 %v529
        %v2748 = vunpack.c.l.b16 %v530
        %v2749 = vunpack.c.h.b16 %v530
        %v2750 = vunpack.c.l.b16 %v531
        %v2751 = vunpack.c.h.b16 %v531
        %v2752 = vunpack.c.l.b16 %v532
        %v2753 = vunpack.c.h.b16 %v532
        %v2754 = vunpack.c.l.b16 %v533
        %v2755 = vunpack.c.h.b16 %v533
        %v2756 = vunpack.c.l.b16 %v534
        %v2757 = vunpack.c.h.b16 %v534
        %v2758 = vunpack.c.l.b16 %v535
        %v2759 = vunpack.c.h.b16 %v535
        %v2760 = vunpack.c.l.b16 %v536
        %v2761 = vunpack.c.h.b16 %v536
        %v2762 = vunpack.c.l.b16 %v537
        %v2763 = vunpack.c.h.b16 %v537
        %v2764 = vunpack.c.l.b16 %v538
        %v2765 = vunpack.c.h.b16 %v538
        %v2766 = vunpack.c.l.b16 %v539
        %v2767 = vunpack.c.h.b16 %v539
        %v2768 = vunpack.c.l.b16 %v540
        %v2769 = vunpack.c.h.b16 %v540
        %v2770 = vunpack.c.l.b16 %v541
        %v2771 = vunpack.c.h.b16 %v541
        %v2772 = vunpack.c.l.b16 %v542
        %v2773 = vunpack.c.h.b16 %v542
        %v2774 = vunpack.c.l.b16 %v543
        %v2775 = vunpack.c.h.b16 %v543
        %v2776 = vunpack.c.l.b16 %v544
        %v2777 = vunpack.c.h.b16 %v544
        %v2778 = vunpack.c.l.b16 %v545
        %v2779 = vunpack.c.h.b16 %v545
        %v2780 = vunpack.c.l.b16 %v546
        %v2781 = vunpack.c.h.b16 %v546
        %v2782 = vunpack.c.l.b16 %v547
        %v2783 = vunpack.c.h.b16 %v547
        %v2784 = vunpack.c.l.b16 %v548
        %v2785 = vunpack.c.h.b16 %v548
        %v2786 = vunpack.c.l.b16 %v549
        %v2787 = vunpack.c.h.b16 %v549
        %v2788 = vunpack.c.l.b16 %v550
        %v2789 = vunpack.c.h.b16 %v550
        %v2790 = vunpack.c.l.b16 %v551
        %v2791 = vunpack.c.h.b16 %v551
        %v2792 = vunpack.c.l.b16 %v552
        %v2793 = vunpack.c.h.b16 %v552
        %v2794 = vunpack.c.l.b16 %v553
        %v2795 = vunpack.c.h.b16 %v553
        %v2796 = vunpack.c.l.b16 %v554
        %v2797 = vunpack.c.h.b16 %v554
        %v2798 = vunpack.c.l.b16 %v555
        %v2799 = vunpack.c.h.b16 %v555
        %v2800 = vunpack.c.l.b16 %v556
        %v2801 = vunpack.c.h.b16 %v556
        %v2802 = vunpack.c.l.b16 %v557
        %v2803 = vunpack.c.h.b16 %v557
        %v2804 = vunpack.c.l.b16 %v558
        %v2805 = vunpack.c.h.b16 %v558
        %v2806 = vunpack.c.l.b16 %v559
        %v2807 = vunpack.c.h.b16 %v559
        %v2808 = vunpack.c.l.b16 %v560
        %v2809 = vunpack.c.h.b16 %v560
        %v2810 = vunpack.c.l.b16 %v561
        %v2811 = vunpack.c.h.b16 %v561
        %v2812 = vunpack.c.l.b16 %v562
        %v2813 = vunpack.c.h.b16 %v562
        %v2814 = vunpack.c.l.b16 %v563
        %v2815 = vunpack.c.h.b16 %v563
        %v2816 = vunpack.c.l.b16 %v564
        %v2817 = vunpack.c.h.b16 %v564
        %v2818 = vunpack.c.l.b16 %v565
        %v2819 = vunpack.c.h.b16 %v565
        %v2820 = vunpack.c.l.b16 %v566
        %v2821 = vunpack.c.h.b16 %v566
        %v2822 = vunpack.c.l.b16 %v567
        %v2823 = vunpack.c.h.b16 %v567
        %v2824 = vunpack.c.l.b16 %v568
        %v2825 = vunpack.c.h.b16 %v568
        %v2826 = vunpack.c.l.b16 %v569
        %v2827 = vunpack.c.h.b16 %v569
        %v2828 = vunpack.c.l.b16 %v570
        %v2829 = vunpack.c.h.b16 %v570
        %v2830 = vunpack.c.l.b16 %v571
        %v2831 = vunpack.c.h.b16 %v571
        %v2832 = vunpack.c.l.b16 %v572
        %v2833 = vunpack.c.h.b16 %v572
        %v2834 = vunpack.c.l.b16 %v573
        %v2835 = vunpack.c.h.b16 %v573
        %v2836 = vunpack.c.l.b16 %v574
        %v2837 = vunpack.c.h.b16 %v574
        %v2838 = vunpack.c.l.b16 %v575
        %v2839 = vunpack.c.h.b16 %v575
        %v2840 = vunpack.c.l.b16 %v576
        %v2841 = vunpack.c.h.b16 %v576
        %v2842 = vunpack.c.l.b16 %v577
        %v2843 = vunpack.c.h.b16 %v577
        %v2844 = vunpack.c.l.b16 %v578
        %v2845 = vunpack.c.h.b16 %v578
        %v2846 = vunpack.c.l.b16 %v579
        %v2847 = vunpack.c.h.b16 %v579
        %v2848 = vunpack.c.l.b16 %v580
        %v2849 = vunpack.c.h.b16 %v580
        %v2850 = vunpack.c.l.b16 %v581
        %v2851 = vunpack.c.h.b16 %v581
        %v2852 = vunpack.c.l.b16 %v582
        %v2853 = vunpack.c.h.b16 %v582
        %v2854 = vunpack.c.l.b16 %v583
        %v2855 = vunpack.c.h.b16 %v583
        %v2856 = vunpack.c.l.b16 %v584
        %v2857 = vunpack.c.h.b16 %v584
        %v2858 = vunpack.c.l.b16 %v585
        %v2859 = vunpack.c.h.b16 %v585
        %v2860 = vunpack.c.l.b16 %v586
        %v2861 = vunpack.c.h.b16 %v586
        %v2862 = vunpack.c.l.b16 %v587
        %v2863 = vunpack.c.h.b16 %v587
        %v2864 = vunpack.c.l.b16 %v588
        %v2865 = vunpack.c.h.b16 %v588
        %v2866 = vunpack.c.l.b16 %v589
        %v2867 = vunpack.c.h.b16 %v589
        %v2868 = vunpack.c.l.b16 %v590
        %v2869 = vunpack.c.h.b16 %v590
        %v2870 = vunpack.c.l.b16 %v591
        %v2871 = vunpack.c.h.b16 %v591
        %v2872 = vunpack.c.l.b16 %v592
        %v2873 = vunpack.c.h.b16 %v592
        %v2874 = vunpack.c.l.b16 %v593
        %v2875 = vunpack.c.h.b16 %v593
        %v2876 = vunpack.c.l.b16 %v594
        %v2877 = vunpack.c.h.b16 %v594
        %v2878 = vunpack.c.l.b16 %v595
        %v2879 = vunpack.c.h.b16 %v595
        %v2880 = vunpack.c.l.b16 %v596
        %v2881 = vunpack.c.h.b16 %v596
        %v2882 = vunpack.c.l.b16 %v597
        %v2883 = vunpack.c.h.b16 %v597
        %v2884 = vunpack.c.l.b16 %v598
        %v2885 = vunpack.c.h.b16 %v598
        %v2886 = vunpack.c.l.b16 %v599
        %v2887 = vunpack.c.h.b16 %v599
        %v2888 = vunpack.c.l.b16 %v600
        %v2889 = vunpack.c.h.b16 %v600
        %v2890 = vunpack.c.l.b16 %v601
        %v2891 = vunpack.c.h.b16 %v601
        %v2892 = vunpack.c.l.b16 %v602
        %v2893 = vunpack.c.h.b16 %v602
        %v2894 = vunpack.c.l.b16 %v603
        %v2895 = vunpack.c.h.b16 %v603
        %v2896 = vunpack.c.l.b16 %v604
        %v2897 = vunpack.c.h.b16 %v604
        %v2898 = vunpack.c.l.b16 %v605
        %v2899 = vunpack.c.h.b16 %v605
        %v2900 = vunpack.c.l.b16 %v606
        %v2901 = vunpack.c.h.b16 %v606
        %v2902 = vunpack.c.l.b16 %v607
        %v2903 = vunpack.c.h.b16 %v607
        %v2904 = vunpack.c.l.b16 %v608
        %v2905 = vunpack.c.h.b16 %v608
        %v2906 = vunpack.c.l.b16 %v609
        %v2907 = vunpack.c.h.b16 %v609
        %v2908 = vunpack.c.l.b16 %v610
        %v2909 = vunpack.c.h.b16 %v610
        %v2910 = vunpack.c.l.b16 %v611
        %v2911 = vunpack.c.h.b16 %v611
        %v2912 = vunpack.c.l.b16 %v612
        %v2913 = vunpack.c.h.b16 %v612
        %v2914 = vunpack.c.l.b16 %v613
        %v2915 = vunpack.c.h.b16 %v613
        %v2916 = vunpack.c.l.b16 %v614
        %v2917 = vunpack.c.h.b16 %v614
        %v2918 = vunpack.c.l.b16 %v615
        %v2919 = vunpack.c.h.b16 %v615
        %v2920 = vunpack.c.l.b16 %v616
        %v2921 = vunpack.c.h.b16 %v616
        %v2922 = vunpack.c.l.b16 %v617
        %v2923 = vunpack.c.h.b16 %v617
        %v2924 = vunpack.c.l.b16 %v618
        %v2925 = vunpack.c.h.b16 %v618
        %v2926 = vunpack.c.l.b16 %v619
        %v2927 = vunpack.c.h.b16 %v619
        %v2928 = vunpack.c.l.b16 %v620
        %v2929 = vunpack.c.h.b16 %v620
        %v2930 = vunpack.c.l.b16 %v621
        %v2931 = vunpack.c.h.b16 %v621
        %v2932 = vunpack.c.l.b16 %v622
        %v2933 = vunpack.c.h.b16 %v622
        %v2934 = vunpack.c.l.b16 %v623
        %v2935 = vunpack.c.h.b16 %v623
        %v2936 = vunpack.c.l.b16 %v624
        %v2937 = vunpack.c.h.b16 %v624
        %v2938 = vunpack.c.l.b16 %v625
        %v2939 = vunpack.c.h.b16 %v625
        %v2940 = vunpack.c.l.b16 %v626
        %v2941 = vunpack.c.h.b16 %v626
        %v2942 = vunpack.c.l.b16 %v627
        %v2943 = vunpack.c.h.b16 %v627
        %v2944 = vunpack.c.l.b16 %v628
        %v2945 = vunpack.c.h.b16 %v628
        %v2946 = vunpack.c.l.b16 %v629
        %v2947 = vunpack.c.h.b16 %v629
        %v2948 = vunpack.c.l.b16 %v630
        %v2949 = vunpack.c.h.b16 %v630
        %v2950 = vunpack.c.l.b16 %v631
        %v2951 = vunpack.c.h.b16 %v631
        %v2952 = vunpack.c.l.b16 %v632
        %v2953 = vunpack.c.h.b16 %v632
        %v2954 = vunpack.c.l.b16 %v633
        %v2955 = vunpack.c.h.b16 %v633
        %v2956 = vunpack.c.l.b16 %v634
        %v2957 = vunpack.c.h.b16 %v634
        %v2958 = vunpack.c.l.b16 %v635
        %v2959 = vunpack.c.h.b16 %v635
        %v2960 = vunpack.c.l.b16 %v636
        %v2961 = vunpack.c.h.b16 %v636
        %v2962 = vunpack.c.l.b16 %v637
        %v2963 = vunpack.c.h.b16 %v637
        %v2964 = vunpack.c.l.b16 %v638
        %v2965 = vunpack.c.h.b16 %v638
        %v2966 = vunpack.c.l.b16 %v639
        %v2967 = vunpack.c.h.b16 %v639
        %v2968 = vunpack.c.l.b16 %v640
        %v2969 = vunpack.c.h.b16 %v640
        %v2970 = vunpack.c.l.b16 %v641
        %v2971 = vunpack.c.h.b16 %v641
        %v2972 = vunpack.c.l.b16 %v642
        %v2973 = vunpack.c.h.b16 %v642
        %v2974 = vunpack.c.l.b16 %v643
        %v2975 = vunpack.c.h.b16 %v643
        %v2976 = vunpack.c.l.b16 %v644
        %v2977 = vunpack.c.h.b16 %v644
        %v2978 = vunpack.c.l.b16 %v645
        %v2979 = vunpack.c.h.b16 %v645
        %v2980 = vunpack.c.l.b16 %v646
        %v2981 = vunpack.c.h.b16 %v646
        %v2982 = vunpack.c.l.b16 %v647
        %v2983 = vunpack.c.h.b16 %v647
        %v2984 = vunpack.c.l.b16 %v648
        %v2985 = vunpack.c.h.b16 %v648
        %v2986 = vunpack.c.l.b16 %v649
        %v2987 = vunpack.c.h.b16 %v649
        %v2988 = vunpack.c.l.b16 %v650
        %v2989 = vunpack.c.h.b16 %v650
        %v2990 = vunpack.c.l.b16 %v651
        %v2991 = vunpack.c.h.b16 %v651
        %v2992 = vunpack.c.l.b16 %v652
        %v2993 = vunpack.c.h.b16 %v652
        %v2994 = vunpack.c.l.b16 %v653
        %v2995 = vunpack.c.h.b16 %v653
        %v2996 = vunpack.c.l.b16 %v654
        %v2997 = vunpack.c.h.b16 %v654
        %v2998 = vunpack.c.l.b16 %v655
        %v2999 = vunpack.c.h.b16 %v655
        %v3000 = vunpack.c.l.b16 %v656
        %v3001 = vunpack.c.h.b16 %v656
        %v3002 = vunpack.c.l.b16 %v657
        %v3003 = vunpack.c.h.b16 %v657
        %v3004 = vunpack.c.l.b16 %v658
        %v3005 = vunpack.c.h.b16 %v658
        %v3006 = vunpack.c.l.b16 %v659
        %v3007 = vunpack.c.h.b16 %v659
        %v3008 = vunpack.c.l.b16 %v660
        %v3009 = vunpack.c.h.b16 %v660
        %v3010 = vunpack.c.l.b16 %v661
        %v3011 = vunpack.c.h.b16 %v661
        %v3012 = vunpack.c.l.b16 %v662
        %v3013 = vunpack.c.h.b16 %v662
        %v3014 = vunpack.c.l.b16 %v663
        %v3015 = vunpack.c.h.b16 %v663
        %v3016 = vunpack.c.l.b16 %v664
        %v3017 = vunpack.c.h.b16 %v664
        %v3018 = vunpack.c.l.b16 %v665
        %v3019 = vunpack.c.h.b16 %v665
        %v3020 = vunpack.c.l.b16 %v666
        %v3021 = vunpack.c.h.b16 %v666
        %v3022 = vunpack.c.l.b16 %v667
        %v3023 = vunpack.c.h.b16 %v667
        %v3024 = vunpack.c.l.b16 %v668
        %v3025 = vunpack.c.h.b16 %v668
        %v3026 = vunpack.c.l.b16 %v669
        %v3027 = vunpack.c.h.b16 %v669
        %v3028 = vunpack.c.l.b16 %v670
        %v3029 = vunpack.c.h.b16 %v670
        %v3030 = vunpack.c.l.b16 %v671
        %v3031 = vunpack.c.h.b16 %v671
        %v3032 = vunpack.c.l.b16 %v672
        %v3033 = vunpack.c.h.b16 %v672
        %v3034 = vunpack.c.l.b16 %v673
        %v3035 = vunpack.c.h.b16 %v673
        %v3036 = vunpack.c.l.b16 %v674
        %v3037 = vunpack.c.h.b16 %v674
        %v3038 = vunpack.c.l.b16 %v675
        %v3039 = vunpack.c.h.b16 %v675
        %v3040 = vunpack.c.l.b16 %v676
        %v3041 = vunpack.c.h.b16 %v676
        %v3042 = vunpack.c.l.b16 %v677
        %v3043 = vunpack.c.h.b16 %v677
        %v3044 = vunpack.c.l.b16 %v678
        %v3045 = vunpack.c.h.b16 %v678
        %v3046 = vunpack.c.l.b16 %v679
        %v3047 = vunpack.c.h.b16 %v679
        %v3048 = vunpack.c.l.b16 %v680
        %v3049 = vunpack.c.h.b16 %v680
        %v3050 = vunpack.c.l.b16 %v681
        %v3051 = vunpack.c.h.b16 %v681
        %v3052 = vunpack.c.l.b16 %v682
        %v3053 = vunpack.c.h.b16 %v682
        %v3054 = vunpack.c.l.b16 %v683
        %v3055 = vunpack.c.h.b16 %v683
        %v3056 = vunpack.c.l.b16 %v684
        %v3057 = vunpack.c.h.b16 %v684
        %v3058 = vunpack.c.l.b16 %v685
        %v3059 = vunpack.c.h.b16 %v685
        %v3060 = vunpack.c.l.b16 %v686
        %v3061 = vunpack.c.h.b16 %v686
        %v3062 = vunpack.c.l.b16 %v687
        %v3063 = vunpack.c.h.b16 %v687
        %v3064 = vunpack.c.l.b16 %v688
        %v3065 = vunpack.c.h.b16 %v688
        %v3066 = vunpack.c.l.b16 %v689
        %v3067 = vunpack.c.h.b16 %v689
        %v3068 = vunpack.c.l.b16 %v690
        %v3069 = vunpack.c.h.b16 %v690
        %v3070 = vunpack.c.l.b16 %v691
        %v3071 = vunpack.c.h.b16 %v691
        %v3072 = vunpack.c.l.b16 %v692
        %v3073 = vunpack.c.h.b16 %v692
        %v3074 = vunpack.c.l.b16 %v693
        %v3075 = vunpack.c.h.b16 %v693
        %v3076 = vunpack.c.l.b16 %v694
        %v3077 = vunpack.c.h.b16 %v694
        %v3078 = vunpack.c.l.b16 %v695
        %v3079 = vunpack.c.h.b16 %v695
        %v3080 = vunpack.c.l.b16 %v696
        %v3081 = vunpack.c.h.b16 %v696
        %v3082 = vunpack.c.l.b16 %v697
        %v3083 = vunpack.c.h.b16 %v697
        %v3084 = vunpack.c.l.b16 %v698
        %v3085 = vunpack.c.h.b16 %v698
        %v3086 = vunpack.c.l.b16 %v699
        %v3087 = vunpack.c.h.b16 %v699
        %v3088 = vunpack.c.l.b16 %v700
        %v3089 = vunpack.c.h.b16 %v700
        %v3090 = vunpack.c.l.b16 %v701
        %v3091 = vunpack.c.h.b16 %v701
        %v3092 = vunpack.c.l.b16 %v702
        %v3093 = vunpack.c.h.b16 %v702
        %v3094 = vunpack.c.l.b16 %v703
        %v3095 = vunpack.c.h.b16 %v703
        %v3096 = vunpack.c.l.b16 %v704
        %v3097 = vunpack.c.h.b16 %v704
        %v3098 = vunpack.c.l.b16 %v705
        %v3099 = vunpack.c.h.b16 %v705
        %v3100 = vunpack.c.l.b16 %v706
        %v3101 = vunpack.c.h.b16 %v706
        %v3102 = vunpack.c.l.b16 %v707
        %v3103 = vunpack.c.h.b16 %v707
        %v3104 = vunpack.c.l.b16 %v708
        %v3105 = vunpack.c.h.b16 %v708
        %v3106 = vunpack.c.l.b16 %v709
        %v3107 = vunpack.c.h.b16 %v709
        %v3108 = vunpack.c.l.b16 %v710
        %v3109 = vunpack.c.h.b16 %v710
        %v3110 = vunpack.c.l.b16 %v711
        %v3111 = vunpack.c.h.b16 %v711
        %v3112 = vunpack.c.l.b16 %v712
        %v3113 = vunpack.c.h.b16 %v712
        %v3114 = vunpack.c.l.b16 %v713
        %v3115 = vunpack.c.h.b16 %v713
        %v3116 = vunpack.c.l.b16 %v714
        %v3117 = vunpack.c.h.b16 %v714
        %v3118 = vunpack.c.l.b16 %v715
        %v3119 = vunpack.c.h.b16 %v715
        %v3120 = vunpack.c.l.b16 %v716
        %v3121 = vunpack.c.h.b16 %v716
        %v3122 = vunpack.c.l.b16 %v717
        %v3123 = vunpack.c.h.b16 %v717
        %v3124 = vunpack.c.l.b16 %v718
        %v3125 = vunpack.c.h.b16 %v718
        %v3126 = vunpack.c.l.b16 %v719
        %v3127 = vunpack.c.h.b16 %v719
        %v3128 = vunpack.c.l.b16 %v720
        %v3129 = vunpack.c.h.b16 %v720
        %v3130 = vunpack.c.l.b16 %v721
        %v3131 = vunpack.c.h.b16 %v721
        %v3132 = vunpack.c.l.b16 %v722
        %v3133 = vunpack.c.h.b16 %v722
        %v3134 = vunpack.c.l.b16 %v723
        %v3135 = vunpack.c.h.b16 %v723
        %v3136 = vunpack.c.l.b16 %v724
        %v3137 = vunpack.c.h.b16 %v724
        %v3138 = vunpack.c.l.b16 %v725
        %v3139 = vunpack.c.h.b16 %v725
        %v3140 = vunpack.c.l.b16 %v726
        %v3141 = vunpack.c.h.b16 %v726
        %v3142 = vunpack.c.l.b16 %v727
        %v3143 = vunpack.c.h.b16 %v727
        %v3144 = vunpack.c.l.b16 %v728
        %v3145 = vunpack.c.h.b16 %v728
        %v3146 = vunpack.c.l.b16 %v729
        %v3147 = vunpack.c.h.b16 %v729
        %v3148 = vunpack.c.l.b16 %v730
        %v3149 = vunpack.c.h.b16 %v730
        %v3150 = vunpack.c.l.b16 %v731
        %v3151 = vunpack.c.h.b16 %v731
        %v3152 = vunpack.c.l.b16 %v732
        %v3153 = vunpack.c.h.b16 %v732
        %v3154 = vunpack.c.l.b16 %v733
        %v3155 = vunpack.c.h.b16 %v733
        %v3156 = vunpack.c.l.b16 %v734
        %v3157 = vunpack.c.h.b16 %v734
        %v3158 = vunpack.c.l.b16 %v735
        %v3159 = vunpack.c.h.b16 %v735
        %v3160 = vunpack.c.l.b16 %v736
        %v3161 = vunpack.c.h.b16 %v736
        %v3162 = vunpack.c.l.b16 %v737
        %v3163 = vunpack.c.h.b16 %v737
        %v3164 = vunpack.c.l.b16 %v738
        %v3165 = vunpack.c.h.b16 %v738
        %v3166 = vunpack.c.l.b16 %v739
        %v3167 = vunpack.c.h.b16 %v739
        %v3168 = vunpack.c.l.b16 %v740
        %v3169 = vunpack.c.h.b16 %v740
        %v3170 = vunpack.c.l.b16 %v741
        %v3171 = vunpack.c.h.b16 %v741
        %v3172 = vunpack.c.l.b16 %v742
        %v3173 = vunpack.c.h.b16 %v742
        %v3174 = vunpack.c.l.b16 %v743
        %v3175 = vunpack.c.h.b16 %v743
        %v3176 = vunpack.c.l.b16 %v744
        %v3177 = vunpack.c.h.b16 %v744
        %v3178 = vunpack.c.l.b16 %v745
        %v3179 = vunpack.c.h.b16 %v745
        %v3180 = vunpack.c.l.b16 %v746
        %v3181 = vunpack.c.h.b16 %v746
        %v3182 = vunpack.c.l.b16 %v747
        %v3183 = vunpack.c.h.b16 %v747
        %v3184 = vunpack.c.l.b16 %v748
        %v3185 = vunpack.c.h.b16 %v748
        %v3186 = vunpack.c.l.b16 %v749
        %v3187 = vunpack.c.h.b16 %v749
        %v3188 = vunpack.c.l.b16 %v750
        %v3189 = vunpack.c.h.b16 %v750
        %v3190 = vunpack.c.l.b16 %v751
        %v3191 = vunpack.c.h.b16 %v751
        %v3192 = vunpack.c.l.b16 %v752
        %v3193 = vunpack.c.h.b16 %v752
        %v3194 = vunpack.c.l.b16 %v753
        %v3195 = vunpack.c.h.b16 %v753
        %v3196 = vunpack.c.l.b16 %v754
        %v3197 = vunpack.c.h.b16 %v754
        %v3198 = vunpack.c.l.b16 %v755
        %v3199 = vunpack.c.h.b16 %v755
        %v3200 = vunpack.c.l.b16 %v756
        %v3201 = vunpack.c.h.b16 %v756
        %v3202 = vunpack.c.l.b16 %v757
        %v3203 = vunpack.c.h.b16 %v757
        %v3204 = vunpack.c.l.b16 %v758
        %v3205 = vunpack.c.h.b16 %v758
        %v3206 = vunpack.c.l.b16 %v759
        %v3207 = vunpack.c.h.b16 %v759
        %v3208 = vunpack.c.l.b16 %v760
        %v3209 = vunpack.c.h.b16 %v760
        %v3210 = vunpack.c.l.b16 %v761
        %v3211 = vunpack.c.h.b16 %v761
        %v3212 = vunpack.c.l.b16 %v762
        %v3213 = vunpack.c.h.b16 %v762
        %v3214 = vunpack.c.l.b16 %v763
        %v3215 = vunpack.c.h.b16 %v763
        %v3216 = vunpack.c.l.b16 %v764
        %v3217 = vunpack.c.h.b16 %v764
        %v3218 = vunpack.c.l.b16 %v765
        %v3219 = vunpack.c.h.b16 %v765
        %v3220 = vunpack.c.l.b16 %v766
        %v3221 = vunpack.c.h.b16 %v766
        %v3222 = vunpack.c.l.b16 %v767
        %v3223 = vunpack.c.h.b16 %v767
        %v3224 = vunpack.c.l.b16 %v768
        %v3225 = vunpack.c.h.b16 %v768
        %v3226 = vunpack.c.l.b16 %v769
        %v3227 = vunpack.c.h.b16 %v769
        %v3228 = vunpack.c.l.b16 %v770
        %v3229 = vunpack.c.h.b16 %v770
        %v3230 = vunpack.c.l.b16 %v771
        %v3231 = vunpack.c.h.b16 %v771
        %v3232 = vunpack.c.l.b16 %v772
        %v3233 = vunpack.c.h.b16 %v772
        %v3234 = vunpack.c.l.b16 %v773
        %v3235 = vunpack.c.h.b16 %v773
        %v3236 = vunpack.c.l.b16 %v774
        %v3237 = vunpack.c.h.b16 %v774
        %v3238 = vunpack.c.l.b16 %v775
        %v3239 = vunpack.c.h.b16 %v775
        %v3240 = vunpack.c.l.b16 %v776
        %v3241 = vunpack.c.h.b16 %v776
        %v3242 = vunpack.c.l.b16 %v777
        %v3243 = vunpack.c.h.b16 %v777
        %v3244 = vunpack.c.l.b16 %v778
        %v3245 = vunpack.c.h.b16 %v778
        %v3246 = vunpack.c.l.b16 %v779
        %v3247 = vunpack.c.h.b16 %v779
        %v3248 = vunpack.c.l.b16 %v780
        %v3249 = vunpack.c.h.b16 %v780
        %v3250 = vunpack.c.l.b16 %v781
        %v3251 = vunpack.c.h.b16 %v781
        %v3252 = vunpack.c.l.b16 %v782
        %v3253 = vunpack.c.h.b16 %v782
        %v3254 = vunpack.c.l.b16 %v783
        %v3255 = vunpack.c.h.b16 %v783
        %v3256 = vunpack.c.l.b16 %v784
        %v3257 = vunpack.c.h.b16 %v784
        %v3258 = vunpack.c.l.b16 %v785
        %v3259 = vunpack.c.h.b16 %v785
        %v3260 = vunpack.c.l.b16 %v786
        %v3261 = vunpack.c.h.b16 %v786
        %v3262 = vunpack.c.l.b16 %v787
        %v3263 = vunpack.c.h.b16 %v787
        %v3264 = vunpack.c.l.b16 %v788
        %v3265 = vunpack.c.h.b16 %v788
        %v3266 = vunpack.c.l.b16 %v789
        %v3267 = vunpack.c.h.b16 %v789
        %v3268 = vunpack.c.l.b16 %v790
        %v3269 = vunpack.c.h.b16 %v790
        %v3270 = vunpack.c.l.b16 %v791
        %v3271 = vunpack.c.h.b16 %v791
        %v3272 = vunpack.c.l.b16 %v792
        %v3273 = vunpack.c.h.b16 %v792
        %v3274 = vunpack.c.l.b16 %v793
        %v3275 = vunpack.c.h.b16 %v793
        %v3276 = vunpack.c.l.b16 %v794
        %v3277 = vunpack.c.h.b16 %v794
        %v3278 = vunpack.c.l.b16 %v795
        %v3279 = vunpack.c.h.b16 %v795
        %v3280 = vunpack.c.l.b16 %v796
        %v3281 = vunpack.c.h.b16 %v796
        %v3282 = vunpack.c.l.b16 %v797
        %v3283 = vunpack.c.h.b16 %v797
        %v3284 = vunpack.c.l.b16 %v798
        %v3285 = vunpack.c.h.b16 %v798
        %v3286 = vunpack.c.l.b16 %v799
        %v3287 = vunpack.c.h.b16 %v799
        %v3288 = vunpack.c.l.b16 %v800
        %v3289 = vunpack.c.h.b16 %v800
        %v3290 = vunpack.c.l.b16 %v801
        %v3291 = vunpack.c.h.b16 %v801
        %v3292 = vunpack.c.l.b16 %v802
        %v3293 = vunpack.c.h.b16 %v802
        %v3294 = vunpack.c.l.b16 %v803
        %v3295 = vunpack.c.h.b16 %v803
        %v3296 = vunpack.c.l.b16 %v804
        %v3297 = vunpack.c.h.b16 %v804
        %v3298 = vunpack.c.l.b16 %v805
        %v3299 = vunpack.c.h.b16 %v805
        %v3300 = vunpack.c.l.b16 %v806
        %v3301 = vunpack.c.h.b16 %v806
        %v3302 = vunpack.c.l.b16 %v807
        %v3303 = vunpack.c.h.b16 %v807
        %v3304 = vunpack.c.l.b16 %v808
        %v3305 = vunpack.c.h.b16 %v808
        %v3306 = vunpack.c.l.b16 %v809
        %v3307 = vunpack.c.h.b16 %v809
        %v3308 = vunpack.c.l.b16 %v810
        %v3309 = vunpack.c.h.b16 %v810
        %v3310 = vunpack.c.l.b16 %v811
        %v3311 = vunpack.c.h.b16 %v811
        %v3312 = vunpack.c.l.b16 %v812
        %v3313 = vunpack.c.h.b16 %v812
        %v3314 = vunpack.c.l.b16 %v813
        %v3315 = vunpack.c.h.b16 %v813
        %v3316 = vunpack.c.l.b16 %v814
        %v3317 = vunpack.c.h.b16 %v814
        %v3318 = vunpack.c.l.b16 %v815
        %v3319 = vunpack.c.h.b16 %v815
        %v3320 = vunpack.c.l.b16 %v816
        %v3321 = vunpack.c.h.b16 %v816
        %v3322 = vunpack.c.l.b16 %v817
        %v3323 = vunpack.c.h.b16 %v817
        %v3324 = vunpack.c.l.b16 %v818
        %v3325 = vunpack.c.h.b16 %v818
        %v3326 = vunpack.c.l.b16 %v819
        %v3327 = vunpack.c.h.b16 %v819
        %v3328 = vunpack.c.l.b16 %v820
        %v3329 = vunpack.c.h.b16 %v820
        %v3330 = vunpack.c.l.b16 %v821
        %v3331 = vunpack.c.h.b16 %v821
        %v3332 = vunpack.c.l.b16 %v822
        %v3333 = vunpack.c.h.b16 %v822
        %v3334 = vunpack.c.l.b16 %v823
        %v3335 = vunpack.c.h.b16 %v823
        %v3336 = vunpack.c.l.b16 %v824
        %v3337 = vunpack.c.h.b16 %v824
        %v3338 = vunpack.c.l.b16 %v825
        %v3339 = vunpack.c.h.b16 %v825
        %v3340 = vunpack.c.l.b16 %v826
        %v3341 = vunpack.c.h.b16 %v826
        %v3342 = vunpack.c.l.b16 %v827
        %v3343 = vunpack.c.h.b16 %v827
        %v3344 = vunpack.c.l.b16 %v828
        %v3345 = vunpack.c.h.b16 %v828
        %v3346 = vunpack.c.l.b16 %v829
        %v3347 = vunpack.c.h.b16 %v829
        %v3348 = vunpack.c.l.b16 %v830
        %v3349 = vunpack.c.h.b16 %v830
        %v3350 = vunpack.c.l.b16 %v831
        %v3351 = vunpack.c.h.b16 %v831
        %v3352 = vunpack.c.l.b16 %v832
        %v3353 = vunpack.c.h.b16 %v832
        %v3354 = vunpack.c.l.b16 %v833
        %v3355 = vunpack.c.h.b16 %v833
        %v3356 = vunpack.c.l.b16 %v834
        %v3357 = vunpack.c.h.b16 %v834
        %v3358 = vunpack.c.l.b16 %v835
        %v3359 = vunpack.c.h.b16 %v835
        %v3360 = vunpack.c.l.b16 %v836
        %v3361 = vunpack.c.h.b16 %v836
        %v3362 = vunpack.c.l.b16 %v837
        %v3363 = vunpack.c.h.b16 %v837
        %v3364 = vunpack.c.l.b16 %v838
        %v3365 = vunpack.c.h.b16 %v838
        %v3366 = vunpack.c.l.b16 %v839
        %v3367 = vunpack.c.h.b16 %v839
        %v3368 = vunpack.c.l.b16 %v840
        %v3369 = vunpack.c.h.b16 %v840
        %v3370 = vunpack.c.l.b16 %v841
        %v3371 = vunpack.c.h.b16 %v841
        %v3372 = vunpack.c.l.b16 %v842
        %v3373 = vunpack.c.h.b16 %v842
        %v3374 = vunpack.c.l.b16 %v843
        %v3375 = vunpack.c.h.b16 %v843
        %v3376 = vunpack.c.l.b16 %v844
        %v3377 = vunpack.c.h.b16 %v844
        %v3378 = vunpack.c.l.b16 %v845
        %v3379 = vunpack.c.h.b16 %v845
        %v3380 = vunpack.c.l.b16 %v846
        %v3381 = vunpack.c.h.b16 %v846
        %v3382 = vunpack.c.l.b16 %v847
        %v3383 = vunpack.c.h.b16 %v847
        %v3384 = vunpack.c.l.b16 %v848
        %v3385 = vunpack.c.h.b16 %v848
        %v3386 = vunpack.c.l.b16 %v849
        %v3387 = vunpack.c.h.b16 %v849
        %v3388 = vunpack.c.l.b16 %v850
        %v3389 = vunpack.c.h.b16 %v850
        %v3390 = vunpack.c.l.b16 %v851
        %v3391 = vunpack.c.h.b16 %v851
        %v3392 = vunpack.c.l.b16 %v852
        %v3393 = vunpack.c.h.b16 %v852
        %v3394 = vunpack.c.l.b16 %v853
        %v3395 = vunpack.c.h.b16 %v853
        %v3396 = vunpack.c.l.b16 %v854
        %v3397 = vunpack.c.h.b16 %v854
        %v3398 = vunpack.c.l.b16 %v855
        %v3399 = vunpack.c.h.b16 %v855
        %v3400 = vunpack.c.l.b16 %v856
        %v3401 = vunpack.c.h.b16 %v856
        %v3402 = vunpack.c.l.b16 %v857
        %v3403 = vunpack.c.h.b16 %v857
        %v3404 = vunpack.c.l.b16 %v858
        %v3405 = vunpack.c.h.b16 %v858
        %v3406 = vunpack.c.l.b16 %v859
        %v3407 = vunpack.c.h.b16 %v859
        %v3408 = vunpack.c.l.b16 %v860
        %v3409 = vunpack.c.h.b16 %v860
        %v3410 = vunpack.c.l.b16 %v861
        %v3411 = vunpack.c.h.b16 %v861
        %v3412 = vunpack.c.l.b16 %v862
        %v3413 = vunpack.c.h.b16 %v862
        %v3414 = vunpack.c.l.b16 %v863
        %v3415 = vunpack.c.h.b16 %v863
        %v3416 = vunpack.c.l.b16 %v864
        %v3417 = vunpack.c.h.b16 %v864
        %v3418 = vunpack.c.l.b16 %v865
        %v3419 = vunpack.c.h.b16 %v865
        %v3420 = vunpack.c.l.b16 %v866
        %v3421 = vunpack.c.h.b16 %v866
        %v3422 = vunpack.c.l.b16 %v867
        %v3423 = vunpack.c.h.b16 %v867
        %v3424 = vunpack.c.l.b16 %v868
        %v3425 = vunpack.c.h.b16 %v868
        %v3426 = vunpack.c.l.b16 %v869
        %v3427 = vunpack.c.h.b16 %v869
        %v3428 = vunpack.c.l.b16 %v870
        %v3429 = vunpack.c.h.b16 %v870
        %v3430 = vunpack.c.l.b16 %v871
        %v3431 = vunpack.c.h.b16 %v871
        %v3432 = vunpack.c.l.b16 %v872
        %v3433 = vunpack.c.h.b16 %v872
        %v3434 = vunpack.c.l.b16 %v873
        %v3435 = vunpack.c.h.b16 %v873
        %v3436 = vunpack.c.l.b16 %v874
        %v3437 = vunpack.c.h.b16 %v874
        %v3438 = vunpack.c.l.b16 %v875
        %v3439 = vunpack.c.h.b16 %v875
        %v3440 = vunpack.c.l.b16 %v876
        %v3441 = vunpack.c.h.b16 %v876
        %v3442 = vunpack.c.l.b16 %v877
        %v3443 = vunpack.c.h.b16 %v877
        %v3444 = vunpack.c.l.b16 %v878
        %v3445 = vunpack.c.h.b16 %v878
        %v3446 = vunpack.c.l.b16 %v879
        %v3447 = vunpack.c.h.b16 %v879
        %v3448 = vunpack.c.l.b16 %v880
        %v3449 = vunpack.c.h.b16 %v880
        %v3450 = vunpack.c.l.b16 %v881
        %v3451 = vunpack.c.h.b16 %v881
        %v3452 = vunpack.c.l.b16 %v882
        %v3453 = vunpack.c.h.b16 %v882
        %v3454 = vunpack.c.l.b16 %v883
        %v3455 = vunpack.c.h.b16 %v883
        %v3456 = vunpack.c.l.b16 %v884
        %v3457 = vunpack.c.h.b16 %v884
        %v3458 = vunpack.c.l.b16 %v885
        %v3459 = vunpack.c.h.b16 %v885
        %v3460 = vunpack.c.l.b16 %v886
        %v3461 = vunpack.c.h.b16 %v886
        %v3462 = vunpack.c.l.b16 %v887
        %v3463 = vunpack.c.h.b16 %v887
        %v3464 = vunpack.c.l.b16 %v888
        %v3465 = vunpack.c.h.b16 %v888
        %v3466 = vunpack.c.l.b16 %v889
        %v3467 = vunpack.c.h.b16 %v889
        %v3468 = vunpack.c.l.b16 %v890
        %v3469 = vunpack.c.h.b16 %v890
        %v3470 = vunpack.c.l.b16 %v891
        %v3471 = vunpack.c.h.b16 %v891
        %v3472 = vunpack.c.l.b16 %v892
        %v3473 = vunpack.c.h.b16 %v892
        %v3474 = vunpack.c.l.b16 %v893
        %v3475 = vunpack.c.h.b16 %v893
        %v3476 = vunpack.c.l.b16 %v894
        %v3477 = vunpack.c.h.b16 %v894
        %v3478 = vunpack.c.l.b16 %v895
        %v3479 = vunpack.c.h.b16 %v895
        %v3480 = vunpack.c.l.b16 %v896
        %v3481 = vunpack.c.h.b16 %v896
        %v3482 = vunpack.c.l.b16 %v897
        %v3483 = vunpack.c.h.b16 %v897
        %v3484 = vunpack.c.l.b16 %v898
        %v3485 = vunpack.c.h.b16 %v898
        %v3486 = vunpack.c.l.b16 %v899
        %v3487 = vunpack.c.h.b16 %v899
        %v3488 = vunpack.c.l.b16 %v900
        %v3489 = vunpack.c.h.b16 %v900
        %v3490 = vunpack.c.l.b16 %v901
        %v3491 = vunpack.c.h.b16 %v901
        %v3492 = vunpack.c.l.b16 %v902
        %v3493 = vunpack.c.h.b16 %v902
        %v3494 = vunpack.c.l.b16 %v903
        %v3495 = vunpack.c.h.b16 %v903
        %v3496 = vunpack.c.l.b16 %v904
        %v3497 = vunpack.c.h.b16 %v904
        %v3498 = vunpack.c.l.b16 %v905
        %v3499 = vunpack.c.h.b16 %v905
        %v3500 = vunpack.c.l.b16 %v906
        %v3501 = vunpack.c.h.b16 %v906
        %v3502 = vunpack.c.l.b16 %v907
        %v3503 = vunpack.c.h.b16 %v907
        %v3504 = vunpack.c.l.b16 %v908
        %v3505 = vunpack.c.h.b16 %v908
        %v3506 = vunpack.c.l.b16 %v909
        %v3507 = vunpack.c.h.b16 %v909
        %v3508 = vunpack.c.l.b16 %v910
        %v3509 = vunpack.c.h.b16 %v910
        %v3510 = vunpack.c.l.b16 %v911
        %v3511 = vunpack.c.h.b16 %v911
        %v3512 = vunpack.c.l.b16 %v912
        %v3513 = vunpack.c.h.b16 %v912
        %v3514 = vunpack.c.l.b16 %v913
        %v3515 = vunpack.c.h.b16 %v913
        %v3516 = vunpack.c.l.b16 %v914
        %v3517 = vunpack.c.h.b16 %v914
        %v3518 = vunpack.c.l.b16 %v915
        %v3519 = vunpack.c.h.b16 %v915
        %v3520 = vunpack.c.l.b16 %v916
        %v3521 = vunpack.c.h.b16 %v916
        %v3522 = vunpack.c.l.b16 %v917
        %v3523 = vunpack.c.h.b16 %v917
        %v3524 = vunpack.c.l.b16 %v918
        %v3525 = vunpack.c.h.b16 %v918
        %v3526 = vunpack.c.l.b16 %v919
        %v3527 = vunpack.c.h.b16 %v919
        %v3528 = vunpack.c.l.b16 %v920
        %v3529 = vunpack.c.h.b16 %v920
        %v3530 = vunpack.c.l.b16 %v921
        %v3531 = vunpack.c.h.b16 %v921
        %v3532 = vunpack.c.l.b16 %v922
        %v3533 = vunpack.c.h.b16 %v922
        %v3534 = vunpack.c.l.b16 %v923
        %v3535 = vunpack.c.h.b16 %v923
        %v3536 = vunpack.c.l.b16 %v924
        %v3537 = vunpack.c.h.b16 %v924
        %v3538 = vunpack.c.l.b16 %v925
        %v3539 = vunpack.c.h.b16 %v925
        %v3540 = vunpack.c.l.b16 %v926
        %v3541 = vunpack.c.h.b16 %v926
        %v3542 = vunpack.c.l.b16 %v927
        %v3543 = vunpack.c.h.b16 %v927
        %v3544 = vunpack.c.l.b16 %v928
        %v3545 = vunpack.c.h.b16 %v928
        %v3546 = vunpack.c.l.b16 %v929
        %v3547 = vunpack.c.h.b16 %v929
        %v3548 = vunpack.c.l.b16 %v930
        %v3549 = vunpack.c.h.b16 %v930
        %v3550 = vunpack.c.l.b16 %v931
        %v3551 = vunpack.c.h.b16 %v931
        %v3552 = vunpack.c.l.b16 %v932
        %v3553 = vunpack.c.h.b16 %v932
        %v3554 = vunpack.c.l.b16 %v933
        %v3555 = vunpack.c.h.b16 %v933
        %v3556 = vunpack.c.l.b16 %v934
        %v3557 = vunpack.c.h.b16 %v934
        %v3558 = vunpack.c.l.b16 %v935
        %v3559 = vunpack.c.h.b16 %v935
        %v3560 = vunpack.c.l.b16 %v936
        %v3561 = vunpack.c.h.b16 %v936
        %v3562 = vunpack.c.l.b16 %v937
        %v3563 = vunpack.c.h.b16 %v937
        %v3564 = vunpack.c.l.b16 %v938
        %v3565 = vunpack.c.h.b16 %v938
        %v3566 = vunpack.c.l.b16 %v939
        %v3567 = vunpack.c.h.b16 %v939
        %v3568 = vunpack.c.l.b16 %v940
        %v3569 = vunpack.c.h.b16 %v940
        %v3570 = vunpack.c.l.b16 %v941
        %v3571 = vunpack.c.h.b16 %v941
        %v3572 = vunpack.c.l.b16 %v942
        %v3573 = vunpack.c.h.b16 %v942
        %v3574 = vunpack.c.l.b16 %v943
        %v3575 = vunpack.c.h.b16 %v943
        %v3576 = vunpack.c.l.b16 %v944
        %v3577 = vunpack.c.h.b16 %v944
        %v3578 = vunpack.c.l.b16 %v945
        %v3579 = vunpack.c.h.b16 %v945
        %v3580 = vunpack.c.l.b16 %v946
        %v3581 = vunpack.c.h.b16 %v946
        %v3582 = vunpack.c.l.b16 %v947
        %v3583 = vunpack.c.h.b16 %v947
        %v3584 = vunpack.c.l.b16 %v948
        %v3585 = vunpack.c.h.b16 %v948
        %v3586 = vunpack.c.l.b16 %v949
        %v3587 = vunpack.c.h.b16 %v949
        %v3588 = vunpack.c.l.b16 %v950
        %v3589 = vunpack.c.h.b16 %v950
        %v3590 = vunpack.c.l.b16 %v951
        %v3591 = vunpack.c.h.b16 %v951
        %v3592 = vunpack.c.l.b16 %v952
        %v3593 = vunpack.c.h.b16 %v952
        %v3594 = vunpack.c.l.b16 %v953
        %v3595 = vunpack.c.h.b16 %v953
        %v3596 = vunpack.c.l.b16 %v954
        %v3597 = vunpack.c.h.b16 %v954
        %v3598 = vunpack.c.l.b16 %v955
        %v3599 = vunpack.c.h.b16 %v955
        %v3600 = vunpack.c.l.b16 %v956
        %v3601 = vunpack.c.h.b16 %v956
        %v3602 = vunpack.c.l.b16 %v957
        %v3603 = vunpack.c.h.b16 %v957
        %v3604 = vunpack.c.l.b16 %v958
        %v3605 = vunpack.c.h.b16 %v958
        %v3606 = vunpack.c.l.b16 %v959
        %v3607 = vunpack.c.h.b16 %v959
        %v3608 = vunpack.c.l.b16 %v960
        %v3609 = vunpack.c.h.b16 %v960
        %v3610 = vunpack.c.l.b16 %v961
        %v3611 = vunpack.c.h.b16 %v961
        %v3612 = vunpack.c.l.b16 %v962
        %v3613 = vunpack.c.h.b16 %v962
        %v3614 = vunpack.c.l.b16 %v963
        %v3615 = vunpack.c.h.b16 %v963
        %v3616 = vunpack.c.l.b16 %v964
        %v3617 = vunpack.c.h.b16 %v964
        %v3618 = vunpack.c.l.b16 %v965
        %v3619 = vunpack.c.h.b16 %v965
        %v3620 = vunpack.c.l.b16 %v966
        %v3621 = vunpack.c.h.b16 %v966
        %v3622 = vunpack.c.l.b16 %v967
        %v3623 = vunpack.c.h.b16 %v967
        %v3624 = vunpack.c.l.b16 %v968
        %v3625 = vunpack.c.h.b16 %v968
        %v3626 = vunpack.c.l.b16 %v969
        %v3627 = vunpack.c.h.b16 %v969
        %v3628 = vunpack.c.l.b16 %v970
        %v3629 = vunpack.c.h.b16 %v970
        %v3630 = vunpack.c.l.b16 %v971
        %v3631 = vunpack.c.h.b16 %v971
        %v3632 = vunpack.c.l.b16 %v972
        %v3633 = vunpack.c.h.b16 %v972
        %v3634 = vunpack.c.l.b16 %v973
        %v3635 = vunpack.c.h.b16 %v973
        %v3636 = vunpack.c.l.b16 %v974
        %v3637 = vunpack.c.h.b16 %v974
        %v3638 = vunpack.c.l.b16 %v975
        %v3639 = vunpack.c.h.b16 %v975
        %v3640 = vunpack.c.l.b16 %v976
        %v3641 = vunpack.c.h.b16 %v976
        %v3642 = vunpack.c.l.b16 %v977
        %v3643 = vunpack.c.h.b16 %v977
        %v3644 = vunpack.c.l.b16 %v978
        %v3645 = vunpack.c.h.b16 %v978
        %v3646 = vunpack.c.l.b16 %v979
        %v3647 = vunpack.c.h.b16 %v979
        %v3648 = vunpack.c.l.b16 %v980
        %v3649 = vunpack.c.h.b16 %v980
        %v3650 = vunpack.c.l.b16 %v981
        %v3651 = vunpack.c.h.b16 %v981
        %v3652 = vunpack.c.l.b16 %v982
        %v3653 = vunpack.c.h.b16 %v982
        %v3654 = vunpack.c.l.b16 %v983
        %v3655 = vunpack.c.h.b16 %v983
        %v3656 = vunpack.c.l.b16 %v984
        %v3657 = vunpack.c.h.b16 %v984
        %v3658 = vunpack.c.l.b16 %v985
        %v3659 = vunpack.c.h.b16 %v985
        %v3660 = vunpack.c.l.b16 %v986
        %v3661 = vunpack.c.h.b16 %v986
        %v3662 = vunpack.c.l.b16 %v987
        %v3663 = vunpack.c.h.b16 %v987
        %v3664 = vunpack.c.l.b16 %v988
        %v3665 = vunpack.c.h.b16 %v988
        %v3666 = vunpack.c.l.b16 %v989
        %v3667 = vunpack.c.h.b16 %v989
        %v3668 = vunpack.c.l.b16 %v990
        %v3669 = vunpack.c.h.b16 %v990
        %v3670 = vunpack.c.l.b16 %v991
        %v3671 = vunpack.c.h.b16 %v991
        %v3672 = vunpack.c.l.b16 %v992
        %v3673 = vunpack.c.h.b16 %v992
        %v3674 = vunpack.c.l.b16 %v993
        %v3675 = vunpack.c.h.b16 %v993
        %v3676 = vunpack.c.l.b16 %v994
        %v3677 = vunpack.c.h.b16 %v994
        %v3678 = vunpack.c.l.b16 %v995
        %v3679 = vunpack.c.h.b16 %v995
        %v3680 = vunpack.c.l.b16 %v996
        %v3681 = vunpack.c.h.b16 %v996
        %v3682 = vunpack.c.l.b16 %v997
        %v3683 = vunpack.c.h.b16 %v997
        %v3684 = vunpack.c.l.b16 %v998
        %v3685 = vunpack.c.h.b16 %v998
        %v3686 = vunpack.c.l.b16 %v999
        %v3687 = vunpack.c.h.b16 %v999
        %v3688 = vunpack.c.l.b16 %v1000
        %v3689 = vunpack.c.h.b16 %v1000
        %v3690 = vunpack.c.l.b16 %v1001
        %v3691 = vunpack.c.h.b16 %v1001
        %v3692 = vunpack.c.l.b16 %v1002
        %v3693 = vunpack.c.h.b16 %v1002
        %v3694 = vunpack.c.l.b16 %v1003
        %v3695 = vunpack.c.h.b16 %v1003
        %v3696 = vunpack.c.l.b16 %v1004
        %v3697 = vunpack.c.h.b16 %v1004
        %v3698 = vunpack.c.l.b16 %v1005
        %v3699 = vunpack.c.h.b16 %v1005
        %v3700 = vunpack.c.l.b16 %v1006
        %v3701 = vunpack.c.h.b16 %v1006
        %v3702 = vunpack.c.l.b16 %v1007
        %v3703 = vunpack.c.h.b16 %v1007
        %v3704 = vunpack.c.l.b16 %v1008
        %v3705 = vunpack.c.h.b16 %v1008
        %v3706 = vunpack.c.l.b16 %v1009
        %v3707 = vunpack.c.h.b16 %v1009
        %v3708 = vunpack.c.l.b16 %v1010
        %v3709 = vunpack.c.h.b16 %v1010
        %v3710 = vunpack.c.l.b16 %v1011
        %v3711 = vunpack.c.h.b16 %v1011
        %v3712 = vunpack.c.l.b16 %v1012
        %v3713 = vunpack.c.h.b16 %v1012
        %v3714 = vunpack.c.l.b16 %v1013
        %v3715 = vunpack.c.h.b16 %v1013
        %v3716 = vunpack.c.l.b16 %v1014
        %v3717 = vunpack.c.h.b16 %v1014
        %v3718 = vunpack.c.l.b16 %v1015
        %v3719 = vunpack.c.h.b16 %v1015
        %v3720 = vunpack.c.l.b16 %v1016
        %v3721 = vunpack.c.h.b16 %v1016
        %v3722 = vunpack.c.l.b16 %v1017
        %v3723 = vunpack.c.h.b16 %v1017
        %v3724 = vunpack.c.l.b16 %v1018
        %v3725 = vunpack.c.h.b16 %v1018
        %v3726 = vunpack.c.l.b16 %v1019
        %v3727 = vunpack.c.h.b16 %v1019
        %v3728 = vunpack.c.l.b16 %v1020
        %v3729 = vunpack.c.h.b16 %v1020
        %v3730 = vunpack.c.l.b16 %v1021
        %v3731 = vunpack.c.h.b16 %v1021
        %v3732 = vunpack.c.l.b16 %v1022
        %v3733 = vunpack.c.h.b16 %v1022
        %v3734 = vunpack.c.l.b16 %v1023
        %v3735 = vunpack.c.h.b16 %v1023
        %v3736 = vunpack.c.l.b16 %v1024
        %v3737 = vunpack.c.h.b16 %v1024
        %v3738 = vunpack.c.l.b16 %v1025
        %v3739 = vunpack.c.h.b16 %v1025
        %v3740 = vunpack.c.l.b16 %v1026
        %v3741 = vunpack.c.h.b16 %v1026
        %v3742 = vunpack.c.l.b16 %v1027
        %v3743 = vunpack.c.h.b16 %v1027
        %v3744 = vunpack.c.l.b16 %v1028
        %v3745 = vunpack.c.h.b16 %v1028
        %v3746 = vunpack.c.l.b16 %v1029
        %v3747 = vunpack.c.h.b16 %v1029
        %v3748 = vunpack.c.l.b16 %v1030
        %v3749 = vunpack.c.h.b16 %v1030
        %v3750 = vunpack.c.l.b16 %v1031
        %v3751 = vunpack.c.h.b16 %v1031
        %v3752 = vunpack.c.l.b16 %v1032
        %v3753 = vunpack.c.h.b16 %v1032
        %v3754 = vunpack.c.l.b16 %v1033
        %v3755 = vunpack.c.h.b16 %v1033
        %v3756 = vunpack.c.l.b16 %v1034
        %v3757 = vunpack.c.h.b16 %v1034
        %v3758 = vunpack.c.l.b16 %v1035
        %v3759 = vunpack.c.h.b16 %v1035
        %v3760 = vunpack.c.l.b16 %v1036
        %v3761 = vunpack.c.h.b16 %v1036
        %v3762 = vunpack.c.l.b16 %v1037
        %v3763 = vunpack.c.h.b16 %v1037
        %v3764 = vunpack.c.l.b16 %v1038
        %v3765 = vunpack.c.h.b16 %v1038
        %v3766 = vunpack.c.l.b16 %v1039
        %v3767 = vunpack.c.h.b16 %v1039
        %v3768 = vunpack.c.l.b16 %v1040
        %v3769 = vunpack.c.h.b16 %v1040
        %v3770 = vunpack.c.l.b16 %v1041
        %v3771 = vunpack.c.h.b16 %v1041
        %v3772 = vunpack.c.l.b16 %v1042
        %v3773 = vunpack.c.h.b16 %v1042
        %v3774 = vunpack.c.l.b16 %v1043
        %v3775 = vunpack.c.h.b16 %v1043
        %v3776 = vunpack.c.l.b16 %v1044
        %v3777 = vunpack.c.h.b16 %v1044
        %v3778 = vunpack.c.l.b16 %v1045
        %v3779 = vunpack.c.h.b16 %v1045
        %v3780 = vunpack.c.l.b16 %v1046
        %v3781 = vunpack.c.h.b16 %v1046
        %v3782 = vunpack.c.l.b16 %v1047
        %v3783 = vunpack.c.h.b16 %v1047
        %v3784 = vunpack.c.l.b16 %v1048
        %v3785 = vunpack.c.h.b16 %v1048
        %v3786 = vunpack.c.l.b16 %v1049
        %v3787 = vunpack.c.h.b16 %v1049
        %v3788 = vunpack.c.l.b16 %v1050
        %v3789 = vunpack.c.h.b16 %v1050
        %v3790 = vunpack.c.l.b16 %v1051
        %v3791 = vunpack.c.h.b16 %v1051
        %v3792 = vunpack.c.l.b16 %v1052
        %v3793 = vunpack.c.h.b16 %v1052
        %v3794 = vunpack.c.l.b16 %v1053
        %v3795 = vunpack.c.h.b16 %v1053
        %v3796 = vunpack.c.l.b16 %v1054
        %v3797 = vunpack.c.h.b16 %v1054
        %v3798 = vunpack.c.l.b16 %v1055
        %v3799 = vunpack.c.h.b16 %v1055
        %v3800 = vunpack.c.l.b16 %v1056
        %v3801 = vunpack.c.h.b16 %v1056
        %v3802 = vunpack.c.l.b16 %v1057
        %v3803 = vunpack.c.h.b16 %v1057
        %v3804 = vunpack.c.l.b16 %v1058
        %v3805 = vunpack.c.h.b16 %v1058
        %v3806 = vunpack.c.l.b16 %v1059
        %v3807 = vunpack.c.h.b16 %v1059
        %v3808 = vunpack.c.l.b16 %v1060
        %v3809 = vunpack.c.h.b16 %v1060
        %v3810 = vunpack.c.l.b16 %v1061
        %v3811 = vunpack.c.h.b16 %v1061
        %v3812 = vunpack.c.l.b16 %v1062
        %v3813 = vunpack.c.h.b16 %v1062
        %v3814 = vunpack.c.l.b16 %v1063
        %v3815 = vunpack.c.h.b16 %v1063
        %v3816 = vunpack.c.l.b16 %v1064
        %v3817 = vunpack.c.h.b16 %v1064
        %v3818 = vunpack.c.l.b16 %v1065
        %v3819 = vunpack.c.h.b16 %v1065
        %v3820 = vunpack.c.l.b16 %v1066
        %v3821 = vunpack.c.h.b16 %v1066
        %v3822 = vunpack.c.l.b16 %v1067
        %v3823 = vunpack.c.h.b16 %v1067
        %v3824 = vunpack.c.l.b16 %v1068
        %v3825 = vunpack.c.h.b16 %v1068
        %v3826 = vunpack.c.l.b16 %v1069
        %v3827 = vunpack.c.h.b16 %v1069
        %v3828 = vunpack.c.l.b16 %v1070
        %v3829 = vunpack.c.h.b16 %v1070
        %v3830 = vunpack.c.l.b16 %v1071
        %v3831 = vunpack.c.h.b16 %v1071
        %v3832 = vunpack.c.l.b16 %v1072
        %v3833 = vunpack.c.h.b16 %v1072
        %v3834 = vunpack.c.l.b16 %v1073
        %v3835 = vunpack.c.h.b16 %v1073
        %v3836 = vunpack.c.l.b16 %v1074
        %v3837 = vunpack.c.h.b16 %v1074
        %v3838 = vunpack.c.l.b16 %v1075
        %v3839 = vunpack.c.h.b16 %v1075
        %v3840 = vunpack.c.l.b16 %v1076
        %v3841 = vunpack.c.h.b16 %v1076
        %v3842 = vunpack.c.l.b16 %v1077
        %v3843 = vunpack.c.h.b16 %v1077
        %v3844 = vunpack.c.l.b16 %v1078
        %v3845 = vunpack.c.h.b16 %v1078
        %v3846 = vunpack.c.l.b16 %v1079
        %v3847 = vunpack.c.h.b16 %v1079
        %v3848 = vunpack.c.l.b16 %v1080
        %v3849 = vunpack.c.h.b16 %v1080
        %v3850 = vunpack.c.l.b16 %v1081
        %v3851 = vunpack.c.h.b16 %v1081
        %v3852 = vunpack.c.l.b16 %v1082
        %v3853 = vunpack.c.h.b16 %v1082
        %v3854 = vunpack.c.l.b16 %v1083
        %v3855 = vunpack.c.h.b16 %v1083
        %v3856 = vunpack.c.l.b16 %v1084
        %v3857 = vunpack.c.h.b16 %v1084
        %v3858 = vunpack.c.l.b16 %v1085
        %v3859 = vunpack.c.h.b16 %v1085
        %v3860 = vunpack.c.l.b16 %v1086
        %v3861 = vunpack.c.h.b16 %v1086
        %v3862 = vunpack.c.l.b16 %v1087
        %v3863 = vunpack.c.h.b16 %v1087
        %v3864 = vunpack.c.l.b16 %v1088
        %v3865 = vunpack.c.h.b16 %v1088
        %v3866 = vunpack.c.l.b16 %v1089
        %v3867 = vunpack.c.h.b16 %v1089
        %v3868 = vunpack.c.l.b16 %v1090
        %v3869 = vunpack.c.h.b16 %v1090
        %v3870 = vunpack.c.l.b16 %v1091
        %v3871 = vunpack.c.h.b16 %v1091
        %v3872 = vunpack.c.l.b16 %v1092
        %v3873 = vunpack.c.h.b16 %v1092
        %v3874 = vunpack.c.l.b16 %v1093
        %v3875 = vunpack.c.h.b16 %v1093
        %v3876 = vunpack.c.l.b16 %v1094
        %v3877 = vunpack.c.h.b16 %v1094
        %v3878 = vunpack.c.l.b16 %v1095
        %v3879 = vunpack.c.h.b16 %v1095
        %v3880 = vunpack.c.l.b16 %v1096
        %v3881 = vunpack.c.h.b16 %v1096
        %v3882 = vunpack.c.l.b16 %v1097
        %v3883 = vunpack.c.h.b16 %v1097
        %v3884 = vunpack.c.l.b16 %v1098
        %v3885 = vunpack.c.h.b16 %v1098
        %v3886 = vunpack.c.l.b16 %v1099
        %v3887 = vunpack.c.h.b16 %v1099
        %v3888 = vunpack.c.l.b16 %v1100
        %v3889 = vunpack.c.h.b16 %v1100
        %v3890 = vunpack.c.l.b16 %v1101
        %v3891 = vunpack.c.h.b16 %v1101
        %v3892 = vunpack.c.l.b16 %v1102
        %v3893 = vunpack.c.h.b16 %v1102
        %v3894 = vunpack.c.l.b16 %v1103
        %v3895 = vunpack.c.h.b16 %v1103
        %v3896 = vunpack.c.l.b16 %v1104
        %v3897 = vunpack.c.h.b16 %v1104
        %v3898 = vunpack.c.l.b16 %v1105
        %v3899 = vunpack.c.h.b16 %v1105
        %v3900 = vunpack.c.l.b16 %v1106
        %v3901 = vunpack.c.h.b16 %v1106
        %v3902 = vunpack.c.l.b16 %v1107
        %v3903 = vunpack.c.h.b16 %v1107
        %v3904 = vunpack.c.l.b16 %v1108
        %v3905 = vunpack.c.h.b16 %v1108
        %v3906 = vunpack.c.l.b16 %v1109
        %v3907 = vunpack.c.h.b16 %v1109
        %v3908 = vunpack.c.l.b16 %v1110
        %v3909 = vunpack.c.h.b16 %v1110
        %v3910 = vunpack.c.l.b16 %v1111
        %v3911 = vunpack.c.h.b16 %v1111
        %v3912 = vunpack.c.l.b16 %v1112
        %v3913 = vunpack.c.h.b16 %v1112
        %v3914 = vunpack.c.l.b16 %v1113
        %v3915 = vunpack.c.h.b16 %v1113
        %v3916 = vunpack.c.l.b16 %v1114
        %v3917 = vunpack.c.h.b16 %v1114
        %v3918 = vunpack.c.l.b16 %v1115
        %v3919 = vunpack.c.h.b16 %v1115
        %v3920 = vunpack.c.l.b16 %v1116
        %v3921 = vunpack.c.h.b16 %v1116
        %v3922 = vunpack.c.l.b16 %v1117
        %v3923 = vunpack.c.h.b16 %v1117
        %v3924 = vunpack.c.l.b16 %v1118
        %v3925 = vunpack.c.h.b16 %v1118
        %v3926 = vunpack.c.l.b16 %v1119
        %v3927 = vunpack.c.h.b16 %v1119
        %v3928 = vunpack.c.l.b16 %v1120
        %v3929 = vunpack.c.h.b16 %v1120
        %v3930 = vunpack.c.l.b16 %v1121
        %v3931 = vunpack.c.h.b16 %v1121
        %v3932 = vunpack.c.l.b16 %v1122
        %v3933 = vunpack.c.h.b16 %v1122
        %v3934 = vunpack.c.l.b16 %v1123
        %v3935 = vunpack.c.h.b16 %v1123
        %v3936 = vunpack.c.l.b16 %v1124
        %v3937 = vunpack.c.h.b16 %v1124
        %v3938 = vunpack.c.l.b16 %v1125
        %v3939 = vunpack.c.h.b16 %v1125
        %v3940 = vunpack.c.l.b16 %v1126
        %v3941 = vunpack.c.h.b16 %v1126
        %v3942 = vunpack.c.l.b16 %v1127
        %v3943 = vunpack.c.h.b16 %v1127
        %v3944 = vunpack.c.l.b16 %v1128
        %v3945 = vunpack.c.h.b16 %v1128
        %v3946 = vunpack.c.l.b16 %v1129
        %v3947 = vunpack.c.h.b16 %v1129
        %v3948 = vunpack.c.l.b16 %v1130
        %v3949 = vunpack.c.h.b16 %v1130
        %v3950 = vunpack.c.l.b16 %v1131
        %v3951 = vunpack.c.h.b16 %v1131
        %v3952 = vunpack.c.l.b16 %v1132
        %v3953 = vunpack.c.h.b16 %v1132
        %v3954 = vunpack.c.l.b16 %v1133
        %v3955 = vunpack.c.h.b16 %v1133
        %v3956 = vunpack.c.l.b16 %v1134
        %v3957 = vunpack.c.h.b16 %v1134
        %v3958 = vunpack.c.l.b16 %v1135
        %v3959 = vunpack.c.h.b16 %v1135
        %v3960 = vunpack.c.l.b16 %v1136
        %v3961 = vunpack.c.h.b16 %v1136
        %v3962 = vunpack.c.l.b16 %v1137
        %v3963 = vunpack.c.h.b16 %v1137
        %v3964 = vunpack.c.l.b16 %v1138
        %v3965 = vunpack.c.h.b16 %v1138
        %v3966 = vunpack.c.l.b16 %v1139
        %v3967 = vunpack.c.h.b16 %v1139
        %v3968 = vunpack.c.l.b16 %v1140
        %v3969 = vunpack.c.h.b16 %v1140
        %v3970 = vunpack.c.l.b16 %v1141
        %v3971 = vunpack.c.h.b16 %v1141
        %v3972 = vunpack.c.l.b16 %v1142
        %v3973 = vunpack.c.h.b16 %v1142
        %v3974 = vunpack.c.l.b16 %v1143
        %v3975 = vunpack.c.h.b16 %v1143
        %v3976 = vunpack.c.l.b16 %v1144
        %v3977 = vunpack.c.h.b16 %v1144
        %v3978 = vunpack.c.l.b16 %v1145
        %v3979 = vunpack.c.h.b16 %v1145
        %v3980 = vunpack.c.l.b16 %v1146
        %v3981 = vunpack.c.h.b16 %v1146
        %v3982 = vunpack.c.l.b16 %v1147
        %v3983 = vunpack.c.h.b16 %v1147
        %v3984 = vunpack.c.l.b16 %v1148
        %v3985 = vunpack.c.h.b16 %v1148
        %v3986 = vunpack.c.l.b16 %v1149
        %v3987 = vunpack.c.h.b16 %v1149
        %v3988 = vunpack.c.l.b16 %v1150
        %v3989 = vunpack.c.h.b16 %v1150
        %v3990 = vunpack.c.l.b16 %v1151
        %v3991 = vunpack.c.h.b16 %v1151
        %v3992 = vunpack.c.l.b16 %v1152
        %v3993 = vunpack.c.h.b16 %v1152
        %v3994 = vunpack.c.l.b16 %v1153
        %v3995 = vunpack.c.h.b16 %v1153
        %v3996 = vunpack.c.l.b16 %v1154
        %v3997 = vunpack.c.h.b16 %v1154
        %v3998 = vunpack.c.l.b16 %v1155
        %v3999 = vunpack.c.h.b16 %v1155
        %v4000 = vunpack.c.l.b16 %v1156
        %v4001 = vunpack.c.h.b16 %v1156
        %v4002 = vunpack.c.l.b16 %v1157
        %v4003 = vunpack.c.h.b16 %v1157
        %v4004 = vunpack.c.l.b16 %v1158
        %v4005 = vunpack.c.h.b16 %v1158
        %v4006 = vunpack.c.l.b16 %v1159
        %v4007 = vunpack.c.h.b16 %v1159
        %v4008 = vunpack.c.l.b16 %v1160
        %v4009 = vunpack.c.h.b16 %v1160
        %v4010 = vunpack.c.l.b16 %v1161
        %v4011 = vunpack.c.h.b16 %v1161
        %v4012 = vunpack.c.l.b16 %v1162
        %v4013 = vunpack.c.h.b16 %v1162
        %v4014 = vunpack.c.l.b16 %v1163
        %v4015 = vunpack.c.h.b16 %v1163
        %v4016 = vunpack.c.l.b16 %v1164
        %v4017 = vunpack.c.h.b16 %v1164
        %v4018 = vunpack.c.l.b16 %v1165
        %v4019 = vunpack.c.h.b16 %v1165
        %v4020 = vunpack.c.l.b16 %v1166
        %v4021 = vunpack.c.h.b16 %v1166
        %v4022 = vunpack.c.l.b16 %v1167
        %v4023 = vunpack.c.h.b16 %v1167
        %v4024 = vunpack.c.l.b16 %v1168
        %v4025 = vunpack.c.h.b16 %v1168
        %v4026 = vunpack.c.l.b16 %v1169
        %v4027 = vunpack.c.h.b16 %v1169
        %v4028 = vunpack.c.l.b16 %v1170
        %v4029 = vunpack.c.h.b16 %v1170
        %v4030 = vunpack.c.l.b16 %v1171
        %v4031 = vunpack.c.h.b16 %v1171
        %v4032 = vunpack.c.l.b16 %v1172
        %v4033 = vunpack.c.h.b16 %v1172
        %v4034 = vunpack.c.l.b16 %v1173
        %v4035 = vunpack.c.h.b16 %v1173
        %v4036 = vunpack.c.l.b16 %v1174
        %v4037 = vunpack.c.h.b16 %v1174
        %v4038 = vunpack.c.l.b16 %v1175
        %v4039 = vunpack.c.h.b16 %v1175
        %v4040 = vunpack.c.l.b16 %v1176
        %v4041 = vunpack.c.h.b16 %v1176
        %v4042 = vunpack.c.l.b16 %v1177
        %v4043 = vunpack.c.h.b16 %v1177
        %v4044 = vunpack.c.l.b16 %v1178
        %v4045 = vunpack.c.h.b16 %v1178
        %v4046 = vunpack.c.l.b16 %v1179
        %v4047 = vunpack.c.h.b16 %v1179
        %v4048 = vunpack.c.l.b16 %v1180
        %v4049 = vunpack.c.h.b16 %v1180
        %v4050 = vunpack.c.l.b16 %v1181
        %v4051 = vunpack.c.h.b16 %v1181
        %v4052 = vunpack.c.l.b16 %v1182
        %v4053 = vunpack.c.h.b16 %v1182
        %v4054 = vunpack.c.l.b16 %v1183
        %v4055 = vunpack.c.h.b16 %v1183
        %v4056 = vunpack.c.l.b16 %v1184
        %v4057 = vunpack.c.h.b16 %v1184
        %v4058 = vunpack.c.l.b16 %v1185
        %v4059 = vunpack.c.h.b16 %v1185
        %v4060 = vunpack.c.l.b16 %v1186
        %v4061 = vunpack.c.h.b16 %v1186
        %v4062 = vunpack.c.l.b16 %v1187
        %v4063 = vunpack.c.h.b16 %v1187
        %v4064 = vunpack.c.l.b16 %v1188
        %v4065 = vunpack.c.h.b16 %v1188
        %v4066 = vunpack.c.l.b16 %v1189
        %v4067 = vunpack.c.h.b16 %v1189
        %v4068 = vunpack.c.l.b16 %v1190
        %v4069 = vunpack.c.h.b16 %v1190
        %v4070 = vunpack.c.l.b16 %v1191
        %v4071 = vunpack.c.h.b16 %v1191
        %v4072 = vunpack.c.l.b16 %v1192
        %v4073 = vunpack.c.h.b16 %v1192
        %v4074 = vunpack.c.l.b16 %v1193
        %v4075 = vunpack.c.h.b16 %v1193
        %v4076 = vunpack.c.l.b16 %v1194
        %v4077 = vunpack.c.h.b16 %v1194
        %v4078 = vunpack.c.l.b16 %v1195
        %v4079 = vunpack.c.h.b16 %v1195
        %v4080 = vunpack.c.l.b16 %v1196
        %v4081 = vunpack.c.h.b16 %v1196
        %v4082 = vunpack.c.l.b16 %v1197
        %v4083 = vunpack.c.h.b16 %v1197
        %v4084 = vunpack.c.l.b16 %v1198
        %v4085 = vunpack.c.h.b16 %v1198
        %v4086 = vunpack.c.l.b16 %v1199
        %v4087 = vunpack.c.h.b16 %v1199
        %v4088 = vunpack.c.l.b16 %v1200
        %v4089 = vunpack.c.h.b16 %v1200
        %v4090 = vunpack.c.l.b16 %v1201
        %v4091 = vunpack.c.h.b16 %v1201
        %v4092 = vunpack.c.l.b16 %v1202
        %v4093 = vunpack.c.h.b16 %v1202
        %v4094 = vunpack.c.l.b16 %v1203
        %v4095 = vunpack.c.h.b16 %v1203
        %v4096 = vunpack.c.l.b16 %v1204
        %v4097 = vunpack.c.h.b16 %v1204
        %v4098 = vunpack.c.l.b16 %v1205
        %v4099 = vunpack.c.h.b16 %v1205
        %v4100 = vunpack.c.l.b16 %v1206
        %v4101 = vunpack.c.h.b16 %v1206
        %v4102 = vunpack.c.l.b16 %v1207
        %v4103 = vunpack.c.h.b16 %v1207
        %v4104 = vunpack.c.l.b16 %v1208
        %v4105 = vunpack.c.h.b16 %v1208
        %v4106 = vunpack.c.l.b16 %v1209
        %v4107 = vunpack.c.h.b16 %v1209
        %v4108 = vunpack.c.l.b16 %v1210
        %v4109 = vunpack.c.h.b16 %v1210
        %v4110 = vunpack.c.l.b16 %v1211
        %v4111 = vunpack.c.h.b16 %v1211
        %v4112 = vunpack.c.l.b16 %v1212
        %v4113 = vunpack.c.h.b16 %v1212
        %v4114 = vunpack.c.l.b16 %v1213
        %v4115 = vunpack.c.h.b16 %v1213
        %v4116 = vunpack.c.l.b16 %v1214
        %v4117 = vunpack.c.h.b16 %v1214
        %v4118 = vunpack.c.l.b16 %v1215
        %v4119 = vunpack.c.h.b16 %v1215
        %v4120 = vunpack.c.l.b16 %v1216
        %v4121 = vunpack.c.h.b16 %v1216
        %v4122 = vunpack.c.l.b16 %v1217
        %v4123 = vunpack.c.h.b16 %v1217
        %v4124 = vunpack.c.l.b16 %v1218
        %v4125 = vunpack.c.h.b16 %v1218
        %v4126 = vunpack.c.l.b16 %v1219
        %v4127 = vunpack.c.h.b16 %v1219
        %v4128 = vunpack.c.l.b16 %v1220
        %v4129 = vunpack.c.h.b16 %v1220
        %v4130 = vunpack.c.l.b16 %v1221
        %v4131 = vunpack.c.h.b16 %v1221
        %v4132 = vunpack.c.l.b16 %v1222
        %v4133 = vunpack.c.h.b16 %v1222
        %v4134 = vunpack.c.l.b16 %v1223
        %v4135 = vunpack.c.h.b16 %v1223
        %v4136 = vunpack.c.l.b16 %v1224
        %v4137 = vunpack.c.h.b16 %v1224
        %v4138 = vunpack.c.l.b16 %v1225
        %v4139 = vunpack.c.h.b16 %v1225
        %v4140 = vunpack.c.l.b16 %v1226
        %v4141 = vunpack.c.h.b16 %v1226
        %v4142 = vunpack.c.l.b16 %v1227
        %v4143 = vunpack.c.h.b16 %v1227
        %v4144 = vunpack.c.l.b16 %v1228
        %v4145 = vunpack.c.h.b16 %v1228
        %v4146 = vunpack.c.l.b16 %v1229
        %v4147 = vunpack.c.h.b16 %v1229
        %v4148 = vunpack.c.l.b16 %v1230
        %v4149 = vunpack.c.h.b16 %v1230
        %v4150 = vunpack.c.l.b16 %v1231
        %v4151 = vunpack.c.h.b16 %v1231
        %v4152 = vunpack.c.l.b16 %v1232
        %v4153 = vunpack.c.h.b16 %v1232
        %v4154 = vunpack.c.l.b16 %v1233
        %v4155 = vunpack.c.h.b16 %v1233
        %v4156 = vunpack.c.l.b16 %v1234
        %v4157 = vunpack.c.h.b16 %v1234
        %v4158 = vunpack.c.l.b16 %v1235
        %v4159 = vunpack.c.h.b16 %v1235
        %v4160 = vunpack.c.l.b16 %v1236
        %v4161 = vunpack.c.h.b16 %v1236
        %v4162 = vunpack.c.l.b16 %v1237
        %v4163 = vunpack.c.h.b16 %v1237
        %v4164 = vunpack.c.l.b16 %v1238
        %v4165 = vunpack.c.h.b16 %v1238
        %v4166 = vunpack.c.l.b16 %v1239
        %v4167 = vunpack.c.h.b16 %v1239
        %v4168 = vunpack.c.l.b16 %v1240
        %v4169 = vunpack.c.h.b16 %v1240
        %v4170 = vunpack.c.l.b16 %v1241
        %v4171 = vunpack.c.h.b16 %v1241
        %v4172 = vunpack.c.l.b16 %v1242
        %v4173 = vunpack.c.h.b16 %v1242
        %v4174 = vunpack.c.l.b16 %v1243
        %v4175 = vunpack.c.h.b16 %v1243
        %v4176 = vunpack.c.l.b16 %v1244
        %v4177 = vunpack.c.h.b16 %v1244
        %v4178 = vunpack.c.l.b16 %v1245
        %v4179 = vunpack.c.h.b16 %v1245
        %v4180 = vunpack.c.l.b16 %v1246
        %v4181 = vunpack.c.h.b16 %v1246
        %v4182 = vunpack.c.l.b16 %v1247
        %v4183 = vunpack.c.h.b16 %v1247
        %v4184 = vunpack.c.l.b16 %v1248
        %v4185 = vunpack.c.h.b16 %v1248
        %v4186 = vunpack.c.l.b16 %v1249
        %v4187 = vunpack.c.h.b16 %v1249
        %v4188 = vunpack.c.l.b16 %v1250
        %v4189 = vunpack.c.h.b16 %v1250
        %v4190 = vunpack.c.l.b16 %v1251
        %v4191 = vunpack.c.h.b16 %v1251
        %v4192 = vunpack.c.l.b16 %v1252
        %v4193 = vunpack.c.h.b16 %v1252
        %v4194 = vunpack.c.l.b16 %v1253
        %v4195 = vunpack.c.h.b16 %v1253
        %v4196 = vunpack.c.l.b16 %v1254
        %v4197 = vunpack.c.h.b16 %v1254
        %v4198 = vunpack.c.l.b16 %v1255
        %v4199 = vunpack.c.h.b16 %v1255
        %v4200 = vunpack.c.l.b16 %v1256
        %v4201 = vunpack.c.h.b16 %v1256
        %v4202 = vunpack.c.l.b16 %v1257
        %v4203 = vunpack.c.h.b16 %v1257
        %v4204 = vunpack.c.l.b16 %v1258
        %v4205 = vunpack.c.h.b16 %v1258
        %v4206 = vunpack.c.l.b16 %v1259
        %v4207 = vunpack.c.h.b16 %v1259
        %v4208 = vunpack.c.l.b16 %v1260
        %v4209 = vunpack.c.h.b16 %v1260
        %v4210 = vunpack.c.l.b16 %v1261
        %v4211 = vunpack.c.h.b16 %v1261
        %v4212 = vunpack.c.l.b16 %v1262
        %v4213 = vunpack.c.h.b16 %v1262
        %v4214 = vunpack.c.l.b16 %v1263
        %v4215 = vunpack.c.h.b16 %v1263
        %v4216 = vunpack.c.l.b16 %v1264
        %v4217 = vunpack.c.h.b16 %v1264
        %v4218 = vunpack.c.l.b16 %v1265
        %v4219 = vunpack.c.h.b16 %v1265
        %v4220 = vunpack.c.l.b16 %v1266
        %v4221 = vunpack.c.h.b16 %v1266
        %v4222 = vunpack.c.l.b16 %v1267
        %v4223 = vunpack.c.h.b16 %v1267
        %v4224 = vunpack.c.l.b16 %v1268
        %v4225 = vunpack.c.h.b16 %v1268
        %v4226 = vunpack.c.l.b16 %v1269
        %v4227 = vunpack.c.h.b16 %v1269
        %v4228 = vunpack.c.l.b16 %v1270
        %v4229 = vunpack.c.h.b16 %v1270
        %v4230 = vunpack.c.l.b16 %v1271
        %v4231 = vunpack.c.h.b16 %v1271
        %v4232 = vunpack.c.l.b16 %v1272
        %v4233 = vunpack.c.h.b16 %v1272
        %v4234 = vunpack.c.l.b16 %v1273
        %v4235 = vunpack.c.h.b16 %v1273
        %v4236 = vunpack.c.l.b16 %v1274
        %v4237 = vunpack.c.h.b16 %v1274
        %v4238 = vunpack.c.l.b16 %v1275
        %v4239 = vunpack.c.h.b16 %v1275
        %v4240 = vunpack.c.l.b16 %v1276
        %v4241 = vunpack.c.h.b16 %v1276
        %v4242 = vunpack.c.l.b16 %v1277
        %v4243 = vunpack.c.h.b16 %v1277
        %v4244 = vunpack.c.l.b16 %v1278
        %v4245 = vunpack.c.h.b16 %v1278
        %v4246 = vunpack.c.l.b16 %v1279
        %v4247 = vunpack.c.h.b16 %v1279
        %v4248 = vunpack.c.l.b16 %v1280
        %v4249 = vunpack.c.h.b16 %v1280
        %v4250 = vunpack.c.l.b16 %v1281
        %v4251 = vunpack.c.h.b16 %v1281
        %v4252 = vunpack.c.l.b16 %v1282
        %v4253 = vunpack.c.h.b16 %v1282
        %v4254 = vunpack.c.l.b16 %v1283
        %v4255 = vunpack.c.h.b16 %v1283
        %v4256 = vunpack.c.l.b16 %v1284
        %v4257 = vunpack.c.h.b16 %v1284
        %v4258 = vunpack.c.l.b16 %v1285
        %v4259 = vunpack.c.h.b16 %v1285
        %v4260 = vunpack.c.l.b16 %v1286
        %v4261 = vunpack.c.h.b16 %v1286
        %v4262 = vunpack.c.l.b16 %v1287
        %v4263 = vunpack.c.h.b16 %v1287
        %v4264 = vunpack.c.l.b16 %v1288
        %v4265 = vunpack.c.h.b16 %v1288
        %v4266 = vunpack.c.l.b16 %v1289
        %v4267 = vunpack.c.h.b16 %v1289
        %v4268 = vunpack.c.l.b16 %v1290
        %v4269 = vunpack.c.h.b16 %v1290
        %v4270 = vunpack.c.l.b16 %v1291
        %v4271 = vunpack.c.h.b16 %v1291
        %v4272 = vunpack.c.l.b16 %v1292
        %v4273 = vunpack.c.h.b16 %v1292
        %v4274 = vunpack.c.l.b16 %v1293
        %v4275 = vunpack.c.h.b16 %v1293
        %v4276 = vunpack.c.l.b16 %v1294
        %v4277 = vunpack.c.h.b16 %v1294
        %v4278 = vunpack.c.l.b16 %v1295
        %v4279 = vunpack.c.h.b16 %v1295
        %v4280 = vunpack.c.l.b16 %v1296
        %v4281 = vunpack.c.h.b16 %v1296
        %v4282 = vunpack.c.l.b16 %v1297
        %v4283 = vunpack.c.h.b16 %v1297
        %v4284 = vunpack.c.l.b16 %v1298
        %v4285 = vunpack.c.h.b16 %v1298
        %v4286 = vunpack.c.l.b16 %v1299
        %v4287 = vunpack.c.h.b16 %v1299
        %v4288 = vunpack.c.l.b16 %v1300
        %v4289 = vunpack.c.h.b16 %v1300
        %v4290 = vunpack.c.l.b16 %v1301
        %v4291 = vunpack.c.h.b16 %v1301
        %v4292 = vunpack.c.l.b16 %v1302
        %v4293 = vunpack.c.h.b16 %v1302
        %v4294 = vunpack.c.l.b16 %v1303
        %v4295 = vunpack.c.h.b16 %v1303
        %v4296 = vunpack.c.l.b16 %v1304
        %v4297 = vunpack.c.h.b16 %v1304
        %v4298 = vunpack.c.l.b16 %v1305
        %v4299 = vunpack.c.h.b16 %v1305
        %v4300 = vunpack.c.l.b16 %v1306
        %v4301 = vunpack.c.h.b16 %v1306
        %v4302 = vunpack.c.l.b16 %v1307
        %v4303 = vunpack.c.h.b16 %v1307
        %v4304 = vunpack.c.l.b16 %v1308
        %v4305 = vunpack.c.h.b16 %v1308
        %v4306 = vunpack.c.l.b16 %v1309
        %v4307 = vunpack.c.h.b16 %v1309
        %v4308 = vunpack.c.l.b16 %v1310
        %v4309 = vunpack.c.h.b16 %v1310
        %v4310 = vunpack.c.l.b16 %v1311
        %v4311 = vunpack.c.h.b16 %v1311
        %v4312 = vunpack.c.l.b16 %v1312
        %v4313 = vunpack.c.h.b16 %v1312
        %v4314 = vunpack.c.l.b16 %v1313
        %v4315 = vunpack.c.h.b16 %v1313
        %v4316 = vunpack.c.l.b16 %v1314
        %v4317 = vunpack.c.h.b16 %v1314
        %v4318 = vunpack.c.l.b16 %v1315
        %v4319 = vunpack.c.h.b16 %v1315
        %v4320 = vunpack.c.l.b16 %v1316
        %v4321 = vunpack.c.h.b16 %v1316
        %v4322 = vunpack.c.l.b16 %v1317
        %v4323 = vunpack.c.h.b16 %v1317
        %v4324 = vunpack.c.l.b16 %v1318
        %v4325 = vunpack.c.h.b16 %v1318
        %v4326 = vunpack.c.l.b16 %v1319
        %v4327 = vunpack.c.h.b16 %v1319
        %v4328 = vunpack.c.l.b16 %v1320
        %v4329 = vunpack.c.h.b16 %v1320
        %v4330 = vunpack.c.l.b16 %v1321
        %v4331 = vunpack.c.h.b16 %v1321
        %v4332 = vunpack.c.l.b16 %v1322
        %v4333 = vunpack.c.h.b16 %v1322
        %v4334 = vunpack.c.l.b16 %v1323
        %v4335 = vunpack.c.h.b16 %v1323
        %v4336 = vunpack.c.l.b16 %v1324
        %v4337 = vunpack.c.h.b16 %v1324
        %v4338 = vunpack.c.l.b16 %v1325
        %v4339 = vunpack.c.h.b16 %v1325
        %v4340 = vunpack.c.l.b16 %v1326
        %v4341 = vunpack.c.h.b16 %v1326
        %v4342 = vunpack.c.l.b16 %v1327
        %v4343 = vunpack.c.h.b16 %v1327
        %v4344 = vunpack.c.l.b16 %v1328
        %v4345 = vunpack.c.h.b16 %v1328
        %v4346 = vunpack.c.l.b16 %v1329
        %v4347 = vunpack.c.h.b16 %v1329
        %v4348 = vunpack.c.l.b16 %v1330
        %v4349 = vunpack.c.h.b16 %v1330
        %v4350 = vunpack.c.l.b16 %v1331
        %v4351 = vunpack.c.h.b16 %v1331
        %v4352 = vunpack.c.l.b16 %v1332
        %v4353 = vunpack.c.h.b16 %v1332
        %v4354 = vunpack.c.l.b16 %v1333
        %v4355 = vunpack.c.h.b16 %v1333
        %v4356 = vunpack.c.l.b16 %v1334
        %v4357 = vunpack.c.h.b16 %v1334
        %v4358 = vunpack.c.l.b16 %v1335
        %v4359 = vunpack.c.h.b16 %v1335
        %v4360 = vunpack.c.l.b16 %v1336
        %v4361 = vunpack.c.h.b16 %v1336
        %v4362 = vunpack.c.l.b16 %v1337
        %v4363 = vunpack.c.h.b16 %v1337
        %v4364 = vunpack.c.l.b16 %v1338
        %v4365 = vunpack.c.h.b16 %v1338
        %v4366 = vunpack.c.l.b16 %v1339
        %v4367 = vunpack.c.h.b16 %v1339
        %v4368 = vunpack.c.l.b16 %v1340
        %v4369 = vunpack.c.h.b16 %v1340
        %v4370 = vunpack.c.l.b16 %v1341
        %v4371 = vunpack.c.h.b16 %v1341
        %v4372 = vunpack.c.l.b16 %v1342
        %v4373 = vunpack.c.h.b16 %v1342
        %v4374 = vunpack.c.l.b16 %v1343
        %v4375 = vunpack.c.h.b16 %v1343
        %v4376 = vunpack.c.l.b16 %v1344
        %v4377 = vunpack.c.h.b16 %v1344
        %v4378 = vunpack.c.l.b16 %v1345
        %v4379 = vunpack.c.h.b16 %v1345
        %v4380 = vunpack.c.l.b16 %v1346
        %v4381 = vunpack.c.h.b16 %v1346
        %v4382 = vunpack.c.l.b16 %v1347
        %v4383 = vunpack.c.h.b16 %v1347
        %v4384 = vunpack.c.l.b16 %v1348
        %v4385 = vunpack.c.h.b16 %v1348
        %v4386 = vunpack.c.l.b16 %v1349
        %v4387 = vunpack.c.h.b16 %v1349
        %v4388 = vunpack.c.l.b16 %v1350
        %v4389 = vunpack.c.h.b16 %v1350
        %v4390 = vunpack.c.l.b16 %v1351
        %v4391 = vunpack.c.h.b16 %v1351
        %v4392 = vunpack.c.l.b16 %v1352
        %v4393 = vunpack.c.h.b16 %v1352
        %v4394 = vunpack.c.l.b16 %v1353
        %v4395 = vunpack.c.h.b16 %v1353
        %v4396 = vunpack.c.l.b16 %v1354
        %v4397 = vunpack.c.h.b16 %v1354
        %v4398 = vunpack.c.l.b16 %v1355
        %v4399 = vunpack.c.h.b16 %v1355
        %v4400 = vunpack.c.l.b16 %v1356
        %v4401 = vunpack.c.h.b16 %v1356
        %v4402 = vunpack.c.l.b16 %v1357
        %v4403 = vunpack.c.h.b16 %v1357
        %v4404 = vunpack.c.l.b16 %v1358
        %v4405 = vunpack.c.h.b16 %v1358
        %v4406 = vunpack.c.l.b16 %v1359
        %v4407 = vunpack.c.h.b16 %v1359
        %v4408 = vunpack.c.l.b16 %v1360
        %v4409 = vunpack.c.h.b16 %v1360
        %v4410 = vunpack.c.l.b16 %v1361
        %v4411 = vunpack.c.h.b16 %v1361
        %v4412 = vunpack.c.l.b16 %v1362
        %v4413 = vunpack.c.h.b16 %v1362
        %v4414 = vunpack.c.l.b16 %v1363
        %v4415 = vunpack.c.h.b16 %v1363
        %v4416 = vunpack.c.l.b16 %v1364
        %v4417 = vunpack.c.h.b16 %v1364
        %v4418 = vunpack.c.l.b16 %v1365
        %v4419 = vunpack.c.h.b16 %v1365
        %v4420 = vunpack.c.l.b16 %v1366
        %v4421 = vunpack.c.h.b16 %v1366
        %v4422 = vunpack.c.l.b16 %v1367
        %v4423 = vunpack.c.h.b16 %v1367
        %v4424 = vunpack.c.l.b16 %v1368
        %v4425 = vunpack.c.h.b16 %v1368
        %v4426 = vunpack.c.l.b16 %v1369
        %v4427 = vunpack.c.h.b16 %v1369
        %v4428 = vunpack.c.l.b16 %v1370
        %v4429 = vunpack.c.h.b16 %v1370
        %v4430 = vunpack.c.l.b16 %v1371
        %v4431 = vunpack.c.h.b16 %v1371
        %v4432 = vunpack.c.l.b16 %v1372
        %v4433 = vunpack.c.h.b16 %v1372
        %v4434 = vunpack.c.l.b16 %v1373
        %v4435 = vunpack.c.h.b16 %v1373
        %v4436 = vunpack.c.l.b16 %v1374
        %v4437 = vunpack.c.h.b16 %v1374
        %v4438 = vunpack.c.l.b16 %v1375
        %v4439 = vunpack.c.h.b16 %v1375
        %v4440 = vunpack.c.l.b16 %v1376
        %v4441 = vunpack.c.h.b16 %v1376
        %v4442 = vunpack.c.l.b16 %v1377
        %v4443 = vunpack.c.h.b16 %v1377
        %v4444 = vunpack.c.l.b16 %v1378
        %v4445 = vunpack.c.h.b16 %v1378
        %v4446 = vunpack.c.l.b16 %v1379
        %v4447 = vunpack.c.h.b16 %v1379
        %v4448 = vunpack.c.l.b16 %v1380
        %v4449 = vunpack.c.h.b16 %v1380
        %v4450 = vunpack.c.l.b16 %v1381
        %v4451 = vunpack.c.h.b16 %v1381
        %v4452 = vunpack.c.l.b16 %v1382
        %v4453 = vunpack.c.h.b16 %v1382
        %v4454 = vunpack.c.l.b16 %v1383
        %v4455 = vunpack.c.h.b16 %v1383
        %v4456 = vunpack.c.l.b16 %v1384
        %v4457 = vunpack.c.h.b16 %v1384
        %v4458 = vunpack.c.l.b16 %v1385
        %v4459 = vunpack.c.h.b16 %v1385
        %v4460 = vunpack.c.l.b16 %v1386
        %v4461 = vunpack.c.h.b16 %v1386
        %v4462 = vunpack.c.l.b16 %v1387
        %v4463 = vunpack.c.h.b16 %v1387
        %v4464 = vunpack.c.l.b16 %v1388
        %v4465 = vunpack.c.h.b16 %v1388
        %v4466 = vunpack.c.l.b16 %v1389
        %v4467 = vunpack.c.h.b16 %v1389
        %v4468 = vunpack.c.l.b16 %v1390
        %v4469 = vunpack.c.h.b16 %v1390
        %v4470 = vunpack.c.l.b16 %v1391
        %v4471 = vunpack.c.h.b16 %v1391
        %v4472 = vunpack.c.l.b16 %v1392
        %v4473 = vunpack.c.h.b16 %v1392
        %v4474 = vunpack.c.l.b16 %v1393
        %v4475 = vunpack.c.h.b16 %v1393
        %v4476 = vunpack.c.l.b16 %v1394
        %v4477 = vunpack.c.h.b16 %v1394
        %v4478 = vunpack.c.l.b16 %v1395
        %v4479 = vunpack.c.h.b16 %v1395
        %v4480 = vunpack.c.l.b16 %v1396
        %v4481 = vunpack.c.h.b16 %v1396
        %v4482 = vunpack.c.l.b16 %v1397
        %v4483 = vunpack.c.h.b16 %v1397
        %v4484 = vunpack.c.l.b16 %v1398
        %v4485 = vunpack.c.h.b16 %v1398
        %v4486 = vunpack.c.l.b16 %v1399
        %v4487 = vunpack.c.h.b16 %v1399
        %v4488 = vunpack.c.l.b16 %v1400
        %v4489 = vunpack.c.h.b16 %v1400
        %v4490 = vunpack.c.l.b16 %v1401
        %v4491 = vunpack.c.h.b16 %v1401
        %v4492 = vunpack.c.l.b16 %v1402
        %v4493 = vunpack.c.h.b16 %v1402
        %v4494 = vunpack.c.l.b16 %v1403
        %v4495 = vunpack.c.h.b16 %v1403
        %v4496 = vunpack.c.l.b16 %v1404
        %v4497 = vunpack.c.h.b16 %v1404
        %v4498 = vunpack.c.l.b16 %v1405
        %v4499 = vunpack.c.h.b16 %v1405
        %v4500 = vunpack.c.l.b16 %v1406
        %v4501 = vunpack.c.h.b16 %v1406
        %v4502 = vunpack.c.l.b16 %v1407
        %v4503 = vunpack.c.h.b16 %v1407
        %v4504 = vunpack.c.l.b16 %v1408
        %v4505 = vunpack.c.h.b16 %v1408
        %v4506 = vunpack.c.l.b16 %v1409
        %v4507 = vunpack.c.h.b16 %v1409
        %v4508 = vunpack.c.l.b16 %v1410
        %v4509 = vunpack.c.h.b16 %v1410
        %v4510 = vunpack.c.l.b16 %v1411
        %v4511 = vunpack.c.h.b16 %v1411
        %v4512 = vunpack.c.l.b16 %v1412
        %v4513 = vunpack.c.h.b16 %v1412
        %v4514 = vunpack.c.l.b16 %v1413
        %v4515 = vunpack.c.h.b16 %v1413
        %v4516 = vunpack.c.l.b16 %v1414
        %v4517 = vunpack.c.h.b16 %v1414
        %v4518 = vunpack.c.l.b16 %v1415
        %v4519 = vunpack.c.h.b16 %v1415
        %v4520 = vunpack.c.l.b16 %v1416
        %v4521 = vunpack.c.h.b16 %v1416
        %v4522 = vunpack.c.l.b16 %v1417
        %v4523 = vunpack.c.h.b16 %v1417
        %v4524 = vunpack.c.l.b16 %v1418
        %v4525 = vunpack.c.h.b16 %v1418
        %v4526 = vunpack.c.l.b16 %v1419
        %v4527 = vunpack.c.h.b16 %v1419
        %v4528 = vunpack.c.l.b16 %v1420
        %v4529 = vunpack.c.h.b16 %v1420
        %v4530 = vunpack.c.l.b16 %v1421
        %v4531 = vunpack.c.h.b16 %v1421
        %v4532 = vunpack.c.l.b16 %v1422
        %v4533 = vunpack.c.h.b16 %v1422
        %v4534 = vunpack.c.l.b16 %v1423
        %v4535 = vunpack.c.h.b16 %v1423
        %v4536 = vunpack.c.l.b16 %v1424
        %v4537 = vunpack.c.h.b16 %v1424
        %v4538 = vunpack.c.l.b16 %v1425
        %v4539 = vunpack.c.h.b16 %v1425
        %v4540 = vunpack.c.l.b16 %v1426
        %v4541 = vunpack.c.h.b16 %v1426
        %v4542 = vunpack.c.l.b16 %v1427
        %v4543 = vunpack.c.h.b16 %v1427
        %v4544 = vunpack.c.l.b16 %v1428
        %v4545 = vunpack.c.h.b16 %v1428
        %v4546 = vunpack.c.l.b16 %v1429
        %v4547 = vunpack.c.h.b16 %v1429
        %v4548 = vunpack.c.l.b16 %v1430
        %v4549 = vunpack.c.h.b16 %v1430
        %v4550 = vunpack.c.l.b16 %v1431
        %v4551 = vunpack.c.h.b16 %v1431
        %v4552 = vunpack.c.l.b16 %v1432
        %v4553 = vunpack.c.h.b16 %v1432
        %v4554 = vunpack.c.l.b16 %v1433
        %v4555 = vunpack.c.h.b16 %v1433
        %v4556 = vunpack.c.l.b16 %v1434
        %v4557 = vunpack.c.h.b16 %v1434
        %v4558 = vunpack.c.l.b16 %v1435
        %v4559 = vunpack.c.h.b16 %v1435
        %v4560 = vunpack.c.l.b16 %v1436
        %v4561 = vunpack.c.h.b16 %v1436
        %v4562 = vunpack.c.l.b16 %v1437
        %v4563 = vunpack.c.h.b16 %v1437
        %v4564 = vunpack.c.l.b16 %v1438
        %v4565 = vunpack.c.h.b16 %v1438
        %v4566 = vunpack.c.l.b16 %v1439
        %v4567 = vunpack.c.h.b16 %v1439
        %v4568 = vpack.c.b16 %v2528, %v2520
        %v4569 = vpack.c.b16 %v2529, %v2521
        %v4570 = vpack.c.b16 %v2530, %v2522
        %v4571 = vpack.c.b16 %v2531, %v2523
        %v4572 = vpack.c.b16 %v2532, %v2524
        %v4573 = vpack.c.b16 %v2533, %v2525
        %v4574 = vpack.c.b16 %v2534, %v2526
        %v4575 = vpack.c.b16 %v2535, %v2527
        %v4576 = vpack.c.b16 %v2544, %v2536
        %v4577 = vpack.c.b16 %v2545, %v2537
        %v4578 = vpack.c.b16 %v2546, %v2538
        %v4579 = vpack.c.b16 %v2547, %v2539
        %v4580 = vpack.c.b16 %v2548, %v2540
        %v4581 = vpack.c.b16 %v2549, %v2541
        %v4582 = vpack.c.b16 %v2550, %v2542
        %v4583 = vpack.c.b16 %v2551, %v2543
        %v4584 = vpack.c.b16 %v2560, %v2552
        %v4585 = vpack.c.b16 %v2561, %v2553
        %v4586 = vpack.c.b16 %v2562, %v2554
        %v4587 = vpack.c.b16 %v2563, %v2555
        %v4588 = vpack.c.b16 %v2564, %v2556
        %v4589 = vpack.c.b16 %v2565, %v2557
        %v4590 = vpack.c.b16 %v2566, %v2558
        %v4591 = vpack.c.b16 %v2567, %v2559
        %v4592 = vpack.c.b16 %v2576, %v2568
        %v4593 = vpack.c.b16 %v2577, %v2569
        %v4594 = vpack.c.b16 %v2578, %v2570
        %v4595 = vpack.c.b16 %v2579, %v2571
        %v4596 = vpack.c.b16 %v2580, %v2572
        %v4597 = vpack.c.b16 %v2581, %v2573
        %v4598 = vpack.c.b16 %v2582, %v2574
        %v4599 = vpack.c.b16 %v2583, %v2575
        %v4600 = vpack.c.b16 %v2592, %v2584
        %v4601 = vpack.c.b16 %v2593, %v2585
        %v4602 = vpack.c.b16 %v2594, %v2586
        %v4603 = vpack.c.b16 %v2595, %v2587
        %v4604 = vpack.c.b16 %v2596, %v2588
        %v4605 = vpack.c.b16 %v2597, %v2589
        %v4606 = vpack.c.b16 %v2598, %v2590
        %v4607 = vpack.c.b16 %v2599, %v2591
        %v4608 = vpack.c.b16 %v2608, %v2600
        %v4609 = vpack.c.b16 %v2609, %v2601
        %v4610 = vpack.c.b16 %v2610, %v2602
        %v4611 = vpack.c.b16 %v2611, %v2603
        %v4612 = vpack.c.b16 %v2612, %v2604
        %v4613 = vpack.c.b16 %v2613, %v2605
        %v4614 = vpack.c.b16 %v2614, %v2606
        %v4615 = vpack.c.b16 %v2615, %v2607
        %v4616 = vpack.c.b16 %v2624, %v2616
        %v4617 = vpack.c.b16 %v2625, %v2617
        %v4618 = vpack.c.b16 %v2626, %v2618
        %v4619 = vpack.c.b16 %v2627, %v2619
        %v4620 = vpack.c.b16 %v2628, %v2620
        %v4621 = vpack.c.b16 %v2629, %v2621
        %v4622 = vpack.c.b16 %v2630, %v2622
        %v4623 = vpack.c.b16 %v2631, %v2623
        %v4624 = vpack.c.b16 %v2640, %v2632
        %v4625 = vpack.c.b16 %v2641, %v2633
        %v4626 = vpack.c.b16 %v2642, %v2634
        %v4627 = vpack.c.b16 %v2643, %v2635
        %v4628 = vpack.c.b16 %v2644, %v2636
        %v4629 = vpack.c.b16 %v2645, %v2637
        %v4630 = vpack.c.b16 %v2646, %v2638
        %v4631 = vpack.c.b16 %v2647, %v2639
        %v4632 = vpack.c.b16 %v2656, %v2648
        %v4633 = vpack.c.b16 %v2657, %v2649
        %v4634 = vpack.c.b16 %v2658, %v2650
        %v4635 = vpack.c.b16 %v2659, %v2651
        %v4636 = vpack.c.b16 %v2660, %v2652
        %v4637 = vpack.c.b16 %v2661, %v2653
        %v4638 = vpack.c.b16 %v2662, %v2654
        %v4639 = vpack.c.b16 %v2663, %v2655
        %v4640 = vpack.c.b16 %v2672, %v2664
        %v4641 = vpack.c.b16 %v2673, %v2665
        %v4642 = vpack.c.b16 %v2674, %v2666
        %v4643 = vpack.c.b16 %v2675, %v2667
        %v4644 = vpack.c.b16 %v2676, %v2668
        %v4645 = vpack.c.b16 %v2677, %v2669
        %v4646 = vpack.c.b16 %v2678, %v2670
        %v4647 = vpack.c.b16 %v2679, %v2671
        %v4648 = vpack.c.b16 %v2688, %v2680
        %v4649 = vpack.c.b16 %v2689, %v2681
        %v4650 = vpack.c.b16 %v2690, %v2682
        %v4651 = vpack.c.b16 %v2691, %v2683
        %v4652 = vpack.c.b16 %v2692, %v2684
        %v4653 = vpack.c.b16 %v2693, %v2685
        %v4654 = vpack.c.b16 %v2694, %v2686
        %v4655 = vpack.c.b16 %v2695, %v2687
        %v4656 = vpack.c.b16 %v2704, %v2696
        %v4657 = vpack.c.b16 %v2705, %v2697
        %v4658 = vpack.c.b16 %v2706, %v2698
        %v4659 = vpack.c.b16 %v2707, %v2699
        %v4660 = vpack.c.b16 %v2708, %v2700
        %v4661 = vpack.c.b16 %v2709, %v2701
        %v4662 = vpack.c.b16 %v2710, %v2702
        %v4663 = vpack.c.b16 %v2711, %v2703
        %v4664 = vpack.c.b16 %v2720, %v2712
        %v4665 = vpack.c.b16 %v2721, %v2713
        %v4666 = vpack.c.b16 %v2722, %v2714
        %v4667 = vpack.c.b16 %v2723, %v2715
        %v4668 = vpack.c.b16 %v2724, %v2716
        %v4669 = vpack.c.b16 %v2725, %v2717
        %v4670 = vpack.c.b16 %v2726, %v2718
        %v4671 = vpack.c.b16 %v2727, %v2719
        %v4672 = vpack.c.b16 %v2736, %v2728
        %v4673 = vpack.c.b16 %v2737, %v2729
        %v4674 = vpack.c.b16 %v2738, %v2730
        %v4675 = vpack.c.b16 %v2739, %v2731
        %v4676 = vpack.c.b16 %v2740, %v2732
        %v4677 = vpack.c.b16 %v2741, %v2733
        %v4678 = vpack.c.b16 %v2742, %v2734
        %v4679 = vpack.c.b16 %v2743, %v2735
        %v4680 = vpack.c.b16 %v2752, %v2744
        %v4681 = vpack.c.b16 %v2753, %v2745
        %v4682 = vpack.c.b16 %v2754, %v2746
        %v4683 = vpack.c.b16 %v2755, %v2747
        %v4684 = vpack.c.b16 %v2756, %v2748
        %v4685 = vpack.c.b16 %v2757, %v2749
        %v4686 = vpack.c.b16 %v2758, %v2750
        %v4687 = vpack.c.b16 %v2759, %v2751
        %v4688 = vpack.c.b16 %v2768, %v2760
        %v4689 = vpack.c.b16 %v2769, %v2761
        %v4690 = vpack.c.b16 %v2770, %v2762
        %v4691 = vpack.c.b16 %v2771, %v2763
        %v4692 = vpack.c.b16 %v2772, %v2764
        %v4693 = vpack.c.b16 %v2773, %v2765
        %v4694 = vpack.c.b16 %v2774, %v2766
        %v4695 = vpack.c.b16 %v2775, %v2767
        %v4696 = vpack.c.b16 %v2784, %v2776
        %v4697 = vpack.c.b16 %v2785, %v2777
        %v4698 = vpack.c.b16 %v2786, %v2778
        %v4699 = vpack.c.b16 %v2787, %v2779
        %v4700 = vpack.c.b16 %v2788, %v2780
        %v4701 = vpack.c.b16 %v2789, %v2781
        %v4702 = vpack.c.b16 %v2790, %v2782
        %v4703 = vpack.c.b16 %v2791, %v2783
        %v4704 = vpack.c.b16 %v2800, %v2792
        %v4705 = vpack.c.b16 %v2801, %v2793
        %v4706 = vpack.c.b16 %v2802, %v2794
        %v4707 = vpack.c.b16 %v2803, %v2795
        %v4708 = vpack.c.b16 %v2804, %v2796
        %v4709 = vpack.c.b16 %v2805, %v2797
        %v4710 = vpack.c.b16 %v2806, %v2798
        %v4711 = vpack.c.b16 %v2807, %v2799
        %v4712 = vpack.c.b16 %v2816, %v2808
        %v4713 = vpack.c.b16 %v2817, %v2809
        %v4714 = vpack.c.b16 %v2818, %v2810
        %v4715 = vpack.c.b16 %v2819, %v2811
        %v4716 = vpack.c.b16 %v2820, %v2812
        %v4717 = vpack.c.b16 %v2821, %v2813
        %v4718 = vpack.c.b16 %v2822, %v2814
        %v4719 = vpack.c.b16 %v2823, %v2815
        %v4720 = vpack.c.b16 %v2832, %v2824
        %v4721 = vpack.c.b16 %v2833, %v2825
        %v4722 = vpack.c.b16 %v2834, %v2826
        %v4723 = vpack.c.b16 %v2835, %v2827
        %v4724 = vpack.c.b16 %v2836, %v2828
        %v4725 = vpack.c.b16 %v2837, %v2829
        %v4726 = vpack.c.b16 %v2838, %v2830
        %v4727 = vpack.c.b16 %v2839, %v2831
        %v4728 = vpack.c.b16 %v2848, %v2840
        %v4729 = vpack.c.b16 %v2849, %v2841
        %v4730 = vpack.c.b16 %v2850, %v2842
        %v4731 = vpack.c.b16 %v2851, %v2843
        %v4732 = vpack.c.b16 %v2852, %v2844
        %v4733 = vpack.c.b16 %v2853, %v2845
        %v4734 = vpack.c.b16 %v2854, %v2846
        %v4735 = vpack.c.b16 %v2855, %v2847
        %v4736 = vpack.c.b16 %v2864, %v2856
        %v4737 = vpack.c.b16 %v2865, %v2857
        %v4738 = vpack.c.b16 %v2866, %v2858
        %v4739 = vpack.c.b16 %v2867, %v2859
        %v4740 = vpack.c.b16 %v2868, %v2860
        %v4741 = vpack.c.b16 %v2869, %v2861
        %v4742 = vpack.c.b16 %v2870, %v2862
        %v4743 = vpack.c.b16 %v2871, %v2863
        %v4744 = vpack.c.b16 %v2880, %v2872
        %v4745 = vpack.c.b16 %v2881, %v2873
        %v4746 = vpack.c.b16 %v2882, %v2874
        %v4747 = vpack.c.b16 %v2883, %v2875
        %v4748 = vpack.c.b16 %v2884, %v2876
        %v4749 = vpack.c.b16 %v2885, %v2877
        %v4750 = vpack.c.b16 %v2886, %v2878
        %v4751 = vpack.c.b16 %v2887, %v2879
        %v4752 = vpack.c.b16 %v2896, %v2888
        %v4753 = vpack.c.b16 %v2897, %v2889
        %v4754 = vpack.c.b16 %v2898, %v2890
        %v4755 = vpack.c.b16 %v2899, %v2891
        %v4756 = vpack.c.b16 %v2900, %v2892
        %v4757 = vpack.c.b16 %v2901, %v2893
        %v4758 = vpack.c.b16 %v2902, %v2894
        %v4759 = vpack.c.b16 %v2903, %v2895
        %v4760 = vpack.c.b16 %v2912, %v2904
        %v4761 = vpack.c.b16 %v2913, %v2905
        %v4762 = vpack.c.b16 %v2914, %v2906
        %v4763 = vpack.c.b16 %v2915, %v2907
        %v4764 = vpack.c.b16 %v2916, %v2908
        %v4765 = vpack.c.b16 %v2917, %v2909
        %v4766 = vpack.c.b16 %v2918, %v2910
        %v4767 = vpack.c.b16 %v2919, %v2911
        %v4768 = vpack.c.b16 %v2928, %v2920
        %v4769 = vpack.c.b16 %v2929, %v2921
        %v4770 = vpack.c.b16 %v2930, %v2922
        %v4771 = vpack.c.b16 %v2931, %v2923
        %v4772 = vpack.c.b16 %v2932, %v2924
        %v4773 = vpack.c.b16 %v2933, %v2925
        %v4774 = vpack.c.b16 %v2934, %v2926
        %v4775 = vpack.c.b16 %v2935, %v2927
        %v4776 = vpack.c.b16 %v2944, %v2936
        %v4777 = vpack.c.b16 %v2945, %v2937
        %v4778 = vpack.c.b16 %v2946, %v2938
        %v4779 = vpack.c.b16 %v2947, %v2939
        %v4780 = vpack.c.b16 %v2948, %v2940
        %v4781 = vpack.c.b16 %v2949, %v2941
        %v4782 = vpack.c.b16 %v2950, %v2942
        %v4783 = vpack.c.b16 %v2951, %v2943
        %v4784 = vpack.c.b16 %v2960, %v2952
        %v4785 = vpack.c.b16 %v2961, %v2953
        %v4786 = vpack.c.b16 %v2962, %v2954
        %v4787 = vpack.c.b16 %v2963, %v2955
        %v4788 = vpack.c.b16 %v2964, %v2956
        %v4789 = vpack.c.b16 %v2965, %v2957
        %v4790 = vpack.c.b16 %v2966, %v2958
        %v4791 = vpack.c.b16 %v2967, %v2959
        %v4792 = vpack.c.b16 %v2976, %v2968
        %v4793 = vpack.c.b16 %v2977, %v2969
        %v4794 = vpack.c.b16 %v2978, %v2970
        %v4795 = vpack.c.b16 %v2979, %v2971
        %v4796 = vpack.c.b16 %v2980, %v2972
        %v4797 = vpack.c.b16 %v2981, %v2973
        %v4798 = vpack.c.b16 %v2982, %v2974
        %v4799 = vpack.c.b16 %v2983, %v2975
        %v4800 = vpack.c.b16 %v2992, %v2984
        %v4801 = vpack.c.b16 %v2993, %v2985
        %v4802 = vpack.c.b16 %v2994, %v2986
        %v4803 = vpack.c.b16 %v2995, %v2987
        %v4804 = vpack.c.b16 %v2996, %v2988
        %v4805 = vpack.c.b16 %v2997, %v2989
        %v4806 = vpack.c.b16 %v2998, %v2990
        %v4807 = vpack.c.b16 %v2999, %v2991
        %v4808 = vpack.c.b16 %v3008, %v3000
        %v4809 = vpack.c.b16 %v3009, %v3001
        %v4810 = vpack.c.b16 %v3010, %v3002
        %v4811 = vpack.c.b16 %v3011, %v3003
        %v4812 = vpack.c.b16 %v3012, %v3004
        %v4813 = vpack.c.b16 %v3013, %v3005
        %v4814 = vpack.c.b16 %v3014, %v3006
        %v4815 = vpack.c.b16 %v3015, %v3007
        %v4816 = vpack.c.b16 %v3024, %v3016
        %v4817 = vpack.c.b16 %v3025, %v3017
        %v4818 = vpack.c.b16 %v3026, %v3018
        %v4819 = vpack.c.b16 %v3027, %v3019
        %v4820 = vpack.c.b16 %v3028, %v3020
        %v4821 = vpack.c.b16 %v3029, %v3021
        %v4822 = vpack.c.b16 %v3030, %v3022
        %v4823 = vpack.c.b16 %v3031, %v3023
        %v4824 = vpack.c.b16 %v3040, %v3032
        %v4825 = vpack.c.b16 %v3041, %v3033
        %v4826 = vpack.c.b16 %v3042, %v3034
        %v4827 = vpack.c.b16 %v3043, %v3035
        %v4828 = vpack.c.b16 %v3044, %v3036
        %v4829 = vpack.c.b16 %v3045, %v3037
        %v4830 = vpack.c.b16 %v3046, %v3038
        %v4831 = vpack.c.b16 %v3047, %v3039
        %v4832 = vpack.c.b16 %v3056, %v3048
        %v4833 = vpack.c.b16 %v3057, %v3049
        %v4834 = vpack.c.b16 %v3058, %v3050
        %v4835 = vpack.c.b16 %v3059, %v3051
        %v4836 = vpack.c.b16 %v3060, %v3052
        %v4837 = vpack.c.b16 %v3061, %v3053
        %v4838 = vpack.c.b16 %v3062, %v3054
        %v4839 = vpack.c.b16 %v3063, %v3055
        %v4840 = vpack.c.b16 %v3072, %v3064
        %v4841 = vpack.c.b16 %v3073, %v3065
        %v4842 = vpack.c.b16 %v3074, %v3066
        %v4843 = vpack.c.b16 %v3075, %v3067
        %v4844 = vpack.c.b16 %v3076, %v3068
        %v4845 = vpack.c.b16 %v3077, %v3069
        %v4846 = vpack.c.b16 %v3078, %v3070
        %v4847 = vpack.c.b16 %v3079, %v3071
        %v4848 = vpack.c.b16 %v3088, %v3080
        %v4849 = vpack.c.b16 %v3089, %v3081
        %v4850 = vpack.c.b16 %v3090, %v3082
        %v4851 = vpack.c.b16 %v3091, %v3083
        %v4852 = vpack.c.b16 %v3092, %v3084
        %v4853 = vpack.c.b16 %v3093, %v3085
        %v4854 = vpack.c.b16 %v3094, %v3086
        %v4855 = vpack.c.b16 %v3095, %v3087
        %v4856 = vpack.c.b16 %v3104, %v3096
        %v4857 = vpack.c.b16 %v3105, %v3097
        %v4858 = vpack.c.b16 %v3106, %v3098
        %v4859 = vpack.c.b16 %v3107, %v3099
        %v4860 = vpack.c.b16 %v3108, %v3100
        %v4861 = vpack.c.b16 %v3109, %v3101
        %v4862 = vpack.c.b16 %v3110, %v3102
        %v4863 = vpack.c.b16 %v3111, %v3103
        %v4864 = vpack.c.b16 %v3120, %v3112
        %v4865 = vpack.c.b16 %v3121, %v3113
        %v4866 = vpack.c.b16 %v3122, %v3114
        %v4867 = vpack.c.b16 %v3123, %v3115
        %v4868 = vpack.c.b16 %v3124, %v3116
        %v4869 = vpack.c.b16 %v3125, %v3117
        %v4870 = vpack.c.b16 %v3126, %v3118
        %v4871 = vpack.c.b16 %v3127, %v3119
        %v4872 = vpack.c.b16 %v3136, %v3128
        %v4873 = vpack.c.b16 %v3137, %v3129
        %v4874 = vpack.c.b16 %v3138, %v3130
        %v4875 = vpack.c.b16 %v3139, %v3131
        %v4876 = vpack.c.b16 %v3140, %v3132
        %v4877 = vpack.c.b16 %v3141, %v3133
        %v4878 = vpack.c.b16 %v3142, %v3134
        %v4879 = vpack.c.b16 %v3143, %v3135
        %v4880 = vpack.c.b16 %v3152, %v3144
        %v4881 = vpack.c.b16 %v3153, %v3145
        %v4882 = vpack.c.b16 %v3154, %v3146
        %v4883 = vpack.c.b16 %v3155, %v3147
        %v4884 = vpack.c.b16 %v3156, %v3148
        %v4885 = vpack.c.b16 %v3157, %v3149
        %v4886 = vpack.c.b16 %v3158, %v3150
        %v4887 = vpack.c.b16 %v3159, %v3151
        %v4888 = vpack.c.b16 %v3168, %v3160
        %v4889 = vpack.c.b16 %v3169, %v3161
        %v4890 = vpack.c.b16 %v3170, %v3162
        %v4891 = vpack.c.b16 %v3171, %v3163
        %v4892 = vpack.c.b16 %v3172, %v3164
        %v4893 = vpack.c.b16 %v3173, %v3165
        %v4894 = vpack.c.b16 %v3174, %v3166
        %v4895 = vpack.c.b16 %v3175, %v3167
        %v4896 = vpack.c.b16 %v3184, %v3176
        %v4897 = vpack.c.b16 %v3185, %v3177
        %v4898 = vpack.c.b16 %v3186, %v3178
        %v4899 = vpack.c.b16 %v3187, %v3179
        %v4900 = vpack.c.b16 %v3188, %v3180
        %v4901 = vpack.c.b16 %v3189, %v3181
        %v4902 = vpack.c.b16 %v3190, %v3182
        %v4903 = vpack.c.b16 %v3191, %v3183
        %v4904 = vpack.c.b16 %v3200, %v3192
        %v4905 = vpack.c.b16 %v3201, %v3193
        %v4906 = vpack.c.b16 %v3202, %v3194
        %v4907 = vpack.c.b16 %v3203, %v3195
        %v4908 = vpack.c.b16 %v3204, %v3196
        %v4909 = vpack.c.b16 %v3205, %v3197
        %v4910 = vpack.c.b16 %v3206, %v3198
        %v4911 = vpack.c.b16 %v3207, %v3199
        %v4912 = vpack.c.b16 %v3216, %v3208
        %v4913 = vpack.c.b16 %v3217, %v3209
        %v4914 = vpack.c.b16 %v3218, %v3210
        %v4915 = vpack.c.b16 %v3219, %v3211
        %v4916 = vpack.c.b16 %v3220, %v3212
        %v4917 = vpack.c.b16 %v3221, %v3213
        %v4918 = vpack.c.b16 %v3222, %v3214
        %v4919 = vpack.c.b16 %v3223, %v3215
        %v4920 = vpack.c.b16 %v3232, %v3224
        %v4921 = vpack.c.b16 %v3233, %v3225
        %v4922 = vpack.c.b16 %v3234, %v3226
        %v4923 = vpack.c.b16 %v3235, %v3227
        %v4924 = vpack.c.b16 %v3236, %v3228
        %v4925 = vpack.c.b16 %v3237, %v3229
        %v4926 = vpack.c.b16 %v3238, %v3230
        %v4927 = vpack.c.b16 %v3239, %v3231
        %v4928 = vpack.c.b16 %v3248, %v3240
        %v4929 = vpack.c.b16 %v3249, %v3241
        %v4930 = vpack.c.b16 %v3250, %v3242
        %v4931 = vpack.c.b16 %v3251, %v3243
        %v4932 = vpack.c.b16 %v3252, %v3244
        %v4933 = vpack.c.b16 %v3253, %v3245
        %v4934 = vpack.c.b16 %v3254, %v3246
        %v4935 = vpack.c.b16 %v3255, %v3247
        %v4936 = vpack.c.b16 %v3264, %v3256
        %v4937 = vpack.c.b16 %v3265, %v3257
        %v4938 = vpack.c.b16 %v3266, %v3258
        %v4939 = vpack.c.b16 %v3267, %v3259
        %v4940 = vpack.c.b16 %v3268, %v3260
        %v4941 = vpack.c.b16 %v3269, %v3261
        %v4942 = vpack.c.b16 %v3270, %v3262
        %v4943 = vpack.c.b16 %v3271, %v3263
        %v4944 = vpack.c.b16 %v3280, %v3272
        %v4945 = vpack.c.b16 %v3281, %v3273
        %v4946 = vpack.c.b16 %v3282, %v3274
        %v4947 = vpack.c.b16 %v3283, %v3275
        %v4948 = vpack.c.b16 %v3284, %v3276
        %v4949 = vpack.c.b16 %v3285, %v3277
        %v4950 = vpack.c.b16 %v3286, %v3278
        %v4951 = vpack.c.b16 %v3287, %v3279
        %v4952 = vpack.c.b16 %v3296, %v3288
        %v4953 = vpack.c.b16 %v3297, %v3289
        %v4954 = vpack.c.b16 %v3298, %v3290
        %v4955 = vpack.c.b16 %v3299, %v3291
        %v4956 = vpack.c.b16 %v3300, %v3292
        %v4957 = vpack.c.b16 %v3301, %v3293
        %v4958 = vpack.c.b16 %v3302, %v3294
        %v4959 = vpack.c.b16 %v3303, %v3295
        %v4960 = vpack.c.b16 %v3312, %v3304
        %v4961 = vpack.c.b16 %v3313, %v3305
        %v4962 = vpack.c.b16 %v3314, %v3306
        %v4963 = vpack.c.b16 %v3315, %v3307
        %v4964 = vpack.c.b16 %v3316, %v3308
        %v4965 = vpack.c.b16 %v3317, %v3309
        %v4966 = vpack.c.b16 %v3318, %v3310
        %v4967 = vpack.c.b16 %v3319, %v3311
        %v4968 = vpack.c.b16 %v3328, %v3320
        %v4969 = vpack.c.b16 %v3329, %v3321
        %v4970 = vpack.c.b16 %v3330, %v3322
        %v4971 = vpack.c.b16 %v3331, %v3323
        %v4972 = vpack.c.b16 %v3332, %v3324
        %v4973 = vpack.c.b16 %v3333, %v3325
        %v4974 = vpack.c.b16 %v3334, %v3326
        %v4975 = vpack.c.b16 %v3335, %v3327
        %v4976 = vpack.c.b16 %v3344, %v3336
        %v4977 = vpack.c.b16 %v3345, %v3337
        %v4978 = vpack.c.b16 %v3346, %v3338
        %v4979 = vpack.c.b16 %v3347, %v3339
        %v4980 = vpack.c.b16 %v3348, %v3340
        %v4981 = vpack.c.b16 %v3349, %v3341
        %v4982 = vpack.c.b16 %v3350, %v3342
        %v4983 = vpack.c.b16 %v3351, %v3343
        %v4984 = vpack.c.b16 %v3360, %v3352
        %v4985 = vpack.c.b16 %v3361, %v3353
        %v4986 = vpack.c.b16 %v3362, %v3354
        %v4987 = vpack.c.b16 %v3363, %v3355
        %v4988 = vpack.c.b16 %v3364, %v3356
        %v4989 = vpack.c.b16 %v3365, %v3357
        %v4990 = vpack.c.b16 %v3366, %v3358
        %v4991 = vpack.c.b16 %v3367, %v3359
        %v4992 = vpack.c.b16 %v3376, %v3368
        %v4993 = vpack.c.b16 %v3377, %v3369
        %v4994 = vpack.c.b16 %v3378, %v3370
        %v4995 = vpack.c.b16 %v3379, %v3371
        %v4996 = vpack.c.b16 %v3380, %v3372
        %v4997 = vpack.c.b16 %v3381, %v3373
        %v4998 = vpack.c.b16 %v3382, %v3374
        %v4999 = vpack.c.b16 %v3383, %v3375
        %v5000 = vpack.c.b16 %v3392, %v3384
        %v5001 = vpack.c.b16 %v3393, %v3385
        %v5002 = vpack.c.b16 %v3394, %v3386
        %v5003 = vpack.c.b16 %v3395, %v3387
        %v5004 = vpack.c.b16 %v3396, %v3388
        %v5005 = vpack.c.b16 %v3397, %v3389
        %v5006 = vpack.c.b16 %v3398, %v3390
        %v5007 = vpack.c.b16 %v3399, %v3391
        %v5008 = vpack.c.b16 %v3408, %v3400
        %v5009 = vpack.c.b16 %v3409, %v3401
        %v5010 = vpack.c.b16 %v3410, %v3402
        %v5011 = vpack.c.b16 %v3411, %v3403
        %v5012 = vpack.c.b16 %v3412, %v3404
        %v5013 = vpack.c.b16 %v3413, %v3405
        %v5014 = vpack.c.b16 %v3414, %v3406
        %v5015 = vpack.c.b16 %v3415, %v3407
        %v5016 = vpack.c.b16 %v3424, %v3416
        %v5017 = vpack.c.b16 %v3425, %v3417
        %v5018 = vpack.c.b16 %v3426, %v3418
        %v5019 = vpack.c.b16 %v3427, %v3419
        %v5020 = vpack.c.b16 %v3428, %v3420
        %v5021 = vpack.c.b16 %v3429, %v3421
        %v5022 = vpack.c.b16 %v3430, %v3422
        %v5023 = vpack.c.b16 %v3431, %v3423
        %v5024 = vpack.c.b16 %v3440, %v3432
        %v5025 = vpack.c.b16 %v3441, %v3433
        %v5026 = vpack.c.b16 %v3442, %v3434
        %v5027 = vpack.c.b16 %v3443, %v3435
        %v5028 = vpack.c.b16 %v3444, %v3436
        %v5029 = vpack.c.b16 %v3445, %v3437
        %v5030 = vpack.c.b16 %v3446, %v3438
        %v5031 = vpack.c.b16 %v3447, %v3439
        %v5032 = vpack.c.b16 %v3456, %v3448
        %v5033 = vpack.c.b16 %v3457, %v3449
        %v5034 = vpack.c.b16 %v3458, %v3450
        %v5035 = vpack.c.b16 %v3459, %v3451
        %v5036 = vpack.c.b16 %v3460, %v3452
        %v5037 = vpack.c.b16 %v3461, %v3453
        %v5038 = vpack.c.b16 %v3462, %v3454
        %v5039 = vpack.c.b16 %v3463, %v3455
        %v5040 = vpack.c.b16 %v3472, %v3464
        %v5041 = vpack.c.b16 %v3473, %v3465
        %v5042 = vpack.c.b16 %v3474, %v3466
        %v5043 = vpack.c.b16 %v3475, %v3467
        %v5044 = vpack.c.b16 %v3476, %v3468
        %v5045 = vpack.c.b16 %v3477, %v3469
        %v5046 = vpack.c.b16 %v3478, %v3470
        %v5047 = vpack.c.b16 %v3479, %v3471
        %v5048 = vpack.c.b16 %v3488, %v3480
        %v5049 = vpack.c.b16 %v3489, %v3481
        %v5050 = vpack.c.b16 %v3490, %v3482
        %v5051 = vpack.c.b16 %v3491, %v3483
        %v5052 = vpack.c.b16 %v3492, %v3484
        %v5053 = vpack.c.b16 %v3493, %v3485
        %v5054 = vpack.c.b16 %v3494, %v3486
        %v5055 = vpack.c.b16 %v3495, %v3487
        %v5056 = vpack.c.b16 %v3504, %v3496
        %v5057 = vpack.c.b16 %v3505, %v3497
        %v5058 = vpack.c.b16 %v3506, %v3498
        %v5059 = vpack.c.b16 %v3507, %v3499
        %v5060 = vpack.c.b16 %v3508, %v3500
        %v5061 = vpack.c.b16 %v3509, %v3501
        %v5062 = vpack.c.b16 %v3510, %v3502
        %v5063 = vpack.c.b16 %v3511, %v3503
        %v5064 = vpack.c.b16 %v3520, %v3512
        %v5065 = vpack.c.b16 %v3521, %v3513
        %v5066 = vpack.c.b16 %v3522, %v3514
        %v5067 = vpack.c.b16 %v3523, %v3515
        %v5068 = vpack.c.b16 %v3524, %v3516
        %v5069 = vpack.c.b16 %v3525, %v3517
        %v5070 = vpack.c.b16 %v3526, %v3518
        %v5071 = vpack.c.b16 %v3527, %v3519
        %v5072 = vpack.c.b16 %v3536, %v3528
        %v5073 = vpack.c.b16 %v3537, %v3529
        %v5074 = vpack.c.b16 %v3538, %v3530
        %v5075 = vpack.c.b16 %v3539, %v3531
        %v5076 = vpack.c.b16 %v3540, %v3532
        %v5077 = vpack.c.b16 %v3541, %v3533
        %v5078 = vpack.c.b16 %v3542, %v3534
        %v5079 = vpack.c.b16 %v3543, %v3535
        %v5080 = vpack.c.b16 %v3552, %v3544
        %v5081 = vpack.c.b16 %v3553, %v3545
        %v5082 = vpack.c.b16 %v3554, %v3546
        %v5083 = vpack.c.b16 %v3555, %v3547
        %v5084 = vpack.c.b16 %v3556, %v3548
        %v5085 = vpack.c.b16 %v3557, %v3549
        %v5086 = vpack.c.b16 %v3558, %v3550
        %v5087 = vpack.c.b16 %v3559, %v3551
        %v5088 = vpack.c.b16 %v3568, %v3560
        %v5089 = vpack.c.b16 %v3569, %v3561
        %v5090 = vpack.c.b16 %v3570, %v3562
        %v5091 = vpack.c.b16 %v3571, %v3563
        %v5092 = vpack.c.b16 %v3572, %v3564
        %v5093 = vpack.c.b16 %v3573, %v3565
        %v5094 = vpack.c.b16 %v3574, %v3566
        %v5095 = vpack.c.b16 %v3575, %v3567
        %v5096 = vpack.c.b16 %v3584, %v3576
        %v5097 = vpack.c.b16 %v3585, %v3577
        %v5098 = vpack.c.b16 %v3586, %v3578
        %v5099 = vpack.c.b16 %v3587, %v3579
        %v5100 = vpack.c.b16 %v3588, %v3580
        %v5101 = vpack.c.b16 %v3589, %v3581
        %v5102 = vpack.c.b16 %v3590, %v3582
        %v5103 = vpack.c.b16 %v3591, %v3583
        %v5104 = vpack.c.b16 %v3600, %v3592
        %v5105 = vpack.c.b16 %v3601, %v3593
        %v5106 = vpack.c.b16 %v3602, %v3594
        %v5107 = vpack.c.b16 %v3603, %v3595
        %v5108 = vpack.c.b16 %v3604, %v3596
        %v5109 = vpack.c.b16 %v3605, %v3597
        %v5110 = vpack.c.b16 %v3606, %v3598
        %v5111 = vpack.c.b16 %v3607, %v3599
        %v5112 = vpack.c.b16 %v3616, %v3608
        %v5113 = vpack.c.b16 %v3617, %v3609
        %v5114 = vpack.c.b16 %v3618, %v3610
        %v5115 = vpack.c.b16 %v3619, %v3611
        %v5116 = vpack.c.b16 %v3620, %v3612
        %v5117 = vpack.c.b16 %v3621, %v3613
        %v5118 = vpack.c.b16 %v3622, %v3614
        %v5119 = vpack.c.b16 %v3623, %v3615
        %v5120 = vpack.c.b16 %v3632, %v3624
        %v5121 = vpack.c.b16 %v3633, %v3625
        %v5122 = vpack.c.b16 %v3634, %v3626
        %v5123 = vpack.c.b16 %v3635, %v3627
        %v5124 = vpack.c.b16 %v3636, %v3628
        %v5125 = vpack.c.b16 %v3637, %v3629
        %v5126 = vpack.c.b16 %v3638, %v3630
        %v5127 = vpack.c.b16 %v3639, %v3631
        %v5128 = vpack.c.b16 %v3648, %v3640
        %v5129 = vpack.c.b16 %v3649, %v3641
        %v5130 = vpack.c.b16 %v3650, %v3642
        %v5131 = vpack.c.b16 %v3651, %v3643
        %v5132 = vpack.c.b16 %v3652, %v3644
        %v5133 = vpack.c.b16 %v3653, %v3645
        %v5134 = vpack.c.b16 %v3654, %v3646
        %v5135 = vpack.c.b16 %v3655, %v3647
        %v5136 = vpack.c.b16 %v3664, %v3656
        %v5137 = vpack.c.b16 %v3665, %v3657
        %v5138 = vpack.c.b16 %v3666, %v3658
        %v5139 = vpack.c.b16 %v3667, %v3659
        %v5140 = vpack.c.b16 %v3668, %v3660
        %v5141 = vpack.c.b16 %v3669, %v3661
        %v5142 = vpack.c.b16 %v3670, %v3662
        %v5143 = vpack.c.b16 %v3671, %v3663
        %v5144 = vpack.c.b16 %v3680, %v3672
        %v5145 = vpack.c.b16 %v3681, %v3673
        %v5146 = vpack.c.b16 %v3682, %v3674
        %v5147 = vpack.c.b16 %v3683, %v3675
        %v5148 = vpack.c.b16 %v3684, %v3676
        %v5149 = vpack.c.b16 %v3685, %v3677
        %v5150 = vpack.c.b16 %v3686, %v3678
        %v5151 = vpack.c.b16 %v3687, %v3679
        %v5152 = vpack.c.b16 %v3696, %v3688
        %v5153 = vpack.c.b16 %v3697, %v3689
        %v5154 = vpack.c.b16 %v3698, %v3690
        %v5155 = vpack.c.b16 %v3699, %v3691
        %v5156 = vpack.c.b16 %v3700, %v3692
        %v5157 = vpack.c.b16 %v3701, %v3693
        %v5158 = vpack.c.b16 %v3702, %v3694
        %v5159 = vpack.c.b16 %v3703, %v3695
        %v5160 = vpack.c.b16 %v3712, %v3704
        %v5161 = vpack.c.b16 %v3713, %v3705
        %v5162 = vpack.c.b16 %v3714, %v3706
        %v5163 = vpack.c.b16 %v3715, %v3707
        %v5164 = vpack.c.b16 %v3716, %v3708
        %v5165 = vpack.c.b16 %v3717, %v3709
        %v5166 = vpack.c.b16 %v3718, %v3710
        %v5167 = vpack.c.b16 %v3719, %v3711
        %v5168 = vpack.c.b16 %v3728, %v3720
        %v5169 = vpack.c.b16 %v3729, %v3721
        %v5170 = vpack.c.b16 %v3730, %v3722
        %v5171 = vpack.c.b16 %v3731, %v3723
        %v5172 = vpack.c.b16 %v3732, %v3724
        %v5173 = vpack.c.b16 %v3733, %v3725
        %v5174 = vpack.c.b16 %v3734, %v3726
        %v5175 = vpack.c.b16 %v3735, %v3727
        %v5176 = vpack.c.b16 %v3744, %v3736
        %v5177 = vpack.c.b16 %v3745, %v3737
        %v5178 = vpack.c.b16 %v3746, %v3738
        %v5179 = vpack.c.b16 %v3747, %v3739
        %v5180 = vpack.c.b16 %v3748, %v3740
        %v5181 = vpack.c.b16 %v3749, %v3741
        %v5182 = vpack.c.b16 %v3750, %v3742
        %v5183 = vpack.c.b16 %v3751, %v3743
        %v5184 = vpack.c.b16 %v3760, %v3752
        %v5185 = vpack.c.b16 %v3761, %v3753
        %v5186 = vpack.c.b16 %v3762, %v3754
        %v5187 = vpack.c.b16 %v3763, %v3755
        %v5188 = vpack.c.b16 %v3764, %v3756
        %v5189 = vpack.c.b16 %v3765, %v3757
        %v5190 = vpack.c.b16 %v3766, %v3758
        %v5191 = vpack.c.b16 %v3767, %v3759
        %v5192 = vpack.c.b16 %v3776, %v3768
        %v5193 = vpack.c.b16 %v3777, %v3769
        %v5194 = vpack.c.b16 %v3778, %v3770
        %v5195 = vpack.c.b16 %v3779, %v3771
        %v5196 = vpack.c.b16 %v3780, %v3772
        %v5197 = vpack.c.b16 %v3781, %v3773
        %v5198 = vpack.c.b16 %v3782, %v3774
        %v5199 = vpack.c.b16 %v3783, %v3775
        %v5200 = vpack.c.b16 %v3792, %v3784
        %v5201 = vpack.c.b16 %v3793, %v3785
        %v5202 = vpack.c.b16 %v3794, %v3786
        %v5203 = vpack.c.b16 %v3795, %v3787
        %v5204 = vpack.c.b16 %v3796, %v3788
        %v5205 = vpack.c.b16 %v3797, %v3789
        %v5206 = vpack.c.b16 %v3798, %v3790
        %v5207 = vpack.c.b16 %v3799, %v3791
        %v5208 = vpack.c.b16 %v3808, %v3800
        %v5209 = vpack.c.b16 %v3809, %v3801
        %v5210 = vpack.c.b16 %v3810, %v3802
        %v5211 = vpack.c.b16 %v3811, %v3803
        %v5212 = vpack.c.b16 %v3812, %v3804
        %v5213 = vpack.c.b16 %v3813, %v3805
        %v5214 = vpack.c.b16 %v3814, %v3806
        %v5215 = vpack.c.b16 %v3815, %v3807
        %v5216 = vpack.c.b16 %v3824, %v3816
        %v5217 = vpack.c.b16 %v3825, %v3817
        %v5218 = vpack.c.b16 %v3826, %v3818
        %v5219 = vpack.c.b16 %v3827, %v3819
        %v5220 = vpack.c.b16 %v3828, %v3820
        %v5221 = vpack.c.b16 %v3829, %v3821
        %v5222 = vpack.c.b16 %v3830, %v3822
        %v5223 = vpack.c.b16 %v3831, %v3823
        %v5224 = vpack.c.b16 %v3840, %v3832
        %v5225 = vpack.c.b16 %v3841, %v3833
        %v5226 = vpack.c.b16 %v3842, %v3834
        %v5227 = vpack.c.b16 %v3843, %v3835
        %v5228 = vpack.c.b16 %v3844, %v3836
        %v5229 = vpack.c.b16 %v3845, %v3837
        %v5230 = vpack.c.b16 %v3846, %v3838
        %v5231 = vpack.c.b16 %v3847, %v3839
        %v5232 = vpack.c.b16 %v3856, %v3848
        %v5233 = vpack.c.b16 %v3857, %v3849
        %v5234 = vpack.c.b16 %v3858, %v3850
        %v5235 = vpack.c.b16 %v3859, %v3851
        %v5236 = vpack.c.b16 %v3860, %v3852
        %v5237 = vpack.c.b16 %v3861, %v3853
        %v5238 = vpack.c.b16 %v3862, %v3854
        %v5239 = vpack.c.b16 %v3863, %v3855
        %v5240 = vpack.c.b16 %v3872, %v3864
        %v5241 = vpack.c.b16 %v3873, %v3865
        %v5242 = vpack.c.b16 %v3874, %v3866
        %v5243 = vpack.c.b16 %v3875, %v3867
        %v5244 = vpack.c.b16 %v3876, %v3868
        %v5245 = vpack.c.b16 %v3877, %v3869
        %v5246 = vpack.c.b16 %v3878, %v3870
        %v5247 = vpack.c.b16 %v3879, %v3871
        %v5248 = vpack.c.b16 %v3888, %v3880
        %v5249 = vpack.c.b16 %v3889, %v3881
        %v5250 = vpack.c.b16 %v3890, %v3882
        %v5251 = vpack.c.b16 %v3891, %v3883
        %v5252 = vpack.c.b16 %v3892, %v3884
        %v5253 = vpack.c.b16 %v3893, %v3885
        %v5254 = vpack.c.b16 %v3894, %v3886
        %v5255 = vpack.c.b16 %v3895, %v3887
        %v5256 = vpack.c.b16 %v3904, %v3896
        %v5257 = vpack.c.b16 %v3905, %v3897
        %v5258 = vpack.c.b16 %v3906, %v3898
        %v5259 = vpack.c.b16 %v3907, %v3899
        %v5260 = vpack.c.b16 %v3908, %v3900
        %v5261 = vpack.c.b16 %v3909, %v3901
        %v5262 = vpack.c.b16 %v3910, %v3902
        %v5263 = vpack.c.b16 %v3911, %v3903
        %v5264 = vpack.c.b16 %v3920, %v3912
        %v5265 = vpack.c.b16 %v3921, %v3913
        %v5266 = vpack.c.b16 %v3922, %v3914
        %v5267 = vpack.c.b16 %v3923, %v3915
        %v5268 = vpack.c.b16 %v3924, %v3916
        %v5269 = vpack.c.b16 %v3925, %v3917
        %v5270 = vpack.c.b16 %v3926, %v3918
        %v5271 = vpack.c.b16 %v3927, %v3919
        %v5272 = vpack.c.b16 %v3936, %v3928
        %v5273 = vpack.c.b16 %v3937, %v3929
        %v5274 = vpack.c.b16 %v3938, %v3930
        %v5275 = vpack.c.b16 %v3939, %v3931
        %v5276 = vpack.c.b16 %v3940, %v3932
        %v5277 = vpack.c.b16 %v3941, %v3933
        %v5278 = vpack.c.b16 %v3942, %v3934
        %v5279 = vpack.c.b16 %v3943, %v3935
        %v5280 = vpack.c.b16 %v3952, %v3944
        %v5281 = vpack.c.b16 %v3953, %v3945
        %v5282 = vpack.c.b16 %v3954, %v3946
        %v5283 = vpack.c.b16 %v3955, %v3947
        %v5284 = vpack.c.b16 %v3956, %v3948
        %v5285 = vpack.c.b16 %v3957, %v3949
        %v5286 = vpack.c.b16 %v3958, %v3950
        %v5287 = vpack.c.b16 %v3959, %v3951
        %v5288 = vpack.c.b16 %v3968, %v3960
        %v5289 = vpack.c.b16 %v3969, %v3961
        %v5290 = vpack.c.b16 %v3970, %v3962
        %v5291 = vpack.c.b16 %v3971, %v3963
        %v5292 = vpack.c.b16 %v3972, %v3964
        %v5293 = vpack.c.b16 %v3973, %v3965
        %v5294 = vpack.c.b16 %v3974, %v3966
        %v5295 = vpack.c.b16 %v3975, %v3967
        %v5296 = vpack.c.b16 %v3984, %v3976
        %v5297 = vpack.c.b16 %v3985, %v3977
        %v5298 = vpack.c.b16 %v3986, %v3978
        %v5299 = vpack.c.b16 %v3987, %v3979
        %v5300 = vpack.c.b16 %v3988, %v3980
        %v5301 = vpack.c.b16 %v3989, %v3981
        %v5302 = vpack.c.b16 %v3990, %v3982
        %v5303 = vpack.c.b16 %v3991, %v3983
        %v5304 = vpack.c.b16 %v4000, %v3992
        %v5305 = vpack.c.b16 %v4001, %v3993
        %v5306 = vpack.c.b16 %v4002, %v3994
        %v5307 = vpack.c.b16 %v4003, %v3995
        %v5308 = vpack.c.b16 %v4004, %v3996
        %v5309 = vpack.c.b16 %v4005, %v3997
        %v5310 = vpack.c.b16 %v4006, %v3998
        %v5311 = vpack.c.b16 %v4007, %v3999
        %v5312 = vpack.c.b16 %v4016, %v4008
        %v5313 = vpack.c.b16 %v4017, %v4009
        %v5314 = vpack.c.b16 %v4018, %v4010
        %v5315 = vpack.c.b16 %v4019, %v4011
        %v5316 = vpack.c.b16 %v4020, %v4012
        %v5317 = vpack.c.b16 %v4021, %v4013
        %v5318 = vpack.c.b16 %v4022, %v4014
        %v5319 = vpack.c.b16 %v4023, %v4015
        %v5320 = vpack.c.b16 %v4032, %v4024
        %v5321 = vpack.c.b16 %v4033, %v4025
        %v5322 = vpack.c.b16 %v4034, %v4026
        %v5323 = vpack.c.b16 %v4035, %v4027
        %v5324 = vpack.c.b16 %v4036, %v4028
        %v5325 = vpack.c.b16 %v4037, %v4029
        %v5326 = vpack.c.b16 %v4038, %v4030
        %v5327 = vpack.c.b16 %v4039, %v4031
        %v5328 = vpack.c.b16 %v4048, %v4040
        %v5329 = vpack.c.b16 %v4049, %v4041
        %v5330 = vpack.c.b16 %v4050, %v4042
        %v5331 = vpack.c.b16 %v4051, %v4043
        %v5332 = vpack.c.b16 %v4052, %v4044
        %v5333 = vpack.c.b16 %v4053, %v4045
        %v5334 = vpack.c.b16 %v4054, %v4046
        %v5335 = vpack.c.b16 %v4055, %v4047
        %v5336 = vpack.c.b16 %v4064, %v4056
        %v5337 = vpack.c.b16 %v4065, %v4057
        %v5338 = vpack.c.b16 %v4066, %v4058
        %v5339 = vpack.c.b16 %v4067, %v4059
        %v5340 = vpack.c.b16 %v4068, %v4060
        %v5341 = vpack.c.b16 %v4069, %v4061
        %v5342 = vpack.c.b16 %v4070, %v4062
        %v5343 = vpack.c.b16 %v4071, %v4063
        %v5344 = vpack.c.b16 %v4080, %v4072
        %v5345 = vpack.c.b16 %v4081, %v4073
        %v5346 = vpack.c.b16 %v4082, %v4074
        %v5347 = vpack.c.b16 %v4083, %v4075
        %v5348 = vpack.c.b16 %v4084, %v4076
        %v5349 = vpack.c.b16 %v4085, %v4077
        %v5350 = vpack.c.b16 %v4086, %v4078
        %v5351 = vpack.c.b16 %v4087, %v4079
        %v5352 = vpack.c.b16 %v4096, %v4088
        %v5353 = vpack.c.b16 %v4097, %v4089
        %v5354 = vpack.c.b16 %v4098, %v4090
        %v5355 = vpack.c.b16 %v4099, %v4091
        %v5356 = vpack.c.b16 %v4100, %v4092
        %v5357 = vpack.c.b16 %v4101, %v4093
        %v5358 = vpack.c.b16 %v4102, %v4094
        %v5359 = vpack.c.b16 %v4103, %v4095
        %v5360 = vpack.c.b16 %v4112, %v4104
        %v5361 = vpack.c.b16 %v4113, %v4105
        %v5362 = vpack.c.b16 %v4114, %v4106
        %v5363 = vpack.c.b16 %v4115, %v4107
        %v5364 = vpack.c.b16 %v4116, %v4108
        %v5365 = vpack.c.b16 %v4117, %v4109
        %v5366 = vpack.c.b16 %v4118, %v4110
        %v5367 = vpack.c.b16 %v4119, %v4111
        %v5368 = vpack.c.b16 %v4128, %v4120
        %v5369 = vpack.c.b16 %v4129, %v4121
        %v5370 = vpack.c.b16 %v4130, %v4122
        %v5371 = vpack.c.b16 %v4131, %v4123
        %v5372 = vpack.c.b16 %v4132, %v4124
        %v5373 = vpack.c.b16 %v4133, %v4125
        %v5374 = vpack.c.b16 %v4134, %v4126
        %v5375 = vpack.c.b16 %v4135, %v4127
        %v5376 = vpack.c.b16 %v4144, %v4136
        %v5377 = vpack.c.b16 %v4145, %v4137
        %v5378 = vpack.c.b16 %v4146, %v4138
        %v5379 = vpack.c.b16 %v4147, %v4139
        %v5380 = vpack.c.b16 %v4148, %v4140
        %v5381 = vpack.c.b16 %v4149, %v4141
        %v5382 = vpack.c.b16 %v4150, %v4142
        %v5383 = vpack.c.b16 %v4151, %v4143
        %v5384 = vpack.c.b16 %v4160, %v4152
        %v5385 = vpack.c.b16 %v4161, %v4153
        %v5386 = vpack.c.b16 %v4162, %v4154
        %v5387 = vpack.c.b16 %v4163, %v4155
        %v5388 = vpack.c.b16 %v4164, %v4156
        %v5389 = vpack.c.b16 %v4165, %v4157
        %v5390 = vpack.c.b16 %v4166, %v4158
        %v5391 = vpack.c.b16 %v4167, %v4159
        %v5392 = vpack.c.b16 %v4176, %v4168
        %v5393 = vpack.c.b16 %v4177, %v4169
        %v5394 = vpack.c.b16 %v4178, %v4170
        %v5395 = vpack.c.b16 %v4179, %v4171
        %v5396 = vpack.c.b16 %v4180, %v4172
        %v5397 = vpack.c.b16 %v4181, %v4173
        %v5398 = vpack.c.b16 %v4182, %v4174
        %v5399 = vpack.c.b16 %v4183, %v4175
        %v5400 = vpack.c.b16 %v4192, %v4184
        %v5401 = vpack.c.b16 %v4193, %v4185
        %v5402 = vpack.c.b16 %v4194, %v4186
        %v5403 = vpack.c.b16 %v4195, %v4187
        %v5404 = vpack.c.b16 %v4196, %v4188
        %v5405 = vpack.c.b16 %v4197, %v4189
        %v5406 = vpack.c.b16 %v4198, %v4190
        %v5407 = vpack.c.b16 %v4199, %v4191
        %v5408 = vpack.c.b16 %v4208, %v4200
        %v5409 = vpack.c.b16 %v4209, %v4201
        %v5410 = vpack.c.b16 %v4210, %v4202
        %v5411 = vpack.c.b16 %v4211, %v4203
        %v5412 = vpack.c.b16 %v4212, %v4204
        %v5413 = vpack.c.b16 %v4213, %v4205
        %v5414 = vpack.c.b16 %v4214, %v4206
        %v5415 = vpack.c.b16 %v4215, %v4207
        %v5416 = vpack.c.b16 %v4224, %v4216
        %v5417 = vpack.c.b16 %v4225, %v4217
        %v5418 = vpack.c.b16 %v4226, %v4218
        %v5419 = vpack.c.b16 %v4227, %v4219
        %v5420 = vpack.c.b16 %v4228, %v4220
        %v5421 = vpack.c.b16 %v4229, %v4221
        %v5422 = vpack.c.b16 %v4230, %v4222
        %v5423 = vpack.c.b16 %v4231, %v4223
        %v5424 = vpack.c.b16 %v4240, %v4232
        %v5425 = vpack.c.b16 %v4241, %v4233
        %v5426 = vpack.c.b16 %v4242, %v4234
        %v5427 = vpack.c.b16 %v4243, %v4235
        %v5428 = vpack.c.b16 %v4244, %v4236
        %v5429 = vpack.c.b16 %v4245, %v4237
        %v5430 = vpack.c.b16 %v4246, %v4238
        %v5431 = vpack.c.b16 %v4247, %v4239
        %v5432 = vpack.c.b16 %v4256, %v4248
        %v5433 = vpack.c.b16 %v4257, %v4249
        %v5434 = vpack.c.b16 %v4258, %v4250
        %v5435 = vpack.c.b16 %v4259, %v4251
        %v5436 = vpack.c.b16 %v4260, %v4252
        %v5437 = vpack.c.b16 %v4261, %v4253
        %v5438 = vpack.c.b16 %v4262, %v4254
        %v5439 = vpack.c.b16 %v4263, %v4255
        %v5440 = vpack.c.b16 %v4272, %v4264
        %v5441 = vpack.c.b16 %v4273, %v4265
        %v5442 = vpack.c.b16 %v4274, %v4266
        %v5443 = vpack.c.b16 %v4275, %v4267
        %v5444 = vpack.c.b16 %v4276, %v4268
        %v5445 = vpack.c.b16 %v4277, %v4269
        %v5446 = vpack.c.b16 %v4278, %v4270
        %v5447 = vpack.c.b16 %v4279, %v4271
        %v5448 = vpack.c.b16 %v4288, %v4280
        %v5449 = vpack.c.b16 %v4289, %v4281
        %v5450 = vpack.c.b16 %v4290, %v4282
        %v5451 = vpack.c.b16 %v4291, %v4283
        %v5452 = vpack.c.b16 %v4292, %v4284
        %v5453 = vpack.c.b16 %v4293, %v4285
        %v5454 = vpack.c.b16 %v4294, %v4286
        %v5455 = vpack.c.b16 %v4295, %v4287
        %v5456 = vpack.c.b16 %v4304, %v4296
        %v5457 = vpack.c.b16 %v4305, %v4297
        %v5458 = vpack.c.b16 %v4306, %v4298
        %v5459 = vpack.c.b16 %v4307, %v4299
        %v5460 = vpack.c.b16 %v4308, %v4300
        %v5461 = vpack.c.b16 %v4309, %v4301
        %v5462 = vpack.c.b16 %v4310, %v4302
        %v5463 = vpack.c.b16 %v4311, %v4303
        %v5464 = vpack.c.b16 %v4320, %v4312
        %v5465 = vpack.c.b16 %v4321, %v4313
        %v5466 = vpack.c.b16 %v4322, %v4314
        %v5467 = vpack.c.b16 %v4323, %v4315
        %v5468 = vpack.c.b16 %v4324, %v4316
        %v5469 = vpack.c.b16 %v4325, %v4317
        %v5470 = vpack.c.b16 %v4326, %v4318
        %v5471 = vpack.c.b16 %v4327, %v4319
        %v5472 = vpack.c.b16 %v4336, %v4328
        %v5473 = vpack.c.b16 %v4337, %v4329
        %v5474 = vpack.c.b16 %v4338, %v4330
        %v5475 = vpack.c.b16 %v4339, %v4331
        %v5476 = vpack.c.b16 %v4340, %v4332
        %v5477 = vpack.c.b16 %v4341, %v4333
        %v5478 = vpack.c.b16 %v4342, %v4334
        %v5479 = vpack.c.b16 %v4343, %v4335
        %v5480 = vpack.c.b16 %v4352, %v4344
        %v5481 = vpack.c.b16 %v4353, %v4345
        %v5482 = vpack.c.b16 %v4354, %v4346
        %v5483 = vpack.c.b16 %v4355, %v4347
        %v5484 = vpack.c.b16 %v4356, %v4348
        %v5485 = vpack.c.b16 %v4357, %v4349
        %v5486 = vpack.c.b16 %v4358, %v4350
        %v5487 = vpack.c.b16 %v4359, %v4351
        %v5488 = vpack.c.b16 %v4368, %v4360
        %v5489 = vpack.c.b16 %v4369, %v4361
        %v5490 = vpack.c.b16 %v4370, %v4362
        %v5491 = vpack.c.b16 %v4371, %v4363
        %v5492 = vpack.c.b16 %v4372, %v4364
        %v5493 = vpack.c.b16 %v4373, %v4365
        %v5494 = vpack.c.b16 %v4374, %v4366
        %v5495 = vpack.c.b16 %v4375, %v4367
        %v5496 = vpack.c.b16 %v4384, %v4376
        %v5497 = vpack.c.b16 %v4385, %v4377
        %v5498 = vpack.c.b16 %v4386, %v4378
        %v5499 = vpack.c.b16 %v4387, %v4379
        %v5500 = vpack.c.b16 %v4388, %v4380
        %v5501 = vpack.c.b16 %v4389, %v4381
        %v5502 = vpack.c.b16 %v4390, %v4382
        %v5503 = vpack.c.b16 %v4391, %v4383
        %v5504 = vpack.c.b16 %v4400, %v4392
        %v5505 = vpack.c.b16 %v4401, %v4393
        %v5506 = vpack.c.b16 %v4402, %v4394
        %v5507 = vpack.c.b16 %v4403, %v4395
        %v5508 = vpack.c.b16 %v4404, %v4396
        %v5509 = vpack.c.b16 %v4405, %v4397
        %v5510 = vpack.c.b16 %v4406, %v4398
        %v5511 = vpack.c.b16 %v4407, %v4399
        %v5512 = vpack.c.b16 %v4416, %v4408
        %v5513 = vpack.c.b16 %v4417, %v4409
        %v5514 = vpack.c.b16 %v4418, %v4410
        %v5515 = vpack.c.b16 %v4419, %v4411
        %v5516 = vpack.c.b16 %v4420, %v4412
        %v5517 = vpack.c.b16 %v4421, %v4413
        %v5518 = vpack.c.b16 %v4422, %v4414
        %v5519 = vpack.c.b16 %v4423, %v4415
        %v5520 = vpack.c.b16 %v4432, %v4424
        %v5521 = vpack.c.b16 %v4433, %v4425
        %v5522 = vpack.c.b16 %v4434, %v4426
        %v5523 = vpack.c.b16 %v4435, %v4427
        %v5524 = vpack.c.b16 %v4436, %v4428
        %v5525 = vpack.c.b16 %v4437, %v4429
        %v5526 = vpack.c.b16 %v4438, %v4430
        %v5527 = vpack.c.b16 %v4439, %v4431
        %v5528 = vpack.c.b16 %v4448, %v4440
        %v5529 = vpack.c.b16 %v4449, %v4441
        %v5530 = vpack.c.b16 %v4450, %v4442
        %v5531 = vpack.c.b16 %v4451, %v4443
        %v5532 = vpack.c.b16 %v4452, %v4444
        %v5533 = vpack.c.b16 %v4453, %v4445
        %v5534 = vpack.c.b16 %v4454, %v4446
        %v5535 = vpack.c.b16 %v4455, %v4447
        %v5536 = vpack.c.b16 %v4464, %v4456
        %v5537 = vpack.c.b16 %v4465, %v4457
        %v5538 = vpack.c.b16 %v4466, %v4458
        %v5539 = vpack.c.b16 %v4467, %v4459
        %v5540 = vpack.c.b16 %v4468, %v4460
        %v5541 = vpack.c.b16 %v4469, %v4461
        %v5542 = vpack.c.b16 %v4470, %v4462
        %v5543 = vpack.c.b16 %v4471, %v4463
        %v5544 = vpack.c.b16 %v4480, %v4472
        %v5545 = vpack.c.b16 %v4481, %v4473
        %v5546 = vpack.c.b16 %v4482, %v4474
        %v5547 = vpack.c.b16 %v4483, %v4475
        %v5548 = vpack.c.b16 %v4484, %v4476
        %v5549 = vpack.c.b16 %v4485, %v4477
        %v5550 = vpack.c.b16 %v4486, %v4478
        %v5551 = vpack.c.b16 %v4487, %v4479
        %v5552 = vpack.c.b16 %v4496, %v4488
        %v5553 = vpack.c.b16 %v4497, %v4489
        %v5554 = vpack.c.b16 %v4498, %v4490
        %v5555 = vpack.c.b16 %v4499, %v4491
        %v5556 = vpack.c.b16 %v4500, %v4492
        %v5557 = vpack.c.b16 %v4501, %v4493
        %v5558 = vpack.c.b16 %v4502, %v4494
        %v5559 = vpack.c.b16 %v4503, %v4495
        %v5560 = vpack.c.b16 %v4512, %v4504
        %v5561 = vpack.c.b16 %v4513, %v4505
        %v5562 = vpack.c.b16 %v4514, %v4506
        %v5563 = vpack.c.b16 %v4515, %v4507
        %v5564 = vpack.c.b16 %v4516, %v4508
        %v5565 = vpack.c.b16 %v4517, %v4509
        %v5566 = vpack.c.b16 %v4518, %v4510
        %v5567 = vpack.c.b16 %v4519, %v4511
        %v5568 = vpack.c.b16 %v4528, %v4520
        %v5569 = vpack.c.b16 %v4529, %v4521
        %v5570 = vpack.c.b16 %v4530, %v4522
        %v5571 = vpack.c.b16 %v4531, %v4523
        %v5572 = vpack.c.b16 %v4532, %v4524
        %v5573 = vpack.c.b16 %v4533, %v4525
        %v5574 = vpack.c.b16 %v4534, %v4526
        %v5575 = vpack.c.b16 %v4535, %v4527
        %v5576 = vpack.c.b16 %v4544, %v4536
        %v5577 = vpack.c.b16 %v4545, %v4537
        %v5578 = vpack.c.b16 %v4546, %v4538
        %v5579 = vpack.c.b16 %v4547, %v4539
        %v5580 = vpack.c.b16 %v4548, %v4540
        %v5581 = vpack.c.b16 %v4549, %v4541
        %v5582 = vpack.c.b16 %v4550, %v4542
        %v5583 = vpack.c.b16 %v4551, %v4543
        %v5584 = vpack.c.b16 %v4560, %v4552
        %v5585 = vpack.c.b16 %v4561, %v4553
        %v5586 = vpack.c.b16 %v4562, %v4554
        %v5587 = vpack.c.b16 %v4563, %v4555
        %v5588 = vpack.c.b16 %v4564, %v4556
        %v5589 = vpack.c.b16 %v4565, %v4557
        %v5590 = vpack.c.b16 %v4566, %v4558
        %v5591 = vpack.c.b16 %v4567, %v4559
        %6616 = vmatpush.bf16.msra.mxu0 %v4624
        %6617 = vmatpush.bf16.msra.mxu0 %v4616
        %6618 = vmatpush.bf16.msra.mxu0 %v4608
        %6619 = vmatpush.bf16.msra.mxu0 %v4600
        %6620 = vmatpush.bf16.msra.mxu0 %v4592
        %6621 = vmatpush.bf16.msra.mxu0 %v4584
        %6622 = vmatpush.bf16.msra.mxu0 %v4576
        %6623 = vmatpush.bf16.msra.mxu0 %v4568
        %6624 = vmatmul.bf16.gmra.mxu0 %v1464
        %v6625 = vpop.f32.mrf.mxu0
        %v6626 = vadd.f32 0.0, %v6625
        %v6627 = vpop.f32.mrf.mxu0
        %6628 = vdwg.mxu0
        %6629 = vmatpush.bf16.msra.mxu0 %v4688
        %6630 = vmatpush.bf16.msra.mxu0 %v4680
        %6631 = vmatpush.bf16.msra.mxu0 %v4672
        %6632 = vmatpush.bf16.msra.mxu0 %v4664
        %6633 = vmatpush.bf16.msra.mxu0 %v4656
        %6634 = vmatpush.bf16.msra.mxu0 %v4648
        %6635 = vmatpush.bf16.msra.mxu0 %v4640
        %6636 = vmatpush.bf16.msra.mxu0 %v4632
        %6637 = vmatmul.bf16.gmra.mxu0 %v1465
        %v6638 = vpop.f32.mrf.mxu0
        %v6639 = vadd.f32 %v6626, %v6638
        %v6640 = vpop.f32.mrf.mxu0
        %6641 = vdwg.mxu0
        %6642 = vmatpush.bf16.msra.mxu0 %v4752
        %6643 = vmatpush.bf16.msra.mxu0 %v4744
        %6644 = vmatpush.bf16.msra.mxu0 %v4736
        %6645 = vmatpush.bf16.msra.mxu0 %v4728
        %6646 = vmatpush.bf16.msra.mxu0 %v4720
        %6647 = vmatpush.bf16.msra.mxu0 %v4712
        %6648 = vmatpush.bf16.msra.mxu0 %v4704
        %6649 = vmatpush.bf16.msra.mxu0 %v4696
        %6650 = vmatmul.bf16.gmra.mxu0 %v1466
        %v6651 = vpop.f32.mrf.mxu0
        %v6652 = vadd.f32 %v6639, %v6651
        %v6653 = vpop.f32.mrf.mxu0
        %6654 = vdwg.mxu0
        %6655 = vmatpush.bf16.msra.mxu0 %v4816
        %6656 = vmatpush.bf16.msra.mxu0 %v4808
        %6657 = vmatpush.bf16.msra.mxu0 %v4800
        %6658 = vmatpush.bf16.msra.mxu0 %v4792
        %6659 = vmatpush.bf16.msra.mxu0 %v4784
        %6660 = vmatpush.bf16.msra.mxu0 %v4776
        %6661 = vmatpush.bf16.msra.mxu0 %v4768
        %6662 = vmatpush.bf16.msra.mxu0 %v4760
        %6663 = vmatmul.bf16.gmra.mxu0 %v1467
        %v6664 = vpop.f32.mrf.mxu0
        %v6665 = vadd.f32 %v6652, %v6664
        %v6666 = vpop.f32.mrf.mxu0
        %6667 = vdwg.mxu0
        %6668 = vmatpush.bf16.msra.mxu0 %v4880
        %6669 = vmatpush.bf16.msra.mxu0 %v4872
        %6670 = vmatpush.bf16.msra.mxu0 %v4864
        %6671 = vmatpush.bf16.msra.mxu0 %v4856
        %6672 = vmatpush.bf16.msra.mxu0 %v4848
        %6673 = vmatpush.bf16.msra.mxu0 %v4840
        %6674 = vmatpush.bf16.msra.mxu0 %v4832
        %6675 = vmatpush.bf16.msra.mxu0 %v4824
        %6676 = vmatmul.bf16.gmra.mxu0 %v1468
        %v6677 = vpop.f32.mrf.mxu0
        %v6678 = vadd.f32 %v6665, %v6677
        %v6679 = vpop.f32.mrf.mxu0
        %6680 = vdwg.mxu0
        %6681 = vmatpush.bf16.msra.mxu0 %v4944
        %6682 = vmatpush.bf16.msra.mxu0 %v4936
        %6683 = vmatpush.bf16.msra.mxu0 %v4928
        %6684 = vmatpush.bf16.msra.mxu0 %v4920
        %6685 = vmatpush.bf16.msra.mxu0 %v4912
        %6686 = vmatpush.bf16.msra.mxu0 %v4904
        %6687 = vmatpush.bf16.msra.mxu0 %v4896
        %6688 = vmatpush.bf16.msra.mxu0 %v4888
        %6689 = vmatmul.bf16.gmra.mxu0 %v1469
        %v6690 = vpop.f32.mrf.mxu0
        %v6691 = vadd.f32 %v6678, %v6690
        %v6692 = vpop.f32.mrf.mxu0
        %6693 = vdwg.mxu0
        %6694 = vmatpush.bf16.msra.mxu0 %v5008
        %6695 = vmatpush.bf16.msra.mxu0 %v5000
        %6696 = vmatpush.bf16.msra.mxu0 %v4992
        %6697 = vmatpush.bf16.msra.mxu0 %v4984
        %6698 = vmatpush.bf16.msra.mxu0 %v4976
        %6699 = vmatpush.bf16.msra.mxu0 %v4968
        %6700 = vmatpush.bf16.msra.mxu0 %v4960
        %6701 = vmatpush.bf16.msra.mxu0 %v4952
        %6702 = vmatmul.bf16.gmra.mxu0 %v1470
        %v6703 = vpop.f32.mrf.mxu0
        %v6704 = vadd.f32 %v6691, %v6703
        %v6705 = vpop.f32.mrf.mxu0
        %6706 = vdwg.mxu0
        %6707 = vmatpush.bf16.msra.mxu0 %v5072
        %6708 = vmatpush.bf16.msra.mxu0 %v5064
        %6709 = vmatpush.bf16.msra.mxu0 %v5056
        %6710 = vmatpush.bf16.msra.mxu0 %v5048
        %6711 = vmatpush.bf16.msra.mxu0 %v5040
        %6712 = vmatpush.bf16.msra.mxu0 %v5032
        %6713 = vmatpush.bf16.msra.mxu0 %v5024
        %6714 = vmatpush.bf16.msra.mxu0 %v5016
        %6715 = vmatmul.bf16.gmra.mxu0 %v1471
        %v6716 = vpop.f32.mrf.mxu0
        %v6717 = vadd.f32 %v6704, %v6716
        %v6718 = vpop.f32.mrf.mxu0
        %6719 = vdwg.mxu0
        %6720 = vmatpush.bf16.msra.mxu0 %v5136
        %6721 = vmatpush.bf16.msra.mxu0 %v5128
        %6722 = vmatpush.bf16.msra.mxu0 %v5120
        %6723 = vmatpush.bf16.msra.mxu0 %v5112
        %6724 = vmatpush.bf16.msra.mxu0 %v5104
        %6725 = vmatpush.bf16.msra.mxu0 %v5096
        %6726 = vmatpush.bf16.msra.mxu0 %v5088
        %6727 = vmatpush.bf16.msra.mxu0 %v5080
        %6728 = vmatmul.bf16.gmra.mxu0 %v1472
        %v6729 = vpop.f32.mrf.mxu0
        %v6730 = vadd.f32 %v6717, %v6729
        %v6731 = vpop.f32.mrf.mxu0
        %6732 = vdwg.mxu0
        %6733 = vmatpush.bf16.msra.mxu0 %v5200
        %6734 = vmatpush.bf16.msra.mxu0 %v5192
        %6735 = vmatpush.bf16.msra.mxu0 %v5184
        %6736 = vmatpush.bf16.msra.mxu0 %v5176
        %6737 = vmatpush.bf16.msra.mxu0 %v5168
        %6738 = vmatpush.bf16.msra.mxu0 %v5160
        %6739 = vmatpush.bf16.msra.mxu0 %v5152
        %6740 = vmatpush.bf16.msra.mxu0 %v5144
        %6741 = vmatmul.bf16.gmra.mxu0 %v1473
        %v6742 = vpop.f32.mrf.mxu0
        %v6743 = vadd.f32 %v6730, %v6742
        %v6744 = vpop.f32.mrf.mxu0
        %6745 = vdwg.mxu0
        %6746 = vmatpush.bf16.msra.mxu0 %v5264
        %6747 = vmatpush.bf16.msra.mxu0 %v5256
        %6748 = vmatpush.bf16.msra.mxu0 %v5248
        %6749 = vmatpush.bf16.msra.mxu0 %v5240
        %6750 = vmatpush.bf16.msra.mxu0 %v5232
        %6751 = vmatpush.bf16.msra.mxu0 %v5224
        %6752 = vmatpush.bf16.msra.mxu0 %v5216
        %6753 = vmatpush.bf16.msra.mxu0 %v5208
        %6754 = vmatmul.bf16.gmra.mxu0 %v1474
        %v6755 = vpop.f32.mrf.mxu0
        %v6756 = vadd.f32 %v6743, %v6755
        %v6757 = vpop.f32.mrf.mxu0
        %6758 = vdwg.mxu0
        %6759 = vmatpush.bf16.msra.mxu0 %v5328
        %6760 = vmatpush.bf16.msra.mxu0 %v5320
        %6761 = vmatpush.bf16.msra.mxu0 %v5312
        %6762 = vmatpush.bf16.msra.mxu0 %v5304
        %6763 = vmatpush.bf16.msra.mxu0 %v5296
        %6764 = vmatpush.bf16.msra.mxu0 %v5288
        %6765 = vmatpush.bf16.msra.mxu0 %v5280
        %6766 = vmatpush.bf16.msra.mxu0 %v5272
        %6767 = vmatmul.bf16.gmra.mxu0 %v1475
        %v6768 = vpop.f32.mrf.mxu0
        %v6769 = vadd.f32 %v6756, %v6768
        %v6770 = vpop.f32.mrf.mxu0
        %6771 = vdwg.mxu0
        %6772 = vmatpush.bf16.msra.mxu0 %v5392
        %6773 = vmatpush.bf16.msra.mxu0 %v5384
        %6774 = vmatpush.bf16.msra.mxu0 %v5376
        %6775 = vmatpush.bf16.msra.mxu0 %v5368
        %6776 = vmatpush.bf16.msra.mxu0 %v5360
        %6777 = vmatpush.bf16.msra.mxu0 %v5352
        %6778 = vmatpush.bf16.msra.mxu0 %v5344
        %6779 = vmatpush.bf16.msra.mxu0 %v5336
        %6780 = vmatmul.bf16.gmra.mxu0 %v1476
        %v6781 = vpop.f32.mrf.mxu0
        %v6782 = vadd.f32 %v6769, %v6781
        %v6783 = vpop.f32.mrf.mxu0
        %6784 = vdwg.mxu0
        %6785 = vmatpush.bf16.msra.mxu0 %v5456
        %6786 = vmatpush.bf16.msra.mxu0 %v5448
        %6787 = vmatpush.bf16.msra.mxu0 %v5440
        %6788 = vmatpush.bf16.msra.mxu0 %v5432
        %6789 = vmatpush.bf16.msra.mxu0 %v5424
        %6790 = vmatpush.bf16.msra.mxu0 %v5416
        %6791 = vmatpush.bf16.msra.mxu0 %v5408
        %6792 = vmatpush.bf16.msra.mxu0 %v5400
        %6793 = vmatmul.bf16.gmra.mxu0 %v1477
        %v6794 = vpop.f32.mrf.mxu0
        %v6795 = vadd.f32 %v6782, %v6794
        %v6796 = vpop.f32.mrf.mxu0
        %6797 = vdwg.mxu0
        %6798 = vmatpush.bf16.msra.mxu0 %v5520
        %6799 = vmatpush.bf16.msra.mxu0 %v5512
        %6800 = vmatpush.bf16.msra.mxu0 %v5504
        %6801 = vmatpush.bf16.msra.mxu0 %v5496
        %6802 = vmatpush.bf16.msra.mxu0 %v5488
        %6803 = vmatpush.bf16.msra.mxu0 %v5480
        %6804 = vmatpush.bf16.msra.mxu0 %v5472
        %6805 = vmatpush.bf16.msra.mxu0 %v5464
        %6806 = vmatmul.bf16.gmra.mxu0 %v1478
        %v6807 = vpop.f32.mrf.mxu0
        %v6808 = vadd.f32 %v6795, %v6807
        %v6809 = vpop.f32.mrf.mxu0
        %6810 = vdwg.mxu0
        %6811 = vmatpush.bf16.msra.mxu0 %v5584
        %6812 = vmatpush.bf16.msra.mxu0 %v5576
        %6813 = vmatpush.bf16.msra.mxu0 %v5568
        %6814 = vmatpush.bf16.msra.mxu0 %v5560
        %6815 = vmatpush.bf16.msra.mxu0 %v5552
        %6816 = vmatpush.bf16.msra.mxu0 %v5544
        %6817 = vmatpush.bf16.msra.mxu0 %v5536
        %6818 = vmatpush.bf16.msra.mxu0 %v5528
        %6819 = vmatmul.bf16.gmra.mxu0 %v1479
        %v6820 = vpop.f32.mrf.mxu0
        %v6821 = vadd.f32 %v6808, %v6820
        %v6822 = vpop.f32.mrf.mxu0
        %6823 = vdwg.mxu0
        %6824 = vmatpush.bf16.msra.mxu0 %v4625
        %6825 = vmatpush.bf16.msra.mxu0 %v4617
        %6826 = vmatpush.bf16.msra.mxu0 %v4609
        %6827 = vmatpush.bf16.msra.mxu0 %v4601
        %6828 = vmatpush.bf16.msra.mxu0 %v4593
        %6829 = vmatpush.bf16.msra.mxu0 %v4585
        %6830 = vmatpush.bf16.msra.mxu0 %v4577
        %6831 = vmatpush.bf16.msra.mxu0 %v4569
        %6832 = vmatmul.bf16.gmra.mxu0 %v1464
        %v6833 = vpop.f32.mrf.mxu0
        %v6834 = vadd.f32 0.0, %v6833
        %v6835 = vpop.f32.mrf.mxu0
        %6836 = vdwg.mxu0
        %6837 = vmatpush.bf16.msra.mxu0 %v4689
        %6838 = vmatpush.bf16.msra.mxu0 %v4681
        %6839 = vmatpush.bf16.msra.mxu0 %v4673
        %6840 = vmatpush.bf16.msra.mxu0 %v4665
        %6841 = vmatpush.bf16.msra.mxu0 %v4657
        %6842 = vmatpush.bf16.msra.mxu0 %v4649
        %6843 = vmatpush.bf16.msra.mxu0 %v4641
        %6844 = vmatpush.bf16.msra.mxu0 %v4633
        %6845 = vmatmul.bf16.gmra.mxu0 %v1465
        %v6846 = vpop.f32.mrf.mxu0
        %v6847 = vadd.f32 %v6834, %v6846
        %v6848 = vpop.f32.mrf.mxu0
        %6849 = vdwg.mxu0
        %6850 = vmatpush.bf16.msra.mxu0 %v4753
        %6851 = vmatpush.bf16.msra.mxu0 %v4745
        %6852 = vmatpush.bf16.msra.mxu0 %v4737
        %6853 = vmatpush.bf16.msra.mxu0 %v4729
        %6854 = vmatpush.bf16.msra.mxu0 %v4721
        %6855 = vmatpush.bf16.msra.mxu0 %v4713
        %6856 = vmatpush.bf16.msra.mxu0 %v4705
        %6857 = vmatpush.bf16.msra.mxu0 %v4697
        %6858 = vmatmul.bf16.gmra.mxu0 %v1466
        %v6859 = vpop.f32.mrf.mxu0
        %v6860 = vadd.f32 %v6847, %v6859
        %v6861 = vpop.f32.mrf.mxu0
        %6862 = vdwg.mxu0
        %6863 = vmatpush.bf16.msra.mxu0 %v4817
        %6864 = vmatpush.bf16.msra.mxu0 %v4809
        %6865 = vmatpush.bf16.msra.mxu0 %v4801
        %6866 = vmatpush.bf16.msra.mxu0 %v4793
        %6867 = vmatpush.bf16.msra.mxu0 %v4785
        %6868 = vmatpush.bf16.msra.mxu0 %v4777
        %6869 = vmatpush.bf16.msra.mxu0 %v4769
        %6870 = vmatpush.bf16.msra.mxu0 %v4761
        %6871 = vmatmul.bf16.gmra.mxu0 %v1467
        %v6872 = vpop.f32.mrf.mxu0
        %v6873 = vadd.f32 %v6860, %v6872
        %v6874 = vpop.f32.mrf.mxu0
        %6875 = vdwg.mxu0
        %6876 = vmatpush.bf16.msra.mxu0 %v4881
        %6877 = vmatpush.bf16.msra.mxu0 %v4873
        %6878 = vmatpush.bf16.msra.mxu0 %v4865
        %6879 = vmatpush.bf16.msra.mxu0 %v4857
        %6880 = vmatpush.bf16.msra.mxu0 %v4849
        %6881 = vmatpush.bf16.msra.mxu0 %v4841
        %6882 = vmatpush.bf16.msra.mxu0 %v4833
        %6883 = vmatpush.bf16.msra.mxu0 %v4825
        %6884 = vmatmul.bf16.gmra.mxu0 %v1468
        %v6885 = vpop.f32.mrf.mxu0
        %v6886 = vadd.f32 %v6873, %v6885
        %v6887 = vpop.f32.mrf.mxu0
        %6888 = vdwg.mxu0
        %6889 = vmatpush.bf16.msra.mxu0 %v4945
        %6890 = vmatpush.bf16.msra.mxu0 %v4937
        %6891 = vmatpush.bf16.msra.mxu0 %v4929
        %6892 = vmatpush.bf16.msra.mxu0 %v4921
        %6893 = vmatpush.bf16.msra.mxu0 %v4913
        %6894 = vmatpush.bf16.msra.mxu0 %v4905
        %6895 = vmatpush.bf16.msra.mxu0 %v4897
        %6896 = vmatpush.bf16.msra.mxu0 %v4889
        %6897 = vmatmul.bf16.gmra.mxu0 %v1469
        %v6898 = vpop.f32.mrf.mxu0
        %v6899 = vadd.f32 %v6886, %v6898
        %v6900 = vpop.f32.mrf.mxu0
        %6901 = vdwg.mxu0
        %6902 = vmatpush.bf16.msra.mxu0 %v5009
        %6903 = vmatpush.bf16.msra.mxu0 %v5001
        %6904 = vmatpush.bf16.msra.mxu0 %v4993
        %6905 = vmatpush.bf16.msra.mxu0 %v4985
        %6906 = vmatpush.bf16.msra.mxu0 %v4977
        %6907 = vmatpush.bf16.msra.mxu0 %v4969
        %6908 = vmatpush.bf16.msra.mxu0 %v4961
        %6909 = vmatpush.bf16.msra.mxu0 %v4953
        %6910 = vmatmul.bf16.gmra.mxu0 %v1470
        %v6911 = vpop.f32.mrf.mxu0
        %v6912 = vadd.f32 %v6899, %v6911
        %v6913 = vpop.f32.mrf.mxu0
        %6914 = vdwg.mxu0
        %6915 = vmatpush.bf16.msra.mxu0 %v5073
        %6916 = vmatpush.bf16.msra.mxu0 %v5065
        %6917 = vmatpush.bf16.msra.mxu0 %v5057
        %6918 = vmatpush.bf16.msra.mxu0 %v5049
        %6919 = vmatpush.bf16.msra.mxu0 %v5041
        %6920 = vmatpush.bf16.msra.mxu0 %v5033
        %6921 = vmatpush.bf16.msra.mxu0 %v5025
        %6922 = vmatpush.bf16.msra.mxu0 %v5017
        %6923 = vmatmul.bf16.gmra.mxu0 %v1471
        %v6924 = vpop.f32.mrf.mxu0
        %v6925 = vadd.f32 %v6912, %v6924
        %v6926 = vpop.f32.mrf.mxu0
        %6927 = vdwg.mxu0
        %6928 = vmatpush.bf16.msra.mxu0 %v5137
        %6929 = vmatpush.bf16.msra.mxu0 %v5129
        %6930 = vmatpush.bf16.msra.mxu0 %v5121
        %6931 = vmatpush.bf16.msra.mxu0 %v5113
        %6932 = vmatpush.bf16.msra.mxu0 %v5105
        %6933 = vmatpush.bf16.msra.mxu0 %v5097
        %6934 = vmatpush.bf16.msra.mxu0 %v5089
        %6935 = vmatpush.bf16.msra.mxu0 %v5081
        %6936 = vmatmul.bf16.gmra.mxu0 %v1472
        %v6937 = vpop.f32.mrf.mxu0
        %v6938 = vadd.f32 %v6925, %v6937
        %v6939 = vpop.f32.mrf.mxu0
        %6940 = vdwg.mxu0
        %6941 = vmatpush.bf16.msra.mxu0 %v5201
        %6942 = vmatpush.bf16.msra.mxu0 %v5193
        %6943 = vmatpush.bf16.msra.mxu0 %v5185
        %6944 = vmatpush.bf16.msra.mxu0 %v5177
        %6945 = vmatpush.bf16.msra.mxu0 %v5169
        %6946 = vmatpush.bf16.msra.mxu0 %v5161
        %6947 = vmatpush.bf16.msra.mxu0 %v5153
        %6948 = vmatpush.bf16.msra.mxu0 %v5145
        %6949 = vmatmul.bf16.gmra.mxu0 %v1473
        %v6950 = vpop.f32.mrf.mxu0
        %v6951 = vadd.f32 %v6938, %v6950
        %v6952 = vpop.f32.mrf.mxu0
        %6953 = vdwg.mxu0
        %6954 = vmatpush.bf16.msra.mxu0 %v5265
        %6955 = vmatpush.bf16.msra.mxu0 %v5257
        %6956 = vmatpush.bf16.msra.mxu0 %v5249
        %6957 = vmatpush.bf16.msra.mxu0 %v5241
        %6958 = vmatpush.bf16.msra.mxu0 %v5233
        %6959 = vmatpush.bf16.msra.mxu0 %v5225
        %6960 = vmatpush.bf16.msra.mxu0 %v5217
        %6961 = vmatpush.bf16.msra.mxu0 %v5209
        %6962 = vmatmul.bf16.gmra.mxu0 %v1474
        %v6963 = vpop.f32.mrf.mxu0
        %v6964 = vadd.f32 %v6951, %v6963
        %v6965 = vpop.f32.mrf.mxu0
        %6966 = vdwg.mxu0
        %6967 = vmatpush.bf16.msra.mxu0 %v5329
        %6968 = vmatpush.bf16.msra.mxu0 %v5321
        %6969 = vmatpush.bf16.msra.mxu0 %v5313
        %6970 = vmatpush.bf16.msra.mxu0 %v5305
        %6971 = vmatpush.bf16.msra.mxu0 %v5297
        %6972 = vmatpush.bf16.msra.mxu0 %v5289
        %6973 = vmatpush.bf16.msra.mxu0 %v5281
        %6974 = vmatpush.bf16.msra.mxu0 %v5273
        %6975 = vmatmul.bf16.gmra.mxu0 %v1475
        %v6976 = vpop.f32.mrf.mxu0
        %v6977 = vadd.f32 %v6964, %v6976
        %v6978 = vpop.f32.mrf.mxu0
        %6979 = vdwg.mxu0
        %6980 = vmatpush.bf16.msra.mxu0 %v5393
        %6981 = vmatpush.bf16.msra.mxu0 %v5385
        %6982 = vmatpush.bf16.msra.mxu0 %v5377
        %6983 = vmatpush.bf16.msra.mxu0 %v5369
        %6984 = vmatpush.bf16.msra.mxu0 %v5361
        %6985 = vmatpush.bf16.msra.mxu0 %v5353
        %6986 = vmatpush.bf16.msra.mxu0 %v5345
        %6987 = vmatpush.bf16.msra.mxu0 %v5337
        %6988 = vmatmul.bf16.gmra.mxu0 %v1476
        %v6989 = vpop.f32.mrf.mxu0
        %v6990 = vadd.f32 %v6977, %v6989
        %v6991 = vpop.f32.mrf.mxu0
        %6992 = vdwg.mxu0
        %6993 = vmatpush.bf16.msra.mxu0 %v5457
        %6994 = vmatpush.bf16.msra.mxu0 %v5449
        %6995 = vmatpush.bf16.msra.mxu0 %v5441
        %6996 = vmatpush.bf16.msra.mxu0 %v5433
        %6997 = vmatpush.bf16.msra.mxu0 %v5425
        %6998 = vmatpush.bf16.msra.mxu0 %v5417
        %6999 = vmatpush.bf16.msra.mxu0 %v5409
        %7000 = vmatpush.bf16.msra.mxu0 %v5401
        %7001 = vmatmul.bf16.gmra.mxu0 %v1477
        %v7002 = vpop.f32.mrf.mxu0
        %v7003 = vadd.f32 %v6990, %v7002
        %v7004 = vpop.f32.mrf.mxu0
        %7005 = vdwg.mxu0
        %7006 = vmatpush.bf16.msra.mxu0 %v5521
        %7007 = vmatpush.bf16.msra.mxu0 %v5513
        %7008 = vmatpush.bf16.msra.mxu0 %v5505
        %7009 = vmatpush.bf16.msra.mxu0 %v5497
        %7010 = vmatpush.bf16.msra.mxu0 %v5489
        %7011 = vmatpush.bf16.msra.mxu0 %v5481
        %7012 = vmatpush.bf16.msra.mxu0 %v5473
        %7013 = vmatpush.bf16.msra.mxu0 %v5465
        %7014 = vmatmul.bf16.gmra.mxu0 %v1478
        %v7015 = vpop.f32.mrf.mxu0
        %v7016 = vadd.f32 %v7003, %v7015
        %v7017 = vpop.f32.mrf.mxu0
        %7018 = vdwg.mxu0
        %7019 = vmatpush.bf16.msra.mxu0 %v5585
        %7020 = vmatpush.bf16.msra.mxu0 %v5577
        %7021 = vmatpush.bf16.msra.mxu0 %v5569
        %7022 = vmatpush.bf16.msra.mxu0 %v5561
        %7023 = vmatpush.bf16.msra.mxu0 %v5553
        %7024 = vmatpush.bf16.msra.mxu0 %v5545
        %7025 = vmatpush.bf16.msra.mxu0 %v5537
        %7026 = vmatpush.bf16.msra.mxu0 %v5529
        %7027 = vmatmul.bf16.gmra.mxu0 %v1479
        %v7028 = vpop.f32.mrf.mxu0
        %v7029 = vadd.f32 %v7016, %v7028
        %v7030 = vpop.f32.mrf.mxu0
        %7031 = vdwg.mxu0
        %7032 = vmatpush.bf16.msra.mxu0 %v4626
        %7033 = vmatpush.bf16.msra.mxu0 %v4618
        %7034 = vmatpush.bf16.msra.mxu0 %v4610
        %7035 = vmatpush.bf16.msra.mxu0 %v4602
        %7036 = vmatpush.bf16.msra.mxu0 %v4594
        %7037 = vmatpush.bf16.msra.mxu0 %v4586
        %7038 = vmatpush.bf16.msra.mxu0 %v4578
        %7039 = vmatpush.bf16.msra.mxu0 %v4570
        %7040 = vmatmul.bf16.gmra.mxu0 %v1464
        %v7041 = vpop.f32.mrf.mxu0
        %v7042 = vadd.f32 0.0, %v7041
        %v7043 = vpop.f32.mrf.mxu0
        %7044 = vdwg.mxu0
        %7045 = vmatpush.bf16.msra.mxu0 %v4690
        %7046 = vmatpush.bf16.msra.mxu0 %v4682
        %7047 = vmatpush.bf16.msra.mxu0 %v4674
        %7048 = vmatpush.bf16.msra.mxu0 %v4666
        %7049 = vmatpush.bf16.msra.mxu0 %v4658
        %7050 = vmatpush.bf16.msra.mxu0 %v4650
        %7051 = vmatpush.bf16.msra.mxu0 %v4642
        %7052 = vmatpush.bf16.msra.mxu0 %v4634
        %7053 = vmatmul.bf16.gmra.mxu0 %v1465
        %v7054 = vpop.f32.mrf.mxu0
        %v7055 = vadd.f32 %v7042, %v7054
        %v7056 = vpop.f32.mrf.mxu0
        %7057 = vdwg.mxu0
        %7058 = vmatpush.bf16.msra.mxu0 %v4754
        %7059 = vmatpush.bf16.msra.mxu0 %v4746
        %7060 = vmatpush.bf16.msra.mxu0 %v4738
        %7061 = vmatpush.bf16.msra.mxu0 %v4730
        %7062 = vmatpush.bf16.msra.mxu0 %v4722
        %7063 = vmatpush.bf16.msra.mxu0 %v4714
        %7064 = vmatpush.bf16.msra.mxu0 %v4706
        %7065 = vmatpush.bf16.msra.mxu0 %v4698
        %7066 = vmatmul.bf16.gmra.mxu0 %v1466
        %v7067 = vpop.f32.mrf.mxu0
        %v7068 = vadd.f32 %v7055, %v7067
        %v7069 = vpop.f32.mrf.mxu0
        %7070 = vdwg.mxu0
        %7071 = vmatpush.bf16.msra.mxu0 %v4818
        %7072 = vmatpush.bf16.msra.mxu0 %v4810
        %7073 = vmatpush.bf16.msra.mxu0 %v4802
        %7074 = vmatpush.bf16.msra.mxu0 %v4794
        %7075 = vmatpush.bf16.msra.mxu0 %v4786
        %7076 = vmatpush.bf16.msra.mxu0 %v4778
        %7077 = vmatpush.bf16.msra.mxu0 %v4770
        %7078 = vmatpush.bf16.msra.mxu0 %v4762
        %7079 = vmatmul.bf16.gmra.mxu0 %v1467
        %v7080 = vpop.f32.mrf.mxu0
        %v7081 = vadd.f32 %v7068, %v7080
        %v7082 = vpop.f32.mrf.mxu0
        %7083 = vdwg.mxu0
        %7084 = vmatpush.bf16.msra.mxu0 %v4882
        %7085 = vmatpush.bf16.msra.mxu0 %v4874
        %7086 = vmatpush.bf16.msra.mxu0 %v4866
        %7087 = vmatpush.bf16.msra.mxu0 %v4858
        %7088 = vmatpush.bf16.msra.mxu0 %v4850
        %7089 = vmatpush.bf16.msra.mxu0 %v4842
        %7090 = vmatpush.bf16.msra.mxu0 %v4834
        %7091 = vmatpush.bf16.msra.mxu0 %v4826
        %7092 = vmatmul.bf16.gmra.mxu0 %v1468
        %v7093 = vpop.f32.mrf.mxu0
        %v7094 = vadd.f32 %v7081, %v7093
        %v7095 = vpop.f32.mrf.mxu0
        %7096 = vdwg.mxu0
        %7097 = vmatpush.bf16.msra.mxu0 %v4946
        %7098 = vmatpush.bf16.msra.mxu0 %v4938
        %7099 = vmatpush.bf16.msra.mxu0 %v4930
        %7100 = vmatpush.bf16.msra.mxu0 %v4922
        %7101 = vmatpush.bf16.msra.mxu0 %v4914
        %7102 = vmatpush.bf16.msra.mxu0 %v4906
        %7103 = vmatpush.bf16.msra.mxu0 %v4898
        %7104 = vmatpush.bf16.msra.mxu0 %v4890
        %7105 = vmatmul.bf16.gmra.mxu0 %v1469
        %v7106 = vpop.f32.mrf.mxu0
        %v7107 = vadd.f32 %v7094, %v7106
        %v7108 = vpop.f32.mrf.mxu0
        %7109 = vdwg.mxu0
        %7110 = vmatpush.bf16.msra.mxu0 %v5010
        %7111 = vmatpush.bf16.msra.mxu0 %v5002
        %7112 = vmatpush.bf16.msra.mxu0 %v4994
        %7113 = vmatpush.bf16.msra.mxu0 %v4986
        %7114 = vmatpush.bf16.msra.mxu0 %v4978
        %7115 = vmatpush.bf16.msra.mxu0 %v4970
        %7116 = vmatpush.bf16.msra.mxu0 %v4962
        %7117 = vmatpush.bf16.msra.mxu0 %v4954
        %7118 = vmatmul.bf16.gmra.mxu0 %v1470
        %v7119 = vpop.f32.mrf.mxu0
        %v7120 = vadd.f32 %v7107, %v7119
        %v7121 = vpop.f32.mrf.mxu0
        %7122 = vdwg.mxu0
        %7123 = vmatpush.bf16.msra.mxu0 %v5074
        %7124 = vmatpush.bf16.msra.mxu0 %v5066
        %7125 = vmatpush.bf16.msra.mxu0 %v5058
        %7126 = vmatpush.bf16.msra.mxu0 %v5050
        %7127 = vmatpush.bf16.msra.mxu0 %v5042
        %7128 = vmatpush.bf16.msra.mxu0 %v5034
        %7129 = vmatpush.bf16.msra.mxu0 %v5026
        %7130 = vmatpush.bf16.msra.mxu0 %v5018
        %7131 = vmatmul.bf16.gmra.mxu0 %v1471
        %v7132 = vpop.f32.mrf.mxu0
        %v7133 = vadd.f32 %v7120, %v7132
        %v7134 = vpop.f32.mrf.mxu0
        %7135 = vdwg.mxu0
        %7136 = vmatpush.bf16.msra.mxu0 %v5138
        %7137 = vmatpush.bf16.msra.mxu0 %v5130
        %7138 = vmatpush.bf16.msra.mxu0 %v5122
        %7139 = vmatpush.bf16.msra.mxu0 %v5114
        %7140 = vmatpush.bf16.msra.mxu0 %v5106
        %7141 = vmatpush.bf16.msra.mxu0 %v5098
        %7142 = vmatpush.bf16.msra.mxu0 %v5090
        %7143 = vmatpush.bf16.msra.mxu0 %v5082
        %7144 = vmatmul.bf16.gmra.mxu0 %v1472
        %v7145 = vpop.f32.mrf.mxu0
        %v7146 = vadd.f32 %v7133, %v7145
        %v7147 = vpop.f32.mrf.mxu0
        %7148 = vdwg.mxu0
        %7149 = vmatpush.bf16.msra.mxu0 %v5202
        %7150 = vmatpush.bf16.msra.mxu0 %v5194
        %7151 = vmatpush.bf16.msra.mxu0 %v5186
        %7152 = vmatpush.bf16.msra.mxu0 %v5178
        %7153 = vmatpush.bf16.msra.mxu0 %v5170
        %7154 = vmatpush.bf16.msra.mxu0 %v5162
        %7155 = vmatpush.bf16.msra.mxu0 %v5154
        %7156 = vmatpush.bf16.msra.mxu0 %v5146
        %7157 = vmatmul.bf16.gmra.mxu0 %v1473
        %v7158 = vpop.f32.mrf.mxu0
        %v7159 = vadd.f32 %v7146, %v7158
        %v7160 = vpop.f32.mrf.mxu0
        %7161 = vdwg.mxu0
        %7162 = vmatpush.bf16.msra.mxu0 %v5266
        %7163 = vmatpush.bf16.msra.mxu0 %v5258
        %7164 = vmatpush.bf16.msra.mxu0 %v5250
        %7165 = vmatpush.bf16.msra.mxu0 %v5242
        %7166 = vmatpush.bf16.msra.mxu0 %v5234
        %7167 = vmatpush.bf16.msra.mxu0 %v5226
        %7168 = vmatpush.bf16.msra.mxu0 %v5218
        %7169 = vmatpush.bf16.msra.mxu0 %v5210
        %7170 = vmatmul.bf16.gmra.mxu0 %v1474
        %v7171 = vpop.f32.mrf.mxu0
        %v7172 = vadd.f32 %v7159, %v7171
        %v7173 = vpop.f32.mrf.mxu0
        %7174 = vdwg.mxu0
        %7175 = vmatpush.bf16.msra.mxu0 %v5330
        %7176 = vmatpush.bf16.msra.mxu0 %v5322
        %7177 = vmatpush.bf16.msra.mxu0 %v5314
        %7178 = vmatpush.bf16.msra.mxu0 %v5306
        %7179 = vmatpush.bf16.msra.mxu0 %v5298
        %7180 = vmatpush.bf16.msra.mxu0 %v5290
        %7181 = vmatpush.bf16.msra.mxu0 %v5282
        %7182 = vmatpush.bf16.msra.mxu0 %v5274
        %7183 = vmatmul.bf16.gmra.mxu0 %v1475
        %v7184 = vpop.f32.mrf.mxu0
        %v7185 = vadd.f32 %v7172, %v7184
        %v7186 = vpop.f32.mrf.mxu0
        %7187 = vdwg.mxu0
        %7188 = vmatpush.bf16.msra.mxu0 %v5394
        %7189 = vmatpush.bf16.msra.mxu0 %v5386
        %7190 = vmatpush.bf16.msra.mxu0 %v5378
        %7191 = vmatpush.bf16.msra.mxu0 %v5370
        %7192 = vmatpush.bf16.msra.mxu0 %v5362
        %7193 = vmatpush.bf16.msra.mxu0 %v5354
        %7194 = vmatpush.bf16.msra.mxu0 %v5346
        %7195 = vmatpush.bf16.msra.mxu0 %v5338
        %7196 = vmatmul.bf16.gmra.mxu0 %v1476
        %v7197 = vpop.f32.mrf.mxu0
        %v7198 = vadd.f32 %v7185, %v7197
        %v7199 = vpop.f32.mrf.mxu0
        %7200 = vdwg.mxu0
        %7201 = vmatpush.bf16.msra.mxu0 %v5458
        %7202 = vmatpush.bf16.msra.mxu0 %v5450
        %7203 = vmatpush.bf16.msra.mxu0 %v5442
        %7204 = vmatpush.bf16.msra.mxu0 %v5434
        %7205 = vmatpush.bf16.msra.mxu0 %v5426
        %7206 = vmatpush.bf16.msra.mxu0 %v5418
        %7207 = vmatpush.bf16.msra.mxu0 %v5410
        %7208 = vmatpush.bf16.msra.mxu0 %v5402
        %7209 = vmatmul.bf16.gmra.mxu0 %v1477
        %v7210 = vpop.f32.mrf.mxu0
        %v7211 = vadd.f32 %v7198, %v7210
        %v7212 = vpop.f32.mrf.mxu0
        %7213 = vdwg.mxu0
        %7214 = vmatpush.bf16.msra.mxu0 %v5522
        %7215 = vmatpush.bf16.msra.mxu0 %v5514
        %7216 = vmatpush.bf16.msra.mxu0 %v5506
        %7217 = vmatpush.bf16.msra.mxu0 %v5498
        %7218 = vmatpush.bf16.msra.mxu0 %v5490
        %7219 = vmatpush.bf16.msra.mxu0 %v5482
        %7220 = vmatpush.bf16.msra.mxu0 %v5474
        %7221 = vmatpush.bf16.msra.mxu0 %v5466
        %7222 = vmatmul.bf16.gmra.mxu0 %v1478
        %v7223 = vpop.f32.mrf.mxu0
        %v7224 = vadd.f32 %v7211, %v7223
        %v7225 = vpop.f32.mrf.mxu0
        %7226 = vdwg.mxu0
        %7227 = vmatpush.bf16.msra.mxu0 %v5586
        %7228 = vmatpush.bf16.msra.mxu0 %v5578
        %7229 = vmatpush.bf16.msra.mxu0 %v5570
        %7230 = vmatpush.bf16.msra.mxu0 %v5562
        %7231 = vmatpush.bf16.msra.mxu0 %v5554
        %7232 = vmatpush.bf16.msra.mxu0 %v5546
        %7233 = vmatpush.bf16.msra.mxu0 %v5538
        %7234 = vmatpush.bf16.msra.mxu0 %v5530
        %7235 = vmatmul.bf16.gmra.mxu0 %v1479
        %v7236 = vpop.f32.mrf.mxu0
        %v7237 = vadd.f32 %v7224, %v7236
        %v7238 = vpop.f32.mrf.mxu0
        %7239 = vdwg.mxu0
        %7240 = vmatpush.bf16.msra.mxu0 %v4627
        %7241 = vmatpush.bf16.msra.mxu0 %v4619
        %7242 = vmatpush.bf16.msra.mxu0 %v4611
        %7243 = vmatpush.bf16.msra.mxu0 %v4603
        %7244 = vmatpush.bf16.msra.mxu0 %v4595
        %7245 = vmatpush.bf16.msra.mxu0 %v4587
        %7246 = vmatpush.bf16.msra.mxu0 %v4579
        %7247 = vmatpush.bf16.msra.mxu0 %v4571
        %7248 = vmatmul.bf16.gmra.mxu0 %v1464
        %v7249 = vpop.f32.mrf.mxu0
        %v7250 = vadd.f32 0.0, %v7249
        %v7251 = vpop.f32.mrf.mxu0
        %7252 = vdwg.mxu0
        %7253 = vmatpush.bf16.msra.mxu0 %v4691
        %7254 = vmatpush.bf16.msra.mxu0 %v4683
        %7255 = vmatpush.bf16.msra.mxu0 %v4675
        %7256 = vmatpush.bf16.msra.mxu0 %v4667
        %7257 = vmatpush.bf16.msra.mxu0 %v4659
        %7258 = vmatpush.bf16.msra.mxu0 %v4651
        %7259 = vmatpush.bf16.msra.mxu0 %v4643
        %7260 = vmatpush.bf16.msra.mxu0 %v4635
        %7261 = vmatmul.bf16.gmra.mxu0 %v1465
        %v7262 = vpop.f32.mrf.mxu0
        %v7263 = vadd.f32 %v7250, %v7262
        %v7264 = vpop.f32.mrf.mxu0
        %7265 = vdwg.mxu0
        %7266 = vmatpush.bf16.msra.mxu0 %v4755
        %7267 = vmatpush.bf16.msra.mxu0 %v4747
        %7268 = vmatpush.bf16.msra.mxu0 %v4739
        %7269 = vmatpush.bf16.msra.mxu0 %v4731
        %7270 = vmatpush.bf16.msra.mxu0 %v4723
        %7271 = vmatpush.bf16.msra.mxu0 %v4715
        %7272 = vmatpush.bf16.msra.mxu0 %v4707
        %7273 = vmatpush.bf16.msra.mxu0 %v4699
        %7274 = vmatmul.bf16.gmra.mxu0 %v1466
        %v7275 = vpop.f32.mrf.mxu0
        %v7276 = vadd.f32 %v7263, %v7275
        %v7277 = vpop.f32.mrf.mxu0
        %7278 = vdwg.mxu0
        %7279 = vmatpush.bf16.msra.mxu0 %v4819
        %7280 = vmatpush.bf16.msra.mxu0 %v4811
        %7281 = vmatpush.bf16.msra.mxu0 %v4803
        %7282 = vmatpush.bf16.msra.mxu0 %v4795
        %7283 = vmatpush.bf16.msra.mxu0 %v4787
        %7284 = vmatpush.bf16.msra.mxu0 %v4779
        %7285 = vmatpush.bf16.msra.mxu0 %v4771
        %7286 = vmatpush.bf16.msra.mxu0 %v4763
        %7287 = vmatmul.bf16.gmra.mxu0 %v1467
        %v7288 = vpop.f32.mrf.mxu0
        %v7289 = vadd.f32 %v7276, %v7288
        %v7290 = vpop.f32.mrf.mxu0
        %7291 = vdwg.mxu0
        %7292 = vmatpush.bf16.msra.mxu0 %v4883
        %7293 = vmatpush.bf16.msra.mxu0 %v4875
        %7294 = vmatpush.bf16.msra.mxu0 %v4867
        %7295 = vmatpush.bf16.msra.mxu0 %v4859
        %7296 = vmatpush.bf16.msra.mxu0 %v4851
        %7297 = vmatpush.bf16.msra.mxu0 %v4843
        %7298 = vmatpush.bf16.msra.mxu0 %v4835
        %7299 = vmatpush.bf16.msra.mxu0 %v4827
        %7300 = vmatmul.bf16.gmra.mxu0 %v1468
        %v7301 = vpop.f32.mrf.mxu0
        %v7302 = vadd.f32 %v7289, %v7301
        %v7303 = vpop.f32.mrf.mxu0
        %7304 = vdwg.mxu0
        %7305 = vmatpush.bf16.msra.mxu0 %v4947
        %7306 = vmatpush.bf16.msra.mxu0 %v4939
        %7307 = vmatpush.bf16.msra.mxu0 %v4931
        %7308 = vmatpush.bf16.msra.mxu0 %v4923
        %7309 = vmatpush.bf16.msra.mxu0 %v4915
        %7310 = vmatpush.bf16.msra.mxu0 %v4907
        %7311 = vmatpush.bf16.msra.mxu0 %v4899
        %7312 = vmatpush.bf16.msra.mxu0 %v4891
        %7313 = vmatmul.bf16.gmra.mxu0 %v1469
        %v7314 = vpop.f32.mrf.mxu0
        %v7315 = vadd.f32 %v7302, %v7314
        %v7316 = vpop.f32.mrf.mxu0
        %7317 = vdwg.mxu0
        %7318 = vmatpush.bf16.msra.mxu0 %v5011
        %7319 = vmatpush.bf16.msra.mxu0 %v5003
        %7320 = vmatpush.bf16.msra.mxu0 %v4995
        %7321 = vmatpush.bf16.msra.mxu0 %v4987
        %7322 = vmatpush.bf16.msra.mxu0 %v4979
        %7323 = vmatpush.bf16.msra.mxu0 %v4971
        %7324 = vmatpush.bf16.msra.mxu0 %v4963
        %7325 = vmatpush.bf16.msra.mxu0 %v4955
        %7326 = vmatmul.bf16.gmra.mxu0 %v1470
        %v7327 = vpop.f32.mrf.mxu0
        %v7328 = vadd.f32 %v7315, %v7327
        %v7329 = vpop.f32.mrf.mxu0
        %7330 = vdwg.mxu0
        %7331 = vmatpush.bf16.msra.mxu0 %v5075
        %7332 = vmatpush.bf16.msra.mxu0 %v5067
        %7333 = vmatpush.bf16.msra.mxu0 %v5059
        %7334 = vmatpush.bf16.msra.mxu0 %v5051
        %7335 = vmatpush.bf16.msra.mxu0 %v5043
        %7336 = vmatpush.bf16.msra.mxu0 %v5035
        %7337 = vmatpush.bf16.msra.mxu0 %v5027
        %7338 = vmatpush.bf16.msra.mxu0 %v5019
        %7339 = vmatmul.bf16.gmra.mxu0 %v1471
        %v7340 = vpop.f32.mrf.mxu0
        %v7341 = vadd.f32 %v7328, %v7340
        %v7342 = vpop.f32.mrf.mxu0
        %7343 = vdwg.mxu0
        %7344 = vmatpush.bf16.msra.mxu0 %v5139
        %7345 = vmatpush.bf16.msra.mxu0 %v5131
        %7346 = vmatpush.bf16.msra.mxu0 %v5123
        %7347 = vmatpush.bf16.msra.mxu0 %v5115
        %7348 = vmatpush.bf16.msra.mxu0 %v5107
        %7349 = vmatpush.bf16.msra.mxu0 %v5099
        %7350 = vmatpush.bf16.msra.mxu0 %v5091
        %7351 = vmatpush.bf16.msra.mxu0 %v5083
        %7352 = vmatmul.bf16.gmra.mxu0 %v1472
        %v7353 = vpop.f32.mrf.mxu0
        %v7354 = vadd.f32 %v7341, %v7353
        %v7355 = vpop.f32.mrf.mxu0
        %7356 = vdwg.mxu0
        %7357 = vmatpush.bf16.msra.mxu0 %v5203
        %7358 = vmatpush.bf16.msra.mxu0 %v5195
        %7359 = vmatpush.bf16.msra.mxu0 %v5187
        %7360 = vmatpush.bf16.msra.mxu0 %v5179
        %7361 = vmatpush.bf16.msra.mxu0 %v5171
        %7362 = vmatpush.bf16.msra.mxu0 %v5163
        %7363 = vmatpush.bf16.msra.mxu0 %v5155
        %7364 = vmatpush.bf16.msra.mxu0 %v5147
        %7365 = vmatmul.bf16.gmra.mxu0 %v1473
        %v7366 = vpop.f32.mrf.mxu0
        %v7367 = vadd.f32 %v7354, %v7366
        %v7368 = vpop.f32.mrf.mxu0
        %7369 = vdwg.mxu0
        %7370 = vmatpush.bf16.msra.mxu0 %v5267
        %7371 = vmatpush.bf16.msra.mxu0 %v5259
        %7372 = vmatpush.bf16.msra.mxu0 %v5251
        %7373 = vmatpush.bf16.msra.mxu0 %v5243
        %7374 = vmatpush.bf16.msra.mxu0 %v5235
        %7375 = vmatpush.bf16.msra.mxu0 %v5227
        %7376 = vmatpush.bf16.msra.mxu0 %v5219
        %7377 = vmatpush.bf16.msra.mxu0 %v5211
        %7378 = vmatmul.bf16.gmra.mxu0 %v1474
        %v7379 = vpop.f32.mrf.mxu0
        %v7380 = vadd.f32 %v7367, %v7379
        %v7381 = vpop.f32.mrf.mxu0
        %7382 = vdwg.mxu0
        %7383 = vmatpush.bf16.msra.mxu0 %v5331
        %7384 = vmatpush.bf16.msra.mxu0 %v5323
        %7385 = vmatpush.bf16.msra.mxu0 %v5315
        %7386 = vmatpush.bf16.msra.mxu0 %v5307
        %7387 = vmatpush.bf16.msra.mxu0 %v5299
        %7388 = vmatpush.bf16.msra.mxu0 %v5291
        %7389 = vmatpush.bf16.msra.mxu0 %v5283
        %7390 = vmatpush.bf16.msra.mxu0 %v5275
        %7391 = vmatmul.bf16.gmra.mxu0 %v1475
        %v7392 = vpop.f32.mrf.mxu0
        %v7393 = vadd.f32 %v7380, %v7392
        %v7394 = vpop.f32.mrf.mxu0
        %7395 = vdwg.mxu0
        %7396 = vmatpush.bf16.msra.mxu0 %v5395
        %7397 = vmatpush.bf16.msra.mxu0 %v5387
        %7398 = vmatpush.bf16.msra.mxu0 %v5379
        %7399 = vmatpush.bf16.msra.mxu0 %v5371
        %7400 = vmatpush.bf16.msra.mxu0 %v5363
        %7401 = vmatpush.bf16.msra.mxu0 %v5355
        %7402 = vmatpush.bf16.msra.mxu0 %v5347
        %7403 = vmatpush.bf16.msra.mxu0 %v5339
        %7404 = vmatmul.bf16.gmra.mxu0 %v1476
        %v7405 = vpop.f32.mrf.mxu0
        %v7406 = vadd.f32 %v7393, %v7405
        %v7407 = vpop.f32.mrf.mxu0
        %7408 = vdwg.mxu0
        %7409 = vmatpush.bf16.msra.mxu0 %v5459
        %7410 = vmatpush.bf16.msra.mxu0 %v5451
        %7411 = vmatpush.bf16.msra.mxu0 %v5443
        %7412 = vmatpush.bf16.msra.mxu0 %v5435
        %7413 = vmatpush.bf16.msra.mxu0 %v5427
        %7414 = vmatpush.bf16.msra.mxu0 %v5419
        %7415 = vmatpush.bf16.msra.mxu0 %v5411
        %7416 = vmatpush.bf16.msra.mxu0 %v5403
        %7417 = vmatmul.bf16.gmra.mxu0 %v1477
        %v7418 = vpop.f32.mrf.mxu0
        %v7419 = vadd.f32 %v7406, %v7418
        %v7420 = vpop.f32.mrf.mxu0
        %7421 = vdwg.mxu0
        %7422 = vmatpush.bf16.msra.mxu0 %v5523
        %7423 = vmatpush.bf16.msra.mxu0 %v5515
        %7424 = vmatpush.bf16.msra.mxu0 %v5507
        %7425 = vmatpush.bf16.msra.mxu0 %v5499
        %7426 = vmatpush.bf16.msra.mxu0 %v5491
        %7427 = vmatpush.bf16.msra.mxu0 %v5483
        %7428 = vmatpush.bf16.msra.mxu0 %v5475
        %7429 = vmatpush.bf16.msra.mxu0 %v5467
        %7430 = vmatmul.bf16.gmra.mxu0 %v1478
        %v7431 = vpop.f32.mrf.mxu0
        %v7432 = vadd.f32 %v7419, %v7431
        %v7433 = vpop.f32.mrf.mxu0
        %7434 = vdwg.mxu0
        %7435 = vmatpush.bf16.msra.mxu0 %v5587
        %7436 = vmatpush.bf16.msra.mxu0 %v5579
        %7437 = vmatpush.bf16.msra.mxu0 %v5571
        %7438 = vmatpush.bf16.msra.mxu0 %v5563
        %7439 = vmatpush.bf16.msra.mxu0 %v5555
        %7440 = vmatpush.bf16.msra.mxu0 %v5547
        %7441 = vmatpush.bf16.msra.mxu0 %v5539
        %7442 = vmatpush.bf16.msra.mxu0 %v5531
        %7443 = vmatmul.bf16.gmra.mxu0 %v1479
        %v7444 = vpop.f32.mrf.mxu0
        %v7445 = vadd.f32 %v7432, %v7444
        %v7446 = vpop.f32.mrf.mxu0
        %7447 = vdwg.mxu0
        %7448 = vmatpush.bf16.msra.mxu0 %v4628
        %7449 = vmatpush.bf16.msra.mxu0 %v4620
        %7450 = vmatpush.bf16.msra.mxu0 %v4612
        %7451 = vmatpush.bf16.msra.mxu0 %v4604
        %7452 = vmatpush.bf16.msra.mxu0 %v4596
        %7453 = vmatpush.bf16.msra.mxu0 %v4588
        %7454 = vmatpush.bf16.msra.mxu0 %v4580
        %7455 = vmatpush.bf16.msra.mxu0 %v4572
        %7456 = vmatmul.bf16.gmra.mxu0 %v1464
        %v7457 = vpop.f32.mrf.mxu0
        %v7458 = vadd.f32 0.0, %v7457
        %v7459 = vpop.f32.mrf.mxu0
        %7460 = vdwg.mxu0
        %7461 = vmatpush.bf16.msra.mxu0 %v4692
        %7462 = vmatpush.bf16.msra.mxu0 %v4684
        %7463 = vmatpush.bf16.msra.mxu0 %v4676
        %7464 = vmatpush.bf16.msra.mxu0 %v4668
        %7465 = vmatpush.bf16.msra.mxu0 %v4660
        %7466 = vmatpush.bf16.msra.mxu0 %v4652
        %7467 = vmatpush.bf16.msra.mxu0 %v4644
        %7468 = vmatpush.bf16.msra.mxu0 %v4636
        %7469 = vmatmul.bf16.gmra.mxu0 %v1465
        %v7470 = vpop.f32.mrf.mxu0
        %v7471 = vadd.f32 %v7458, %v7470
        %v7472 = vpop.f32.mrf.mxu0
        %7473 = vdwg.mxu0
        %7474 = vmatpush.bf16.msra.mxu0 %v4756
        %7475 = vmatpush.bf16.msra.mxu0 %v4748
        %7476 = vmatpush.bf16.msra.mxu0 %v4740
        %7477 = vmatpush.bf16.msra.mxu0 %v4732
        %7478 = vmatpush.bf16.msra.mxu0 %v4724
        %7479 = vmatpush.bf16.msra.mxu0 %v4716
        %7480 = vmatpush.bf16.msra.mxu0 %v4708
        %7481 = vmatpush.bf16.msra.mxu0 %v4700
        %7482 = vmatmul.bf16.gmra.mxu0 %v1466
        %v7483 = vpop.f32.mrf.mxu0
        %v7484 = vadd.f32 %v7471, %v7483
        %v7485 = vpop.f32.mrf.mxu0
        %7486 = vdwg.mxu0
        %7487 = vmatpush.bf16.msra.mxu0 %v4820
        %7488 = vmatpush.bf16.msra.mxu0 %v4812
        %7489 = vmatpush.bf16.msra.mxu0 %v4804
        %7490 = vmatpush.bf16.msra.mxu0 %v4796
        %7491 = vmatpush.bf16.msra.mxu0 %v4788
        %7492 = vmatpush.bf16.msra.mxu0 %v4780
        %7493 = vmatpush.bf16.msra.mxu0 %v4772
        %7494 = vmatpush.bf16.msra.mxu0 %v4764
        %7495 = vmatmul.bf16.gmra.mxu0 %v1467
        %v7496 = vpop.f32.mrf.mxu0
        %v7497 = vadd.f32 %v7484, %v7496
        %v7498 = vpop.f32.mrf.mxu0
        %7499 = vdwg.mxu0
        %7500 = vmatpush.bf16.msra.mxu0 %v4884
        %7501 = vmatpush.bf16.msra.mxu0 %v4876
        %7502 = vmatpush.bf16.msra.mxu0 %v4868
        %7503 = vmatpush.bf16.msra.mxu0 %v4860
        %7504 = vmatpush.bf16.msra.mxu0 %v4852
        %7505 = vmatpush.bf16.msra.mxu0 %v4844
        %7506 = vmatpush.bf16.msra.mxu0 %v4836
        %7507 = vmatpush.bf16.msra.mxu0 %v4828
        %7508 = vmatmul.bf16.gmra.mxu0 %v1468
        %v7509 = vpop.f32.mrf.mxu0
        %v7510 = vadd.f32 %v7497, %v7509
        %v7511 = vpop.f32.mrf.mxu0
        %7512 = vdwg.mxu0
        %7513 = vmatpush.bf16.msra.mxu0 %v4948
        %7514 = vmatpush.bf16.msra.mxu0 %v4940
        %7515 = vmatpush.bf16.msra.mxu0 %v4932
        %7516 = vmatpush.bf16.msra.mxu0 %v4924
        %7517 = vmatpush.bf16.msra.mxu0 %v4916
        %7518 = vmatpush.bf16.msra.mxu0 %v4908
        %7519 = vmatpush.bf16.msra.mxu0 %v4900
        %7520 = vmatpush.bf16.msra.mxu0 %v4892
        %7521 = vmatmul.bf16.gmra.mxu0 %v1469
        %v7522 = vpop.f32.mrf.mxu0
        %v7523 = vadd.f32 %v7510, %v7522
        %v7524 = vpop.f32.mrf.mxu0
        %7525 = vdwg.mxu0
        %7526 = vmatpush.bf16.msra.mxu0 %v5012
        %7527 = vmatpush.bf16.msra.mxu0 %v5004
        %7528 = vmatpush.bf16.msra.mxu0 %v4996
        %7529 = vmatpush.bf16.msra.mxu0 %v4988
        %7530 = vmatpush.bf16.msra.mxu0 %v4980
        %7531 = vmatpush.bf16.msra.mxu0 %v4972
        %7532 = vmatpush.bf16.msra.mxu0 %v4964
        %7533 = vmatpush.bf16.msra.mxu0 %v4956
        %7534 = vmatmul.bf16.gmra.mxu0 %v1470
        %v7535 = vpop.f32.mrf.mxu0
        %v7536 = vadd.f32 %v7523, %v7535
        %v7537 = vpop.f32.mrf.mxu0
        %7538 = vdwg.mxu0
        %7539 = vmatpush.bf16.msra.mxu0 %v5076
        %7540 = vmatpush.bf16.msra.mxu0 %v5068
        %7541 = vmatpush.bf16.msra.mxu0 %v5060
        %7542 = vmatpush.bf16.msra.mxu0 %v5052
        %7543 = vmatpush.bf16.msra.mxu0 %v5044
        %7544 = vmatpush.bf16.msra.mxu0 %v5036
        %7545 = vmatpush.bf16.msra.mxu0 %v5028
        %7546 = vmatpush.bf16.msra.mxu0 %v5020
        %7547 = vmatmul.bf16.gmra.mxu0 %v1471
        %v7548 = vpop.f32.mrf.mxu0
        %v7549 = vadd.f32 %v7536, %v7548
        %v7550 = vpop.f32.mrf.mxu0
        %7551 = vdwg.mxu0
        %7552 = vmatpush.bf16.msra.mxu0 %v5140
        %7553 = vmatpush.bf16.msra.mxu0 %v5132
        %7554 = vmatpush.bf16.msra.mxu0 %v5124
        %7555 = vmatpush.bf16.msra.mxu0 %v5116
        %7556 = vmatpush.bf16.msra.mxu0 %v5108
        %7557 = vmatpush.bf16.msra.mxu0 %v5100
        %7558 = vmatpush.bf16.msra.mxu0 %v5092
        %7559 = vmatpush.bf16.msra.mxu0 %v5084
        %7560 = vmatmul.bf16.gmra.mxu0 %v1472
        %v7561 = vpop.f32.mrf.mxu0
        %v7562 = vadd.f32 %v7549, %v7561
        %v7563 = vpop.f32.mrf.mxu0
        %7564 = vdwg.mxu0
        %7565 = vmatpush.bf16.msra.mxu0 %v5204
        %7566 = vmatpush.bf16.msra.mxu0 %v5196
        %7567 = vmatpush.bf16.msra.mxu0 %v5188
        %7568 = vmatpush.bf16.msra.mxu0 %v5180
        %7569 = vmatpush.bf16.msra.mxu0 %v5172
        %7570 = vmatpush.bf16.msra.mxu0 %v5164
        %7571 = vmatpush.bf16.msra.mxu0 %v5156
        %7572 = vmatpush.bf16.msra.mxu0 %v5148
        %7573 = vmatmul.bf16.gmra.mxu0 %v1473
        %v7574 = vpop.f32.mrf.mxu0
        %v7575 = vadd.f32 %v7562, %v7574
        %v7576 = vpop.f32.mrf.mxu0
        %7577 = vdwg.mxu0
        %7578 = vmatpush.bf16.msra.mxu0 %v5268
        %7579 = vmatpush.bf16.msra.mxu0 %v5260
        %7580 = vmatpush.bf16.msra.mxu0 %v5252
        %7581 = vmatpush.bf16.msra.mxu0 %v5244
        %7582 = vmatpush.bf16.msra.mxu0 %v5236
        %7583 = vmatpush.bf16.msra.mxu0 %v5228
        %7584 = vmatpush.bf16.msra.mxu0 %v5220
        %7585 = vmatpush.bf16.msra.mxu0 %v5212
        %7586 = vmatmul.bf16.gmra.mxu0 %v1474
        %v7587 = vpop.f32.mrf.mxu0
        %v7588 = vadd.f32 %v7575, %v7587
        %v7589 = vpop.f32.mrf.mxu0
        %7590 = vdwg.mxu0
        %7591 = vmatpush.bf16.msra.mxu0 %v5332
        %7592 = vmatpush.bf16.msra.mxu0 %v5324
        %7593 = vmatpush.bf16.msra.mxu0 %v5316
        %7594 = vmatpush.bf16.msra.mxu0 %v5308
        %7595 = vmatpush.bf16.msra.mxu0 %v5300
        %7596 = vmatpush.bf16.msra.mxu0 %v5292
        %7597 = vmatpush.bf16.msra.mxu0 %v5284
        %7598 = vmatpush.bf16.msra.mxu0 %v5276
        %7599 = vmatmul.bf16.gmra.mxu0 %v1475
        %v7600 = vpop.f32.mrf.mxu0
        %v7601 = vadd.f32 %v7588, %v7600
        %v7602 = vpop.f32.mrf.mxu0
        %7603 = vdwg.mxu0
        %7604 = vmatpush.bf16.msra.mxu0 %v5396
        %7605 = vmatpush.bf16.msra.mxu0 %v5388
        %7606 = vmatpush.bf16.msra.mxu0 %v5380
        %7607 = vmatpush.bf16.msra.mxu0 %v5372
        %7608 = vmatpush.bf16.msra.mxu0 %v5364
        %7609 = vmatpush.bf16.msra.mxu0 %v5356
        %7610 = vmatpush.bf16.msra.mxu0 %v5348
        %7611 = vmatpush.bf16.msra.mxu0 %v5340
        %7612 = vmatmul.bf16.gmra.mxu0 %v1476
        %v7613 = vpop.f32.mrf.mxu0
        %v7614 = vadd.f32 %v7601, %v7613
        %v7615 = vpop.f32.mrf.mxu0
        %7616 = vdwg.mxu0
        %7617 = vmatpush.bf16.msra.mxu0 %v5460
        %7618 = vmatpush.bf16.msra.mxu0 %v5452
        %7619 = vmatpush.bf16.msra.mxu0 %v5444
        %7620 = vmatpush.bf16.msra.mxu0 %v5436
        %7621 = vmatpush.bf16.msra.mxu0 %v5428
        %7622 = vmatpush.bf16.msra.mxu0 %v5420
        %7623 = vmatpush.bf16.msra.mxu0 %v5412
        %7624 = vmatpush.bf16.msra.mxu0 %v5404
        %7625 = vmatmul.bf16.gmra.mxu0 %v1477
        %v7626 = vpop.f32.mrf.mxu0
        %v7627 = vadd.f32 %v7614, %v7626
        %v7628 = vpop.f32.mrf.mxu0
        %7629 = vdwg.mxu0
        %7630 = vmatpush.bf16.msra.mxu0 %v5524
        %7631 = vmatpush.bf16.msra.mxu0 %v5516
        %7632 = vmatpush.bf16.msra.mxu0 %v5508
        %7633 = vmatpush.bf16.msra.mxu0 %v5500
        %7634 = vmatpush.bf16.msra.mxu0 %v5492
        %7635 = vmatpush.bf16.msra.mxu0 %v5484
        %7636 = vmatpush.bf16.msra.mxu0 %v5476
        %7637 = vmatpush.bf16.msra.mxu0 %v5468
        %7638 = vmatmul.bf16.gmra.mxu0 %v1478
        %v7639 = vpop.f32.mrf.mxu0
        %v7640 = vadd.f32 %v7627, %v7639
        %v7641 = vpop.f32.mrf.mxu0
        %7642 = vdwg.mxu0
        %7643 = vmatpush.bf16.msra.mxu0 %v5588
        %7644 = vmatpush.bf16.msra.mxu0 %v5580
        %7645 = vmatpush.bf16.msra.mxu0 %v5572
        %7646 = vmatpush.bf16.msra.mxu0 %v5564
        %7647 = vmatpush.bf16.msra.mxu0 %v5556
        %7648 = vmatpush.bf16.msra.mxu0 %v5548
        %7649 = vmatpush.bf16.msra.mxu0 %v5540
        %7650 = vmatpush.bf16.msra.mxu0 %v5532
        %7651 = vmatmul.bf16.gmra.mxu0 %v1479
        %v7652 = vpop.f32.mrf.mxu0
        %v7653 = vadd.f32 %v7640, %v7652
        %v7654 = vpop.f32.mrf.mxu0
        %7655 = vdwg.mxu0
        %7656 = vmatpush.bf16.msra.mxu0 %v4629
        %7657 = vmatpush.bf16.msra.mxu0 %v4621
        %7658 = vmatpush.bf16.msra.mxu0 %v4613
        %7659 = vmatpush.bf16.msra.mxu0 %v4605
        %7660 = vmatpush.bf16.msra.mxu0 %v4597
        %7661 = vmatpush.bf16.msra.mxu0 %v4589
        %7662 = vmatpush.bf16.msra.mxu0 %v4581
        %7663 = vmatpush.bf16.msra.mxu0 %v4573
        %7664 = vmatmul.bf16.gmra.mxu0 %v1464
        %v7665 = vpop.f32.mrf.mxu0
        %v7666 = vadd.f32 0.0, %v7665
        %v7667 = vpop.f32.mrf.mxu0
        %7668 = vdwg.mxu0
        %7669 = vmatpush.bf16.msra.mxu0 %v4693
        %7670 = vmatpush.bf16.msra.mxu0 %v4685
        %7671 = vmatpush.bf16.msra.mxu0 %v4677
        %7672 = vmatpush.bf16.msra.mxu0 %v4669
        %7673 = vmatpush.bf16.msra.mxu0 %v4661
        %7674 = vmatpush.bf16.msra.mxu0 %v4653
        %7675 = vmatpush.bf16.msra.mxu0 %v4645
        %7676 = vmatpush.bf16.msra.mxu0 %v4637
        %7677 = vmatmul.bf16.gmra.mxu0 %v1465
        %v7678 = vpop.f32.mrf.mxu0
        %v7679 = vadd.f32 %v7666, %v7678
        %v7680 = vpop.f32.mrf.mxu0
        %7681 = vdwg.mxu0
        %7682 = vmatpush.bf16.msra.mxu0 %v4757
        %7683 = vmatpush.bf16.msra.mxu0 %v4749
        %7684 = vmatpush.bf16.msra.mxu0 %v4741
        %7685 = vmatpush.bf16.msra.mxu0 %v4733
        %7686 = vmatpush.bf16.msra.mxu0 %v4725
        %7687 = vmatpush.bf16.msra.mxu0 %v4717
        %7688 = vmatpush.bf16.msra.mxu0 %v4709
        %7689 = vmatpush.bf16.msra.mxu0 %v4701
        %7690 = vmatmul.bf16.gmra.mxu0 %v1466
        %v7691 = vpop.f32.mrf.mxu0
        %v7692 = vadd.f32 %v7679, %v7691
        %v7693 = vpop.f32.mrf.mxu0
        %7694 = vdwg.mxu0
        %7695 = vmatpush.bf16.msra.mxu0 %v4821
        %7696 = vmatpush.bf16.msra.mxu0 %v4813
        %7697 = vmatpush.bf16.msra.mxu0 %v4805
        %7698 = vmatpush.bf16.msra.mxu0 %v4797
        %7699 = vmatpush.bf16.msra.mxu0 %v4789
        %7700 = vmatpush.bf16.msra.mxu0 %v4781
        %7701 = vmatpush.bf16.msra.mxu0 %v4773
        %7702 = vmatpush.bf16.msra.mxu0 %v4765
        %7703 = vmatmul.bf16.gmra.mxu0 %v1467
        %v7704 = vpop.f32.mrf.mxu0
        %v7705 = vadd.f32 %v7692, %v7704
        %v7706 = vpop.f32.mrf.mxu0
        %7707 = vdwg.mxu0
        %7708 = vmatpush.bf16.msra.mxu0 %v4885
        %7709 = vmatpush.bf16.msra.mxu0 %v4877
        %7710 = vmatpush.bf16.msra.mxu0 %v4869
        %7711 = vmatpush.bf16.msra.mxu0 %v4861
        %7712 = vmatpush.bf16.msra.mxu0 %v4853
        %7713 = vmatpush.bf16.msra.mxu0 %v4845
        %7714 = vmatpush.bf16.msra.mxu0 %v4837
        %7715 = vmatpush.bf16.msra.mxu0 %v4829
        %7716 = vmatmul.bf16.gmra.mxu0 %v1468
        %v7717 = vpop.f32.mrf.mxu0
        %v7718 = vadd.f32 %v7705, %v7717
        %v7719 = vpop.f32.mrf.mxu0
        %7720 = vdwg.mxu0
        %7721 = vmatpush.bf16.msra.mxu0 %v4949
        %7722 = vmatpush.bf16.msra.mxu0 %v4941
        %7723 = vmatpush.bf16.msra.mxu0 %v4933
        %7724 = vmatpush.bf16.msra.mxu0 %v4925
        %7725 = vmatpush.bf16.msra.mxu0 %v4917
        %7726 = vmatpush.bf16.msra.mxu0 %v4909
        %7727 = vmatpush.bf16.msra.mxu0 %v4901
        %7728 = vmatpush.bf16.msra.mxu0 %v4893
        %7729 = vmatmul.bf16.gmra.mxu0 %v1469
        %v7730 = vpop.f32.mrf.mxu0
        %v7731 = vadd.f32 %v7718, %v7730
        %v7732 = vpop.f32.mrf.mxu0
        %7733 = vdwg.mxu0
        %7734 = vmatpush.bf16.msra.mxu0 %v5013
        %7735 = vmatpush.bf16.msra.mxu0 %v5005
        %7736 = vmatpush.bf16.msra.mxu0 %v4997
        %7737 = vmatpush.bf16.msra.mxu0 %v4989
        %7738 = vmatpush.bf16.msra.mxu0 %v4981
        %7739 = vmatpush.bf16.msra.mxu0 %v4973
        %7740 = vmatpush.bf16.msra.mxu0 %v4965
        %7741 = vmatpush.bf16.msra.mxu0 %v4957
        %7742 = vmatmul.bf16.gmra.mxu0 %v1470
        %v7743 = vpop.f32.mrf.mxu0
        %v7744 = vadd.f32 %v7731, %v7743
        %v7745 = vpop.f32.mrf.mxu0
        %7746 = vdwg.mxu0
        %7747 = vmatpush.bf16.msra.mxu0 %v5077
        %7748 = vmatpush.bf16.msra.mxu0 %v5069
        %7749 = vmatpush.bf16.msra.mxu0 %v5061
        %7750 = vmatpush.bf16.msra.mxu0 %v5053
        %7751 = vmatpush.bf16.msra.mxu0 %v5045
        %7752 = vmatpush.bf16.msra.mxu0 %v5037
        %7753 = vmatpush.bf16.msra.mxu0 %v5029
        %7754 = vmatpush.bf16.msra.mxu0 %v5021
        %7755 = vmatmul.bf16.gmra.mxu0 %v1471
        %v7756 = vpop.f32.mrf.mxu0
        %v7757 = vadd.f32 %v7744, %v7756
        %v7758 = vpop.f32.mrf.mxu0
        %7759 = vdwg.mxu0
        %7760 = vmatpush.bf16.msra.mxu0 %v5141
        %7761 = vmatpush.bf16.msra.mxu0 %v5133
        %7762 = vmatpush.bf16.msra.mxu0 %v5125
        %7763 = vmatpush.bf16.msra.mxu0 %v5117
        %7764 = vmatpush.bf16.msra.mxu0 %v5109
        %7765 = vmatpush.bf16.msra.mxu0 %v5101
        %7766 = vmatpush.bf16.msra.mxu0 %v5093
        %7767 = vmatpush.bf16.msra.mxu0 %v5085
        %7768 = vmatmul.bf16.gmra.mxu0 %v1472
        %v7769 = vpop.f32.mrf.mxu0
        %v7770 = vadd.f32 %v7757, %v7769
        %v7771 = vpop.f32.mrf.mxu0
        %7772 = vdwg.mxu0
        %7773 = vmatpush.bf16.msra.mxu0 %v5205
        %7774 = vmatpush.bf16.msra.mxu0 %v5197
        %7775 = vmatpush.bf16.msra.mxu0 %v5189
        %7776 = vmatpush.bf16.msra.mxu0 %v5181
        %7777 = vmatpush.bf16.msra.mxu0 %v5173
        %7778 = vmatpush.bf16.msra.mxu0 %v5165
        %7779 = vmatpush.bf16.msra.mxu0 %v5157
        %7780 = vmatpush.bf16.msra.mxu0 %v5149
        %7781 = vmatmul.bf16.gmra.mxu0 %v1473
        %v7782 = vpop.f32.mrf.mxu0
        %v7783 = vadd.f32 %v7770, %v7782
        %v7784 = vpop.f32.mrf.mxu0
        %7785 = vdwg.mxu0
        %7786 = vmatpush.bf16.msra.mxu0 %v5269
        %7787 = vmatpush.bf16.msra.mxu0 %v5261
        %7788 = vmatpush.bf16.msra.mxu0 %v5253
        %7789 = vmatpush.bf16.msra.mxu0 %v5245
        %7790 = vmatpush.bf16.msra.mxu0 %v5237
        %7791 = vmatpush.bf16.msra.mxu0 %v5229
        %7792 = vmatpush.bf16.msra.mxu0 %v5221
        %7793 = vmatpush.bf16.msra.mxu0 %v5213
        %7794 = vmatmul.bf16.gmra.mxu0 %v1474
        %v7795 = vpop.f32.mrf.mxu0
        %v7796 = vadd.f32 %v7783, %v7795
        %v7797 = vpop.f32.mrf.mxu0
        %7798 = vdwg.mxu0
        %7799 = vmatpush.bf16.msra.mxu0 %v5333
        %7800 = vmatpush.bf16.msra.mxu0 %v5325
        %7801 = vmatpush.bf16.msra.mxu0 %v5317
        %7802 = vmatpush.bf16.msra.mxu0 %v5309
        %7803 = vmatpush.bf16.msra.mxu0 %v5301
        %7804 = vmatpush.bf16.msra.mxu0 %v5293
        %7805 = vmatpush.bf16.msra.mxu0 %v5285
        %7806 = vmatpush.bf16.msra.mxu0 %v5277
        %7807 = vmatmul.bf16.gmra.mxu0 %v1475
        %v7808 = vpop.f32.mrf.mxu0
        %v7809 = vadd.f32 %v7796, %v7808
        %v7810 = vpop.f32.mrf.mxu0
        %7811 = vdwg.mxu0
        %7812 = vmatpush.bf16.msra.mxu0 %v5397
        %7813 = vmatpush.bf16.msra.mxu0 %v5389
        %7814 = vmatpush.bf16.msra.mxu0 %v5381
        %7815 = vmatpush.bf16.msra.mxu0 %v5373
        %7816 = vmatpush.bf16.msra.mxu0 %v5365
        %7817 = vmatpush.bf16.msra.mxu0 %v5357
        %7818 = vmatpush.bf16.msra.mxu0 %v5349
        %7819 = vmatpush.bf16.msra.mxu0 %v5341
        %7820 = vmatmul.bf16.gmra.mxu0 %v1476
        %v7821 = vpop.f32.mrf.mxu0
        %v7822 = vadd.f32 %v7809, %v7821
        %v7823 = vpop.f32.mrf.mxu0
        %7824 = vdwg.mxu0
        %7825 = vmatpush.bf16.msra.mxu0 %v5461
        %7826 = vmatpush.bf16.msra.mxu0 %v5453
        %7827 = vmatpush.bf16.msra.mxu0 %v5445
        %7828 = vmatpush.bf16.msra.mxu0 %v5437
        %7829 = vmatpush.bf16.msra.mxu0 %v5429
        %7830 = vmatpush.bf16.msra.mxu0 %v5421
        %7831 = vmatpush.bf16.msra.mxu0 %v5413
        %7832 = vmatpush.bf16.msra.mxu0 %v5405
        %7833 = vmatmul.bf16.gmra.mxu0 %v1477
        %v7834 = vpop.f32.mrf.mxu0
        %v7835 = vadd.f32 %v7822, %v7834
        %v7836 = vpop.f32.mrf.mxu0
        %7837 = vdwg.mxu0
        %7838 = vmatpush.bf16.msra.mxu0 %v5525
        %7839 = vmatpush.bf16.msra.mxu0 %v5517
        %7840 = vmatpush.bf16.msra.mxu0 %v5509
        %7841 = vmatpush.bf16.msra.mxu0 %v5501
        %7842 = vmatpush.bf16.msra.mxu0 %v5493
        %7843 = vmatpush.bf16.msra.mxu0 %v5485
        %7844 = vmatpush.bf16.msra.mxu0 %v5477
        %7845 = vmatpush.bf16.msra.mxu0 %v5469
        %7846 = vmatmul.bf16.gmra.mxu0 %v1478
        %v7847 = vpop.f32.mrf.mxu0
        %v7848 = vadd.f32 %v7835, %v7847
        %v7849 = vpop.f32.mrf.mxu0
        %7850 = vdwg.mxu0
        %7851 = vmatpush.bf16.msra.mxu0 %v5589
        %7852 = vmatpush.bf16.msra.mxu0 %v5581
        %7853 = vmatpush.bf16.msra.mxu0 %v5573
        %7854 = vmatpush.bf16.msra.mxu0 %v5565
        %7855 = vmatpush.bf16.msra.mxu0 %v5557
        %7856 = vmatpush.bf16.msra.mxu0 %v5549
        %7857 = vmatpush.bf16.msra.mxu0 %v5541
        %7858 = vmatpush.bf16.msra.mxu0 %v5533
        %7859 = vmatmul.bf16.gmra.mxu0 %v1479
        %v7860 = vpop.f32.mrf.mxu0
        %v7861 = vadd.f32 %v7848, %v7860
        %v7862 = vpop.f32.mrf.mxu0
        %7863 = vdwg.mxu0
        %7864 = vmatpush.bf16.msra.mxu0 %v4630
        %7865 = vmatpush.bf16.msra.mxu0 %v4622
        %7866 = vmatpush.bf16.msra.mxu0 %v4614
        %7867 = vmatpush.bf16.msra.mxu0 %v4606
        %7868 = vmatpush.bf16.msra.mxu0 %v4598
        %7869 = vmatpush.bf16.msra.mxu0 %v4590
        %7870 = vmatpush.bf16.msra.mxu0 %v4582
        %7871 = vmatpush.bf16.msra.mxu0 %v4574
        %7872 = vmatmul.bf16.gmra.mxu0 %v1464
        %v7873 = vpop.f32.mrf.mxu0
        %v7874 = vadd.f32 0.0, %v7873
        %v7875 = vpop.f32.mrf.mxu0
        %7876 = vdwg.mxu0
        %7877 = vmatpush.bf16.msra.mxu0 %v4694
        %7878 = vmatpush.bf16.msra.mxu0 %v4686
        %7879 = vmatpush.bf16.msra.mxu0 %v4678
        %7880 = vmatpush.bf16.msra.mxu0 %v4670
        %7881 = vmatpush.bf16.msra.mxu0 %v4662
        %7882 = vmatpush.bf16.msra.mxu0 %v4654
        %7883 = vmatpush.bf16.msra.mxu0 %v4646
        %7884 = vmatpush.bf16.msra.mxu0 %v4638
        %7885 = vmatmul.bf16.gmra.mxu0 %v1465
        %v7886 = vpop.f32.mrf.mxu0
        %v7887 = vadd.f32 %v7874, %v7886
        %v7888 = vpop.f32.mrf.mxu0
        %7889 = vdwg.mxu0
        %7890 = vmatpush.bf16.msra.mxu0 %v4758
        %7891 = vmatpush.bf16.msra.mxu0 %v4750
        %7892 = vmatpush.bf16.msra.mxu0 %v4742
        %7893 = vmatpush.bf16.msra.mxu0 %v4734
        %7894 = vmatpush.bf16.msra.mxu0 %v4726
        %7895 = vmatpush.bf16.msra.mxu0 %v4718
        %7896 = vmatpush.bf16.msra.mxu0 %v4710
        %7897 = vmatpush.bf16.msra.mxu0 %v4702
        %7898 = vmatmul.bf16.gmra.mxu0 %v1466
        %v7899 = vpop.f32.mrf.mxu0
        %v7900 = vadd.f32 %v7887, %v7899
        %v7901 = vpop.f32.mrf.mxu0
        %7902 = vdwg.mxu0
        %7903 = vmatpush.bf16.msra.mxu0 %v4822
        %7904 = vmatpush.bf16.msra.mxu0 %v4814
        %7905 = vmatpush.bf16.msra.mxu0 %v4806
        %7906 = vmatpush.bf16.msra.mxu0 %v4798
        %7907 = vmatpush.bf16.msra.mxu0 %v4790
        %7908 = vmatpush.bf16.msra.mxu0 %v4782
        %7909 = vmatpush.bf16.msra.mxu0 %v4774
        %7910 = vmatpush.bf16.msra.mxu0 %v4766
        %7911 = vmatmul.bf16.gmra.mxu0 %v1467
        %v7912 = vpop.f32.mrf.mxu0
        %v7913 = vadd.f32 %v7900, %v7912
        %v7914 = vpop.f32.mrf.mxu0
        %7915 = vdwg.mxu0
        %7916 = vmatpush.bf16.msra.mxu0 %v4886
        %7917 = vmatpush.bf16.msra.mxu0 %v4878
        %7918 = vmatpush.bf16.msra.mxu0 %v4870
        %7919 = vmatpush.bf16.msra.mxu0 %v4862
        %7920 = vmatpush.bf16.msra.mxu0 %v4854
        %7921 = vmatpush.bf16.msra.mxu0 %v4846
        %7922 = vmatpush.bf16.msra.mxu0 %v4838
        %7923 = vmatpush.bf16.msra.mxu0 %v4830
        %7924 = vmatmul.bf16.gmra.mxu0 %v1468
        %v7925 = vpop.f32.mrf.mxu0
        %v7926 = vadd.f32 %v7913, %v7925
        %v7927 = vpop.f32.mrf.mxu0
        %7928 = vdwg.mxu0
        %7929 = vmatpush.bf16.msra.mxu0 %v4950
        %7930 = vmatpush.bf16.msra.mxu0 %v4942
        %7931 = vmatpush.bf16.msra.mxu0 %v4934
        %7932 = vmatpush.bf16.msra.mxu0 %v4926
        %7933 = vmatpush.bf16.msra.mxu0 %v4918
        %7934 = vmatpush.bf16.msra.mxu0 %v4910
        %7935 = vmatpush.bf16.msra.mxu0 %v4902
        %7936 = vmatpush.bf16.msra.mxu0 %v4894
        %7937 = vmatmul.bf16.gmra.mxu0 %v1469
        %v7938 = vpop.f32.mrf.mxu0
        %v7939 = vadd.f32 %v7926, %v7938
        %v7940 = vpop.f32.mrf.mxu0
        %7941 = vdwg.mxu0
        %7942 = vmatpush.bf16.msra.mxu0 %v5014
        %7943 = vmatpush.bf16.msra.mxu0 %v5006
        %7944 = vmatpush.bf16.msra.mxu0 %v4998
        %7945 = vmatpush.bf16.msra.mxu0 %v4990
        %7946 = vmatpush.bf16.msra.mxu0 %v4982
        %7947 = vmatpush.bf16.msra.mxu0 %v4974
        %7948 = vmatpush.bf16.msra.mxu0 %v4966
        %7949 = vmatpush.bf16.msra.mxu0 %v4958
        %7950 = vmatmul.bf16.gmra.mxu0 %v1470
        %v7951 = vpop.f32.mrf.mxu0
        %v7952 = vadd.f32 %v7939, %v7951
        %v7953 = vpop.f32.mrf.mxu0
        %7954 = vdwg.mxu0
        %7955 = vmatpush.bf16.msra.mxu0 %v5078
        %7956 = vmatpush.bf16.msra.mxu0 %v5070
        %7957 = vmatpush.bf16.msra.mxu0 %v5062
        %7958 = vmatpush.bf16.msra.mxu0 %v5054
        %7959 = vmatpush.bf16.msra.mxu0 %v5046
        %7960 = vmatpush.bf16.msra.mxu0 %v5038
        %7961 = vmatpush.bf16.msra.mxu0 %v5030
        %7962 = vmatpush.bf16.msra.mxu0 %v5022
        %7963 = vmatmul.bf16.gmra.mxu0 %v1471
        %v7964 = vpop.f32.mrf.mxu0
        %v7965 = vadd.f32 %v7952, %v7964
        %v7966 = vpop.f32.mrf.mxu0
        %7967 = vdwg.mxu0
        %7968 = vmatpush.bf16.msra.mxu0 %v5142
        %7969 = vmatpush.bf16.msra.mxu0 %v5134
        %7970 = vmatpush.bf16.msra.mxu0 %v5126
        %7971 = vmatpush.bf16.msra.mxu0 %v5118
        %7972 = vmatpush.bf16.msra.mxu0 %v5110
        %7973 = vmatpush.bf16.msra.mxu0 %v5102
        %7974 = vmatpush.bf16.msra.mxu0 %v5094
        %7975 = vmatpush.bf16.msra.mxu0 %v5086
        %7976 = vmatmul.bf16.gmra.mxu0 %v1472
        %v7977 = vpop.f32.mrf.mxu0
        %v7978 = vadd.f32 %v7965, %v7977
        %v7979 = vpop.f32.mrf.mxu0
        %7980 = vdwg.mxu0
        %7981 = vmatpush.bf16.msra.mxu0 %v5206
        %7982 = vmatpush.bf16.msra.mxu0 %v5198
        %7983 = vmatpush.bf16.msra.mxu0 %v5190
        %7984 = vmatpush.bf16.msra.mxu0 %v5182
        %7985 = vmatpush.bf16.msra.mxu0 %v5174
        %7986 = vmatpush.bf16.msra.mxu0 %v5166
        %7987 = vmatpush.bf16.msra.mxu0 %v5158
        %7988 = vmatpush.bf16.msra.mxu0 %v5150
        %7989 = vmatmul.bf16.gmra.mxu0 %v1473
        %v7990 = vpop.f32.mrf.mxu0
        %v7991 = vadd.f32 %v7978, %v7990
        %v7992 = vpop.f32.mrf.mxu0
        %7993 = vdwg.mxu0
        %7994 = vmatpush.bf16.msra.mxu0 %v5270
        %7995 = vmatpush.bf16.msra.mxu0 %v5262
        %7996 = vmatpush.bf16.msra.mxu0 %v5254
        %7997 = vmatpush.bf16.msra.mxu0 %v5246
        %7998 = vmatpush.bf16.msra.mxu0 %v5238
        %7999 = vmatpush.bf16.msra.mxu0 %v5230
        %8000 = vmatpush.bf16.msra.mxu0 %v5222
        %8001 = vmatpush.bf16.msra.mxu0 %v5214
        %8002 = vmatmul.bf16.gmra.mxu0 %v1474
        %v8003 = vpop.f32.mrf.mxu0
        %v8004 = vadd.f32 %v7991, %v8003
        %v8005 = vpop.f32.mrf.mxu0
        %8006 = vdwg.mxu0
        %8007 = vmatpush.bf16.msra.mxu0 %v5334
        %8008 = vmatpush.bf16.msra.mxu0 %v5326
        %8009 = vmatpush.bf16.msra.mxu0 %v5318
        %8010 = vmatpush.bf16.msra.mxu0 %v5310
        %8011 = vmatpush.bf16.msra.mxu0 %v5302
        %8012 = vmatpush.bf16.msra.mxu0 %v5294
        %8013 = vmatpush.bf16.msra.mxu0 %v5286
        %8014 = vmatpush.bf16.msra.mxu0 %v5278
        %8015 = vmatmul.bf16.gmra.mxu0 %v1475
        %v8016 = vpop.f32.mrf.mxu0
        %v8017 = vadd.f32 %v8004, %v8016
        %v8018 = vpop.f32.mrf.mxu0
        %8019 = vdwg.mxu0
        %8020 = vmatpush.bf16.msra.mxu0 %v5398
        %8021 = vmatpush.bf16.msra.mxu0 %v5390
        %8022 = vmatpush.bf16.msra.mxu0 %v5382
        %8023 = vmatpush.bf16.msra.mxu0 %v5374
        %8024 = vmatpush.bf16.msra.mxu0 %v5366
        %8025 = vmatpush.bf16.msra.mxu0 %v5358
        %8026 = vmatpush.bf16.msra.mxu0 %v5350
        %8027 = vmatpush.bf16.msra.mxu0 %v5342
        %8028 = vmatmul.bf16.gmra.mxu0 %v1476
        %v8029 = vpop.f32.mrf.mxu0
        %v8030 = vadd.f32 %v8017, %v8029
        %v8031 = vpop.f32.mrf.mxu0
        %8032 = vdwg.mxu0
        %8033 = vmatpush.bf16.msra.mxu0 %v5462
        %8034 = vmatpush.bf16.msra.mxu0 %v5454
        %8035 = vmatpush.bf16.msra.mxu0 %v5446
        %8036 = vmatpush.bf16.msra.mxu0 %v5438
        %8037 = vmatpush.bf16.msra.mxu0 %v5430
        %8038 = vmatpush.bf16.msra.mxu0 %v5422
        %8039 = vmatpush.bf16.msra.mxu0 %v5414
        %8040 = vmatpush.bf16.msra.mxu0 %v5406
        %8041 = vmatmul.bf16.gmra.mxu0 %v1477
        %v8042 = vpop.f32.mrf.mxu0
        %v8043 = vadd.f32 %v8030, %v8042
        %v8044 = vpop.f32.mrf.mxu0
        %8045 = vdwg.mxu0
        %8046 = vmatpush.bf16.msra.mxu0 %v5526
        %8047 = vmatpush.bf16.msra.mxu0 %v5518
        %8048 = vmatpush.bf16.msra.mxu0 %v5510
        %8049 = vmatpush.bf16.msra.mxu0 %v5502
        %8050 = vmatpush.bf16.msra.mxu0 %v5494
        %8051 = vmatpush.bf16.msra.mxu0 %v5486
        %8052 = vmatpush.bf16.msra.mxu0 %v5478
        %8053 = vmatpush.bf16.msra.mxu0 %v5470
        %8054 = vmatmul.bf16.gmra.mxu0 %v1478
        %v8055 = vpop.f32.mrf.mxu0
        %v8056 = vadd.f32 %v8043, %v8055
        %v8057 = vpop.f32.mrf.mxu0
        %8058 = vdwg.mxu0
        %8059 = vmatpush.bf16.msra.mxu0 %v5590
        %8060 = vmatpush.bf16.msra.mxu0 %v5582
        %8061 = vmatpush.bf16.msra.mxu0 %v5574
        %8062 = vmatpush.bf16.msra.mxu0 %v5566
        %8063 = vmatpush.bf16.msra.mxu0 %v5558
        %8064 = vmatpush.bf16.msra.mxu0 %v5550
        %8065 = vmatpush.bf16.msra.mxu0 %v5542
        %8066 = vmatpush.bf16.msra.mxu0 %v5534
        %8067 = vmatmul.bf16.gmra.mxu0 %v1479
        %v8068 = vpop.f32.mrf.mxu0
        %v8069 = vadd.f32 %v8056, %v8068
        %v8070 = vpop.f32.mrf.mxu0
        %8071 = vdwg.mxu0
        %8072 = vmatpush.bf16.msra.mxu0 %v4631
        %8073 = vmatpush.bf16.msra.mxu0 %v4623
        %8074 = vmatpush.bf16.msra.mxu0 %v4615
        %8075 = vmatpush.bf16.msra.mxu0 %v4607
        %8076 = vmatpush.bf16.msra.mxu0 %v4599
        %8077 = vmatpush.bf16.msra.mxu0 %v4591
        %8078 = vmatpush.bf16.msra.mxu0 %v4583
        %8079 = vmatpush.bf16.msra.mxu0 %v4575
        %8080 = vmatmul.bf16.gmra.mxu0 %v1464
        %v8081 = vpop.f32.mrf.mxu0
        %v8082 = vadd.f32 0.0, %v8081
        %v8083 = vpop.f32.mrf.mxu0
        %8084 = vdwg.mxu0
        %8085 = vmatpush.bf16.msra.mxu0 %v4695
        %8086 = vmatpush.bf16.msra.mxu0 %v4687
        %8087 = vmatpush.bf16.msra.mxu0 %v4679
        %8088 = vmatpush.bf16.msra.mxu0 %v4671
        %8089 = vmatpush.bf16.msra.mxu0 %v4663
        %8090 = vmatpush.bf16.msra.mxu0 %v4655
        %8091 = vmatpush.bf16.msra.mxu0 %v4647
        %8092 = vmatpush.bf16.msra.mxu0 %v4639
        %8093 = vmatmul.bf16.gmra.mxu0 %v1465
        %v8094 = vpop.f32.mrf.mxu0
        %v8095 = vadd.f32 %v8082, %v8094
        %v8096 = vpop.f32.mrf.mxu0
        %8097 = vdwg.mxu0
        %8098 = vmatpush.bf16.msra.mxu0 %v4759
        %8099 = vmatpush.bf16.msra.mxu0 %v4751
        %8100 = vmatpush.bf16.msra.mxu0 %v4743
        %8101 = vmatpush.bf16.msra.mxu0 %v4735
        %8102 = vmatpush.bf16.msra.mxu0 %v4727
        %8103 = vmatpush.bf16.msra.mxu0 %v4719
        %8104 = vmatpush.bf16.msra.mxu0 %v4711
        %8105 = vmatpush.bf16.msra.mxu0 %v4703
        %8106 = vmatmul.bf16.gmra.mxu0 %v1466
        %v8107 = vpop.f32.mrf.mxu0
        %v8108 = vadd.f32 %v8095, %v8107
        %v8109 = vpop.f32.mrf.mxu0
        %8110 = vdwg.mxu0
        %8111 = vmatpush.bf16.msra.mxu0 %v4823
        %8112 = vmatpush.bf16.msra.mxu0 %v4815
        %8113 = vmatpush.bf16.msra.mxu0 %v4807
        %8114 = vmatpush.bf16.msra.mxu0 %v4799
        %8115 = vmatpush.bf16.msra.mxu0 %v4791
        %8116 = vmatpush.bf16.msra.mxu0 %v4783
        %8117 = vmatpush.bf16.msra.mxu0 %v4775
        %8118 = vmatpush.bf16.msra.mxu0 %v4767
        %8119 = vmatmul.bf16.gmra.mxu0 %v1467
        %v8120 = vpop.f32.mrf.mxu0
        %v8121 = vadd.f32 %v8108, %v8120
        %v8122 = vpop.f32.mrf.mxu0
        %8123 = vdwg.mxu0
        %8124 = vmatpush.bf16.msra.mxu0 %v4887
        %8125 = vmatpush.bf16.msra.mxu0 %v4879
        %8126 = vmatpush.bf16.msra.mxu0 %v4871
        %8127 = vmatpush.bf16.msra.mxu0 %v4863
        %8128 = vmatpush.bf16.msra.mxu0 %v4855
        %8129 = vmatpush.bf16.msra.mxu0 %v4847
        %8130 = vmatpush.bf16.msra.mxu0 %v4839
        %8131 = vmatpush.bf16.msra.mxu0 %v4831
        %8132 = vmatmul.bf16.gmra.mxu0 %v1468
        %v8133 = vpop.f32.mrf.mxu0
        %v8134 = vadd.f32 %v8121, %v8133
        %v8135 = vpop.f32.mrf.mxu0
        %8136 = vdwg.mxu0
        %8137 = vmatpush.bf16.msra.mxu0 %v4951
        %8138 = vmatpush.bf16.msra.mxu0 %v4943
        %8139 = vmatpush.bf16.msra.mxu0 %v4935
        %8140 = vmatpush.bf16.msra.mxu0 %v4927
        %8141 = vmatpush.bf16.msra.mxu0 %v4919
        %8142 = vmatpush.bf16.msra.mxu0 %v4911
        %8143 = vmatpush.bf16.msra.mxu0 %v4903
        %8144 = vmatpush.bf16.msra.mxu0 %v4895
        %8145 = vmatmul.bf16.gmra.mxu0 %v1469
        %v8146 = vpop.f32.mrf.mxu0
        %v8147 = vadd.f32 %v8134, %v8146
        %v8148 = vpop.f32.mrf.mxu0
        %8149 = vdwg.mxu0
        %8150 = vmatpush.bf16.msra.mxu0 %v5015
        %8151 = vmatpush.bf16.msra.mxu0 %v5007
        %8152 = vmatpush.bf16.msra.mxu0 %v4999
        %8153 = vmatpush.bf16.msra.mxu0 %v4991
        %8154 = vmatpush.bf16.msra.mxu0 %v4983
        %8155 = vmatpush.bf16.msra.mxu0 %v4975
        %8156 = vmatpush.bf16.msra.mxu0 %v4967
        %8157 = vmatpush.bf16.msra.mxu0 %v4959
        %8158 = vmatmul.bf16.gmra.mxu0 %v1470
        %v8159 = vpop.f32.mrf.mxu0
        %v8160 = vadd.f32 %v8147, %v8159
        %v8161 = vpop.f32.mrf.mxu0
        %8162 = vdwg.mxu0
        %8163 = vmatpush.bf16.msra.mxu0 %v5079
        %8164 = vmatpush.bf16.msra.mxu0 %v5071
        %8165 = vmatpush.bf16.msra.mxu0 %v5063
        %8166 = vmatpush.bf16.msra.mxu0 %v5055
        %8167 = vmatpush.bf16.msra.mxu0 %v5047
        %8168 = vmatpush.bf16.msra.mxu0 %v5039
        %8169 = vmatpush.bf16.msra.mxu0 %v5031
        %8170 = vmatpush.bf16.msra.mxu0 %v5023
        %8171 = vmatmul.bf16.gmra.mxu0 %v1471
        %v8172 = vpop.f32.mrf.mxu0
        %v8173 = vadd.f32 %v8160, %v8172
        %v8174 = vpop.f32.mrf.mxu0
        %8175 = vdwg.mxu0
        %8176 = vmatpush.bf16.msra.mxu0 %v5143
        %8177 = vmatpush.bf16.msra.mxu0 %v5135
        %8178 = vmatpush.bf16.msra.mxu0 %v5127
        %8179 = vmatpush.bf16.msra.mxu0 %v5119
        %8180 = vmatpush.bf16.msra.mxu0 %v5111
        %8181 = vmatpush.bf16.msra.mxu0 %v5103
        %8182 = vmatpush.bf16.msra.mxu0 %v5095
        %8183 = vmatpush.bf16.msra.mxu0 %v5087
        %8184 = vmatmul.bf16.gmra.mxu0 %v1472
        %v8185 = vpop.f32.mrf.mxu0
        %v8186 = vadd.f32 %v8173, %v8185
        %v8187 = vpop.f32.mrf.mxu0
        %8188 = vdwg.mxu0
        %8189 = vmatpush.bf16.msra.mxu0 %v5207
        %8190 = vmatpush.bf16.msra.mxu0 %v5199
        %8191 = vmatpush.bf16.msra.mxu0 %v5191
        %8192 = vmatpush.bf16.msra.mxu0 %v5183
        %8193 = vmatpush.bf16.msra.mxu0 %v5175
        %8194 = vmatpush.bf16.msra.mxu0 %v5167
        %8195 = vmatpush.bf16.msra.mxu0 %v5159
        %8196 = vmatpush.bf16.msra.mxu0 %v5151
        %8197 = vmatmul.bf16.gmra.mxu0 %v1473
        %v8198 = vpop.f32.mrf.mxu0
        %v8199 = vadd.f32 %v8186, %v8198
        %v8200 = vpop.f32.mrf.mxu0
        %8201 = vdwg.mxu0
        %8202 = vmatpush.bf16.msra.mxu0 %v5271
        %8203 = vmatpush.bf16.msra.mxu0 %v5263
        %8204 = vmatpush.bf16.msra.mxu0 %v5255
        %8205 = vmatpush.bf16.msra.mxu0 %v5247
        %8206 = vmatpush.bf16.msra.mxu0 %v5239
        %8207 = vmatpush.bf16.msra.mxu0 %v5231
        %8208 = vmatpush.bf16.msra.mxu0 %v5223
        %8209 = vmatpush.bf16.msra.mxu0 %v5215
        %8210 = vmatmul.bf16.gmra.mxu0 %v1474
        %v8211 = vpop.f32.mrf.mxu0
        %v8212 = vadd.f32 %v8199, %v8211
        %v8213 = vpop.f32.mrf.mxu0
        %8214 = vdwg.mxu0
        %8215 = vmatpush.bf16.msra.mxu0 %v5335
        %8216 = vmatpush.bf16.msra.mxu0 %v5327
        %8217 = vmatpush.bf16.msra.mxu0 %v5319
        %8218 = vmatpush.bf16.msra.mxu0 %v5311
        %8219 = vmatpush.bf16.msra.mxu0 %v5303
        %8220 = vmatpush.bf16.msra.mxu0 %v5295
        %8221 = vmatpush.bf16.msra.mxu0 %v5287
        %8222 = vmatpush.bf16.msra.mxu0 %v5279
        %8223 = vmatmul.bf16.gmra.mxu0 %v1475
        %v8224 = vpop.f32.mrf.mxu0
        %v8225 = vadd.f32 %v8212, %v8224
        %v8226 = vpop.f32.mrf.mxu0
        %8227 = vdwg.mxu0
        %8228 = vmatpush.bf16.msra.mxu0 %v5399
        %8229 = vmatpush.bf16.msra.mxu0 %v5391
        %8230 = vmatpush.bf16.msra.mxu0 %v5383
        %8231 = vmatpush.bf16.msra.mxu0 %v5375
        %8232 = vmatpush.bf16.msra.mxu0 %v5367
        %8233 = vmatpush.bf16.msra.mxu0 %v5359
        %8234 = vmatpush.bf16.msra.mxu0 %v5351
        %8235 = vmatpush.bf16.msra.mxu0 %v5343
        %8236 = vmatmul.bf16.gmra.mxu0 %v1476
        %v8237 = vpop.f32.mrf.mxu0
        %v8238 = vadd.f32 %v8225, %v8237
        %v8239 = vpop.f32.mrf.mxu0
        %8240 = vdwg.mxu0
        %8241 = vmatpush.bf16.msra.mxu0 %v5463
        %8242 = vmatpush.bf16.msra.mxu0 %v5455
        %8243 = vmatpush.bf16.msra.mxu0 %v5447
        %8244 = vmatpush.bf16.msra.mxu0 %v5439
        %8245 = vmatpush.bf16.msra.mxu0 %v5431
        %8246 = vmatpush.bf16.msra.mxu0 %v5423
        %8247 = vmatpush.bf16.msra.mxu0 %v5415
        %8248 = vmatpush.bf16.msra.mxu0 %v5407
        %8249 = vmatmul.bf16.gmra.mxu0 %v1477
        %v8250 = vpop.f32.mrf.mxu0
        %v8251 = vadd.f32 %v8238, %v8250
        %v8252 = vpop.f32.mrf.mxu0
        %8253 = vdwg.mxu0
        %8254 = vmatpush.bf16.msra.mxu0 %v5527
        %8255 = vmatpush.bf16.msra.mxu0 %v5519
        %8256 = vmatpush.bf16.msra.mxu0 %v5511
        %8257 = vmatpush.bf16.msra.mxu0 %v5503
        %8258 = vmatpush.bf16.msra.mxu0 %v5495
        %8259 = vmatpush.bf16.msra.mxu0 %v5487
        %8260 = vmatpush.bf16.msra.mxu0 %v5479
        %8261 = vmatpush.bf16.msra.mxu0 %v5471
        %8262 = vmatmul.bf16.gmra.mxu0 %v1478
        %v8263 = vpop.f32.mrf.mxu0
        %v8264 = vadd.f32 %v8251, %v8263
        %v8265 = vpop.f32.mrf.mxu0
        %8266 = vdwg.mxu0
        %8267 = vmatpush.bf16.msra.mxu0 %v5591
        %8268 = vmatpush.bf16.msra.mxu0 %v5583
        %8269 = vmatpush.bf16.msra.mxu0 %v5575
        %8270 = vmatpush.bf16.msra.mxu0 %v5567
        %8271 = vmatpush.bf16.msra.mxu0 %v5559
        %8272 = vmatpush.bf16.msra.mxu0 %v5551
        %8273 = vmatpush.bf16.msra.mxu0 %v5543
        %8274 = vmatpush.bf16.msra.mxu0 %v5535
        %8275 = vmatmul.bf16.gmra.mxu0 %v1479
        %v8276 = vpop.f32.mrf.mxu0
        %v8277 = vadd.f32 %v8264, %v8276
        %v8278 = vpop.f32.mrf.mxu0
        %8279 = vdwg.mxu0
        %v8280 = vadd.f32 %v400, %v6821
        %v8281 = vadd.f32 %v401, %v7029
        %v8282 = vadd.f32 %v402, %v7237
        %v8283 = vadd.f32 %v403, %v7445
        %v8284 = vadd.f32 %v404, %v7653
        %v8285 = vadd.f32 %v405, %v7861
        %v8286 = vadd.f32 %v406, %v8069
        %v8287 = vadd.f32 %v407, %v8277
        %8288 = vst [vmem:[#allocation2] sm:$0xff] %v8280
        %8289 = vst [vmem:[#allocation2 + $0x8] sm:$0xff] %v8281
        %8290 = vst [vmem:[#allocation2 + $0x10] sm:$0xff] %v8282
        %8291 = vst [vmem:[#allocation2 + $0x18] sm:$0xff] %v8283
        %8292 = vst [vmem:[#allocation2 + $0x20] sm:$0xff] %v8284
        %8293 = vst [vmem:[#allocation2 + $0x28] sm:$0xff] %v8285
        %8294 = vst [vmem:[#allocation2 + $0x30] sm:$0xff] %v8286
        %8295 = vst [vmem:[#allocation2 + $0x38] sm:$0xff] %v8287
        %p8296 = scmp.eq.s32.totalorder %s25, 1
        // Predicated region
        $region77: #{olivetti_forward.1} parent=47 // pred_check
          %p8297 = pneg %p8296
        $region78: #{olivetti_forward.1} parent=47 // pred_check_branch
          %8299 = sbr.rel (%p8297) target = $region80
        $region79: #{olivetti_forward.1} parent=47 // pred_region
          %v8300 = vld [vmem:[#allocation2] sm:$0xff]
          %v8301 = vld [vmem:[#allocation2 + $0x8] sm:$0xff]
          %v8302 = vld [vmem:[#allocation2 + $0x10] sm:$0xff]
          %v8303 = vld [vmem:[#allocation2 + $0x18] sm:$0xff]
          %v8304 = vld [vmem:[#allocation2 + $0x20] sm:$0xff]
          %v8305 = vld [vmem:[#allocation2 + $0x28] sm:$0xff]
          %v8306 = vld [vmem:[#allocation2 + $0x30] sm:$0xff]
          %v8307 = vld [vmem:[#allocation2 + $0x38] sm:$0xff]
          %v8308 = vld [vmem:[#allocation6] sm:$0xff]
          %v8310 = vperm.slane %v8308, 0
          %v8311 = vperm.slane %v8308, 1
          %v8312 = vperm.slane %v8308, 2
          %v8313 = vperm.slane %v8308, 3
          %v8314 = vperm.slane %v8308, 4
          %v8315 = vperm.slane %v8308, 5
          %v8316 = vperm.slane %v8308, 6
          %v8317 = vperm.slane %v8308, 7
          %v8326 = vadd.f32 %v8300, %v8310
          %v8327 = vadd.f32 %v8301, %v8311
          %v8328 = vadd.f32 %v8302, %v8312
          %v8329 = vadd.f32 %v8303, %v8313
          %v8330 = vadd.f32 %v8304, %v8314
          %v8331 = vadd.f32 %v8305, %v8315
          %v8332 = vadd.f32 %v8306, %v8316
          %v8333 = vadd.f32 %v8307, %v8317
          %v8334 = vmax.f32 %v8326, 0.0
          %v8335 = vmax.f32 %v8327, 0.0
          %v8336 = vmax.f32 %v8328, 0.0
          %v8337 = vmax.f32 %v8329, 0.0
          %v8338 = vmax.f32 %v8330, 0.0
          %v8339 = vmax.f32 %v8331, 0.0
          %v8340 = vmax.f32 %v8332, 0.0
          %v8341 = vmax.f32 %v8333, 0.0
          %v8342 = vpack.c.bf16 %v8334, %v8334
          %v8343 = vpack.c.bf16 %v8335, %v8335
          %v8344 = vpack.c.bf16 %v8336, %v8336
          %v8345 = vpack.c.bf16 %v8337, %v8337
          %v8346 = vpack.c.bf16 %v8338, %v8338
          %v8347 = vpack.c.bf16 %v8339, %v8339
          %v8348 = vpack.c.bf16 %v8340, %v8340
          %v8349 = vpack.c.bf16 %v8341, %v8341
          %v8350 = vld [vmem:[#allocation8] sm:$0xff]
          %v8351 = vld [vmem:[#allocation8 + $0x8] sm:$0xff]
          %v8352 = vld [vmem:[#allocation8 + $0x10] sm:$0xff]
          %v8353 = vld [vmem:[#allocation8 + $0x18] sm:$0xff]
          %v8354 = vld [vmem:[#allocation8 + $0x20] sm:$0xff]
          %v8355 = vld [vmem:[#allocation8 + $0x28] sm:$0xff]
          %v8356 = vld [vmem:[#allocation8 + $0x30] sm:$0xff]
          %v8357 = vld [vmem:[#allocation8 + $0x38] sm:$0xff]
          %v8358 = vld [vmem:[#allocation8 + $0x40] sm:$0xff]
          %v8359 = vld [vmem:[#allocation8 + $0x48] sm:$0xff]
          %v8360 = vld [vmem:[#allocation8 + $0x50] sm:$0xff]
          %v8361 = vld [vmem:[#allocation8 + $0x58] sm:$0xff]
          %v8362 = vld [vmem:[#allocation8 + $0x60] sm:$0xff]
          %v8363 = vld [vmem:[#allocation8 + $0x68] sm:$0xff]
          %v8364 = vld [vmem:[#allocation8 + $0x70] sm:$0xff]
          %v8365 = vld [vmem:[#allocation8 + $0x78] sm:$0xff]
          %v8366 = vld [vmem:[#allocation8 + $0x80] sm:$0xff]
          %v8367 = vld [vmem:[#allocation8 + $0x88] sm:$0xff]
          %v8368 = vld [vmem:[#allocation8 + $0x90] sm:$0xff]
          %v8369 = vld [vmem:[#allocation8 + $0x98] sm:$0xff]
          %v8370 = vld [vmem:[#allocation8 + $0xa0] sm:$0xff]
          %v8371 = vld [vmem:[#allocation8 + $0xa8] sm:$0xff]
          %v8372 = vld [vmem:[#allocation8 + $0xb0] sm:$0xff]
          %v8373 = vld [vmem:[#allocation8 + $0xb8] sm:$0xff]
          %v8374 = vld [vmem:[#allocation8 + $0xc0] sm:$0xff]
          %v8375 = vld [vmem:[#allocation8 + $0xc8] sm:$0xff]
          %v8376 = vld [vmem:[#allocation8 + $0xd0] sm:$0xff]
          %v8377 = vld [vmem:[#allocation8 + $0xd8] sm:$0xff]
          %v8378 = vld [vmem:[#allocation8 + $0xe0] sm:$0xff]
          %v8379 = vld [vmem:[#allocation8 + $0xe8] sm:$0xff]
          %v8380 = vld [vmem:[#allocation8 + $0xf0] sm:$0xff]
          %v8381 = vld [vmem:[#allocation8 + $0xf8] sm:$0xff]
          %v8382 = vld [vmem:[#allocation8 + $0x100] sm:$0xff]
          %v8383 = vld [vmem:[#allocation8 + $0x108] sm:$0xff]
          %v8384 = vld [vmem:[#allocation8 + $0x110] sm:$0xff]
          %v8385 = vld [vmem:[#allocation8 + $0x118] sm:$0xff]
          %v8386 = vld [vmem:[#allocation8 + $0x120] sm:$0xff]
          %v8387 = vld [vmem:[#allocation8 + $0x128] sm:$0xff]
          %v8388 = vld [vmem:[#allocation8 + $0x130] sm:$0xff]
          %v8389 = vld [vmem:[#allocation8 + $0x138] sm:$0xff]
          %v8390 = vld [vmem:[#allocation8 + $0x140] sm:$0xff]
          %v8391 = vld [vmem:[#allocation8 + $0x148] sm:$0xff]
          %v8392 = vld [vmem:[#allocation8 + $0x150] sm:$0xff]
          %v8393 = vld [vmem:[#allocation8 + $0x158] sm:$0xff]
          %v8394 = vld [vmem:[#allocation8 + $0x160] sm:$0xff]
          %v8395 = vld [vmem:[#allocation8 + $0x168] sm:$0xff]
          %v8396 = vld [vmem:[#allocation8 + $0x170] sm:$0xff]
          %v8397 = vld [vmem:[#allocation8 + $0x178] sm:$0xff]
          %v8398 = vld [vmem:[#allocation8 + $0x180] sm:$0xff]
          %v8399 = vld [vmem:[#allocation8 + $0x188] sm:$0xff]
          %v8400 = vld [vmem:[#allocation8 + $0x190] sm:$0xff]
          %v8401 = vld [vmem:[#allocation8 + $0x198] sm:$0xff]
          %v8402 = vld [vmem:[#allocation8 + $0x1a0] sm:$0xff]
          %v8403 = vld [vmem:[#allocation8 + $0x1a8] sm:$0xff]
          %v8404 = vld [vmem:[#allocation8 + $0x1b0] sm:$0xff]
          %v8405 = vld [vmem:[#allocation8 + $0x1b8] sm:$0xff]
          %v8406 = vld [vmem:[#allocation8 + $0x1c0] sm:$0xff]
          %v8407 = vld [vmem:[#allocation8 + $0x1c8] sm:$0xff]
          %v8408 = vld [vmem:[#allocation8 + $0x1d0] sm:$0xff]
          %v8409 = vld [vmem:[#allocation8 + $0x1d8] sm:$0xff]
          %v8410 = vld [vmem:[#allocation8 + $0x1e0] sm:$0xff]
          %v8411 = vld [vmem:[#allocation8 + $0x1e8] sm:$0xff]
          %v8412 = vld [vmem:[#allocation8 + $0x1f0] sm:$0xff]
          %v8413 = vld [vmem:[#allocation8 + $0x1f8] sm:$0xff]
          %v8414 = vld [vmem:[#allocation8 + $0x200] sm:$0xff]
          %v8415 = vld [vmem:[#allocation8 + $0x208] sm:$0xff]
          %v8416 = vld [vmem:[#allocation8 + $0x210] sm:$0xff]
          %v8417 = vld [vmem:[#allocation8 + $0x218] sm:$0xff]
          %v8418 = vld [vmem:[#allocation8 + $0x220] sm:$0xff]
          %v8419 = vld [vmem:[#allocation8 + $0x228] sm:$0xff]
          %v8420 = vld [vmem:[#allocation8 + $0x230] sm:$0xff]
          %v8421 = vld [vmem:[#allocation8 + $0x238] sm:$0xff]
          %v8422 = vld [vmem:[#allocation8 + $0x240] sm:$0xff]
          %v8423 = vld [vmem:[#allocation8 + $0x248] sm:$0xff]
          %v8424 = vld [vmem:[#allocation8 + $0x250] sm:$0xff]
          %v8425 = vld [vmem:[#allocation8 + $0x258] sm:$0xff]
          %v8426 = vld [vmem:[#allocation8 + $0x260] sm:$0xff]
          %v8427 = vld [vmem:[#allocation8 + $0x268] sm:$0xff]
          %v8428 = vld [vmem:[#allocation8 + $0x270] sm:$0xff]
          %v8429 = vld [vmem:[#allocation8 + $0x278] sm:$0xff]
          %v8430 = vld [vmem:[#allocation8 + $0x280] sm:$0xff]
          %v8431 = vld [vmem:[#allocation8 + $0x288] sm:$0xff]
          %v8432 = vld [vmem:[#allocation8 + $0x290] sm:$0xff]
          %v8433 = vld [vmem:[#allocation8 + $0x298] sm:$0xff]
          %v8434 = vld [vmem:[#allocation8 + $0x2a0] sm:$0xff]
          %v8435 = vld [vmem:[#allocation8 + $0x2a8] sm:$0xff]
          %v8436 = vld [vmem:[#allocation8 + $0x2b0] sm:$0xff]
          %v8437 = vld [vmem:[#allocation8 + $0x2b8] sm:$0xff]
          %v8438 = vld [vmem:[#allocation8 + $0x2c0] sm:$0xff]
          %v8439 = vld [vmem:[#allocation8 + $0x2c8] sm:$0xff]
          %v8440 = vld [vmem:[#allocation8 + $0x2d0] sm:$0xff]
          %v8441 = vld [vmem:[#allocation8 + $0x2d8] sm:$0xff]
          %v8442 = vld [vmem:[#allocation8 + $0x2e0] sm:$0xff]
          %v8443 = vld [vmem:[#allocation8 + $0x2e8] sm:$0xff]
          %v8444 = vld [vmem:[#allocation8 + $0x2f0] sm:$0xff]
          %v8445 = vld [vmem:[#allocation8 + $0x2f8] sm:$0xff]
          %v8446 = vld [vmem:[#allocation8 + $0x300] sm:$0xff]
          %v8447 = vld [vmem:[#allocation8 + $0x308] sm:$0xff]
          %v8448 = vld [vmem:[#allocation8 + $0x310] sm:$0xff]
          %v8449 = vld [vmem:[#allocation8 + $0x318] sm:$0xff]
          %v8450 = vld [vmem:[#allocation8 + $0x320] sm:$0xff]
          %v8451 = vld [vmem:[#allocation8 + $0x328] sm:$0xff]
          %v8452 = vld [vmem:[#allocation8 + $0x330] sm:$0xff]
          %v8453 = vld [vmem:[#allocation8 + $0x338] sm:$0xff]
          %v8454 = vld [vmem:[#allocation8 + $0x340] sm:$0xff]
          %v8455 = vld [vmem:[#allocation8 + $0x348] sm:$0xff]
          %v8456 = vld [vmem:[#allocation8 + $0x350] sm:$0xff]
          %v8457 = vld [vmem:[#allocation8 + $0x358] sm:$0xff]
          %v8458 = vld [vmem:[#allocation8 + $0x360] sm:$0xff]
          %v8459 = vld [vmem:[#allocation8 + $0x368] sm:$0xff]
          %v8460 = vld [vmem:[#allocation8 + $0x370] sm:$0xff]
          %v8461 = vld [vmem:[#allocation8 + $0x378] sm:$0xff]
          %v8462 = vld [vmem:[#allocation8 + $0x380] sm:$0xff]
          %v8463 = vld [vmem:[#allocation8 + $0x388] sm:$0xff]
          %v8464 = vld [vmem:[#allocation8 + $0x390] sm:$0xff]
          %v8465 = vld [vmem:[#allocation8 + $0x398] sm:$0xff]
          %v8466 = vld [vmem:[#allocation8 + $0x3a0] sm:$0xff]
          %v8467 = vld [vmem:[#allocation8 + $0x3a8] sm:$0xff]
          %v8468 = vld [vmem:[#allocation8 + $0x3b0] sm:$0xff]
          %v8469 = vld [vmem:[#allocation8 + $0x3b8] sm:$0xff]
          %v8470 = vld [vmem:[#allocation8 + $0x3c0] sm:$0xff]
          %v8471 = vld [vmem:[#allocation8 + $0x3c8] sm:$0xff]
          %v8472 = vld [vmem:[#allocation8 + $0x3d0] sm:$0xff]
          %v8473 = vld [vmem:[#allocation8 + $0x3d8] sm:$0xff]
          %v8474 = vld [vmem:[#allocation8 + $0x3e0] sm:$0xff]
          %v8475 = vld [vmem:[#allocation8 + $0x3e8] sm:$0xff]
          %v8476 = vld [vmem:[#allocation8 + $0x3f0] sm:$0xff]
          %v8477 = vld [vmem:[#allocation8 + $0x3f8] sm:$0xff]
          %v8478 = vld [vmem:[#allocation8 + $0x400] sm:$0xff]
          %v8479 = vld [vmem:[#allocation8 + $0x408] sm:$0xff]
          %v8480 = vld [vmem:[#allocation8 + $0x410] sm:$0xff]
          %v8481 = vld [vmem:[#allocation8 + $0x418] sm:$0xff]
          %v8482 = vld [vmem:[#allocation8 + $0x420] sm:$0xff]
          %v8483 = vld [vmem:[#allocation8 + $0x428] sm:$0xff]
          %v8484 = vld [vmem:[#allocation8 + $0x430] sm:$0xff]
          %v8485 = vld [vmem:[#allocation8 + $0x438] sm:$0xff]
          %v8486 = vld [vmem:[#allocation8 + $0x440] sm:$0xff]
          %v8487 = vld [vmem:[#allocation8 + $0x448] sm:$0xff]
          %v8488 = vld [vmem:[#allocation8 + $0x450] sm:$0xff]
          %v8489 = vld [vmem:[#allocation8 + $0x458] sm:$0xff]
          %v8490 = vld [vmem:[#allocation8 + $0x460] sm:$0xff]
          %v8491 = vld [vmem:[#allocation8 + $0x468] sm:$0xff]
          %v8492 = vld [vmem:[#allocation8 + $0x470] sm:$0xff]
          %v8493 = vld [vmem:[#allocation8 + $0x478] sm:$0xff]
          %v8494 = vld [vmem:[#allocation8 + $0x480] sm:$0xff]
          %v8495 = vld [vmem:[#allocation8 + $0x488] sm:$0xff]
          %v8496 = vld [vmem:[#allocation8 + $0x490] sm:$0xff]
          %v8497 = vld [vmem:[#allocation8 + $0x498] sm:$0xff]
          %v8498 = vld [vmem:[#allocation8 + $0x4a0] sm:$0xff]
          %v8499 = vld [vmem:[#allocation8 + $0x4a8] sm:$0xff]
          %v8500 = vld [vmem:[#allocation8 + $0x4b0] sm:$0xff]
          %v8501 = vld [vmem:[#allocation8 + $0x4b8] sm:$0xff]
          %v8502 = vld [vmem:[#allocation8 + $0x4c0] sm:$0xff]
          %v8503 = vld [vmem:[#allocation8 + $0x4c8] sm:$0xff]
          %v8504 = vld [vmem:[#allocation8 + $0x4d0] sm:$0xff]
          %v8505 = vld [vmem:[#allocation8 + $0x4d8] sm:$0xff]
          %v8506 = vld [vmem:[#allocation8 + $0x4e0] sm:$0xff]
          %v8507 = vld [vmem:[#allocation8 + $0x4e8] sm:$0xff]
          %v8508 = vld [vmem:[#allocation8 + $0x4f0] sm:$0xff]
          %v8509 = vld [vmem:[#allocation8 + $0x4f8] sm:$0xff]
          %v8510 = vld [vmem:[#allocation8 + $0x500] sm:$0xff]
          %v8511 = vld [vmem:[#allocation8 + $0x508] sm:$0xff]
          %v8512 = vld [vmem:[#allocation8 + $0x510] sm:$0xff]
          %v8513 = vld [vmem:[#allocation8 + $0x518] sm:$0xff]
          %v8514 = vld [vmem:[#allocation8 + $0x520] sm:$0xff]
          %v8515 = vld [vmem:[#allocation8 + $0x528] sm:$0xff]
          %v8516 = vld [vmem:[#allocation8 + $0x530] sm:$0xff]
          %v8517 = vld [vmem:[#allocation8 + $0x538] sm:$0xff]
          %v8518 = vld [vmem:[#allocation8 + $0x540] sm:$0xff]
          %v8519 = vld [vmem:[#allocation8 + $0x548] sm:$0xff]
          %v8520 = vld [vmem:[#allocation8 + $0x550] sm:$0xff]
          %v8521 = vld [vmem:[#allocation8 + $0x558] sm:$0xff]
          %v8522 = vld [vmem:[#allocation8 + $0x560] sm:$0xff]
          %v8523 = vld [vmem:[#allocation8 + $0x568] sm:$0xff]
          %v8524 = vld [vmem:[#allocation8 + $0x570] sm:$0xff]
          %v8525 = vld [vmem:[#allocation8 + $0x578] sm:$0xff]
          %v8526 = vld [vmem:[#allocation8 + $0x580] sm:$0xff]
          %v8527 = vld [vmem:[#allocation8 + $0x588] sm:$0xff]
          %v8528 = vld [vmem:[#allocation8 + $0x590] sm:$0xff]
          %v8529 = vld [vmem:[#allocation8 + $0x598] sm:$0xff]
          %v8530 = vld [vmem:[#allocation8 + $0x5a0] sm:$0xff]
          %v8531 = vld [vmem:[#allocation8 + $0x5a8] sm:$0xff]
          %v8532 = vld [vmem:[#allocation8 + $0x5b0] sm:$0xff]
          %v8533 = vld [vmem:[#allocation8 + $0x5b8] sm:$0xff]
          %v8534 = vld [vmem:[#allocation8 + $0x5c0] sm:$0xff]
          %v8535 = vld [vmem:[#allocation8 + $0x5c8] sm:$0xff]
          %v8536 = vld [vmem:[#allocation8 + $0x5d0] sm:$0xff]
          %v8537 = vld [vmem:[#allocation8 + $0x5d8] sm:$0xff]
          %v8538 = vld [vmem:[#allocation8 + $0x5e0] sm:$0xff]
          %v8539 = vld [vmem:[#allocation8 + $0x5e8] sm:$0xff]
          %v8540 = vld [vmem:[#allocation8 + $0x5f0] sm:$0xff]
          %v8541 = vld [vmem:[#allocation8 + $0x5f8] sm:$0xff]
          %v8542 = vld [vmem:[#allocation8 + $0x600] sm:$0xff]
          %v8543 = vld [vmem:[#allocation8 + $0x608] sm:$0xff]
          %v8544 = vld [vmem:[#allocation8 + $0x610] sm:$0xff]
          %v8545 = vld [vmem:[#allocation8 + $0x618] sm:$0xff]
          %v8546 = vld [vmem:[#allocation8 + $0x620] sm:$0xff]
          %v8547 = vld [vmem:[#allocation8 + $0x628] sm:$0xff]
          %v8548 = vld [vmem:[#allocation8 + $0x630] sm:$0xff]
          %v8549 = vld [vmem:[#allocation8 + $0x638] sm:$0xff]
          %v8550 = vld [vmem:[#allocation8 + $0x640] sm:$0xff]
          %v8551 = vld [vmem:[#allocation8 + $0x648] sm:$0xff]
          %v8552 = vld [vmem:[#allocation8 + $0x650] sm:$0xff]
          %v8553 = vld [vmem:[#allocation8 + $0x658] sm:$0xff]
          %v8554 = vld [vmem:[#allocation8 + $0x660] sm:$0xff]
          %v8555 = vld [vmem:[#allocation8 + $0x668] sm:$0xff]
          %v8556 = vld [vmem:[#allocation8 + $0x670] sm:$0xff]
          %v8557 = vld [vmem:[#allocation8 + $0x678] sm:$0xff]
          %v8558 = vld [vmem:[#allocation8 + $0x680] sm:$0xff]
          %v8559 = vld [vmem:[#allocation8 + $0x688] sm:$0xff]
          %v8560 = vld [vmem:[#allocation8 + $0x690] sm:$0xff]
          %v8561 = vld [vmem:[#allocation8 + $0x698] sm:$0xff]
          %v8562 = vld [vmem:[#allocation8 + $0x6a0] sm:$0xff]
          %v8563 = vld [vmem:[#allocation8 + $0x6a8] sm:$0xff]
          %v8564 = vld [vmem:[#allocation8 + $0x6b0] sm:$0xff]
          %v8565 = vld [vmem:[#allocation8 + $0x6b8] sm:$0xff]
          %v8566 = vld [vmem:[#allocation8 + $0x6c0] sm:$0xff]
          %v8567 = vld [vmem:[#allocation8 + $0x6c8] sm:$0xff]
          %v8568 = vld [vmem:[#allocation8 + $0x6d0] sm:$0xff]
          %v8569 = vld [vmem:[#allocation8 + $0x6d8] sm:$0xff]
          %v8570 = vld [vmem:[#allocation8 + $0x6e0] sm:$0xff]
          %v8571 = vld [vmem:[#allocation8 + $0x6e8] sm:$0xff]
          %v8572 = vld [vmem:[#allocation8 + $0x6f0] sm:$0xff]
          %v8573 = vld [vmem:[#allocation8 + $0x6f8] sm:$0xff]
          %v8574 = vld [vmem:[#allocation8 + $0x700] sm:$0xff]
          %v8575 = vld [vmem:[#allocation8 + $0x708] sm:$0xff]
          %v8576 = vld [vmem:[#allocation8 + $0x710] sm:$0xff]
          %v8577 = vld [vmem:[#allocation8 + $0x718] sm:$0xff]
          %v8578 = vld [vmem:[#allocation8 + $0x720] sm:$0xff]
          %v8579 = vld [vmem:[#allocation8 + $0x728] sm:$0xff]
          %v8580 = vld [vmem:[#allocation8 + $0x730] sm:$0xff]
          %v8581 = vld [vmem:[#allocation8 + $0x738] sm:$0xff]
          %v8582 = vld [vmem:[#allocation8 + $0x740] sm:$0xff]
          %v8583 = vld [vmem:[#allocation8 + $0x748] sm:$0xff]
          %v8584 = vld [vmem:[#allocation8 + $0x750] sm:$0xff]
          %v8585 = vld [vmem:[#allocation8 + $0x758] sm:$0xff]
          %v8586 = vld [vmem:[#allocation8 + $0x760] sm:$0xff]
          %v8587 = vld [vmem:[#allocation8 + $0x768] sm:$0xff]
          %v8588 = vld [vmem:[#allocation8 + $0x770] sm:$0xff]
          %v8589 = vld [vmem:[#allocation8 + $0x778] sm:$0xff]
          %v8590 = vld [vmem:[#allocation8 + $0x780] sm:$0xff]
          %v8591 = vld [vmem:[#allocation8 + $0x788] sm:$0xff]
          %v8592 = vld [vmem:[#allocation8 + $0x790] sm:$0xff]
          %v8593 = vld [vmem:[#allocation8 + $0x798] sm:$0xff]
          %v8594 = vld [vmem:[#allocation8 + $0x7a0] sm:$0xff]
          %v8595 = vld [vmem:[#allocation8 + $0x7a8] sm:$0xff]
          %v8596 = vld [vmem:[#allocation8 + $0x7b0] sm:$0xff]
          %v8597 = vld [vmem:[#allocation8 + $0x7b8] sm:$0xff]
          %v8598 = vld [vmem:[#allocation8 + $0x7c0] sm:$0xff]
          %v8599 = vld [vmem:[#allocation8 + $0x7c8] sm:$0xff]
          %v8600 = vld [vmem:[#allocation8 + $0x7d0] sm:$0xff]
          %v8601 = vld [vmem:[#allocation8 + $0x7d8] sm:$0xff]
          %v8602 = vld [vmem:[#allocation8 + $0x7e0] sm:$0xff]
          %v8603 = vld [vmem:[#allocation8 + $0x7e8] sm:$0xff]
          %v8604 = vld [vmem:[#allocation8 + $0x7f0] sm:$0xff]
          %v8605 = vld [vmem:[#allocation8 + $0x7f8] sm:$0xff]
          %v8606 = vld [vmem:[#allocation9] sm:$0xf]
          %v8608 = vperm.slane %v8606, 0
          %v8609 = vperm.slane %v8606, 1
          %v8610 = vperm.slane %v8606, 2
          %v8611 = vperm.slane %v8606, 3
          %v8872 = vunpack.c.l.b16 %v8350
          %v8873 = vunpack.c.h.b16 %v8350
          %v8874 = vunpack.c.l.b16 %v8351
          %v8875 = vunpack.c.h.b16 %v8351
          %v8876 = vunpack.c.l.b16 %v8352
          %v8877 = vunpack.c.h.b16 %v8352
          %v8878 = vunpack.c.l.b16 %v8353
          %v8879 = vunpack.c.h.b16 %v8353
          %v8880 = vunpack.c.l.b16 %v8354
          %v8881 = vunpack.c.h.b16 %v8354
          %v8882 = vunpack.c.l.b16 %v8355
          %v8883 = vunpack.c.h.b16 %v8355
          %v8884 = vunpack.c.l.b16 %v8356
          %v8885 = vunpack.c.h.b16 %v8356
          %v8886 = vunpack.c.l.b16 %v8357
          %v8887 = vunpack.c.h.b16 %v8357
          %v8888 = vunpack.c.l.b16 %v8358
          %v8889 = vunpack.c.h.b16 %v8358
          %v8890 = vunpack.c.l.b16 %v8359
          %v8891 = vunpack.c.h.b16 %v8359
          %v8892 = vunpack.c.l.b16 %v8360
          %v8893 = vunpack.c.h.b16 %v8360
          %v8894 = vunpack.c.l.b16 %v8361
          %v8895 = vunpack.c.h.b16 %v8361
          %v8896 = vunpack.c.l.b16 %v8362
          %v8897 = vunpack.c.h.b16 %v8362
          %v8898 = vunpack.c.l.b16 %v8363
          %v8899 = vunpack.c.h.b16 %v8363
          %v8900 = vunpack.c.l.b16 %v8364
          %v8901 = vunpack.c.h.b16 %v8364
          %v8902 = vunpack.c.l.b16 %v8365
          %v8903 = vunpack.c.h.b16 %v8365
          %v8904 = vunpack.c.l.b16 %v8366
          %v8905 = vunpack.c.h.b16 %v8366
          %v8906 = vunpack.c.l.b16 %v8367
          %v8907 = vunpack.c.h.b16 %v8367
          %v8908 = vunpack.c.l.b16 %v8368
          %v8909 = vunpack.c.h.b16 %v8368
          %v8910 = vunpack.c.l.b16 %v8369
          %v8911 = vunpack.c.h.b16 %v8369
          %v8912 = vunpack.c.l.b16 %v8370
          %v8913 = vunpack.c.h.b16 %v8370
          %v8914 = vunpack.c.l.b16 %v8371
          %v8915 = vunpack.c.h.b16 %v8371
          %v8916 = vunpack.c.l.b16 %v8372
          %v8917 = vunpack.c.h.b16 %v8372
          %v8918 = vunpack.c.l.b16 %v8373
          %v8919 = vunpack.c.h.b16 %v8373
          %v8920 = vunpack.c.l.b16 %v8374
          %v8921 = vunpack.c.h.b16 %v8374
          %v8922 = vunpack.c.l.b16 %v8375
          %v8923 = vunpack.c.h.b16 %v8375
          %v8924 = vunpack.c.l.b16 %v8376
          %v8925 = vunpack.c.h.b16 %v8376
          %v8926 = vunpack.c.l.b16 %v8377
          %v8927 = vunpack.c.h.b16 %v8377
          %v8928 = vunpack.c.l.b16 %v8378
          %v8929 = vunpack.c.h.b16 %v8378
          %v8930 = vunpack.c.l.b16 %v8379
          %v8931 = vunpack.c.h.b16 %v8379
          %v8932 = vunpack.c.l.b16 %v8380
          %v8933 = vunpack.c.h.b16 %v8380
          %v8934 = vunpack.c.l.b16 %v8381
          %v8935 = vunpack.c.h.b16 %v8381
          %v8936 = vunpack.c.l.b16 %v8382
          %v8937 = vunpack.c.h.b16 %v8382
          %v8938 = vunpack.c.l.b16 %v8383
          %v8939 = vunpack.c.h.b16 %v8383
          %v8940 = vunpack.c.l.b16 %v8384
          %v8941 = vunpack.c.h.b16 %v8384
          %v8942 = vunpack.c.l.b16 %v8385
          %v8943 = vunpack.c.h.b16 %v8385
          %v8944 = vunpack.c.l.b16 %v8386
          %v8945 = vunpack.c.h.b16 %v8386
          %v8946 = vunpack.c.l.b16 %v8387
          %v8947 = vunpack.c.h.b16 %v8387
          %v8948 = vunpack.c.l.b16 %v8388
          %v8949 = vunpack.c.h.b16 %v8388
          %v8950 = vunpack.c.l.b16 %v8389
          %v8951 = vunpack.c.h.b16 %v8389
          %v8952 = vunpack.c.l.b16 %v8390
          %v8953 = vunpack.c.h.b16 %v8390
          %v8954 = vunpack.c.l.b16 %v8391
          %v8955 = vunpack.c.h.b16 %v8391
          %v8956 = vunpack.c.l.b16 %v8392
          %v8957 = vunpack.c.h.b16 %v8392
          %v8958 = vunpack.c.l.b16 %v8393
          %v8959 = vunpack.c.h.b16 %v8393
          %v8960 = vunpack.c.l.b16 %v8394
          %v8961 = vunpack.c.h.b16 %v8394
          %v8962 = vunpack.c.l.b16 %v8395
          %v8963 = vunpack.c.h.b16 %v8395
          %v8964 = vunpack.c.l.b16 %v8396
          %v8965 = vunpack.c.h.b16 %v8396
          %v8966 = vunpack.c.l.b16 %v8397
          %v8967 = vunpack.c.h.b16 %v8397
          %v8968 = vunpack.c.l.b16 %v8398
          %v8969 = vunpack.c.h.b16 %v8398
          %v8970 = vunpack.c.l.b16 %v8399
          %v8971 = vunpack.c.h.b16 %v8399
          %v8972 = vunpack.c.l.b16 %v8400
          %v8973 = vunpack.c.h.b16 %v8400
          %v8974 = vunpack.c.l.b16 %v8401
          %v8975 = vunpack.c.h.b16 %v8401
          %v8976 = vunpack.c.l.b16 %v8402
          %v8977 = vunpack.c.h.b16 %v8402
          %v8978 = vunpack.c.l.b16 %v8403
          %v8979 = vunpack.c.h.b16 %v8403
          %v8980 = vunpack.c.l.b16 %v8404
          %v8981 = vunpack.c.h.b16 %v8404
          %v8982 = vunpack.c.l.b16 %v8405
          %v8983 = vunpack.c.h.b16 %v8405
          %v8984 = vunpack.c.l.b16 %v8406
          %v8985 = vunpack.c.h.b16 %v8406
          %v8986 = vunpack.c.l.b16 %v8407
          %v8987 = vunpack.c.h.b16 %v8407
          %v8988 = vunpack.c.l.b16 %v8408
          %v8989 = vunpack.c.h.b16 %v8408
          %v8990 = vunpack.c.l.b16 %v8409
          %v8991 = vunpack.c.h.b16 %v8409
          %v8992 = vunpack.c.l.b16 %v8410
          %v8993 = vunpack.c.h.b16 %v8410
          %v8994 = vunpack.c.l.b16 %v8411
          %v8995 = vunpack.c.h.b16 %v8411
          %v8996 = vunpack.c.l.b16 %v8412
          %v8997 = vunpack.c.h.b16 %v8412
          %v8998 = vunpack.c.l.b16 %v8413
          %v8999 = vunpack.c.h.b16 %v8413
          %v9000 = vunpack.c.l.b16 %v8414
          %v9001 = vunpack.c.h.b16 %v8414
          %v9002 = vunpack.c.l.b16 %v8415
          %v9003 = vunpack.c.h.b16 %v8415
          %v9004 = vunpack.c.l.b16 %v8416
          %v9005 = vunpack.c.h.b16 %v8416
          %v9006 = vunpack.c.l.b16 %v8417
          %v9007 = vunpack.c.h.b16 %v8417
          %v9008 = vunpack.c.l.b16 %v8418
          %v9009 = vunpack.c.h.b16 %v8418
          %v9010 = vunpack.c.l.b16 %v8419
          %v9011 = vunpack.c.h.b16 %v8419
          %v9012 = vunpack.c.l.b16 %v8420
          %v9013 = vunpack.c.h.b16 %v8420
          %v9014 = vunpack.c.l.b16 %v8421
          %v9015 = vunpack.c.h.b16 %v8421
          %v9016 = vunpack.c.l.b16 %v8422
          %v9017 = vunpack.c.h.b16 %v8422
          %v9018 = vunpack.c.l.b16 %v8423
          %v9019 = vunpack.c.h.b16 %v8423
          %v9020 = vunpack.c.l.b16 %v8424
          %v9021 = vunpack.c.h.b16 %v8424
          %v9022 = vunpack.c.l.b16 %v8425
          %v9023 = vunpack.c.h.b16 %v8425
          %v9024 = vunpack.c.l.b16 %v8426
          %v9025 = vunpack.c.h.b16 %v8426
          %v9026 = vunpack.c.l.b16 %v8427
          %v9027 = vunpack.c.h.b16 %v8427
          %v9028 = vunpack.c.l.b16 %v8428
          %v9029 = vunpack.c.h.b16 %v8428
          %v9030 = vunpack.c.l.b16 %v8429
          %v9031 = vunpack.c.h.b16 %v8429
          %v9032 = vunpack.c.l.b16 %v8430
          %v9033 = vunpack.c.h.b16 %v8430
          %v9034 = vunpack.c.l.b16 %v8431
          %v9035 = vunpack.c.h.b16 %v8431
          %v9036 = vunpack.c.l.b16 %v8432
          %v9037 = vunpack.c.h.b16 %v8432
          %v9038 = vunpack.c.l.b16 %v8433
          %v9039 = vunpack.c.h.b16 %v8433
          %v9040 = vunpack.c.l.b16 %v8434
          %v9041 = vunpack.c.h.b16 %v8434
          %v9042 = vunpack.c.l.b16 %v8435
          %v9043 = vunpack.c.h.b16 %v8435
          %v9044 = vunpack.c.l.b16 %v8436
          %v9045 = vunpack.c.h.b16 %v8436
          %v9046 = vunpack.c.l.b16 %v8437
          %v9047 = vunpack.c.h.b16 %v8437
          %v9048 = vunpack.c.l.b16 %v8438
          %v9049 = vunpack.c.h.b16 %v8438
          %v9050 = vunpack.c.l.b16 %v8439
          %v9051 = vunpack.c.h.b16 %v8439
          %v9052 = vunpack.c.l.b16 %v8440
          %v9053 = vunpack.c.h.b16 %v8440
          %v9054 = vunpack.c.l.b16 %v8441
          %v9055 = vunpack.c.h.b16 %v8441
          %v9056 = vunpack.c.l.b16 %v8442
          %v9057 = vunpack.c.h.b16 %v8442
          %v9058 = vunpack.c.l.b16 %v8443
          %v9059 = vunpack.c.h.b16 %v8443
          %v9060 = vunpack.c.l.b16 %v8444
          %v9061 = vunpack.c.h.b16 %v8444
          %v9062 = vunpack.c.l.b16 %v8445
          %v9063 = vunpack.c.h.b16 %v8445
          %v9064 = vunpack.c.l.b16 %v8446
          %v9065 = vunpack.c.h.b16 %v8446
          %v9066 = vunpack.c.l.b16 %v8447
          %v9067 = vunpack.c.h.b16 %v8447
          %v9068 = vunpack.c.l.b16 %v8448
          %v9069 = vunpack.c.h.b16 %v8448
          %v9070 = vunpack.c.l.b16 %v8449
          %v9071 = vunpack.c.h.b16 %v8449
          %v9072 = vunpack.c.l.b16 %v8450
          %v9073 = vunpack.c.h.b16 %v8450
          %v9074 = vunpack.c.l.b16 %v8451
          %v9075 = vunpack.c.h.b16 %v8451
          %v9076 = vunpack.c.l.b16 %v8452
          %v9077 = vunpack.c.h.b16 %v8452
          %v9078 = vunpack.c.l.b16 %v8453
          %v9079 = vunpack.c.h.b16 %v8453
          %v9080 = vunpack.c.l.b16 %v8454
          %v9081 = vunpack.c.h.b16 %v8454
          %v9082 = vunpack.c.l.b16 %v8455
          %v9083 = vunpack.c.h.b16 %v8455
          %v9084 = vunpack.c.l.b16 %v8456
          %v9085 = vunpack.c.h.b16 %v8456
          %v9086 = vunpack.c.l.b16 %v8457
          %v9087 = vunpack.c.h.b16 %v8457
          %v9088 = vunpack.c.l.b16 %v8458
          %v9089 = vunpack.c.h.b16 %v8458
          %v9090 = vunpack.c.l.b16 %v8459
          %v9091 = vunpack.c.h.b16 %v8459
          %v9092 = vunpack.c.l.b16 %v8460
          %v9093 = vunpack.c.h.b16 %v8460
          %v9094 = vunpack.c.l.b16 %v8461
          %v9095 = vunpack.c.h.b16 %v8461
          %v9096 = vunpack.c.l.b16 %v8462
          %v9097 = vunpack.c.h.b16 %v8462
          %v9098 = vunpack.c.l.b16 %v8463
          %v9099 = vunpack.c.h.b16 %v8463
          %v9100 = vunpack.c.l.b16 %v8464
          %v9101 = vunpack.c.h.b16 %v8464
          %v9102 = vunpack.c.l.b16 %v8465
          %v9103 = vunpack.c.h.b16 %v8465
          %v9104 = vunpack.c.l.b16 %v8466
          %v9105 = vunpack.c.h.b16 %v8466
          %v9106 = vunpack.c.l.b16 %v8467
          %v9107 = vunpack.c.h.b16 %v8467
          %v9108 = vunpack.c.l.b16 %v8468
          %v9109 = vunpack.c.h.b16 %v8468
          %v9110 = vunpack.c.l.b16 %v8469
          %v9111 = vunpack.c.h.b16 %v8469
          %v9112 = vunpack.c.l.b16 %v8470
          %v9113 = vunpack.c.h.b16 %v8470
          %v9114 = vunpack.c.l.b16 %v8471
          %v9115 = vunpack.c.h.b16 %v8471
          %v9116 = vunpack.c.l.b16 %v8472
          %v9117 = vunpack.c.h.b16 %v8472
          %v9118 = vunpack.c.l.b16 %v8473
          %v9119 = vunpack.c.h.b16 %v8473
          %v9120 = vunpack.c.l.b16 %v8474
          %v9121 = vunpack.c.h.b16 %v8474
          %v9122 = vunpack.c.l.b16 %v8475
          %v9123 = vunpack.c.h.b16 %v8475
          %v9124 = vunpack.c.l.b16 %v8476
          %v9125 = vunpack.c.h.b16 %v8476
          %v9126 = vunpack.c.l.b16 %v8477
          %v9127 = vunpack.c.h.b16 %v8477
          %v9128 = vunpack.c.l.b16 %v8478
          %v9129 = vunpack.c.h.b16 %v8478
          %v9130 = vunpack.c.l.b16 %v8479
          %v9131 = vunpack.c.h.b16 %v8479
          %v9132 = vunpack.c.l.b16 %v8480
          %v9133 = vunpack.c.h.b16 %v8480
          %v9134 = vunpack.c.l.b16 %v8481
          %v9135 = vunpack.c.h.b16 %v8481
          %v9136 = vunpack.c.l.b16 %v8482
          %v9137 = vunpack.c.h.b16 %v8482
          %v9138 = vunpack.c.l.b16 %v8483
          %v9139 = vunpack.c.h.b16 %v8483
          %v9140 = vunpack.c.l.b16 %v8484
          %v9141 = vunpack.c.h.b16 %v8484
          %v9142 = vunpack.c.l.b16 %v8485
          %v9143 = vunpack.c.h.b16 %v8485
          %v9144 = vunpack.c.l.b16 %v8486
          %v9145 = vunpack.c.h.b16 %v8486
          %v9146 = vunpack.c.l.b16 %v8487
          %v9147 = vunpack.c.h.b16 %v8487
          %v9148 = vunpack.c.l.b16 %v8488
          %v9149 = vunpack.c.h.b16 %v8488
          %v9150 = vunpack.c.l.b16 %v8489
          %v9151 = vunpack.c.h.b16 %v8489
          %v9152 = vunpack.c.l.b16 %v8490
          %v9153 = vunpack.c.h.b16 %v8490
          %v9154 = vunpack.c.l.b16 %v8491
          %v9155 = vunpack.c.h.b16 %v8491
          %v9156 = vunpack.c.l.b16 %v8492
          %v9157 = vunpack.c.h.b16 %v8492
          %v9158 = vunpack.c.l.b16 %v8493
          %v9159 = vunpack.c.h.b16 %v8493
          %v9160 = vunpack.c.l.b16 %v8494
          %v9161 = vunpack.c.h.b16 %v8494
          %v9162 = vunpack.c.l.b16 %v8495
          %v9163 = vunpack.c.h.b16 %v8495
          %v9164 = vunpack.c.l.b16 %v8496
          %v9165 = vunpack.c.h.b16 %v8496
          %v9166 = vunpack.c.l.b16 %v8497
          %v9167 = vunpack.c.h.b16 %v8497
          %v9168 = vunpack.c.l.b16 %v8498
          %v9169 = vunpack.c.h.b16 %v8498
          %v9170 = vunpack.c.l.b16 %v8499
          %v9171 = vunpack.c.h.b16 %v8499
          %v9172 = vunpack.c.l.b16 %v8500
          %v9173 = vunpack.c.h.b16 %v8500
          %v9174 = vunpack.c.l.b16 %v8501
          %v9175 = vunpack.c.h.b16 %v8501
          %v9176 = vunpack.c.l.b16 %v8502
          %v9177 = vunpack.c.h.b16 %v8502
          %v9178 = vunpack.c.l.b16 %v8503
          %v9179 = vunpack.c.h.b16 %v8503
          %v9180 = vunpack.c.l.b16 %v8504
          %v9181 = vunpack.c.h.b16 %v8504
          %v9182 = vunpack.c.l.b16 %v8505
          %v9183 = vunpack.c.h.b16 %v8505
          %v9184 = vunpack.c.l.b16 %v8506
          %v9185 = vunpack.c.h.b16 %v8506
          %v9186 = vunpack.c.l.b16 %v8507
          %v9187 = vunpack.c.h.b16 %v8507
          %v9188 = vunpack.c.l.b16 %v8508
          %v9189 = vunpack.c.h.b16 %v8508
          %v9190 = vunpack.c.l.b16 %v8509
          %v9191 = vunpack.c.h.b16 %v8509
          %v9192 = vunpack.c.l.b16 %v8510
          %v9193 = vunpack.c.h.b16 %v8510
          %v9194 = vunpack.c.l.b16 %v8511
          %v9195 = vunpack.c.h.b16 %v8511
          %v9196 = vunpack.c.l.b16 %v8512
          %v9197 = vunpack.c.h.b16 %v8512
          %v9198 = vunpack.c.l.b16 %v8513
          %v9199 = vunpack.c.h.b16 %v8513
          %v9200 = vunpack.c.l.b16 %v8514
          %v9201 = vunpack.c.h.b16 %v8514
          %v9202 = vunpack.c.l.b16 %v8515
          %v9203 = vunpack.c.h.b16 %v8515
          %v9204 = vunpack.c.l.b16 %v8516
          %v9205 = vunpack.c.h.b16 %v8516
          %v9206 = vunpack.c.l.b16 %v8517
          %v9207 = vunpack.c.h.b16 %v8517
          %v9208 = vunpack.c.l.b16 %v8518
          %v9209 = vunpack.c.h.b16 %v8518
          %v9210 = vunpack.c.l.b16 %v8519
          %v9211 = vunpack.c.h.b16 %v8519
          %v9212 = vunpack.c.l.b16 %v8520
          %v9213 = vunpack.c.h.b16 %v8520
          %v9214 = vunpack.c.l.b16 %v8521
          %v9215 = vunpack.c.h.b16 %v8521
          %v9216 = vunpack.c.l.b16 %v8522
          %v9217 = vunpack.c.h.b16 %v8522
          %v9218 = vunpack.c.l.b16 %v8523
          %v9219 = vunpack.c.h.b16 %v8523
          %v9220 = vunpack.c.l.b16 %v8524
          %v9221 = vunpack.c.h.b16 %v8524
          %v9222 = vunpack.c.l.b16 %v8525
          %v9223 = vunpack.c.h.b16 %v8525
          %v9224 = vunpack.c.l.b16 %v8526
          %v9225 = vunpack.c.h.b16 %v8526
          %v9226 = vunpack.c.l.b16 %v8527
          %v9227 = vunpack.c.h.b16 %v8527
          %v9228 = vunpack.c.l.b16 %v8528
          %v9229 = vunpack.c.h.b16 %v8528
          %v9230 = vunpack.c.l.b16 %v8529
          %v9231 = vunpack.c.h.b16 %v8529
          %v9232 = vunpack.c.l.b16 %v8530
          %v9233 = vunpack.c.h.b16 %v8530
          %v9234 = vunpack.c.l.b16 %v8531
          %v9235 = vunpack.c.h.b16 %v8531
          %v9236 = vunpack.c.l.b16 %v8532
          %v9237 = vunpack.c.h.b16 %v8532
          %v9238 = vunpack.c.l.b16 %v8533
          %v9239 = vunpack.c.h.b16 %v8533
          %v9240 = vunpack.c.l.b16 %v8534
          %v9241 = vunpack.c.h.b16 %v8534
          %v9242 = vunpack.c.l.b16 %v8535
          %v9243 = vunpack.c.h.b16 %v8535
          %v9244 = vunpack.c.l.b16 %v8536
          %v9245 = vunpack.c.h.b16 %v8536
          %v9246 = vunpack.c.l.b16 %v8537
          %v9247 = vunpack.c.h.b16 %v8537
          %v9248 = vunpack.c.l.b16 %v8538
          %v9249 = vunpack.c.h.b16 %v8538
          %v9250 = vunpack.c.l.b16 %v8539
          %v9251 = vunpack.c.h.b16 %v8539
          %v9252 = vunpack.c.l.b16 %v8540
          %v9253 = vunpack.c.h.b16 %v8540
          %v9254 = vunpack.c.l.b16 %v8541
          %v9255 = vunpack.c.h.b16 %v8541
          %v9256 = vunpack.c.l.b16 %v8542
          %v9257 = vunpack.c.h.b16 %v8542
          %v9258 = vunpack.c.l.b16 %v8543
          %v9259 = vunpack.c.h.b16 %v8543
          %v9260 = vunpack.c.l.b16 %v8544
          %v9261 = vunpack.c.h.b16 %v8544
          %v9262 = vunpack.c.l.b16 %v8545
          %v9263 = vunpack.c.h.b16 %v8545
          %v9264 = vunpack.c.l.b16 %v8546
          %v9265 = vunpack.c.h.b16 %v8546
          %v9266 = vunpack.c.l.b16 %v8547
          %v9267 = vunpack.c.h.b16 %v8547
          %v9268 = vunpack.c.l.b16 %v8548
          %v9269 = vunpack.c.h.b16 %v8548
          %v9270 = vunpack.c.l.b16 %v8549
          %v9271 = vunpack.c.h.b16 %v8549
          %v9272 = vunpack.c.l.b16 %v8550
          %v9273 = vunpack.c.h.b16 %v8550
          %v9274 = vunpack.c.l.b16 %v8551
          %v9275 = vunpack.c.h.b16 %v8551
          %v9276 = vunpack.c.l.b16 %v8552
          %v9277 = vunpack.c.h.b16 %v8552
          %v9278 = vunpack.c.l.b16 %v8553
          %v9279 = vunpack.c.h.b16 %v8553
          %v9280 = vunpack.c.l.b16 %v8554
          %v9281 = vunpack.c.h.b16 %v8554
          %v9282 = vunpack.c.l.b16 %v8555
          %v9283 = vunpack.c.h.b16 %v8555
          %v9284 = vunpack.c.l.b16 %v8556
          %v9285 = vunpack.c.h.b16 %v8556
          %v9286 = vunpack.c.l.b16 %v8557
          %v9287 = vunpack.c.h.b16 %v8557
          %v9288 = vunpack.c.l.b16 %v8558
          %v9289 = vunpack.c.h.b16 %v8558
          %v9290 = vunpack.c.l.b16 %v8559
          %v9291 = vunpack.c.h.b16 %v8559
          %v9292 = vunpack.c.l.b16 %v8560
          %v9293 = vunpack.c.h.b16 %v8560
          %v9294 = vunpack.c.l.b16 %v8561
          %v9295 = vunpack.c.h.b16 %v8561
          %v9296 = vunpack.c.l.b16 %v8562
          %v9297 = vunpack.c.h.b16 %v8562
          %v9298 = vunpack.c.l.b16 %v8563
          %v9299 = vunpack.c.h.b16 %v8563
          %v9300 = vunpack.c.l.b16 %v8564
          %v9301 = vunpack.c.h.b16 %v8564
          %v9302 = vunpack.c.l.b16 %v8565
          %v9303 = vunpack.c.h.b16 %v8565
          %v9304 = vunpack.c.l.b16 %v8566
          %v9305 = vunpack.c.h.b16 %v8566
          %v9306 = vunpack.c.l.b16 %v8567
          %v9307 = vunpack.c.h.b16 %v8567
          %v9308 = vunpack.c.l.b16 %v8568
          %v9309 = vunpack.c.h.b16 %v8568
          %v9310 = vunpack.c.l.b16 %v8569
          %v9311 = vunpack.c.h.b16 %v8569
          %v9312 = vunpack.c.l.b16 %v8570
          %v9313 = vunpack.c.h.b16 %v8570
          %v9314 = vunpack.c.l.b16 %v8571
          %v9315 = vunpack.c.h.b16 %v8571
          %v9316 = vunpack.c.l.b16 %v8572
          %v9317 = vunpack.c.h.b16 %v8572
          %v9318 = vunpack.c.l.b16 %v8573
          %v9319 = vunpack.c.h.b16 %v8573
          %v9320 = vunpack.c.l.b16 %v8574
          %v9321 = vunpack.c.h.b16 %v8574
          %v9322 = vunpack.c.l.b16 %v8575
          %v9323 = vunpack.c.h.b16 %v8575
          %v9324 = vunpack.c.l.b16 %v8576
          %v9325 = vunpack.c.h.b16 %v8576
          %v9326 = vunpack.c.l.b16 %v8577
          %v9327 = vunpack.c.h.b16 %v8577
          %v9328 = vunpack.c.l.b16 %v8578
          %v9329 = vunpack.c.h.b16 %v8578
          %v9330 = vunpack.c.l.b16 %v8579
          %v9331 = vunpack.c.h.b16 %v8579
          %v9332 = vunpack.c.l.b16 %v8580
          %v9333 = vunpack.c.h.b16 %v8580
          %v9334 = vunpack.c.l.b16 %v8581
          %v9335 = vunpack.c.h.b16 %v8581
          %v9336 = vunpack.c.l.b16 %v8582
          %v9337 = vunpack.c.h.b16 %v8582
          %v9338 = vunpack.c.l.b16 %v8583
          %v9339 = vunpack.c.h.b16 %v8583
          %v9340 = vunpack.c.l.b16 %v8584
          %v9341 = vunpack.c.h.b16 %v8584
          %v9342 = vunpack.c.l.b16 %v8585
          %v9343 = vunpack.c.h.b16 %v8585
          %v9344 = vunpack.c.l.b16 %v8586
          %v9345 = vunpack.c.h.b16 %v8586
          %v9346 = vunpack.c.l.b16 %v8587
          %v9347 = vunpack.c.h.b16 %v8587
          %v9348 = vunpack.c.l.b16 %v8588
          %v9349 = vunpack.c.h.b16 %v8588
          %v9350 = vunpack.c.l.b16 %v8589
          %v9351 = vunpack.c.h.b16 %v8589
          %v9352 = vunpack.c.l.b16 %v8590
          %v9353 = vunpack.c.h.b16 %v8590
          %v9354 = vunpack.c.l.b16 %v8591
          %v9355 = vunpack.c.h.b16 %v8591
          %v9356 = vunpack.c.l.b16 %v8592
          %v9357 = vunpack.c.h.b16 %v8592
          %v9358 = vunpack.c.l.b16 %v8593
          %v9359 = vunpack.c.h.b16 %v8593
          %v9360 = vunpack.c.l.b16 %v8594
          %v9361 = vunpack.c.h.b16 %v8594
          %v9362 = vunpack.c.l.b16 %v8595
          %v9363 = vunpack.c.h.b16 %v8595
          %v9364 = vunpack.c.l.b16 %v8596
          %v9365 = vunpack.c.h.b16 %v8596
          %v9366 = vunpack.c.l.b16 %v8597
          %v9367 = vunpack.c.h.b16 %v8597
          %v9368 = vunpack.c.l.b16 %v8598
          %v9369 = vunpack.c.h.b16 %v8598
          %v9370 = vunpack.c.l.b16 %v8599
          %v9371 = vunpack.c.h.b16 %v8599
          %v9372 = vunpack.c.l.b16 %v8600
          %v9373 = vunpack.c.h.b16 %v8600
          %v9374 = vunpack.c.l.b16 %v8601
          %v9375 = vunpack.c.h.b16 %v8601
          %v9376 = vunpack.c.l.b16 %v8602
          %v9377 = vunpack.c.h.b16 %v8602
          %v9378 = vunpack.c.l.b16 %v8603
          %v9379 = vunpack.c.h.b16 %v8603
          %v9380 = vunpack.c.l.b16 %v8604
          %v9381 = vunpack.c.h.b16 %v8604
          %v9382 = vunpack.c.l.b16 %v8605
          %v9383 = vunpack.c.h.b16 %v8605
          %v9384 = vpack.c.b16 %v8876, %v8872
          %v9385 = vpack.c.b16 %v8877, %v8873
          %v9386 = vpack.c.b16 %v8878, %v8874
          %v9387 = vpack.c.b16 %v8879, %v8875
          %v9388 = vpack.c.b16 %v8884, %v8880
          %v9389 = vpack.c.b16 %v8885, %v8881
          %v9390 = vpack.c.b16 %v8886, %v8882
          %v9391 = vpack.c.b16 %v8887, %v8883
          %v9392 = vpack.c.b16 %v8892, %v8888
          %v9393 = vpack.c.b16 %v8893, %v8889
          %v9394 = vpack.c.b16 %v8894, %v8890
          %v9395 = vpack.c.b16 %v8895, %v8891
          %v9396 = vpack.c.b16 %v8900, %v8896
          %v9397 = vpack.c.b16 %v8901, %v8897
          %v9398 = vpack.c.b16 %v8902, %v8898
          %v9399 = vpack.c.b16 %v8903, %v8899
          %v9400 = vpack.c.b16 %v8908, %v8904
          %v9401 = vpack.c.b16 %v8909, %v8905
          %v9402 = vpack.c.b16 %v8910, %v8906
          %v9403 = vpack.c.b16 %v8911, %v8907
          %v9404 = vpack.c.b16 %v8916, %v8912
          %v9405 = vpack.c.b16 %v8917, %v8913
          %v9406 = vpack.c.b16 %v8918, %v8914
          %v9407 = vpack.c.b16 %v8919, %v8915
          %v9408 = vpack.c.b16 %v8924, %v8920
          %v9409 = vpack.c.b16 %v8925, %v8921
          %v9410 = vpack.c.b16 %v8926, %v8922
          %v9411 = vpack.c.b16 %v8927, %v8923
          %v9412 = vpack.c.b16 %v8932, %v8928
          %v9413 = vpack.c.b16 %v8933, %v8929
          %v9414 = vpack.c.b16 %v8934, %v8930
          %v9415 = vpack.c.b16 %v8935, %v8931
          %v9416 = vpack.c.b16 %v8940, %v8936
          %v9417 = vpack.c.b16 %v8941, %v8937
          %v9418 = vpack.c.b16 %v8942, %v8938
          %v9419 = vpack.c.b16 %v8943, %v8939
          %v9420 = vpack.c.b16 %v8948, %v8944
          %v9421 = vpack.c.b16 %v8949, %v8945
          %v9422 = vpack.c.b16 %v8950, %v8946
          %v9423 = vpack.c.b16 %v8951, %v8947
          %v9424 = vpack.c.b16 %v8956, %v8952
          %v9425 = vpack.c.b16 %v8957, %v8953
          %v9426 = vpack.c.b16 %v8958, %v8954
          %v9427 = vpack.c.b16 %v8959, %v8955
          %v9428 = vpack.c.b16 %v8964, %v8960
          %v9429 = vpack.c.b16 %v8965, %v8961
          %v9430 = vpack.c.b16 %v8966, %v8962
          %v9431 = vpack.c.b16 %v8967, %v8963
          %v9432 = vpack.c.b16 %v8972, %v8968
          %v9433 = vpack.c.b16 %v8973, %v8969
          %v9434 = vpack.c.b16 %v8974, %v8970
          %v9435 = vpack.c.b16 %v8975, %v8971
          %v9436 = vpack.c.b16 %v8980, %v8976
          %v9437 = vpack.c.b16 %v8981, %v8977
          %v9438 = vpack.c.b16 %v8982, %v8978
          %v9439 = vpack.c.b16 %v8983, %v8979
          %v9440 = vpack.c.b16 %v8988, %v8984
          %v9441 = vpack.c.b16 %v8989, %v8985
          %v9442 = vpack.c.b16 %v8990, %v8986
          %v9443 = vpack.c.b16 %v8991, %v8987
          %v9444 = vpack.c.b16 %v8996, %v8992
          %v9445 = vpack.c.b16 %v8997, %v8993
          %v9446 = vpack.c.b16 %v8998, %v8994
          %v9447 = vpack.c.b16 %v8999, %v8995
          %v9448 = vpack.c.b16 %v9004, %v9000
          %v9449 = vpack.c.b16 %v9005, %v9001
          %v9450 = vpack.c.b16 %v9006, %v9002
          %v9451 = vpack.c.b16 %v9007, %v9003
          %v9452 = vpack.c.b16 %v9012, %v9008
          %v9453 = vpack.c.b16 %v9013, %v9009
          %v9454 = vpack.c.b16 %v9014, %v9010
          %v9455 = vpack.c.b16 %v9015, %v9011
          %v9456 = vpack.c.b16 %v9020, %v9016
          %v9457 = vpack.c.b16 %v9021, %v9017
          %v9458 = vpack.c.b16 %v9022, %v9018
          %v9459 = vpack.c.b16 %v9023, %v9019
          %v9460 = vpack.c.b16 %v9028, %v9024
          %v9461 = vpack.c.b16 %v9029, %v9025
          %v9462 = vpack.c.b16 %v9030, %v9026
          %v9463 = vpack.c.b16 %v9031, %v9027
          %v9464 = vpack.c.b16 %v9036, %v9032
          %v9465 = vpack.c.b16 %v9037, %v9033
          %v9466 = vpack.c.b16 %v9038, %v9034
          %v9467 = vpack.c.b16 %v9039, %v9035
          %v9468 = vpack.c.b16 %v9044, %v9040
          %v9469 = vpack.c.b16 %v9045, %v9041
          %v9470 = vpack.c.b16 %v9046, %v9042
          %v9471 = vpack.c.b16 %v9047, %v9043
          %v9472 = vpack.c.b16 %v9052, %v9048
          %v9473 = vpack.c.b16 %v9053, %v9049
          %v9474 = vpack.c.b16 %v9054, %v9050
          %v9475 = vpack.c.b16 %v9055, %v9051
          %v9476 = vpack.c.b16 %v9060, %v9056
          %v9477 = vpack.c.b16 %v9061, %v9057
          %v9478 = vpack.c.b16 %v9062, %v9058
          %v9479 = vpack.c.b16 %v9063, %v9059
          %v9480 = vpack.c.b16 %v9068, %v9064
          %v9481 = vpack.c.b16 %v9069, %v9065
          %v9482 = vpack.c.b16 %v9070, %v9066
          %v9483 = vpack.c.b16 %v9071, %v9067
          %v9484 = vpack.c.b16 %v9076, %v9072
          %v9485 = vpack.c.b16 %v9077, %v9073
          %v9486 = vpack.c.b16 %v9078, %v9074
          %v9487 = vpack.c.b16 %v9079, %v9075
          %v9488 = vpack.c.b16 %v9084, %v9080
          %v9489 = vpack.c.b16 %v9085, %v9081
          %v9490 = vpack.c.b16 %v9086, %v9082
          %v9491 = vpack.c.b16 %v9087, %v9083
          %v9492 = vpack.c.b16 %v9092, %v9088
          %v9493 = vpack.c.b16 %v9093, %v9089
          %v9494 = vpack.c.b16 %v9094, %v9090
          %v9495 = vpack.c.b16 %v9095, %v9091
          %v9496 = vpack.c.b16 %v9100, %v9096
          %v9497 = vpack.c.b16 %v9101, %v9097
          %v9498 = vpack.c.b16 %v9102, %v9098
          %v9499 = vpack.c.b16 %v9103, %v9099
          %v9500 = vpack.c.b16 %v9108, %v9104
          %v9501 = vpack.c.b16 %v9109, %v9105
          %v9502 = vpack.c.b16 %v9110, %v9106
          %v9503 = vpack.c.b16 %v9111, %v9107
          %v9504 = vpack.c.b16 %v9116, %v9112
          %v9505 = vpack.c.b16 %v9117, %v9113
          %v9506 = vpack.c.b16 %v9118, %v9114
          %v9507 = vpack.c.b16 %v9119, %v9115
          %v9508 = vpack.c.b16 %v9124, %v9120
          %v9509 = vpack.c.b16 %v9125, %v9121
          %v9510 = vpack.c.b16 %v9126, %v9122
          %v9511 = vpack.c.b16 %v9127, %v9123
          %v9512 = vpack.c.b16 %v9132, %v9128
          %v9513 = vpack.c.b16 %v9133, %v9129
          %v9514 = vpack.c.b16 %v9134, %v9130
          %v9515 = vpack.c.b16 %v9135, %v9131
          %v9516 = vpack.c.b16 %v9140, %v9136
          %v9517 = vpack.c.b16 %v9141, %v9137
          %v9518 = vpack.c.b16 %v9142, %v9138
          %v9519 = vpack.c.b16 %v9143, %v9139
          %v9520 = vpack.c.b16 %v9148, %v9144
          %v9521 = vpack.c.b16 %v9149, %v9145
          %v9522 = vpack.c.b16 %v9150, %v9146
          %v9523 = vpack.c.b16 %v9151, %v9147
          %v9524 = vpack.c.b16 %v9156, %v9152
          %v9525 = vpack.c.b16 %v9157, %v9153
          %v9526 = vpack.c.b16 %v9158, %v9154
          %v9527 = vpack.c.b16 %v9159, %v9155
          %v9528 = vpack.c.b16 %v9164, %v9160
          %v9529 = vpack.c.b16 %v9165, %v9161
          %v9530 = vpack.c.b16 %v9166, %v9162
          %v9531 = vpack.c.b16 %v9167, %v9163
          %v9532 = vpack.c.b16 %v9172, %v9168
          %v9533 = vpack.c.b16 %v9173, %v9169
          %v9534 = vpack.c.b16 %v9174, %v9170
          %v9535 = vpack.c.b16 %v9175, %v9171
          %v9536 = vpack.c.b16 %v9180, %v9176
          %v9537 = vpack.c.b16 %v9181, %v9177
          %v9538 = vpack.c.b16 %v9182, %v9178
          %v9539 = vpack.c.b16 %v9183, %v9179
          %v9540 = vpack.c.b16 %v9188, %v9184
          %v9541 = vpack.c.b16 %v9189, %v9185
          %v9542 = vpack.c.b16 %v9190, %v9186
          %v9543 = vpack.c.b16 %v9191, %v9187
          %v9544 = vpack.c.b16 %v9196, %v9192
          %v9545 = vpack.c.b16 %v9197, %v9193
          %v9546 = vpack.c.b16 %v9198, %v9194
          %v9547 = vpack.c.b16 %v9199, %v9195
          %v9548 = vpack.c.b16 %v9204, %v9200
          %v9549 = vpack.c.b16 %v9205, %v9201
          %v9550 = vpack.c.b16 %v9206, %v9202
          %v9551 = vpack.c.b16 %v9207, %v9203
          %v9552 = vpack.c.b16 %v9212, %v9208
          %v9553 = vpack.c.b16 %v9213, %v9209
          %v9554 = vpack.c.b16 %v9214, %v9210
          %v9555 = vpack.c.b16 %v9215, %v9211
          %v9556 = vpack.c.b16 %v9220, %v9216
          %v9557 = vpack.c.b16 %v9221, %v9217
          %v9558 = vpack.c.b16 %v9222, %v9218
          %v9559 = vpack.c.b16 %v9223, %v9219
          %v9560 = vpack.c.b16 %v9228, %v9224
          %v9561 = vpack.c.b16 %v9229, %v9225
          %v9562 = vpack.c.b16 %v9230, %v9226
          %v9563 = vpack.c.b16 %v9231, %v9227
          %v9564 = vpack.c.b16 %v9236, %v9232
          %v9565 = vpack.c.b16 %v9237, %v9233
          %v9566 = vpack.c.b16 %v9238, %v9234
          %v9567 = vpack.c.b16 %v9239, %v9235
          %v9568 = vpack.c.b16 %v9244, %v9240
          %v9569 = vpack.c.b16 %v9245, %v9241
          %v9570 = vpack.c.b16 %v9246, %v9242
          %v9571 = vpack.c.b16 %v9247, %v9243
          %v9572 = vpack.c.b16 %v9252, %v9248
          %v9573 = vpack.c.b16 %v9253, %v9249
          %v9574 = vpack.c.b16 %v9254, %v9250
          %v9575 = vpack.c.b16 %v9255, %v9251
          %v9576 = vpack.c.b16 %v9260, %v9256
          %v9577 = vpack.c.b16 %v9261, %v9257
          %v9578 = vpack.c.b16 %v9262, %v9258
          %v9579 = vpack.c.b16 %v9263, %v9259
          %v9580 = vpack.c.b16 %v9268, %v9264
          %v9581 = vpack.c.b16 %v9269, %v9265
          %v9582 = vpack.c.b16 %v9270, %v9266
          %v9583 = vpack.c.b16 %v9271, %v9267
          %v9584 = vpack.c.b16 %v9276, %v9272
          %v9585 = vpack.c.b16 %v9277, %v9273
          %v9586 = vpack.c.b16 %v9278, %v9274
          %v9587 = vpack.c.b16 %v9279, %v9275
          %v9588 = vpack.c.b16 %v9284, %v9280
          %v9589 = vpack.c.b16 %v9285, %v9281
          %v9590 = vpack.c.b16 %v9286, %v9282
          %v9591 = vpack.c.b16 %v9287, %v9283
          %v9592 = vpack.c.b16 %v9292, %v9288
          %v9593 = vpack.c.b16 %v9293, %v9289
          %v9594 = vpack.c.b16 %v9294, %v9290
          %v9595 = vpack.c.b16 %v9295, %v9291
          %v9596 = vpack.c.b16 %v9300, %v9296
          %v9597 = vpack.c.b16 %v9301, %v9297
          %v9598 = vpack.c.b16 %v9302, %v9298
          %v9599 = vpack.c.b16 %v9303, %v9299
          %v9600 = vpack.c.b16 %v9308, %v9304
          %v9601 = vpack.c.b16 %v9309, %v9305
          %v9602 = vpack.c.b16 %v9310, %v9306
          %v9603 = vpack.c.b16 %v9311, %v9307
          %v9604 = vpack.c.b16 %v9316, %v9312
          %v9605 = vpack.c.b16 %v9317, %v9313
          %v9606 = vpack.c.b16 %v9318, %v9314
          %v9607 = vpack.c.b16 %v9319, %v9315
          %v9608 = vpack.c.b16 %v9324, %v9320
          %v9609 = vpack.c.b16 %v9325, %v9321
          %v9610 = vpack.c.b16 %v9326, %v9322
          %v9611 = vpack.c.b16 %v9327, %v9323
          %v9612 = vpack.c.b16 %v9332, %v9328
          %v9613 = vpack.c.b16 %v9333, %v9329
          %v9614 = vpack.c.b16 %v9334, %v9330
          %v9615 = vpack.c.b16 %v9335, %v9331
          %v9616 = vpack.c.b16 %v9340, %v9336
          %v9617 = vpack.c.b16 %v9341, %v9337
          %v9618 = vpack.c.b16 %v9342, %v9338
          %v9619 = vpack.c.b16 %v9343, %v9339
          %v9620 = vpack.c.b16 %v9348, %v9344
          %v9621 = vpack.c.b16 %v9349, %v9345
          %v9622 = vpack.c.b16 %v9350, %v9346
          %v9623 = vpack.c.b16 %v9351, %v9347
          %v9624 = vpack.c.b16 %v9356, %v9352
          %v9625 = vpack.c.b16 %v9357, %v9353
          %v9626 = vpack.c.b16 %v9358, %v9354
          %v9627 = vpack.c.b16 %v9359, %v9355
          %v9628 = vpack.c.b16 %v9364, %v9360
          %v9629 = vpack.c.b16 %v9365, %v9361
          %v9630 = vpack.c.b16 %v9366, %v9362
          %v9631 = vpack.c.b16 %v9367, %v9363
          %v9632 = vpack.c.b16 %v9372, %v9368
          %v9633 = vpack.c.b16 %v9373, %v9369
          %v9634 = vpack.c.b16 %v9374, %v9370
          %v9635 = vpack.c.b16 %v9375, %v9371
          %v9636 = vpack.c.b16 %v9380, %v9376
          %v9637 = vpack.c.b16 %v9381, %v9377
          %v9638 = vpack.c.b16 %v9382, %v9378
          %v9639 = vpack.c.b16 %v9383, %v9379
          %9896 = vmatpush.bf16.msra.mxu0 %v9412
          %9897 = vmatpush.bf16.msra.mxu0 %v9408
          %9898 = vmatpush.bf16.msra.mxu0 %v9404
          %9899 = vmatpush.bf16.msra.mxu0 %v9400
          %9900 = vmatpush.bf16.msra.mxu0 %v9396
          %9901 = vmatpush.bf16.msra.mxu0 %v9392
          %9902 = vmatpush.bf16.msra.mxu0 %v9388
          %9903 = vmatpush.bf16.msra.mxu0 %v9384
          %9904 = vmatmul.bf16.gmra.mxu0 %v8342
          %v9905 = vpop.f32.mrf.mxu0
          %v9906 = vadd.f32 %v8608, %v9905
          %v9907 = vpop.f32.mrf.mxu0
          %9908 = vdwg.mxu0
          %9909 = vmatpush.bf16.msra.mxu0 %v9444
          %9910 = vmatpush.bf16.msra.mxu0 %v9440
          %9911 = vmatpush.bf16.msra.mxu0 %v9436
          %9912 = vmatpush.bf16.msra.mxu0 %v9432
          %9913 = vmatpush.bf16.msra.mxu0 %v9428
          %9914 = vmatpush.bf16.msra.mxu0 %v9424
          %9915 = vmatpush.bf16.msra.mxu0 %v9420
          %9916 = vmatpush.bf16.msra.mxu0 %v9416
          %9917 = vmatmul.bf16.gmra.mxu0 %v8343
          %v9918 = vpop.f32.mrf.mxu0
          %v9919 = vadd.f32 %v9906, %v9918
          %v9920 = vpop.f32.mrf.mxu0
          %9921 = vdwg.mxu0
          %9922 = vmatpush.bf16.msra.mxu0 %v9476
          %9923 = vmatpush.bf16.msra.mxu0 %v9472
          %9924 = vmatpush.bf16.msra.mxu0 %v9468
          %9925 = vmatpush.bf16.msra.mxu0 %v9464
          %9926 = vmatpush.bf16.msra.mxu0 %v9460
          %9927 = vmatpush.bf16.msra.mxu0 %v9456
          %9928 = vmatpush.bf16.msra.mxu0 %v9452
          %9929 = vmatpush.bf16.msra.mxu0 %v9448
          %9930 = vmatmul.bf16.gmra.mxu0 %v8344
          %v9931 = vpop.f32.mrf.mxu0
          %v9932 = vadd.f32 %v9919, %v9931
          %v9933 = vpop.f32.mrf.mxu0
          %9934 = vdwg.mxu0
          %9935 = vmatpush.bf16.msra.mxu0 %v9508
          %9936 = vmatpush.bf16.msra.mxu0 %v9504
          %9937 = vmatpush.bf16.msra.mxu0 %v9500
          %9938 = vmatpush.bf16.msra.mxu0 %v9496
          %9939 = vmatpush.bf16.msra.mxu0 %v9492
          %9940 = vmatpush.bf16.msra.mxu0 %v9488
          %9941 = vmatpush.bf16.msra.mxu0 %v9484
          %9942 = vmatpush.bf16.msra.mxu0 %v9480
          %9943 = vmatmul.bf16.gmra.mxu0 %v8345
          %v9944 = vpop.f32.mrf.mxu0
          %v9945 = vadd.f32 %v9932, %v9944
          %v9946 = vpop.f32.mrf.mxu0
          %9947 = vdwg.mxu0
          %9948 = vmatpush.bf16.msra.mxu0 %v9540
          %9949 = vmatpush.bf16.msra.mxu0 %v9536
          %9950 = vmatpush.bf16.msra.mxu0 %v9532
          %9951 = vmatpush.bf16.msra.mxu0 %v9528
          %9952 = vmatpush.bf16.msra.mxu0 %v9524
          %9953 = vmatpush.bf16.msra.mxu0 %v9520
          %9954 = vmatpush.bf16.msra.mxu0 %v9516
          %9955 = vmatpush.bf16.msra.mxu0 %v9512
          %9956 = vmatmul.bf16.gmra.mxu0 %v8346
          %v9957 = vpop.f32.mrf.mxu0
          %v9958 = vadd.f32 %v9945, %v9957
          %v9959 = vpop.f32.mrf.mxu0
          %9960 = vdwg.mxu0
          %9961 = vmatpush.bf16.msra.mxu0 %v9572
          %9962 = vmatpush.bf16.msra.mxu0 %v9568
          %9963 = vmatpush.bf16.msra.mxu0 %v9564
          %9964 = vmatpush.bf16.msra.mxu0 %v9560
          %9965 = vmatpush.bf16.msra.mxu0 %v9556
          %9966 = vmatpush.bf16.msra.mxu0 %v9552
          %9967 = vmatpush.bf16.msra.mxu0 %v9548
          %9968 = vmatpush.bf16.msra.mxu0 %v9544
          %9969 = vmatmul.bf16.gmra.mxu0 %v8347
          %v9970 = vpop.f32.mrf.mxu0
          %v9971 = vadd.f32 %v9958, %v9970
          %v9972 = vpop.f32.mrf.mxu0
          %9973 = vdwg.mxu0
          %9974 = vmatpush.bf16.msra.mxu0 %v9604
          %9975 = vmatpush.bf16.msra.mxu0 %v9600
          %9976 = vmatpush.bf16.msra.mxu0 %v9596
          %9977 = vmatpush.bf16.msra.mxu0 %v9592
          %9978 = vmatpush.bf16.msra.mxu0 %v9588
          %9979 = vmatpush.bf16.msra.mxu0 %v9584
          %9980 = vmatpush.bf16.msra.mxu0 %v9580
          %9981 = vmatpush.bf16.msra.mxu0 %v9576
          %9982 = vmatmul.bf16.gmra.mxu0 %v8348
          %v9983 = vpop.f32.mrf.mxu0
          %v9984 = vadd.f32 %v9971, %v9983
          %v9985 = vpop.f32.mrf.mxu0
          %9986 = vdwg.mxu0
          %9987 = vmatpush.bf16.msra.mxu0 %v9636
          %9988 = vmatpush.bf16.msra.mxu0 %v9632
          %9989 = vmatpush.bf16.msra.mxu0 %v9628
          %9990 = vmatpush.bf16.msra.mxu0 %v9624
          %9991 = vmatpush.bf16.msra.mxu0 %v9620
          %9992 = vmatpush.bf16.msra.mxu0 %v9616
          %9993 = vmatpush.bf16.msra.mxu0 %v9612
          %9994 = vmatpush.bf16.msra.mxu0 %v9608
          %9995 = vmatmul.bf16.gmra.mxu0 %v8349
          %v9996 = vpop.f32.mrf.mxu0
          %v9997 = vadd.f32 %v9984, %v9996
          %v9998 = vpop.f32.mrf.mxu0
          %9999 = vdwg.mxu0
          %10000 = vmatpush.bf16.msra.mxu0 %v9413
          %10001 = vmatpush.bf16.msra.mxu0 %v9409
          %10002 = vmatpush.bf16.msra.mxu0 %v9405
          %10003 = vmatpush.bf16.msra.mxu0 %v9401
          %10004 = vmatpush.bf16.msra.mxu0 %v9397
          %10005 = vmatpush.bf16.msra.mxu0 %v9393
          %10006 = vmatpush.bf16.msra.mxu0 %v9389
          %10007 = vmatpush.bf16.msra.mxu0 %v9385
          %10008 = vmatmul.bf16.gmra.mxu0 %v8342
          %v10009 = vpop.f32.mrf.mxu0
          %v10010 = vadd.f32 %v8609, %v10009
          %v10011 = vpop.f32.mrf.mxu0
          %10012 = vdwg.mxu0
          %10013 = vmatpush.bf16.msra.mxu0 %v9445
          %10014 = vmatpush.bf16.msra.mxu0 %v9441
          %10015 = vmatpush.bf16.msra.mxu0 %v9437
          %10016 = vmatpush.bf16.msra.mxu0 %v9433
          %10017 = vmatpush.bf16.msra.mxu0 %v9429
          %10018 = vmatpush.bf16.msra.mxu0 %v9425
          %10019 = vmatpush.bf16.msra.mxu0 %v9421
          %10020 = vmatpush.bf16.msra.mxu0 %v9417
          %10021 = vmatmul.bf16.gmra.mxu0 %v8343
          %v10022 = vpop.f32.mrf.mxu0
          %v10023 = vadd.f32 %v10010, %v10022
          %v10024 = vpop.f32.mrf.mxu0
          %10025 = vdwg.mxu0
          %10026 = vmatpush.bf16.msra.mxu0 %v9477
          %10027 = vmatpush.bf16.msra.mxu0 %v9473
          %10028 = vmatpush.bf16.msra.mxu0 %v9469
          %10029 = vmatpush.bf16.msra.mxu0 %v9465
          %10030 = vmatpush.bf16.msra.mxu0 %v9461
          %10031 = vmatpush.bf16.msra.mxu0 %v9457
          %10032 = vmatpush.bf16.msra.mxu0 %v9453
          %10033 = vmatpush.bf16.msra.mxu0 %v9449
          %10034 = vmatmul.bf16.gmra.mxu0 %v8344
          %v10035 = vpop.f32.mrf.mxu0
          %v10036 = vadd.f32 %v10023, %v10035
          %v10037 = vpop.f32.mrf.mxu0
          %10038 = vdwg.mxu0
          %10039 = vmatpush.bf16.msra.mxu0 %v9509
          %10040 = vmatpush.bf16.msra.mxu0 %v9505
          %10041 = vmatpush.bf16.msra.mxu0 %v9501
          %10042 = vmatpush.bf16.msra.mxu0 %v9497
          %10043 = vmatpush.bf16.msra.mxu0 %v9493
          %10044 = vmatpush.bf16.msra.mxu0 %v9489
          %10045 = vmatpush.bf16.msra.mxu0 %v9485
          %10046 = vmatpush.bf16.msra.mxu0 %v9481
          %10047 = vmatmul.bf16.gmra.mxu0 %v8345
          %v10048 = vpop.f32.mrf.mxu0
          %v10049 = vadd.f32 %v10036, %v10048
          %v10050 = vpop.f32.mrf.mxu0
          %10051 = vdwg.mxu0
          %10052 = vmatpush.bf16.msra.mxu0 %v9541
          %10053 = vmatpush.bf16.msra.mxu0 %v9537
          %10054 = vmatpush.bf16.msra.mxu0 %v9533
          %10055 = vmatpush.bf16.msra.mxu0 %v9529
          %10056 = vmatpush.bf16.msra.mxu0 %v9525
          %10057 = vmatpush.bf16.msra.mxu0 %v9521
          %10058 = vmatpush.bf16.msra.mxu0 %v9517
          %10059 = vmatpush.bf16.msra.mxu0 %v9513
          %10060 = vmatmul.bf16.gmra.mxu0 %v8346
          %v10061 = vpop.f32.mrf.mxu0
          %v10062 = vadd.f32 %v10049, %v10061
          %v10063 = vpop.f32.mrf.mxu0
          %10064 = vdwg.mxu0
          %10065 = vmatpush.bf16.msra.mxu0 %v9573
          %10066 = vmatpush.bf16.msra.mxu0 %v9569
          %10067 = vmatpush.bf16.msra.mxu0 %v9565
          %10068 = vmatpush.bf16.msra.mxu0 %v9561
          %10069 = vmatpush.bf16.msra.mxu0 %v9557
          %10070 = vmatpush.bf16.msra.mxu0 %v9553
          %10071 = vmatpush.bf16.msra.mxu0 %v9549
          %10072 = vmatpush.bf16.msra.mxu0 %v9545
          %10073 = vmatmul.bf16.gmra.mxu0 %v8347
          %v10074 = vpop.f32.mrf.mxu0
          %v10075 = vadd.f32 %v10062, %v10074
          %v10076 = vpop.f32.mrf.mxu0
          %10077 = vdwg.mxu0
          %10078 = vmatpush.bf16.msra.mxu0 %v9605
          %10079 = vmatpush.bf16.msra.mxu0 %v9601
          %10080 = vmatpush.bf16.msra.mxu0 %v9597
          %10081 = vmatpush.bf16.msra.mxu0 %v9593
          %10082 = vmatpush.bf16.msra.mxu0 %v9589
          %10083 = vmatpush.bf16.msra.mxu0 %v9585
          %10084 = vmatpush.bf16.msra.mxu0 %v9581
          %10085 = vmatpush.bf16.msra.mxu0 %v9577
          %10086 = vmatmul.bf16.gmra.mxu0 %v8348
          %v10087 = vpop.f32.mrf.mxu0
          %v10088 = vadd.f32 %v10075, %v10087
          %v10089 = vpop.f32.mrf.mxu0
          %10090 = vdwg.mxu0
          %10091 = vmatpush.bf16.msra.mxu0 %v9637
          %10092 = vmatpush.bf16.msra.mxu0 %v9633
          %10093 = vmatpush.bf16.msra.mxu0 %v9629
          %10094 = vmatpush.bf16.msra.mxu0 %v9625
          %10095 = vmatpush.bf16.msra.mxu0 %v9621
          %10096 = vmatpush.bf16.msra.mxu0 %v9617
          %10097 = vmatpush.bf16.msra.mxu0 %v9613
          %10098 = vmatpush.bf16.msra.mxu0 %v9609
          %10099 = vmatmul.bf16.gmra.mxu0 %v8349
          %v10100 = vpop.f32.mrf.mxu0
          %v10101 = vadd.f32 %v10088, %v10100
          %v10102 = vpop.f32.mrf.mxu0
          %10103 = vdwg.mxu0
          %10104 = vmatpush.bf16.msra.mxu0 %v9414
          %10105 = vmatpush.bf16.msra.mxu0 %v9410
          %10106 = vmatpush.bf16.msra.mxu0 %v9406
          %10107 = vmatpush.bf16.msra.mxu0 %v9402
          %10108 = vmatpush.bf16.msra.mxu0 %v9398
          %10109 = vmatpush.bf16.msra.mxu0 %v9394
          %10110 = vmatpush.bf16.msra.mxu0 %v9390
          %10111 = vmatpush.bf16.msra.mxu0 %v9386
          %10112 = vmatmul.bf16.gmra.mxu0 %v8342
          %v10113 = vpop.f32.mrf.mxu0
          %v10114 = vadd.f32 %v8610, %v10113
          %v10115 = vpop.f32.mrf.mxu0
          %10116 = vdwg.mxu0
          %10117 = vmatpush.bf16.msra.mxu0 %v9446
          %10118 = vmatpush.bf16.msra.mxu0 %v9442
          %10119 = vmatpush.bf16.msra.mxu0 %v9438
          %10120 = vmatpush.bf16.msra.mxu0 %v9434
          %10121 = vmatpush.bf16.msra.mxu0 %v9430
          %10122 = vmatpush.bf16.msra.mxu0 %v9426
          %10123 = vmatpush.bf16.msra.mxu0 %v9422
          %10124 = vmatpush.bf16.msra.mxu0 %v9418
          %10125 = vmatmul.bf16.gmra.mxu0 %v8343
          %v10126 = vpop.f32.mrf.mxu0
          %v10127 = vadd.f32 %v10114, %v10126
          %v10128 = vpop.f32.mrf.mxu0
          %10129 = vdwg.mxu0
          %10130 = vmatpush.bf16.msra.mxu0 %v9478
          %10131 = vmatpush.bf16.msra.mxu0 %v9474
          %10132 = vmatpush.bf16.msra.mxu0 %v9470
          %10133 = vmatpush.bf16.msra.mxu0 %v9466
          %10134 = vmatpush.bf16.msra.mxu0 %v9462
          %10135 = vmatpush.bf16.msra.mxu0 %v9458
          %10136 = vmatpush.bf16.msra.mxu0 %v9454
          %10137 = vmatpush.bf16.msra.mxu0 %v9450
          %10138 = vmatmul.bf16.gmra.mxu0 %v8344
          %v10139 = vpop.f32.mrf.mxu0
          %v10140 = vadd.f32 %v10127, %v10139
          %v10141 = vpop.f32.mrf.mxu0
          %10142 = vdwg.mxu0
          %10143 = vmatpush.bf16.msra.mxu0 %v9510
          %10144 = vmatpush.bf16.msra.mxu0 %v9506
          %10145 = vmatpush.bf16.msra.mxu0 %v9502
          %10146 = vmatpush.bf16.msra.mxu0 %v9498
          %10147 = vmatpush.bf16.msra.mxu0 %v9494
          %10148 = vmatpush.bf16.msra.mxu0 %v9490
          %10149 = vmatpush.bf16.msra.mxu0 %v9486
          %10150 = vmatpush.bf16.msra.mxu0 %v9482
          %10151 = vmatmul.bf16.gmra.mxu0 %v8345
          %v10152 = vpop.f32.mrf.mxu0
          %v10153 = vadd.f32 %v10140, %v10152
          %v10154 = vpop.f32.mrf.mxu0
          %10155 = vdwg.mxu0
          %10156 = vmatpush.bf16.msra.mxu0 %v9542
          %10157 = vmatpush.bf16.msra.mxu0 %v9538
          %10158 = vmatpush.bf16.msra.mxu0 %v9534
          %10159 = vmatpush.bf16.msra.mxu0 %v9530
          %10160 = vmatpush.bf16.msra.mxu0 %v9526
          %10161 = vmatpush.bf16.msra.mxu0 %v9522
          %10162 = vmatpush.bf16.msra.mxu0 %v9518
          %10163 = vmatpush.bf16.msra.mxu0 %v9514
          %10164 = vmatmul.bf16.gmra.mxu0 %v8346
          %v10165 = vpop.f32.mrf.mxu0
          %v10166 = vadd.f32 %v10153, %v10165
          %v10167 = vpop.f32.mrf.mxu0
          %10168 = vdwg.mxu0
          %10169 = vmatpush.bf16.msra.mxu0 %v9574
          %10170 = vmatpush.bf16.msra.mxu0 %v9570
          %10171 = vmatpush.bf16.msra.mxu0 %v9566
          %10172 = vmatpush.bf16.msra.mxu0 %v9562
          %10173 = vmatpush.bf16.msra.mxu0 %v9558
          %10174 = vmatpush.bf16.msra.mxu0 %v9554
          %10175 = vmatpush.bf16.msra.mxu0 %v9550
          %10176 = vmatpush.bf16.msra.mxu0 %v9546
          %10177 = vmatmul.bf16.gmra.mxu0 %v8347
          %v10178 = vpop.f32.mrf.mxu0
          %v10179 = vadd.f32 %v10166, %v10178
          %v10180 = vpop.f32.mrf.mxu0
          %10181 = vdwg.mxu0
          %10182 = vmatpush.bf16.msra.mxu0 %v9606
          %10183 = vmatpush.bf16.msra.mxu0 %v9602
          %10184 = vmatpush.bf16.msra.mxu0 %v9598
          %10185 = vmatpush.bf16.msra.mxu0 %v9594
          %10186 = vmatpush.bf16.msra.mxu0 %v9590
          %10187 = vmatpush.bf16.msra.mxu0 %v9586
          %10188 = vmatpush.bf16.msra.mxu0 %v9582
          %10189 = vmatpush.bf16.msra.mxu0 %v9578
          %10190 = vmatmul.bf16.gmra.mxu0 %v8348
          %v10191 = vpop.f32.mrf.mxu0
          %v10192 = vadd.f32 %v10179, %v10191
          %v10193 = vpop.f32.mrf.mxu0
          %10194 = vdwg.mxu0
          %10195 = vmatpush.bf16.msra.mxu0 %v9638
          %10196 = vmatpush.bf16.msra.mxu0 %v9634
          %10197 = vmatpush.bf16.msra.mxu0 %v9630
          %10198 = vmatpush.bf16.msra.mxu0 %v9626
          %10199 = vmatpush.bf16.msra.mxu0 %v9622
          %10200 = vmatpush.bf16.msra.mxu0 %v9618
          %10201 = vmatpush.bf16.msra.mxu0 %v9614
          %10202 = vmatpush.bf16.msra.mxu0 %v9610
          %10203 = vmatmul.bf16.gmra.mxu0 %v8349
          %v10204 = vpop.f32.mrf.mxu0
          %v10205 = vadd.f32 %v10192, %v10204
          %v10206 = vpop.f32.mrf.mxu0
          %10207 = vdwg.mxu0
          %10208 = vmatpush.bf16.msra.mxu0 %v9415
          %10209 = vmatpush.bf16.msra.mxu0 %v9411
          %10210 = vmatpush.bf16.msra.mxu0 %v9407
          %10211 = vmatpush.bf16.msra.mxu0 %v9403
          %10212 = vmatpush.bf16.msra.mxu0 %v9399
          %10213 = vmatpush.bf16.msra.mxu0 %v9395
          %10214 = vmatpush.bf16.msra.mxu0 %v9391
          %10215 = vmatpush.bf16.msra.mxu0 %v9387
          %10216 = vmatmul.bf16.gmra.mxu0 %v8342
          %v10217 = vpop.f32.mrf.mxu0
          %v10218 = vadd.f32 %v8611, %v10217
          %v10219 = vpop.f32.mrf.mxu0
          %10220 = vdwg.mxu0
          %10221 = vmatpush.bf16.msra.mxu0 %v9447
          %10222 = vmatpush.bf16.msra.mxu0 %v9443
          %10223 = vmatpush.bf16.msra.mxu0 %v9439
          %10224 = vmatpush.bf16.msra.mxu0 %v9435
          %10225 = vmatpush.bf16.msra.mxu0 %v9431
          %10226 = vmatpush.bf16.msra.mxu0 %v9427
          %10227 = vmatpush.bf16.msra.mxu0 %v9423
          %10228 = vmatpush.bf16.msra.mxu0 %v9419
          %10229 = vmatmul.bf16.gmra.mxu0 %v8343
          %v10230 = vpop.f32.mrf.mxu0
          %v10231 = vadd.f32 %v10218, %v10230
          %v10232 = vpop.f32.mrf.mxu0
          %10233 = vdwg.mxu0
          %10234 = vmatpush.bf16.msra.mxu0 %v9479
          %10235 = vmatpush.bf16.msra.mxu0 %v9475
          %10236 = vmatpush.bf16.msra.mxu0 %v9471
          %10237 = vmatpush.bf16.msra.mxu0 %v9467
          %10238 = vmatpush.bf16.msra.mxu0 %v9463
          %10239 = vmatpush.bf16.msra.mxu0 %v9459
          %10240 = vmatpush.bf16.msra.mxu0 %v9455
          %10241 = vmatpush.bf16.msra.mxu0 %v9451
          %10242 = vmatmul.bf16.gmra.mxu0 %v8344
          %v10243 = vpop.f32.mrf.mxu0
          %v10244 = vadd.f32 %v10231, %v10243
          %v10245 = vpop.f32.mrf.mxu0
          %10246 = vdwg.mxu0
          %10247 = vmatpush.bf16.msra.mxu0 %v9511
          %10248 = vmatpush.bf16.msra.mxu0 %v9507
          %10249 = vmatpush.bf16.msra.mxu0 %v9503
          %10250 = vmatpush.bf16.msra.mxu0 %v9499
          %10251 = vmatpush.bf16.msra.mxu0 %v9495
          %10252 = vmatpush.bf16.msra.mxu0 %v9491
          %10253 = vmatpush.bf16.msra.mxu0 %v9487
          %10254 = vmatpush.bf16.msra.mxu0 %v9483
          %10255 = vmatmul.bf16.gmra.mxu0 %v8345
          %v10256 = vpop.f32.mrf.mxu0
          %v10257 = vadd.f32 %v10244, %v10256
          %v10258 = vpop.f32.mrf.mxu0
          %10259 = vdwg.mxu0
          %10260 = vmatpush.bf16.msra.mxu0 %v9543
          %10261 = vmatpush.bf16.msra.mxu0 %v9539
          %10262 = vmatpush.bf16.msra.mxu0 %v9535
          %10263 = vmatpush.bf16.msra.mxu0 %v9531
          %10264 = vmatpush.bf16.msra.mxu0 %v9527
          %10265 = vmatpush.bf16.msra.mxu0 %v9523
          %10266 = vmatpush.bf16.msra.mxu0 %v9519
          %10267 = vmatpush.bf16.msra.mxu0 %v9515
          %10268 = vmatmul.bf16.gmra.mxu0 %v8346
          %v10269 = vpop.f32.mrf.mxu0
          %v10270 = vadd.f32 %v10257, %v10269
          %v10271 = vpop.f32.mrf.mxu0
          %10272 = vdwg.mxu0
          %10273 = vmatpush.bf16.msra.mxu0 %v9575
          %10274 = vmatpush.bf16.msra.mxu0 %v9571
          %10275 = vmatpush.bf16.msra.mxu0 %v9567
          %10276 = vmatpush.bf16.msra.mxu0 %v9563
          %10277 = vmatpush.bf16.msra.mxu0 %v9559
          %10278 = vmatpush.bf16.msra.mxu0 %v9555
          %10279 = vmatpush.bf16.msra.mxu0 %v9551
          %10280 = vmatpush.bf16.msra.mxu0 %v9547
          %10281 = vmatmul.bf16.gmra.mxu0 %v8347
          %v10282 = vpop.f32.mrf.mxu0
          %v10283 = vadd.f32 %v10270, %v10282
          %v10284 = vpop.f32.mrf.mxu0
          %10285 = vdwg.mxu0
          %10286 = vmatpush.bf16.msra.mxu0 %v9607
          %10287 = vmatpush.bf16.msra.mxu0 %v9603
          %10288 = vmatpush.bf16.msra.mxu0 %v9599
          %10289 = vmatpush.bf16.msra.mxu0 %v9595
          %10290 = vmatpush.bf16.msra.mxu0 %v9591
          %10291 = vmatpush.bf16.msra.mxu0 %v9587
          %10292 = vmatpush.bf16.msra.mxu0 %v9583
          %10293 = vmatpush.bf16.msra.mxu0 %v9579
          %10294 = vmatmul.bf16.gmra.mxu0 %v8348
          %v10295 = vpop.f32.mrf.mxu0
          %v10296 = vadd.f32 %v10283, %v10295
          %v10297 = vpop.f32.mrf.mxu0
          %10298 = vdwg.mxu0
          %10299 = vmatpush.bf16.msra.mxu0 %v9639
          %10300 = vmatpush.bf16.msra.mxu0 %v9635
          %10301 = vmatpush.bf16.msra.mxu0 %v9631
          %10302 = vmatpush.bf16.msra.mxu0 %v9627
          %10303 = vmatpush.bf16.msra.mxu0 %v9623
          %10304 = vmatpush.bf16.msra.mxu0 %v9619
          %10305 = vmatpush.bf16.msra.mxu0 %v9615
          %10306 = vmatpush.bf16.msra.mxu0 %v9611
          %10307 = vmatmul.bf16.gmra.mxu0 %v8349
          %v10308 = vpop.f32.mrf.mxu0
          %v10309 = vadd.f32 %v10296, %v10308
          %v10310 = vpop.f32.mrf.mxu0
          %10311 = vdwg.mxu0
          %v10312 = vmax.f32 %v9997, 0.0
          %v10313 = vmax.f32 %v10101, 0.0
          %v10314 = vmax.f32 %v10205, 0.0
          %v10315 = vmax.f32 %v10309, 0.0
          %v10316 = vpack.c.bf16 %v10312, %v10312
          %v10317 = vpack.c.bf16 %v10313, %v10313
          %v10318 = vpack.c.bf16 %v10314, %v10314
          %v10319 = vpack.c.bf16 %v10315, %v10315
          %v10320 = vld [vmem:[#allocation11] sm:$0xf]
          %v10321 = vld [vmem:[#allocation11 + $0x4] sm:$0xf]
          %v10322 = vld [vmem:[#allocation11 + $0x8] sm:$0xf]
          %v10323 = vld [vmem:[#allocation11 + $0xc] sm:$0xf]
          %v10324 = vld [vmem:[#allocation11 + $0x10] sm:$0xf]
          %v10325 = vld [vmem:[#allocation11 + $0x14] sm:$0xf]
          %v10326 = vld [vmem:[#allocation11 + $0x18] sm:$0xf]
          %v10327 = vld [vmem:[#allocation11 + $0x1c] sm:$0xf]
          %v10328 = vld [vmem:[#allocation11 + $0x20] sm:$0xf]
          %v10329 = vld [vmem:[#allocation11 + $0x24] sm:$0xf]
          %v10330 = vld [vmem:[#allocation11 + $0x28] sm:$0xf]
          %v10331 = vld [vmem:[#allocation11 + $0x2c] sm:$0xf]
          %v10332 = vld [vmem:[#allocation11 + $0x30] sm:$0xf]
          %v10333 = vld [vmem:[#allocation11 + $0x34] sm:$0xf]
          %v10334 = vld [vmem:[#allocation11 + $0x38] sm:$0xf]
          %v10335 = vld [vmem:[#allocation11 + $0x3c] sm:$0xf]
          %v10336 = vld [vmem:[#allocation11 + $0x40] sm:$0xf]
          %v10337 = vld [vmem:[#allocation11 + $0x44] sm:$0xf]
          %v10338 = vld [vmem:[#allocation11 + $0x48] sm:$0xf]
          %v10339 = vld [vmem:[#allocation11 + $0x4c] sm:$0xf]
          %v10340 = vld [vmem:[#allocation11 + $0x50] sm:$0xf]
          %v10341 = vld [vmem:[#allocation11 + $0x54] sm:$0xf]
          %v10342 = vld [vmem:[#allocation11 + $0x58] sm:$0xf]
          %v10343 = vld [vmem:[#allocation11 + $0x5c] sm:$0xf]
          %v10344 = vld [vmem:[#allocation11 + $0x60] sm:$0xf]
          %v10345 = vld [vmem:[#allocation11 + $0x64] sm:$0xf]
          %v10346 = vld [vmem:[#allocation11 + $0x68] sm:$0xf]
          %v10347 = vld [vmem:[#allocation11 + $0x6c] sm:$0xf]
          %v10348 = vld [vmem:[#allocation11 + $0x70] sm:$0xf]
          %v10349 = vld [vmem:[#allocation11 + $0x74] sm:$0xf]
          %v10350 = vld [vmem:[#allocation11 + $0x78] sm:$0xf]
          %v10351 = vld [vmem:[#allocation11 + $0x7c] sm:$0xf]
          %v10352 = vld [vmem:[#allocation11 + $0x80] sm:$0xf]
          %v10353 = vld [vmem:[#allocation11 + $0x84] sm:$0xf]
          %v10354 = vld [vmem:[#allocation11 + $0x88] sm:$0xf]
          %v10355 = vld [vmem:[#allocation11 + $0x8c] sm:$0xf]
          %v10356 = vld [vmem:[#allocation11 + $0x90] sm:$0xf]
          %v10357 = vld [vmem:[#allocation11 + $0x94] sm:$0xf]
          %v10358 = vld [vmem:[#allocation11 + $0x98] sm:$0xf]
          %v10359 = vld [vmem:[#allocation11 + $0x9c] sm:$0xf]
          %v10360 = vld [vmem:[#allocation11 + $0xa0] sm:$0xf]
          %v10361 = vld [vmem:[#allocation11 + $0xa4] sm:$0xf]
          %v10362 = vld [vmem:[#allocation11 + $0xa8] sm:$0xf]
          %v10363 = vld [vmem:[#allocation11 + $0xac] sm:$0xf]
          %v10364 = vld [vmem:[#allocation11 + $0xb0] sm:$0xf]
          %v10365 = vld [vmem:[#allocation11 + $0xb4] sm:$0xf]
          %v10366 = vld [vmem:[#allocation11 + $0xb8] sm:$0xf]
          %v10367 = vld [vmem:[#allocation11 + $0xbc] sm:$0xf]
          %v10368 = vld [vmem:[#allocation11 + $0xc0] sm:$0xf]
          %v10369 = vld [vmem:[#allocation11 + $0xc4] sm:$0xf]
          %v10370 = vld [vmem:[#allocation11 + $0xc8] sm:$0xf]
          %v10371 = vld [vmem:[#allocation11 + $0xcc] sm:$0xf]
          %v10372 = vld [vmem:[#allocation11 + $0xd0] sm:$0xf]
          %v10373 = vld [vmem:[#allocation11 + $0xd4] sm:$0xf]
          %v10374 = vld [vmem:[#allocation11 + $0xd8] sm:$0xf]
          %v10375 = vld [vmem:[#allocation11 + $0xdc] sm:$0xf]
          %v10376 = vld [vmem:[#allocation11 + $0xe0] sm:$0xf]
          %v10377 = vld [vmem:[#allocation11 + $0xe4] sm:$0xf]
          %v10378 = vld [vmem:[#allocation11 + $0xe8] sm:$0xf]
          %v10379 = vld [vmem:[#allocation11 + $0xec] sm:$0xf]
          %v10380 = vld [vmem:[#allocation11 + $0xf0] sm:$0xf]
          %v10381 = vld [vmem:[#allocation11 + $0xf4] sm:$0xf]
          %v10382 = vld [vmem:[#allocation11 + $0xf8] sm:$0xf]
          %v10383 = vld [vmem:[#allocation11 + $0xfc] sm:$0xf]
          %v10384 = vld [vmem:[#allocation12] sm:$0x1]
          %v10386 = vperm.slane %v10384, 0
          %v10452 = vunpack.c.l.b16 %v10320
          %v10453 = vunpack.c.l.b16 %v10321
          %v10454 = vunpack.c.l.b16 %v10322
          %v10455 = vunpack.c.l.b16 %v10323
          %v10456 = vunpack.c.l.b16 %v10324
          %v10457 = vunpack.c.l.b16 %v10325
          %v10458 = vunpack.c.l.b16 %v10326
          %v10459 = vunpack.c.l.b16 %v10327
          %v10460 = vunpack.c.l.b16 %v10328
          %v10461 = vunpack.c.l.b16 %v10329
          %v10462 = vunpack.c.l.b16 %v10330
          %v10463 = vunpack.c.l.b16 %v10331
          %v10464 = vunpack.c.l.b16 %v10332
          %v10465 = vunpack.c.l.b16 %v10333
          %v10466 = vunpack.c.l.b16 %v10334
          %v10467 = vunpack.c.l.b16 %v10335
          %v10468 = vunpack.c.l.b16 %v10336
          %v10469 = vunpack.c.l.b16 %v10337
          %v10470 = vunpack.c.l.b16 %v10338
          %v10471 = vunpack.c.l.b16 %v10339
          %v10472 = vunpack.c.l.b16 %v10340
          %v10473 = vunpack.c.l.b16 %v10341
          %v10474 = vunpack.c.l.b16 %v10342
          %v10475 = vunpack.c.l.b16 %v10343
          %v10476 = vunpack.c.l.b16 %v10344
          %v10477 = vunpack.c.l.b16 %v10345
          %v10478 = vunpack.c.l.b16 %v10346
          %v10479 = vunpack.c.l.b16 %v10347
          %v10480 = vunpack.c.l.b16 %v10348
          %v10481 = vunpack.c.l.b16 %v10349
          %v10482 = vunpack.c.l.b16 %v10350
          %v10483 = vunpack.c.l.b16 %v10351
          %v10484 = vunpack.c.l.b16 %v10352
          %v10485 = vunpack.c.l.b16 %v10353
          %v10486 = vunpack.c.l.b16 %v10354
          %v10487 = vunpack.c.l.b16 %v10355
          %v10488 = vunpack.c.l.b16 %v10356
          %v10489 = vunpack.c.l.b16 %v10357
          %v10490 = vunpack.c.l.b16 %v10358
          %v10491 = vunpack.c.l.b16 %v10359
          %v10492 = vunpack.c.l.b16 %v10360
          %v10493 = vunpack.c.l.b16 %v10361
          %v10494 = vunpack.c.l.b16 %v10362
          %v10495 = vunpack.c.l.b16 %v10363
          %v10496 = vunpack.c.l.b16 %v10364
          %v10497 = vunpack.c.l.b16 %v10365
          %v10498 = vunpack.c.l.b16 %v10366
          %v10499 = vunpack.c.l.b16 %v10367
          %v10500 = vunpack.c.l.b16 %v10368
          %v10501 = vunpack.c.l.b16 %v10369
          %v10502 = vunpack.c.l.b16 %v10370
          %v10503 = vunpack.c.l.b16 %v10371
          %v10504 = vunpack.c.l.b16 %v10372
          %v10505 = vunpack.c.l.b16 %v10373
          %v10506 = vunpack.c.l.b16 %v10374
          %v10507 = vunpack.c.l.b16 %v10375
          %v10508 = vunpack.c.l.b16 %v10376
          %v10509 = vunpack.c.l.b16 %v10377
          %v10510 = vunpack.c.l.b16 %v10378
          %v10511 = vunpack.c.l.b16 %v10379
          %v10512 = vunpack.c.l.b16 %v10380
          %v10513 = vunpack.c.l.b16 %v10381
          %v10514 = vunpack.c.l.b16 %v10382
          %v10515 = vunpack.c.l.b16 %v10383
          %v10516 = vpack.c.b16 %v10453, %v10452
          %v10517 = vpack.c.b16 %v10455, %v10454
          %v10518 = vpack.c.b16 %v10457, %v10456
          %v10519 = vpack.c.b16 %v10459, %v10458
          %v10520 = vpack.c.b16 %v10461, %v10460
          %v10521 = vpack.c.b16 %v10463, %v10462
          %v10522 = vpack.c.b16 %v10465, %v10464
          %v10523 = vpack.c.b16 %v10467, %v10466
          %v10524 = vpack.c.b16 %v10469, %v10468
          %v10525 = vpack.c.b16 %v10471, %v10470
          %v10526 = vpack.c.b16 %v10473, %v10472
          %v10527 = vpack.c.b16 %v10475, %v10474
          %v10528 = vpack.c.b16 %v10477, %v10476
          %v10529 = vpack.c.b16 %v10479, %v10478
          %v10530 = vpack.c.b16 %v10481, %v10480
          %v10531 = vpack.c.b16 %v10483, %v10482
          %v10532 = vpack.c.b16 %v10485, %v10484
          %v10533 = vpack.c.b16 %v10487, %v10486
          %v10534 = vpack.c.b16 %v10489, %v10488
          %v10535 = vpack.c.b16 %v10491, %v10490
          %v10536 = vpack.c.b16 %v10493, %v10492
          %v10537 = vpack.c.b16 %v10495, %v10494
          %v10538 = vpack.c.b16 %v10497, %v10496
          %v10539 = vpack.c.b16 %v10499, %v10498
          %v10540 = vpack.c.b16 %v10501, %v10500
          %v10541 = vpack.c.b16 %v10503, %v10502
          %v10542 = vpack.c.b16 %v10505, %v10504
          %v10543 = vpack.c.b16 %v10507, %v10506
          %v10544 = vpack.c.b16 %v10509, %v10508
          %v10545 = vpack.c.b16 %v10511, %v10510
          %v10546 = vpack.c.b16 %v10513, %v10512
          %v10547 = vpack.c.b16 %v10515, %v10514
          %10580 = vmatpush.bf16.msra.mxu0 %v10523
          %10581 = vmatpush.bf16.msra.mxu0 %v10522
          %10582 = vmatpush.bf16.msra.mxu0 %v10521
          %10583 = vmatpush.bf16.msra.mxu0 %v10520
          %10584 = vmatpush.bf16.msra.mxu0 %v10519
          %10585 = vmatpush.bf16.msra.mxu0 %v10518
          %10586 = vmatpush.bf16.msra.mxu0 %v10517
          %10587 = vmatpush.bf16.msra.mxu0 %v10516
          %10588 = vmatmul.bf16.gmra.mxu0 %v10316
          %v10589 = vpop.f32.mrf.mxu0
          %v10590 = vadd.f32 %v10386, %v10589
          %v10591 = vpop.f32.mrf.mxu0
          %10592 = vdwg.mxu0
          %10593 = vmatpush.bf16.msra.mxu0 %v10531
          %10594 = vmatpush.bf16.msra.mxu0 %v10530
          %10595 = vmatpush.bf16.msra.mxu0 %v10529
          %10596 = vmatpush.bf16.msra.mxu0 %v10528
          %10597 = vmatpush.bf16.msra.mxu0 %v10527
          %10598 = vmatpush.bf16.msra.mxu0 %v10526
          %10599 = vmatpush.bf16.msra.mxu0 %v10525
          %10600 = vmatpush.bf16.msra.mxu0 %v10524
          %10601 = vmatmul.bf16.gmra.mxu0 %v10317
          %v10602 = vpop.f32.mrf.mxu0
          %v10603 = vadd.f32 %v10590, %v10602
          %v10604 = vpop.f32.mrf.mxu0
          %10605 = vdwg.mxu0
          %10606 = vmatpush.bf16.msra.mxu0 %v10539
          %10607 = vmatpush.bf16.msra.mxu0 %v10538
          %10608 = vmatpush.bf16.msra.mxu0 %v10537
          %10609 = vmatpush.bf16.msra.mxu0 %v10536
          %10610 = vmatpush.bf16.msra.mxu0 %v10535
          %10611 = vmatpush.bf16.msra.mxu0 %v10534
          %10612 = vmatpush.bf16.msra.mxu0 %v10533
          %10613 = vmatpush.bf16.msra.mxu0 %v10532
          %10614 = vmatmul.bf16.gmra.mxu0 %v10318
          %v10615 = vpop.f32.mrf.mxu0
          %v10616 = vadd.f32 %v10603, %v10615
          %v10617 = vpop.f32.mrf.mxu0
          %10618 = vdwg.mxu0
          %10619 = vmatpush.bf16.msra.mxu0 %v10547
          %10620 = vmatpush.bf16.msra.mxu0 %v10546
          %10621 = vmatpush.bf16.msra.mxu0 %v10545
          %10622 = vmatpush.bf16.msra.mxu0 %v10544
          %10623 = vmatpush.bf16.msra.mxu0 %v10543
          %10624 = vmatpush.bf16.msra.mxu0 %v10542
          %10625 = vmatpush.bf16.msra.mxu0 %v10541
          %10626 = vmatpush.bf16.msra.mxu0 %v10540
          %10627 = vmatmul.bf16.gmra.mxu0 %v10319
          %v10628 = vpop.f32.mrf.mxu0
          %v10629 = vadd.f32 %v10616, %v10628
          %v10630 = vpop.f32.mrf.mxu0
          %10631 = vdwg.mxu0
          %10632 = vst [vmem:[#allocation14] sm:$0xff] %v10629
        $region80: #{olivetti_forward.1} parent=47 // pred_fallthru
          _
        // Predicated region
        $region81: #{olivetti_forward.1} parent=47 // pred_check
          %p10633 = pneg %p195
        $region82: #{olivetti_forward.1} parent=47 // pred_check_branch
          %10635 = sbr.rel (%p10633) target = $region84
        $region83: #{olivetti_forward.1} parent=47 // pred_region
          %10637 = vsyncadd [#allocation5], 0
          %s10639 = sshll.u32 [#allocation14], 4
          %s10640 = int_to_ptr.vmem [resolvable:$true] %s10639
          %s10641 = sshll.u32 %s7, 4
          %s10642 = int_to_ptr.hbm [resolvable:$true] %s10641
          %10644 = dma.vmem_to_hbm [thread:$0]  %s10640, 128, %s10642, [#allocation5]
        $region84: #{olivetti_forward.1} parent=47 // pred_fallthru
          _
        // Predicated region
        $region85: #{olivetti_forward.1} parent=47 // pred_check
          %p10645 = pneg %p195
        $region86: #{olivetti_forward.1} parent=47 // pred_check_branch
          %10647 = sbr.rel (%p10645) target = $region88
        $region87: #{olivetti_forward.1} parent=47 // pred_region
          %10649 = dma.done [#allocation5], 128
        $region88: #{olivetti_forward.1} parent=47 // pred_fallthru
          _
      $region48: #{olivetti_forward.1} parent=5 // pred_fallthru
        _
      %p10650 = scmp.le.s32.totalorder 2, %s20
      // Predicated region
      $region89: #{olivetti_forward.1} parent=5 // pred_check
        %p10651 = pneg %p10650
      $region90: #{olivetti_forward.1} parent=5 // pred_check_branch
        %10653 = sbr.rel (%p10651) target = $region92
      $region91: #{olivetti_forward.1} parent=5 // pred_region
        %s10654 = ssub.s32 %s20, 2
      $region92: #{olivetti_forward.1} parent=5 // pred_fallthru
        _
    $region6: #{olivetti_forward.1} parent=1 // loop_footer
      %s24 = sadd.s32 1, %s20
    $region7: #{olivetti_forward.1} parent=1 // loop_footer_branch
      %19 = sbr.rel target = $region3
    $region8: #{olivetti_forward.1} parent=1 // loop_exit
      _
    %10655 = vsyncpa [#allocation4], 1
    %s10656 = scalar_lea.sflag [#allocation4], 1
    %10657 = vsyncpa %s10656, 1
    %10658 = vsyncpa [#allocation7], 1
    %10659 = vsyncpa [#allocation10], 1
    %10660 = vsyncpa [#allocation13], 1
    %10661 = vsyncpa [#allocation5], 1
    %s10662 = scalar_lea.sflag [#allocation5], 1
    %10663 = vsyncpa %s10662, 1

</llo_original>
